<compile_context>
chip_gen: v6e
topology: v6e:2x2x1
jax: 0.10.0
libtpu: 0.0.40
codegen_flags: <defaults>
</compile_context>

<pallas_src>
import functools
import math

import jax
import jax.numpy as jnp
from jax.experimental import pallas as pl
from jax.experimental.pallas import tpu as pltpu


# ----------------------------------------------------------------------------- config helpers

_VMEM_LIMIT_CACHE = None


def _vmem_limit_bytes():
    """Generation-aware scoped-VMEM limit (<=48MB on v7x, up to 96MB on v5e/v6e)."""
    global _VMEM_LIMIT_CACHE
    if _VMEM_LIMIT_CACHE is None:
        cap = 128 * 1024 * 1024
        try:
            info = pltpu.get_tpu_info()
            cap = int(getattr(info, "vmem_capacity_bytes", cap))
        except Exception:
            pass
        _VMEM_LIMIT_CACHE = max(16 * 1024 * 1024, min((cap * 3) // 4, 96 * 1024 * 1024))
    return _VMEM_LIMIT_CACHE


def _cparams(*sem):
    return pltpu.CompilerParams(dimension_semantics=sem,
                                vmem_limit_bytes=_vmem_limit_bytes())


def _round_up(x, m):
    return (x + m - 1) // m * m


def _pick_row_tile(m, max_tile=2048, prefer_multi=True):
    """Pick (tile_rows, padded_rows). Prefer a multiple-of-8 divisor of m (no pad/slice)."""
    cap = min(max_tile, m)
    cap -= cap % 8
    t = None
    if cap >= 8:
        for cand in range(cap, 7, -8):
            if m % cand == 0:
                t = cand
                break
    if t is None:                                   # rare ragged fallback: pad
        t = min(512, _round_up(m, 8))
        return t, _round_up(m, t)
    if prefer_multi and t == m and m >= 256 and (m // 2) % 8 == 0:
        t = m // 2                                  # v7x: give the 2nd TensorCore work
    return t, m


def _pick_s_tile(s, k, target_rows=2048):
    """Largest divisor of S whose (ss*K) row tile stays under the target."""
    ss = 1
    for cand in range(min(s, max(1, target_rows // max(k, 1))), 0, -1):
        if s % cand == 0:
            ss = cand
            break
    if ss == s and s % 2 == 0 and s * k >= 512:
        ss = s // 2
    return ss


# ----------------------------------------------------------------------------- in-kernel utils

def _col_partials(o):
    """[sum ; sumsq] column partials of a (rows, C) f32 tile -> (16, C) (sublane tree)."""
    rows, c = o.shape
    if rows % 8 == 0 and rows >= 8:
        op = o.reshape(rows // 8, 8, c)
        s1 = jnp.sum(op, axis=0)
        s2 = jnp.sum(op * op, axis=0)
    else:
        pad = jnp.zeros((7, c), jnp.float32)
        s1 = jnp.concatenate([jnp.sum(o, axis=0, keepdims=True), pad], axis=0)
        s2 = jnp.concatenate([jnp.sum(o * o, axis=0, keepdims=True), pad], axis=0)
    return jnp.concatenate([s1, s2], axis=0)


# ----------------------------------------------------------------------------- Pallas kernels

def _mm_kernel(*refs, act, has_skip, has_prelu):
    """o = act(prelu?(x) @ w + b [+ skip]); bf16 inputs, f32 MXU accumulate."""
    x_ref, w_ref, b_ref = refs[:3]
    i = 3
    s_ref = None
    a_ref = None
    if has_skip:
        s_ref = refs[i]
        i += 1
    if has_prelu:
        a_ref = refs[i]
        i += 1
    o_ref = refs[i]

    x = x_ref[...]
    if a_ref is not None:
        alpha = a_ref[0].astype(x.dtype)
        x = jnp.where(x >= 0, x, alpha * x)
    acc = jnp.dot(x, w_ref[...], preferred_element_type=jnp.float32) + b_ref[...]
    if s_ref is not None:
        acc = acc + s_ref[...].astype(jnp.float32)
    if act == "relu":
        acc = jnp.maximum(acc, 0.0)
    o_ref[...] = acc.astype(o_ref.dtype)


def _ffn_gn_kernel(x_ref, pe_ref, w1_ref, b1_ref, w2_ref, b2_ref, o_ref, st_ref,
                   *, valid_rows):
    """Fused: o = relu((x+pe)@W1+b1)@W2+b2 + (x+pe);   stats = [colsum(o); colsum(o^2)]."""
    xpe = x_ref[...] + pe_ref[...]                                        # (tm, N) bf16
    h = jnp.maximum(
        jnp.dot(xpe, w1_ref[...], preferred_element_type=jnp.float32) + b1_ref[...], 0.0)
    o = (jnp.dot(h.astype(w2_ref.dtype), w2_ref[...], preferred_element_type=jnp.float32)
         + b2_ref[...] + xpe.astype(jnp.float32))
    o_ref[...] = o.astype(o_ref.dtype)
    if valid_rows is not None:                      # ragged fallback: keep stats exact
        rows = (pl.program_id(1) * o.shape[0]
                + jax.lax.broadcasted_iota(jnp.int32, o.shape, 0))
        o = jnp.where(rows < valid_rows, o, 0.0)
    st_ref[...] = _col_partials(o)


def _cross_ffn_gn_kernel(x_ref, v_ref, w1_ref, b1_ref, w2_ref, b2_ref, o_ref, st_ref):
    """Fused cross-FFN: o = relu((x + vproj)@W1+b1)@W2+b2 + x; vproj broadcast over K."""
    x3 = x_ref[...]                                                       # (ss, K, N) bf16
    ss, kk, n = x3.shape
    rows = ss * kk
    z = (x3 + v_ref[...]).reshape(rows, n)                                # (ss,1,N) bcast
    y = x3.reshape(rows, n)
    h = jnp.maximum(
        jnp.dot(z, w1_ref[...], preferred_element_type=jnp.float32) + b1_ref[...], 0.0)
    o = (jnp.dot(h.astype(w2_ref.dtype), w2_ref[...], preferred_element_type=jnp.float32)
         + b2_ref[...] + y.astype(jnp.float32))
    o_ref[...] = o.reshape(ss, kk, n).astype(o_ref.dtype)
    st_ref[...] = _col_partials(o)


def _gn_stats_kernel(x_ref, st_ref):
    st_ref[...] = _col_partials(x_ref[...].astype(jnp.float32))


def _gn_apply_kernel(*refs, n_skips):
    """y = x * scale[b, c] + shift[b, c] (+ skips)."""
    x_ref, sc_ref, sh_ref = refs[:3]
    skip_refs = refs[3:3 + n_skips]
    o_ref = refs[3 + n_skips]
    y = x_ref[...].astype(jnp.float32) * sc_ref[...] + sh_ref[...]
    for s_ref in skip_refs:
        y = y + s_ref[...].astype(jnp.float32)
    o_ref[...] = y.astype(o_ref.dtype)


def _gate_end_kernel(x_ref, wtg_ref, btg_ref, wend_ref, o_ref, *, n):
    """Fused output head: relu((tanh(x@Wt+bt) * sigmoid(x@Wg+bg)) @ Wend)."""
    x = x_ref[...]
    acc = jnp.dot(x, wtg_ref[...], preferred_element_type=jnp.float32) + btg_ref[...]
    g = (jnp.tanh(acc[:, :n]) * jax.nn.sigmoid(acc[:, n:])).astype(wend_ref.dtype)
    e = jnp.dot(g, wend_ref[...], preferred_element_type=jnp.float32)
    o_ref[...] = jnp.maximum(e, 0.0).astype(o_ref.dtype)


# ----------------------------------------------------------------------------- Pallas wrappers

def pallas_matmul(x, w, b=None, *, act="none", skip=None, prelu_alpha=None,
                  out_dtype=jnp.bfloat16, max_tile=2048):
    """[M, K] @ [K, N] with fused PReLU-prologue / bias / relu / residual."""
    m, kin = x.shape
    n = w.shape[1]
    tm, mp = _pick_row_tile(m, max_tile)
    xp = x if mp == m else jnp.pad(x, ((0, mp - m), (0, 0)))
    bb = (jnp.zeros((1, n), jnp.float32) if b is None
          else b.reshape(1, n).astype(jnp.float32))

    args = [xp.astype(jnp.bfloat16), w.astype(jnp.bfloat16), bb]
    in_specs = [
        pl.BlockSpec((tm, kin), lambda i: (i, 0)),
        pl.BlockSpec((kin, n), lambda i: (0, 0)),
        pl.BlockSpec((1, n), lambda i: (0, 0)),
    ]
    has_skip = skip is not None
    if has_skip:
        sp = skip if mp == m else jnp.pad(skip, ((0, mp - m), (0, 0)))
        args.append(sp.astype(jnp.bfloat16))
        in_specs.append(pl.BlockSpec((tm, n), lambda i: (i, 0)))
    has_prelu = prelu_alpha is not None
    if has_prelu:
        args.append(jnp.reshape(prelu_alpha, (1,)).astype(jnp.float32))
        in_specs.append(pl.BlockSpec(memory_space=pltpu.MemorySpace.SMEM))

    out = pl.pallas_call(
        functools.partial(_mm_kernel, act=act, has_skip=has_skip, has_prelu=has_prelu),
        out_shape=jax.ShapeDtypeStruct((mp, n), out_dtype),
        grid=(mp // tm,),
        in_specs=in_specs,
        out_specs=pl.BlockSpec((tm, n), lambda i: (i, 0)),
        compiler_params=_cparams("parallel"),
        cost_estimate=pl.CostEstimate(
            flops=2 * mp * kin * n, transcendentals=0,
            bytes_accessed=mp * kin * 2 + kin * n * 2 + mp * n * 2
                           + (mp * n * 2 if has_skip else 0)),
    )(*args)
    return out[:m] if mp != m else out


def pallas_ffn_gn_stats(x, pe, w1, b1, w2, b2, *, max_tile=2048):
    """Fused pos-enc + residual FFN + GroupNorm column partials.

    x: [B, M, N], pe: [M, N].  Returns:
      o[B, M, N] = relu((x+pe)@w1+b1)@w2+b2 + (x+pe)   (bf16)
      stats[B, n_tiles, 16, N] = per-tile [column sums of o ; column sums of o^2]  (f32)
    """
    b_, m, n = x.shape
    tm, mp = _pick_row_tile(m, max_tile)
    xp = x if mp == m else jnp.pad(x, ((0, 0), (0, mp - m), (0, 0)))
    pep = pe if mp == m else jnp.pad(pe, ((0, mp - m), (0, 0)))
    n_tiles = mp // tm
    valid_rows = None if mp == m else m

    o, stats = pl.pallas_call(
        functools.partial(_ffn_gn_kernel, valid_rows=valid_rows),
        out_shape=(jax.ShapeDtypeStruct((b_, mp, n), jnp.bfloat16),
                   jax.ShapeDtypeStruct((b_, n_tiles * 16, n), jnp.float32)),
        grid=(b_, n_tiles),
        in_specs=[
            pl.BlockSpec((None, tm, n), lambda i, j: (i, j, 0)),
            pl.BlockSpec((tm, n), lambda i, j: (j, 0)),
            pl.BlockSpec((n, n), lambda i, j: (0, 0)),
            pl.BlockSpec((1, n), lambda i, j: (0, 0)),
            pl.BlockSpec((n, n), lambda i, j: (0, 0)),
            pl.BlockSpec((1, n), lambda i, j: (0, 0)),
        ],
        out_specs=(
            pl.BlockSpec((None, tm, n), lambda i, j: (i, j, 0)),
            pl.BlockSpec((None, 16, n), lambda i, j: (i, j, 0)),
        ),
        compiler_params=_cparams("parallel", "parallel"),
        cost_estimate=pl.CostEstimate(
            flops=4 * b_ * mp * n * n, transcendentals=0,
            bytes_accessed=b_ * mp * n * 2 * 3 + 4 * n * n),
    )(xp.astype(jnp.bfloat16), pep.astype(jnp.bfloat16),
      w1.astype(jnp.bfloat16), b1.reshape(1, n).astype(jnp.float32),
      w2.astype(jnp.bfloat16), b2.reshape(1, n).astype(jnp.float32))
    if mp != m:
        o = o[:, :m]
    return o, stats.reshape(b_, n_tiles, 16, n)


def pallas_cross_ffn_gn_stats(x, vproj, w1, b1, w2, b2, *, max_rows=2048):
    """Fused video-conditioned residual FFN + GN partials.

    x: [B, S, K, N], vproj: [B, S, N] (broadcast over K inside VMEM, never in HBM).
      o = relu((x + vproj)@w1 + b1)@w2 + b2 + x
    """
    b_, s, k, n = x.shape
    ss = _pick_s_tile(s, k, max_rows)
    n_tiles = s // ss

    o, stats = pl.pallas_call(
        _cross_ffn_gn_kernel,
        out_shape=(jax.ShapeDtypeStruct((b_, s, k, n), jnp.bfloat16),
                   jax.ShapeDtypeStruct((b_, n_tiles * 16, n), jnp.float32)),
        grid=(b_, n_tiles),
        in_specs=[
            pl.BlockSpec((None, ss, k, n), lambda i, j: (i, j, 0, 0)),
            pl.BlockSpec((None, ss, 1, n), lambda i, j: (i, j, 0, 0)),
            pl.BlockSpec((n, n), lambda i, j: (0, 0)),
            pl.BlockSpec((1, n), lambda i, j: (0, 0)),
            pl.BlockSpec((n, n), lambda i, j: (0, 0)),
            pl.BlockSpec((1, n), lambda i, j: (0, 0)),
        ],
        out_specs=(
            pl.BlockSpec((None, ss, k, n), lambda i, j: (i, j, 0, 0)),
            pl.BlockSpec((None, 16, n), lambda i, j: (i, j, 0)),
        ),
        compiler_params=_cparams("parallel", "parallel"),
        cost_estimate=pl.CostEstimate(
            flops=4 * b_ * s * k * n * n, transcendentals=0,
            bytes_accessed=b_ * s * k * n * 2 * 2 + b_ * s * n * 2 + 4 * n * n),
    )(x.astype(jnp.bfloat16), vproj.reshape(b_, s, 1, n).astype(jnp.bfloat16),
      w1.astype(jnp.bfloat16), b1.reshape(1, n).astype(jnp.float32),
      w2.astype(jnp.bfloat16), b2.reshape(1, n).astype(jnp.float32))
    return o, stats.reshape(b_, n_tiles, 16, n)


def gn_scale_shift(stats, weight, bias, count, eps):
    """Combine per-tile [sum; sumsq] partials into per-(batch, channel) affine terms."""
    s1 = jnp.sum(stats[:, :, :8, :], axis=(1, 2, 3))
    s2 = jnp.sum(stats[:, :, 8:, :], axis=(1, 2, 3))
    mean = s1 / count
    var = jnp.maximum(s2 / count - mean * mean, 0.0)
    rstd = jax.lax.rsqrt(var + eps)
    w = weight.astype(jnp.float32)[None, :]
    scale = w * rstd[:, None]
    shift = bias.astype(jnp.float32)[None, :] - mean[:, None] * scale
    return scale, shift


def pallas_gn_apply(x, scale, shift, skips=(), *, out_dtype=jnp.bfloat16, max_tile=2048):
    """y[b,m,c] = x*scale[b,c] + shift[b,c] + sum(skips); skips may be [B,M,C] or [M,C]."""
    b_, m, c = x.shape
    tm, mp = _pick_row_tile(m, max_tile)
    n_tiles = mp // tm

    def pad3(a):
        return a if mp == m else jnp.pad(a, ((0, 0), (0, mp - m), (0, 0)))

    args = [pad3(x), scale.reshape(b_, 1, c).astype(jnp.float32),
            shift.reshape(b_, 1, c).astype(jnp.float32)]
    in_specs = [
        pl.BlockSpec((None, tm, c), lambda i, j: (i, j, 0)),
        pl.BlockSpec((None, 1, c), lambda i, j: (i, 0, 0)),
        pl.BlockSpec((None, 1, c), lambda i, j: (i, 0, 0)),
    ]
    for s in skips:
        if s.ndim == 2:                               # batch-shared (positional encoding)
            sp = s if mp == m else jnp.pad(s, ((0, mp - m), (0, 0)))
            args.append(sp)
            in_specs.append(pl.BlockSpec((tm, c), lambda i, j: (j, 0)))
        else:
            args.append(pad3(s))
            in_specs.append(pl.BlockSpec((None, tm, c), lambda i, j: (i, j, 0)))

    out = pl.pallas_call(
        functools.partial(_gn_apply_kernel, n_skips=len(skips)),
        out_shape=jax.ShapeDtypeStruct((b_, mp, c), out_dtype),
        grid=(b_, n_tiles),
        in_specs=in_specs,
        out_specs=pl.BlockSpec((None, tm, c), lambda i, j: (i, j, 0)),
        compiler_params=_cparams("parallel", "parallel"),
    )(*args)
    return out[:, :m] if mp != m else out


def pallas_groupnorm(x, weight, bias, eps, *, out_dtype=jnp.bfloat16, max_tile=2048):
    """GroupNorm(num_groups=1) on channels-last x [B, M, C]; tiled stats + apply passes."""
    b_, m, c = x.shape
    tm, mp = _pick_row_tile(m, max_tile)
    xp = x if mp == m else jnp.pad(x, ((0, 0), (0, mp - m), (0, 0)))   # zero pad: sums exact
    n_tiles = mp // tm

    stats = pl.pallas_call(
        _gn_stats_kernel,
        out_shape=jax.ShapeDtypeStruct((b_, n_tiles * 16, c), jnp.float32),
        grid=(b_, n_tiles),
        in_specs=[pl.BlockSpec((None, tm, c), lambda i, j: (i, j, 0))],
        out_specs=pl.BlockSpec((None, 16, c), lambda i, j: (i, j, 0)),
        compiler_params=_cparams("parallel", "parallel"),
    )(xp)
    scale, shift = gn_scale_shift(stats.reshape(b_, n_tiles, 16, c), weight, bias,
                                  jnp.float32(m * c), eps)
    return pallas_gn_apply(x, scale, shift, out_dtype=out_dtype, max_tile=max_tile)


def pallas_gate_end(x, w_t, b_t, w_g, b_g, w_end, *, max_tile=1024):
    """Fused tanh/sigmoid gate + end_conv1x1 + ReLU, lane-dense (128-padded) output."""
    m, n = x.shape
    cin = w_end.shape[1]
    cin_p = _round_up(cin, 128)
    wtg = jnp.concatenate([w_t, w_g], axis=1).astype(jnp.bfloat16)            # (N, 2N)
    btg = jnp.concatenate([b_t, b_g], axis=0).reshape(1, 2 * n).astype(jnp.float32)
    wend = jnp.pad(w_end, ((0, 0), (0, cin_p - cin))).astype(jnp.bfloat16)
    tm, mp = _pick_row_tile(m, max_tile)
    xp = x if mp == m else jnp.pad(x, ((0, mp - m), (0, 0)))

    out = pl.pallas_call(
        functools.partial(_gate_end_kernel, n=n),
        out_shape=jax.ShapeDtypeStruct((mp, cin_p), jnp.float32),
        grid=(mp // tm,),
        in_specs=[
            pl.BlockSpec((tm, n), lambda i: (i, 0)),
            pl.BlockSpec((n, 2 * n), lambda i: (0, 0)),
            pl.BlockSpec((1, 2 * n), lambda i: (0, 0)),
            pl.BlockSpec((n, cin_p), lambda i: (0, 0)),
        ],
        out_specs=pl.BlockSpec((tm, cin_p), lambda i: (i, 0)),
        compiler_params=_cparams("parallel"),
        cost_estimate=pl.CostEstimate(
            flops=2 * mp * n * (2 * n + cin_p), transcendentals=2 * mp * n,
            bytes_accessed=mp * n * 2 + 2 * n * n * 2 + n * cin_p * 2 + mp * cin_p * 4),
    )(xp.astype(jnp.bfloat16), wtg, btg, wend)
    out = out[:m] if mp != m else out
    return out[:, :cin] if cin_p != cin else out


# ----------------------------------------------------------------------------- plain-JAX glue

def batchnorm1d_train_cl(x, gamma, beta, eps=1e-5):
    # training-mode BN (fresh module, no .eval()): biased batch stats over (B, T); x is [B,T,C]
    xf = x.astype(jnp.float32)
    mean = jnp.mean(xf, axis=(0, 1), keepdims=True)
    var = jnp.mean((xf - mean) ** 2, axis=(0, 1), keepdims=True)
    y = (xf - mean) * jax.lax.rsqrt(var + eps) * gamma[None, None, :] + beta[None, None, :]
    return y.astype(x.dtype)


def prelu(x, alpha):
    alpha = jnp.asarray(alpha, x.dtype)
    return jnp.where(x >= 0, x, alpha * x)


def depthwise_conv3_cl(x, w):
    # x: [B, T, C], w: [C, 3], padding=1, groups=C, no bias (cross-correlation)
    xp = jnp.pad(x, ((0, 0), (1, 1), (0, 0)))
    w = w.astype(x.dtype)
    return xp[:, :-2, :] * w[:, 0] + xp[:, 1:-1, :] * w[:, 1] + xp[:, 2:, :] * w[:, 2]


def pos2d_pe_skn(N, K, S):
    # PositionalEncodingPermute2D(256) evaluated directly in [S, K, N] (channels-last) layout
    channels = int(math.ceil(256 / 4) * 2)  # 128
    inv_freq = 1.0 / (10000.0 ** (jnp.arange(0, channels, 2, dtype=jnp.float32) / channels))

    def get_emb(pos):
        sin_inp = pos[:, None] * inv_freq[None, :]
        emb = jnp.stack([jnp.sin(sin_inp), jnp.cos(sin_inp)], axis=-1)
        return emb.reshape(pos.shape[0], -1)

    emb_x = get_emb(jnp.arange(K, dtype=jnp.float32))   # (K, 128)
    emb_y = get_emb(jnp.arange(S, dtype=jnp.float32))   # (S, 128)
    emb = jnp.zeros((K, S, 2 * channels), jnp.float32)
    emb = emb.at[:, :, :channels].set(emb_x[:, None, :])
    emb = emb.at[:, :, channels:].set(emb_y[None, :, :])
    return jnp.swapaxes(emb[:, :, :N], 0, 1)             # (S, K, N)


def _segmentation_cl(x, K):
    # x: [B, L, N] channels-last -> [B, S, K, N], gap  (matches torch _Segmentation)
    B, L, N = x.shape
    P = K // 2
    gap = K - (P + L % K) % K
    if gap > 0:
        x = jnp.pad(x, ((0, 0), (0, gap), (0, 0)))
    x = jnp.pad(x, ((0, 0), (P, P), (0, 0)))
    S1 = (x.shape[1] - P) // K
    i1 = x[:, :-P, :].reshape(B, S1, K, N)
    i2 = x[:, P:, :].reshape(B, S1, K, N)
    return jnp.stack([i1, i2], axis=2).reshape(B, 2 * S1, K, N), gap


def _over_add_cl(x, gap):
    # x: [B', S, K, N] channels-last -> [B', L, N]   (matches torch _over_add)
    Bp, S, K, N = x.shape
    P = K // 2
    S1 = S // 2
    xr = x.reshape(Bp, S1, 2, K, N)
    i1 = xr[:, :, 0].reshape(Bp, S1 * K, N)
    i2 = xr[:, :, 1].reshape(Bp, S1 * K, N)
    out = i1[:, P:, :] + i2[:, :-P, :]
    if gap > 0:
        out = out[:, :-gap, :]
    return out


# ----------------------------------------------------------------------------- sub-modules

def visual_conv1d_block_cl(x, p):
    # relu -> BN -> depthwise conv3 -> PReLU -> BN -> pointwise conv (Pallas, residual fused)
    y = jnp.maximum(x, 0.0)
    y = batchnorm1d_train_cl(y, p["bn1_g"], p["bn1_b"])
    y = depthwise_conv3_cl(y, p["dw"])
    y = prelu(y, p["prelu"])
    y = batchnorm1d_train_cl(y, p["bn2_g"], p["bn2_b"])
    B, T, C = y.shape
    out = pallas_matmul(y.reshape(B * T, C), p["pw"], skip=x.reshape(B * T, C))
    return out.reshape(B, T, C)


def cross_dual_computation_block_cl(x, v, pe_flat, pe_v, p, eps=1e-8):
    """x: [B, S, K, N] channels-last, v: [B, S, N] channels-last."""
    B, S, K, N = x.shape
    M = S * K
    x_flat = x.reshape(B, M, N)

    # ---- intra (within chunks): fused pe-add + residual FFN + GN partial stats
    # TODO(synk): synthetic residual-FFN stand-in for the external intra transformer block.
    o, stats = pallas_ffn_gn_stats(x_flat, pe_flat,
                                   p["intra"]["w1"], p["intra"]["b1"],
                                   p["intra"]["w2"], p["intra"]["b2"])
    scale, shift = gn_scale_shift(stats, p["intra_norm_w"], p["intra_norm_b"],
                                  jnp.float32(M * N), eps)
    # intra = intra_norm(o) + (x + pe)  (skip-around-intra; pe re-added in the epilogue)
    intra = pallas_gn_apply(o, scale, shift, skips=(x_flat, pe_flat))

    # ---- inter (across chunks), conditioned on video; (b, s, k) ordering kept (no swapaxes)
    # TODO(synk): synthetic residual cross-FFN stand-in for the external inter (cross) block.
    v_pe = (v + pe_v[None]).astype(jnp.bfloat16)
    vproj = pallas_matmul(v_pe.reshape(B * S, N), p["inter"]["wv"]).reshape(B, S, N)
    o2, stats2 = pallas_cross_ffn_gn_stats(intra.reshape(B, S, K, N), vproj,
                                           p["inter"]["wq"], p["inter"]["b"],
                                           p["inter"]["wo"], p["inter"]["bo"])
    scale2, shift2 = gn_scale_shift(stats2, p["inter_norm_w"], p["inter_norm_b"],
                                    jnp.float32(M * N), eps)
    out = pallas_gn_apply(o2.reshape(B, M, N), scale2, shift2, skips=(intra,))
    return out.reshape(B, S, K, N)


# ----------------------------------------------------------------------------- full forward

def cross_dual_path_forward(x, video, params, *, K, num_spks, num_layers):
    B, Cin, L = x.shape
    N = params["conv1d_w"].shape[1]

    # audio front-end (switch to channels-last once, keep it until the output)
    x_cl = jnp.transpose(x, (0, 2, 1))                                   # [B, L, Cin]
    x_cl = pallas_groupnorm(x_cl, params["norm_w"], params["norm_b"], 1e-8)
    x2 = pallas_matmul(x_cl.reshape(B * L, Cin), params["conv1d_w"])     # 1x1 conv, no bias
    xs, gap = _segmentation_cl(x2.reshape(B, L, N), K)                   # [B, S, K, N]
    S = xs.shape[1]

    # visual encoder: 5 x VisualConv1D(512) + Conv1d(512 -> 256), replicate-pad time to S
    v = jnp.transpose(video, (0, 2, 1))                                  # [B, Tv, 512]
    for i in range(5):
        v = visual_conv1d_block_cl(v, params["ve"][i])
    Bv, Tv, Cv = v.shape
    v = pallas_matmul(v.reshape(Bv * Tv, Cv), params["ve_out_w"], params["ve_out_b"])
    v = v.reshape(Bv, Tv, 256)
    v = jnp.pad(v, ((0, 0), (0, S - Tv), (0, 0)), mode="edge")           # [B, S, 256]

    # positional encodings (hoisted out of the layer loop)
    pe_skn = pos2d_pe_skn(N, K, S)                                       # [S, K, N]
    pe_flat = pe_skn.reshape(S * K, N).astype(jnp.bfloat16)              # [S*K, N]
    pe_v = pe_skn[:, K // 2, :]                                          # [S, N]

    # dual-path blocks
    for i in range(num_layers):
        xs = cross_dual_computation_block_cl(xs, v, pe_flat, pe_v, params["dual"][i])

    # mask head: PReLU fused into the conv2d-1x1 matmul prologue
    y = pallas_matmul(xs.reshape(B * S * K, N), params["conv2d_w"], params["conv2d_b"],
                      prelu_alpha=params["prelu"])
    y = y.reshape(B, S, K, num_spks, N)
    y = jnp.moveaxis(y, 3, 1).reshape(B * num_spks, S, K, N)

    # overlap-add back to [B*spks, L, N] (channels-last)
    y = _over_add_cl(y, gap)
    Bs, Lo, _ = y.shape

    # fused output head: tanh(conv) * sigmoid(conv) -> end_conv1x1 -> ReLU
    e = pallas_gate_end(y.reshape(Bs * Lo, N),
                        params["out_w"], params["out_b"],
                        params["gate_w"], params["gate_b"],
                        params["end_w"])                                  # [Bs*Lo, Cin] f32
    e = e.reshape(B, num_spks, Lo, Cin)
    return jnp.transpose(e, (1, 0, 3, 2))                                 # [spks, B, Cin, L]


# ----------------------------------------------------------------------------- params / main

def init_params(key, in_channels, out_channels, num_spks, num_layers):
    ks = iter(jax.random.split(key, 128))

    def w(shape, scale=0.02):
        return scale * jax.random.normal(next(ks), shape, dtype=jnp.float32)

    params = {
        "norm_w": jnp.ones((in_channels,), jnp.float32),
        "norm_b": jnp.zeros((in_channels,), jnp.float32),
        "conv1d_w": w((in_channels, out_channels)),
        "ve": [],
        "ve_out_w": w((512, 256)),
        "ve_out_b": w((256,)),
        "dual": [],
        "prelu": jnp.asarray(0.25, jnp.float32),
        "conv2d_w": w((out_channels, out_channels * num_spks)),
        "conv2d_b": w((out_channels * num_spks,)),
        "out_w": w((out_channels, out_channels)),
        "out_b": w((out_channels,)),
        "gate_w": w((out_channels, out_channels)),
        "gate_b": w((out_channels,)),
        "end_w": w((out_channels, in_channels)),
    }
    for _ in range(5):
        params["ve"].append({
            "bn1_g": jnp.ones((512,), jnp.float32), "bn1_b": jnp.zeros((512,), jnp.float32),
            "dw": w((512, 3)),
            "prelu": jnp.asarray(0.25, jnp.float32),
            "bn2_g": jnp.ones((512,), jnp.float32), "bn2_b": jnp.zeros((512,), jnp.float32),
            "pw": w((512, 512)),
        })
    for _ in range(num_layers):
        params["dual"].append({
            "intra": {"w1": w((out_channels, out_channels)), "b1": w((out_channels,)),
                      "w2": w((out_channels, out_channels)), "b2": w((out_channels,))},
            "inter": {"wq": w((out_channels, out_channels)), "wv": w((out_channels, out_channels)),
                      "b": w((out_channels,)),
                      "wo": w((out_channels, out_channels)), "bo": w((out_channels,))},
            "intra_norm_w": jnp.ones((out_channels,), jnp.float32),
            "intra_norm_b": jnp.zeros((out_channels,), jnp.float32),
            "inter_norm_w": jnp.ones((out_channels,), jnp.float32),
            "inter_norm_b": jnp.zeros((out_channels,), jnp.float32),
        })
    return params


if __name__ == "__main__":
    B = 2
    in_channels = 64
    out_channels = 256   # fixed by the architecture (pos2d / visual_conv hard-code 256)
    K = 8                # chunk length (small test value; default in the module is 160)
    L = 20               # audio time points
    Tv = 4               # video time points
    num_spks = 2
    num_layers = 1

    key = jax.random.PRNGKey(0)
    kx, kv, kp = jax.random.split(key, 3)
    x = jax.random.normal(kx, (B, in_channels, L), dtype=jnp.float32)
    video = jax.random.normal(kv, (B, 512, Tv), dtype=jnp.float32)
    params = init_params(kp, in_channels, out_channels, num_spks, num_layers)

    fwd = jax.jit(functools.partial(cross_dual_path_forward,
                                    K=K, num_spks=num_spks, num_layers=num_layers))
    out = fwd(x, video, params)
    out = jax.block_until_ready(out)
    assert out.shape == (num_spks, B, in_channels, L), out.shape
    assert bool(jnp.all(jnp.isfinite(out)))
    print("KERNEL_OK")
</pallas_src>

<mosaic_0001>
module attributes {stable_mosaic.version = 11 : i64} {
  func.func @_mm_kernel(%arg0: i32, %arg1: memref<8x512xbf16, #tpu.memory_space<vmem>>, %arg2: memref<512x512xbf16, #tpu.memory_space<vmem>>, %arg3: memref<1x512xf32, #tpu.memory_space<vmem>>, %arg4: memref<8x512xbf16, #tpu.memory_space<vmem>>, %arg5: memref<8x512xbf16, #tpu.memory_space<vmem>>) attributes {dimension_semantics = [#tpu.dimension_semantics<parallel>], iteration_bounds = array<i64: 1>, scalar_prefetch = 0 : i64, scratch_operands = 0 : i64, tpu.core_type = #tpu.core_type<tc>, window_params = [{transform_indices = @transform_0, window_bounds = array<i64: 8, 512>}, {pipeline_mode = #tpu.pipeline_mode<synchronous>, transform_indices = @transform_1, window_bounds = array<i64: 512, 512>}, {pipeline_mode = #tpu.pipeline_mode<synchronous>, transform_indices = @transform_2, window_bounds = array<i64: 1, 512>}, {transform_indices = @transform_3, window_bounds = array<i64: 8, 512>}, {transform_indices = @transform_4, window_bounds = array<i64: 8, 512>}]} {
    %c0 = arith.constant 0 : index
    %c0_0 = arith.constant 0 : index
    %0 = vector.load %arg1[%c0, %c0_0] : memref<8x512xbf16, #tpu.memory_space<vmem>>, vector<8x512xbf16>
    %c0_1 = arith.constant 0 : index
    %c0_2 = arith.constant 0 : index
    %1 = vector.load %arg2[%c0_1, %c0_2] : memref<512x512xbf16, #tpu.memory_space<vmem>>, vector<512x512xbf16>
    %cst = arith.constant dense<0.000000e+00> : vector<8x512xf32>
    %2 = tpu.matmul %0, %1, %cst {dimension_numbers = #tpu.dot_dimension_numbers<[1], [0], [0], [1], [0, 0, 1, 1], [], []>} : vector<8x512xbf16>, vector<512x512xbf16>, vector<8x512xf32> -> vector<8x512xf32>
    %c0_3 = arith.constant 0 : index
    %c0_4 = arith.constant 0 : index
    %3 = vector.load %arg3[%c0_3, %c0_4] : memref<1x512xf32, #tpu.memory_space<vmem>>, vector<1x512xf32>
    %4 = vector.broadcast %3 : vector<1x512xf32> to vector<8x512xf32>
    %5 = arith.addf %2, %4 : vector<8x512xf32>
    %c0_5 = arith.constant 0 : index
    %c0_6 = arith.constant 0 : index
    %6 = vector.load %arg4[%c0_5, %c0_6] : memref<8x512xbf16, #tpu.memory_space<vmem>>, vector<8x512xbf16>
    %7 = arith.extf %6 : vector<8x512xbf16> to vector<8x512xf32>
    %8 = arith.addf %5, %7 : vector<8x512xf32>
    %9 = arith.truncf %8 : vector<8x512xf32> to vector<8x512xbf16>
    %c0_7 = arith.constant 0 : index
    %c0_8 = arith.constant 0 : index
    %10 = vector.load %arg5[%c0_7, %c0_8] : memref<8x512xbf16, #tpu.memory_space<vmem>>, vector<8x512xbf16>
    tpu.vector_store %arg5[%c0_7, %c0_8], %9 {strides = array<i32>} : memref<8x512xbf16, #tpu.memory_space<vmem>>, vector<8x512xbf16>,
    return
  }
  func.func @transform_0(%arg0: i32) -> (i32, i32) {
    %c0_i32 = arith.constant 0 : i32
    %c0_i32_0 = arith.constant 0 : i32
    return %arg0, %c0_i32 : i32, i32
  }
  func.func @transform_1(%arg0: i32) -> (i32, i32) {
    %c0_i32 = arith.constant 0 : i32
    %c0_i32_0 = arith.constant 0 : i32
    %c0_i32_1 = arith.constant 0 : i32
    return %c0_i32, %c0_i32_0 : i32, i32
  }
  func.func @transform_2(%arg0: i32) -> (i32, i32) {
    %c0_i32 = arith.constant 0 : i32
    %c0_i32_0 = arith.constant 0 : i32
    %c0_i32_1 = arith.constant 0 : i32
    return %c0_i32, %c0_i32_0 : i32, i32
  }
  func.func @transform_3(%arg0: i32) -> (i32, i32) {
    %c0_i32 = arith.constant 0 : i32
    %c0_i32_0 = arith.constant 0 : i32
    return %arg0, %c0_i32 : i32, i32
  }
  func.func @transform_4(%arg0: i32) -> (i32, i32) {
    %c0_i32 = arith.constant 0 : i32
    %c0_i32_0 = arith.constant 0 : i32
    return %arg0, %c0_i32 : i32, i32
  }
}

module attributes {stable_mosaic.version = 11 : i64} {
  func.func @_mm_kernel(%arg0: i32, %arg1: memref<8x512xbf16, #tpu.memory_space<vmem>>, %arg2: memref<512x256xbf16, #tpu.memory_space<vmem>>, %arg3: memref<1x256xf32, #tpu.memory_space<vmem>>, %arg4: memref<8x256xbf16, #tpu.memory_space<vmem>>) attributes {dimension_semantics = [#tpu.dimension_semantics<parallel>], iteration_bounds = array<i64: 1>, scalar_prefetch = 0 : i64, scratch_operands = 0 : i64, tpu.core_type = #tpu.core_type<tc>, window_params = [{transform_indices = @transform_0, window_bounds = array<i64: 8, 512>}, {pipeline_mode = #tpu.pipeline_mode<synchronous>, transform_indices = @transform_1, window_bounds = array<i64: 512, 256>}, {pipeline_mode = #tpu.pipeline_mode<synchronous>, transform_indices = @transform_2, window_bounds = array<i64: 1, 256>}, {transform_indices = @transform_3, window_bounds = array<i64: 8, 256>}]} {
    %c0 = arith.constant 0 : index
    %c0_0 = arith.constant 0 : index
    %0 = vector.load %arg1[%c0, %c0_0] : memref<8x512xbf16, #tpu.memory_space<vmem>>, vector<8x512xbf16>
    %c0_1 = arith.constant 0 : index
    %c0_2 = arith.constant 0 : index
    %1 = vector.load %arg2[%c0_1, %c0_2] : memref<512x256xbf16, #tpu.memory_space<vmem>>, vector<512x256xbf16>
    %cst = arith.constant dense<0.000000e+00> : vector<8x256xf32>
    %2 = tpu.matmul %0, %1, %cst {dimension_numbers = #tpu.dot_dimension_numbers<[1], [0], [0], [1], [0, 0, 1, 1], [], []>} : vector<8x512xbf16>, vector<512x256xbf16>, vector<8x256xf32> -> vector<8x256xf32>
    %c0_3 = arith.constant 0 : index
    %c0_4 = arith.constant 0 : index
    %3 = vector.load %arg3[%c0_3, %c0_4] : memref<1x256xf32, #tpu.memory_space<vmem>>, vector<1x256xf32>
    %4 = vector.broadcast %3 : vector<1x256xf32> to vector<8x256xf32>
    %5 = arith.addf %2, %4 : vector<8x256xf32>
    %6 = arith.truncf %5 : vector<8x256xf32> to vector<8x256xbf16>
    %c0_5 = arith.constant 0 : index
    %c0_6 = arith.constant 0 : index
    %7 = vector.load %arg4[%c0_5, %c0_6] : memref<8x256xbf16, #tpu.memory_space<vmem>>, vector<8x256xbf16>
    tpu.vector_store %arg4[%c0_5, %c0_6], %6 {strides = array<i32>} : memref<8x256xbf16, #tpu.memory_space<vmem>>, vector<8x256xbf16>,
    return
  }
  func.func @transform_0(%arg0: i32) -> (i32, i32) {
    %c0_i32 = arith.constant 0 : i32
    %c0_i32_0 = arith.constant 0 : i32
    return %arg0, %c0_i32 : i32, i32
  }
  func.func @transform_1(%arg0: i32) -> (i32, i32) {
    %c0_i32 = arith.constant 0 : i32
    %c0_i32_0 = arith.constant 0 : i32
    %c0_i32_1 = arith.constant 0 : i32
    return %c0_i32, %c0_i32_0 : i32, i32
  }
  func.func @transform_2(%arg0: i32) -> (i32, i32) {
    %c0_i32 = arith.constant 0 : i32
    %c0_i32_0 = arith.constant 0 : i32
    %c0_i32_1 = arith.constant 0 : i32
    return %c0_i32, %c0_i32_0 : i32, i32
  }
  func.func @transform_3(%arg0: i32) -> (i32, i32) {
    %c0_i32 = arith.constant 0 : i32
    %c0_i32_0 = arith.constant 0 : i32
    return %arg0, %c0_i32 : i32, i32
  }
}

module attributes {stable_mosaic.version = 11 : i64} {
  func.func @_mm_kernel(%arg0: i32, %arg1: memref<16x256xbf16, #tpu.memory_space<vmem>>, %arg2: memref<256x256xbf16, #tpu.memory_space<vmem>>, %arg3: memref<1x256xf32, #tpu.memory_space<vmem>>, %arg4: memref<16x256xbf16, #tpu.memory_space<vmem>>) attributes {dimension_semantics = [#tpu.dimension_semantics<parallel>], iteration_bounds = array<i64: 1>, scalar_prefetch = 0 : i64, scratch_operands = 0 : i64, tpu.core_type = #tpu.core_type<tc>, window_params = [{transform_indices = @transform_0, window_bounds = array<i64: 16, 256>}, {pipeline_mode = #tpu.pipeline_mode<synchronous>, transform_indices = @transform_1, window_bounds = array<i64: 256, 256>}, {pipeline_mode = #tpu.pipeline_mode<synchronous>, transform_indices = @transform_2, window_bounds = array<i64: 1, 256>}, {transform_indices = @transform_3, window_bounds = array<i64: 16, 256>}]} {
    %c0 = arith.constant 0 : index
    %c0_0 = arith.constant 0 : index
    %0 = vector.load %arg1[%c0, %c0_0] : memref<16x256xbf16, #tpu.memory_space<vmem>>, vector<16x256xbf16>
    %c0_1 = arith.constant 0 : index
    %c0_2 = arith.constant 0 : index
    %1 = vector.load %arg2[%c0_1, %c0_2] : memref<256x256xbf16, #tpu.memory_space<vmem>>, vector<256x256xbf16>
    %cst = arith.constant dense<0.000000e+00> : vector<16x256xf32>
    %2 = tpu.matmul %0, %1, %cst {dimension_numbers = #tpu.dot_dimension_numbers<[1], [0], [0], [1], [0, 0, 1, 1], [], []>} : vector<16x256xbf16>, vector<256x256xbf16>, vector<16x256xf32> -> vector<16x256xf32>
    %c0_3 = arith.constant 0 : index
    %c0_4 = arith.constant 0 : index
    %3 = vector.load %arg3[%c0_3, %c0_4] : memref<1x256xf32, #tpu.memory_space<vmem>>, vector<1x256xf32>
    %4 = vector.broadcast %3 : vector<1x256xf32> to vector<16x256xf32>
    %5 = arith.addf %2, %4 : vector<16x256xf32>
    %6 = arith.truncf %5 : vector<16x256xf32> to vector<16x256xbf16>
    %c0_5 = arith.constant 0 : index
    %c0_6 = arith.constant 0 : index
    %7 = vector.load %arg4[%c0_5, %c0_6] : memref<16x256xbf16, #tpu.memory_space<vmem>>, vector<16x256xbf16>
    tpu.vector_store %arg4[%c0_5, %c0_6], %6 {strides = array<i32>} : memref<16x256xbf16, #tpu.memory_space<vmem>>, vector<16x256xbf16>,
    return
  }
  func.func @transform_0(%arg0: i32) -> (i32, i32) {
    %c0_i32 = arith.constant 0 : i32
    %c0_i32_0 = arith.constant 0 : i32
    return %arg0, %c0_i32 : i32, i32
  }
  func.func @transform_1(%arg0: i32) -> (i32, i32) {
    %c0_i32 = arith.constant 0 : i32
    %c0_i32_0 = arith.constant 0 : i32
    %c0_i32_1 = arith.constant 0 : i32
    return %c0_i32, %c0_i32_0 : i32, i32
  }
  func.func @transform_2(%arg0: i32) -> (i32, i32) {
    %c0_i32 = arith.constant 0 : i32
    %c0_i32_0 = arith.constant 0 : i32
    %c0_i32_1 = arith.constant 0 : i32
    return %c0_i32, %c0_i32_0 : i32, i32
  }
  func.func @transform_3(%arg0: i32) -> (i32, i32) {
    %c0_i32 = arith.constant 0 : i32
    %c0_i32_0 = arith.constant 0 : i32
    return %arg0, %c0_i32 : i32, i32
  }
}

module attributes {stable_mosaic.version = 11 : i64} {
  func.func @_gn_stats_kernel(%arg0: i32, %arg1: i32, %arg2: memref<1x24x64xf32, #tpu.memory_space<vmem>>, %arg3: memref<1x16x64xf32, #tpu.memory_space<vmem>>) attributes {dimension_semantics = [#tpu.dimension_semantics<parallel>, #tpu.dimension_semantics<parallel>], iteration_bounds = array<i64: 2, 1>, scalar_prefetch = 0 : i64, scratch_operands = 0 : i64, tpu.core_type = #tpu.core_type<tc>, window_params = [{transform_indices = @transform_0, window_bounds = array<i64: 1, 24, 64>}, {transform_indices = @transform_1, window_bounds = array<i64: 1, 16, 64>}]} {
    %c0 = arith.constant 0 : index
    %c0_0 = arith.constant 0 : index
    %c0_1 = arith.constant 0 : index
    %0 = vector.load %arg2[%c0, %c0_0, %c0_1] : memref<1x24x64xf32, #tpu.memory_space<vmem>>, vector<1x24x64xf32>
    %1 = vector.shape_cast %0 : vector<1x24x64xf32> to vector<24x64xf32>
    %2 = vector.shape_cast %1 : vector<24x64xf32> to vector<3x8x64xf32>
    %cst = arith.constant dense<0.000000e+00> : vector<8x64xf32>
    %3 = vector.multi_reduction <add>, %2, %cst [0] : vector<3x8x64xf32> to vector<8x64xf32>
    %4 = arith.mulf %2, %2 : vector<3x8x64xf32>
    %cst_2 = arith.constant dense<0.000000e+00> : vector<8x64xf32>
    %5 = vector.multi_reduction <add>, %4, %cst_2 [0] : vector<3x8x64xf32> to vector<8x64xf32>
    %6 = tpu.concatenate %3, %5 in 0 : vector<8x64xf32>, vector<8x64xf32> -> vector<16x64xf32>
    %c0_3 = arith.constant 0 : index
    %c0_4 = arith.constant 0 : index
    %c0_5 = arith.constant 0 : index
    %7 = vector.load %arg3[%c0_3, %c0_4, %c0_5] : memref<1x16x64xf32, #tpu.memory_space<vmem>>, vector<1x16x64xf32>
    %8 = vector.shape_cast %7 : vector<1x16x64xf32> to vector<16x64xf32>
    %9 = vector.shape_cast %6 : vector<16x64xf32> to vector<1x16x64xf32>
    tpu.vector_store %arg3[%c0_3, %c0_4, %c0_5], %9 {strides = array<i32>} : memref<1x16x64xf32, #tpu.memory_space<vmem>>, vector<1x16x64xf32>,
    return
  }
  func.func @transform_0(%arg0: i32, %arg1: i32) -> (i32, i32, i32) {
    %c0_i32 = arith.constant 0 : i32
    %c0_i32_0 = arith.constant 0 : i32
    return %arg0, %arg1, %c0_i32 : i32, i32, i32
  }
  func.func @transform_1(%arg0: i32, %arg1: i32) -> (i32, i32, i32) {
    %c0_i32 = arith.constant 0 : i32
    %c0_i32_0 = arith.constant 0 : i32
    return %arg0, %arg1, %c0_i32 : i32, i32, i32
  }
}

module attributes {stable_mosaic.version = 11 : i64} {
  func.func @_gn_apply_kernel(%arg0: i32, %arg1: i32, %arg2: memref<1x24x64xf32, #tpu.memory_space<vmem>>, %arg3: memref<1x1x64xf32, #tpu.memory_space<vmem>>, %arg4: memref<1x1x64xf32, #tpu.memory_space<vmem>>, %arg5: memref<1x24x64xbf16, #tpu.memory_space<vmem>>) attributes {dimension_semantics = [#tpu.dimension_semantics<parallel>, #tpu.dimension_semantics<parallel>], iteration_bounds = array<i64: 2, 1>, scalar_prefetch = 0 : i64, scratch_operands = 0 : i64, tpu.core_type = #tpu.core_type<tc>, window_params = [{transform_indices = @transform_0, window_bounds = array<i64: 1, 24, 64>}, {transform_indices = @transform_1, window_bounds = array<i64: 1, 1, 64>}, {transform_indices = @transform_2, window_bounds = array<i64: 1, 1, 64>}, {transform_indices = @transform_3, window_bounds = array<i64: 1, 24, 64>}]} {
    %c0 = arith.constant 0 : index
    %c0_0 = arith.constant 0 : index
    %c0_1 = arith.constant 0 : index
    %0 = vector.load %arg2[%c0, %c0_0, %c0_1] : memref<1x24x64xf32, #tpu.memory_space<vmem>>, vector<1x24x64xf32>
    %1 = vector.shape_cast %0 : vector<1x24x64xf32> to vector<24x64xf32>
    %c0_2 = arith.constant 0 : index
    %c0_3 = arith.constant 0 : index
    %c0_4 = arith.constant 0 : index
    %2 = vector.load %arg3[%c0_2, %c0_3, %c0_4] : memref<1x1x64xf32, #tpu.memory_space<vmem>>, vector<1x1x64xf32>
    %3 = vector.shape_cast %2 : vector<1x1x64xf32> to vector<1x64xf32>
    %4 = vector.broadcast %3 : vector<1x64xf32> to vector<24x64xf32>
    %5 = arith.mulf %1, %4 : vector<24x64xf32>
    %c0_5 = arith.constant 0 : index
    %c0_6 = arith.constant 0 : index
    %c0_7 = arith.constant 0 : index
    %6 = vector.load %arg4[%c0_5, %c0_6, %c0_7] : memref<1x1x64xf32, #tpu.memory_space<vmem>>, vector<1x1x64xf32>
    %7 = vector.shape_cast %6 : vector<1x1x64xf32> to vector<1x64xf32>
    %8 = vector.broadcast %7 : vector<1x64xf32> to vector<24x64xf32>
    %9 = arith.addf %5, %8 : vector<24x64xf32>
    %10 = arith.truncf %9 : vector<24x64xf32> to vector<24x64xbf16>
    %c0_8 = arith.constant 0 : index
    %c0_9 = arith.constant 0 : index
    %c0_10 = arith.constant 0 : index
    %11 = vector.load %arg5[%c0_8, %c0_9, %c0_10] : memref<1x24x64xbf16, #tpu.memory_space<vmem>>, vector<1x24x64xbf16>
    %12 = vector.shape_cast %11 : vector<1x24x64xbf16> to vector<24x64xbf16>
    %13 = vector.shape_cast %10 : vector<24x64xbf16> to vector<1x24x64xbf16>
    tpu.vector_store %arg5[%c0_8, %c0_9, %c0_10], %13 {strides = array<i32>} : memref<1x24x64xbf16, #tpu.memory_space<vmem>>, vector<1x24x64xbf16>,
    return
  }
  func.func @transform_0(%arg0: i32, %arg1: i32) -> (i32, i32, i32) {
    %c0_i32 = arith.constant 0 : i32
    %c0_i32_0 = arith.constant 0 : i32
    return %arg0, %arg1, %c0_i32 : i32, i32, i32
  }
  func.func @transform_1(%arg0: i32, %arg1: i32) -> (i32, i32, i32) {
    %c0_i32 = arith.constant 0 : i32
    %c0_i32_0 = arith.constant 0 : i32
    %c0_i32_1 = arith.constant 0 : i32
    return %arg0, %c0_i32, %c0_i32_0 : i32, i32, i32
  }
  func.func @transform_2(%arg0: i32, %arg1: i32) -> (i32, i32, i32) {
    %c0_i32 = arith.constant 0 : i32
    %c0_i32_0 = arith.constant 0 : i32
    %c0_i32_1 = arith.constant 0 : i32
    return %arg0, %c0_i32, %c0_i32_0 : i32, i32, i32
  }
  func.func @transform_3(%arg0: i32, %arg1: i32) -> (i32, i32, i32) {
    %c0_i32 = arith.constant 0 : i32
    %c0_i32_0 = arith.constant 0 : i32
    return %arg0, %arg1, %c0_i32 : i32, i32, i32
  }
}

module attributes {stable_mosaic.version = 11 : i64} {
  func.func @_mm_kernel(%arg0: i32, %arg1: memref<40x64xbf16, #tpu.memory_space<vmem>>, %arg2: memref<64x256xbf16, #tpu.memory_space<vmem>>, %arg3: memref<1x256xf32, #tpu.memory_space<vmem>>, %arg4: memref<40x256xbf16, #tpu.memory_space<vmem>>) attributes {dimension_semantics = [#tpu.dimension_semantics<parallel>], iteration_bounds = array<i64: 1>, scalar_prefetch = 0 : i64, scratch_operands = 0 : i64, tpu.core_type = #tpu.core_type<tc>, window_params = [{transform_indices = @transform_0, window_bounds = array<i64: 40, 64>}, {pipeline_mode = #tpu.pipeline_mode<synchronous>, transform_indices = @transform_1, window_bounds = array<i64: 64, 256>}, {pipeline_mode = #tpu.pipeline_mode<synchronous>, transform_indices = @transform_2, window_bounds = array<i64: 1, 256>}, {transform_indices = @transform_3, window_bounds = array<i64: 40, 256>}]} {
    %c0 = arith.constant 0 : index
    %c0_0 = arith.constant 0 : index
    %0 = vector.load %arg1[%c0, %c0_0] : memref<40x64xbf16, #tpu.memory_space<vmem>>, vector<40x64xbf16>
    %c0_1 = arith.constant 0 : index
    %c0_2 = arith.constant 0 : index
    %1 = vector.load %arg2[%c0_1, %c0_2] : memref<64x256xbf16, #tpu.memory_space<vmem>>, vector<64x256xbf16>
    %cst = arith.constant dense<0.000000e+00> : vector<40x256xf32>
    %2 = tpu.matmul %0, %1, %cst {dimension_numbers = #tpu.dot_dimension_numbers<[1], [0], [0], [1], [0, 0, 1, 1], [], []>} : vector<40x64xbf16>, vector<64x256xbf16>, vector<40x256xf32> -> vector<40x256xf32>
    %c0_3 = arith.constant 0 : index
    %c0_4 = arith.constant 0 : index
    %3 = vector.load %arg3[%c0_3, %c0_4] : memref<1x256xf32, #tpu.memory_space<vmem>>, vector<1x256xf32>
    %4 = vector.broadcast %3 : vector<1x256xf32> to vector<40x256xf32>
    %5 = arith.addf %2, %4 : vector<40x256xf32>
    %6 = arith.truncf %5 : vector<40x256xf32> to vector<40x256xbf16>
    %c0_5 = arith.constant 0 : index
    %c0_6 = arith.constant 0 : index
    %7 = vector.load %arg4[%c0_5, %c0_6] : memref<40x256xbf16, #tpu.memory_space<vmem>>, vector<40x256xbf16>
    tpu.vector_store %arg4[%c0_5, %c0_6], %6 {strides = array<i32>} : memref<40x256xbf16, #tpu.memory_space<vmem>>, vector<40x256xbf16>,
    return
  }
  func.func @transform_0(%arg0: i32) -> (i32, i32) {
    %c0_i32 = arith.constant 0 : i32
    %c0_i32_0 = arith.constant 0 : i32
    return %arg0, %c0_i32 : i32, i32
  }
  func.func @transform_1(%arg0: i32) -> (i32, i32) {
    %c0_i32 = arith.constant 0 : i32
    %c0_i32_0 = arith.constant 0 : i32
    %c0_i32_1 = arith.constant 0 : i32
    return %c0_i32, %c0_i32_0 : i32, i32
  }
  func.func @transform_2(%arg0: i32) -> (i32, i32) {
    %c0_i32 = arith.constant 0 : i32
    %c0_i32_0 = arith.constant 0 : i32
    %c0_i32_1 = arith.constant 0 : i32
    return %c0_i32, %c0_i32_0 : i32, i32
  }
  func.func @transform_3(%arg0: i32) -> (i32, i32) {
    %c0_i32 = arith.constant 0 : i32
    %c0_i32_0 = arith.constant 0 : i32
    return %arg0, %c0_i32 : i32, i32
  }
}

module attributes {stable_mosaic.version = 11 : i64} {
  func.func @_ffn_gn_kernel(%arg0: i32, %arg1: i32, %arg2: memref<1x64x256xbf16, #tpu.memory_space<vmem>>, %arg3: memref<64x256xbf16, #tpu.memory_space<vmem>>, %arg4: memref<256x256xbf16, #tpu.memory_space<vmem>>, %arg5: memref<1x256xf32, #tpu.memory_space<vmem>>, %arg6: memref<256x256xbf16, #tpu.memory_space<vmem>>, %arg7: memref<1x256xf32, #tpu.memory_space<vmem>>, %arg8: memref<1x64x256xbf16, #tpu.memory_space<vmem>>, %arg9: memref<1x16x256xf32, #tpu.memory_space<vmem>>) attributes {dimension_semantics = [#tpu.dimension_semantics<parallel>, #tpu.dimension_semantics<parallel>], iteration_bounds = array<i64: 2, 1>, scalar_prefetch = 0 : i64, scratch_operands = 0 : i64, tpu.core_type = #tpu.core_type<tc>, window_params = [{transform_indices = @transform_0, window_bounds = array<i64: 1, 64, 256>}, {transform_indices = @transform_1, window_bounds = array<i64: 64, 256>}, {pipeline_mode = #tpu.pipeline_mode<synchronous>, transform_indices = @transform_2, window_bounds = array<i64: 256, 256>}, {pipeline_mode = #tpu.pipeline_mode<synchronous>, transform_indices = @transform_3, window_bounds = array<i64: 1, 256>}, {pipeline_mode = #tpu.pipeline_mode<synchronous>, transform_indices = @transform_4, window_bounds = array<i64: 256, 256>}, {pipeline_mode = #tpu.pipeline_mode<synchronous>, transform_indices = @transform_5, window_bounds = array<i64: 1, 256>}, {transform_indices = @transform_6, window_bounds = array<i64: 1, 64, 256>}, {transform_indices = @transform_7, window_bounds = array<i64: 1, 16, 256>}]} {
    %c0 = arith.constant 0 : index
    %c0_0 = arith.constant 0 : index
    %c0_1 = arith.constant 0 : index
    %0 = vector.load %arg2[%c0, %c0_0, %c0_1] : memref<1x64x256xbf16, #tpu.memory_space<vmem>>, vector<1x64x256xbf16>
    %1 = vector.shape_cast %0 : vector<1x64x256xbf16> to vector<64x256xbf16>
    %c0_2 = arith.constant 0 : index
    %c0_3 = arith.constant 0 : index
    %2 = vector.load %arg3[%c0_2, %c0_3] : memref<64x256xbf16, #tpu.memory_space<vmem>>, vector<64x256xbf16>
    %3 = arith.addf %1, %2 : vector<64x256xbf16>
    %c0_4 = arith.constant 0 : index
    %c0_5 = arith.constant 0 : index
    %4 = vector.load %arg4[%c0_4, %c0_5] : memref<256x256xbf16, #tpu.memory_space<vmem>>, vector<256x256xbf16>
    %cst = arith.constant dense<0.000000e+00> : vector<64x256xf32>
    %5 = tpu.matmul %3, %4, %cst {dimension_numbers = #tpu.dot_dimension_numbers<[1], [0], [0], [1], [0, 0, 1, 1], [], []>} : vector<64x256xbf16>, vector<256x256xbf16>, vector<64x256xf32> -> vector<64x256xf32>
    %c0_6 = arith.constant 0 : index
    %c0_7 = arith.constant 0 : index
    %6 = vector.load %arg5[%c0_6, %c0_7] : memref<1x256xf32, #tpu.memory_space<vmem>>, vector<1x256xf32>
    %7 = vector.broadcast %6 : vector<1x256xf32> to vector<64x256xf32>
    %8 = arith.addf %5, %7 : vector<64x256xf32>
    %cst_8 = arith.constant 0.000000e+00 : f32
    %9 = vector.broadcast %cst_8 : f32 to vector<64x256xf32>
    %10 = arith.maximumf %8, %9 : vector<64x256xf32>
    %11 = arith.truncf %10 : vector<64x256xf32> to vector<64x256xbf16>
    %c0_9 = arith.constant 0 : index
    %c0_10 = arith.constant 0 : index
    %12 = vector.load %arg6[%c0_9, %c0_10] : memref<256x256xbf16, #tpu.memory_space<vmem>>, vector<256x256xbf16>
    %cst_11 = arith.constant dense<0.000000e+00> : vector<64x256xf32>
    %13 = tpu.matmul %11, %12, %cst_11 {dimension_numbers = #tpu.dot_dimension_numbers<[1], [0], [0], [1], [0, 0, 1, 1], [], []>} : vector<64x256xbf16>, vector<256x256xbf16>, vector<64x256xf32> -> vector<64x256xf32>
    %c0_12 = arith.constant 0 : index
    %c0_13 = arith.constant 0 : index
    %14 = vector.load %arg7[%c0_12, %c0_13] : memref<1x256xf32, #tpu.memory_space<vmem>>, vector<1x256xf32>
    %15 = vector.broadcast %14 : vector<1x256xf32> to vector<64x256xf32>
    %16 = arith.addf %13, %15 : vector<64x256xf32>
    %17 = arith.extf %3 : vector<64x256xbf16> to vector<64x256xf32>
    %18 = arith.addf %16, %17 : vector<64x256xf32>
    %19 = arith.truncf %18 : vector<64x256xf32> to vector<64x256xbf16>
    %c0_14 = arith.constant 0 : index
    %c0_15 = arith.constant 0 : index
    %c0_16 = arith.constant 0 : index
    %20 = vector.load %arg8[%c0_14, %c0_15, %c0_16] : memref<1x64x256xbf16, #tpu.memory_space<vmem>>, vector<1x64x256xbf16>
    %21 = vector.shape_cast %20 : vector<1x64x256xbf16> to vector<64x256xbf16>
    %22 = vector.shape_cast %19 : vector<64x256xbf16> to vector<1x64x256xbf16>
    tpu.vector_store %arg8[%c0_14, %c0_15, %c0_16], %22 {strides = array<i32>} : memref<1x64x256xbf16, #tpu.memory_space<vmem>>, vector<1x64x256xbf16>,
    %23 = vector.shape_cast %18 : vector<64x256xf32> to vector<8x8x256xf32>
    %cst_17 = arith.constant dense<0.000000e+00> : vector<8x256xf32>
    %24 = vector.multi_reduction <add>, %23, %cst_17 [0] : vector<8x8x256xf32> to vector<8x256xf32>
    %25 = arith.mulf %23, %23 : vector<8x8x256xf32>
    %cst_18 = arith.constant dense<0.000000e+00> : vector<8x256xf32>
    %26 = vector.multi_reduction <add>, %25, %cst_18 [0] : vector<8x8x256xf32> to vector<8x256xf32>
    %27 = tpu.concatenate %24, %26 in 0 : vector<8x256xf32>, vector<8x256xf32> -> vector<16x256xf32>
    %c0_19 = arith.constant 0 : index
    %c0_20 = arith.constant 0 : index
    %c0_21 = arith.constant 0 : index
    %28 = vector.load %arg9[%c0_19, %c0_20, %c0_21] : memref<1x16x256xf32, #tpu.memory_space<vmem>>, vector<1x16x256xf32>
    %29 = vector.shape_cast %28 : vector<1x16x256xf32> to vector<16x256xf32>
    %30 = vector.shape_cast %27 : vector<16x256xf32> to vector<1x16x256xf32>
    tpu.vector_store %arg9[%c0_19, %c0_20, %c0_21], %30 {strides = array<i32>} : memref<1x16x256xf32, #tpu.memory_space<vmem>>, vector<1x16x256xf32>,
    return
  }
  func.func @transform_0(%arg0: i32, %arg1: i32) -> (i32, i32, i32) {
    %c0_i32 = arith.constant 0 : i32
    %c0_i32_0 = arith.constant 0 : i32
    return %arg0, %arg1, %c0_i32 : i32, i32, i32
  }
  func.func @transform_1(%arg0: i32, %arg1: i32) -> (i32, i32) {
    %c0_i32 = arith.constant 0 : i32
    %c0_i32_0 = arith.constant 0 : i32
    return %arg1, %c0_i32 : i32, i32
  }
  func.func @transform_2(%arg0: i32, %arg1: i32) -> (i32, i32) {
    %c0_i32 = arith.constant 0 : i32
    %c0_i32_0 = arith.constant 0 : i32
    %c0_i32_1 = arith.constant 0 : i32
    return %c0_i32, %c0_i32_0 : i32, i32
  }
  func.func @transform_3(%arg0: i32, %arg1: i32) -> (i32, i32) {
    %c0_i32 = arith.constant 0 : i32
    %c0_i32_0 = arith.constant 0 : i32
    %c0_i32_1 = arith.constant 0 : i32
    return %c0_i32, %c0_i32_0 : i32, i32
  }
  func.func @transform_4(%arg0: i32, %arg1: i32) -> (i32, i32) {
    %c0_i32 = arith.constant 0 : i32
    %c0_i32_0 = arith.constant 0 : i32
    %c0_i32_1 = arith.constant 0 : i32
    return %c0_i32, %c0_i32_0 : i32, i32
  }
  func.func @transform_5(%arg0: i32, %arg1: i32) -> (i32, i32) {
    %c0_i32 = arith.constant 0 : i32
    %c0_i32_0 = arith.constant 0 : i32
    %c0_i32_1 = arith.constant 0 : i32
    return %c0_i32, %c0_i32_0 : i32, i32
  }
  func.func @transform_6(%arg0: i32, %arg1: i32) -> (i32, i32, i32) {
    %c0_i32 = arith.constant 0 : i32
    %c0_i32_0 = arith.constant 0 : i32
    return %arg0, %arg1, %c0_i32 : i32, i32, i32
  }
  func.func @transform_7(%arg0: i32, %arg1: i32) -> (i32, i32, i32) {
    %c0_i32 = arith.constant 0 : i32
    %c0_i32_0 = arith.constant 0 : i32
    return %arg0, %arg1, %c0_i32 : i32, i32, i32
  }
}

module attributes {stable_mosaic.version = 11 : i64} {
  func.func @_gn_apply_kernel(%arg0: i32, %arg1: i32, %arg2: memref<1x64x256xbf16, #tpu.memory_space<vmem>>, %arg3: memref<1x1x256xf32, #tpu.memory_space<vmem>>, %arg4: memref<1x1x256xf32, #tpu.memory_space<vmem>>, %arg5: memref<1x64x256xbf16, #tpu.memory_space<vmem>>, %arg6: memref<64x256xbf16, #tpu.memory_space<vmem>>, %arg7: memref<1x64x256xbf16, #tpu.memory_space<vmem>>) attributes {dimension_semantics = [#tpu.dimension_semantics<parallel>, #tpu.dimension_semantics<parallel>], iteration_bounds = array<i64: 2, 1>, scalar_prefetch = 0 : i64, scratch_operands = 0 : i64, tpu.core_type = #tpu.core_type<tc>, window_params = [{transform_indices = @transform_0, window_bounds = array<i64: 1, 64, 256>}, {transform_indices = @transform_1, window_bounds = array<i64: 1, 1, 256>}, {transform_indices = @transform_2, window_bounds = array<i64: 1, 1, 256>}, {transform_indices = @transform_3, window_bounds = array<i64: 1, 64, 256>}, {transform_indices = @transform_4, window_bounds = array<i64: 64, 256>}, {transform_indices = @transform_5, window_bounds = array<i64: 1, 64, 256>}]} {
    %c0 = arith.constant 0 : index
    %c0_0 = arith.constant 0 : index
    %c0_1 = arith.constant 0 : index
    %0 = vector.load %arg2[%c0, %c0_0, %c0_1] : memref<1x64x256xbf16, #tpu.memory_space<vmem>>, vector<1x64x256xbf16>
    %1 = vector.shape_cast %0 : vector<1x64x256xbf16> to vector<64x256xbf16>
    %2 = arith.extf %1 : vector<64x256xbf16> to vector<64x256xf32>
    %c0_2 = arith.constant 0 : index
    %c0_3 = arith.constant 0 : index
    %c0_4 = arith.constant 0 : index
    %3 = vector.load %arg3[%c0_2, %c0_3, %c0_4] : memref<1x1x256xf32, #tpu.memory_space<vmem>>, vector<1x1x256xf32>
    %4 = vector.shape_cast %3 : vector<1x1x256xf32> to vector<1x256xf32>
    %5 = vector.broadcast %4 : vector<1x256xf32> to vector<64x256xf32>
    %6 = arith.mulf %2, %5 : vector<64x256xf32>
    %c0_5 = arith.constant 0 : index
    %c0_6 = arith.constant 0 : index
    %c0_7 = arith.constant 0 : index
    %7 = vector.load %arg4[%c0_5, %c0_6, %c0_7] : memref<1x1x256xf32, #tpu.memory_space<vmem>>, vector<1x1x256xf32>
    %8 = vector.shape_cast %7 : vector<1x1x256xf32> to vector<1x256xf32>
    %9 = vector.broadcast %8 : vector<1x256xf32> to vector<64x256xf32>
    %10 = arith.addf %6, %9 : vector<64x256xf32>
    %c0_8 = arith.constant 0 : index
    %c0_9 = arith.constant 0 : index
    %c0_10 = arith.constant 0 : index
    %11 = vector.load %arg5[%c0_8, %c0_9, %c0_10] : memref<1x64x256xbf16, #tpu.memory_space<vmem>>, vector<1x64x256xbf16>
    %12 = vector.shape_cast %11 : vector<1x64x256xbf16> to vector<64x256xbf16>
    %13 = arith.extf %12 : vector<64x256xbf16> to vector<64x256xf32>
    %14 = arith.addf %10, %13 : vector<64x256xf32>
    %c0_11 = arith.constant 0 : index
    %c0_12 = arith.constant 0 : index
    %15 = vector.load %arg6[%c0_11, %c0_12] : memref<64x256xbf16, #tpu.memory_space<vmem>>, vector<64x256xbf16>
    %16 = arith.extf %15 : vector<64x256xbf16> to vector<64x256xf32>
    %17 = arith.addf %14, %16 : vector<64x256xf32>
    %18 = arith.truncf %17 : vector<64x256xf32> to vector<64x256xbf16>
    %c0_13 = arith.constant 0 : index
    %c0_14 = arith.constant 0 : index
    %c0_15 = arith.constant 0 : index
    %19 = vector.load %arg7[%c0_13, %c0_14, %c0_15] : memref<1x64x256xbf16, #tpu.memory_space<vmem>>, vector<1x64x256xbf16>
    %20 = vector.shape_cast %19 : vector<1x64x256xbf16> to vector<64x256xbf16>
    %21 = vector.shape_cast %18 : vector<64x256xbf16> to vector<1x64x256xbf16>
    tpu.vector_store %arg7[%c0_13, %c0_14, %c0_15], %21 {strides = array<i32>} : memref<1x64x256xbf16, #tpu.memory_space<vmem>>, vector<1x64x256xbf16>,
    return
  }
  func.func @transform_0(%arg0: i32, %arg1: i32) -> (i32, i32, i32) {
    %c0_i32 = arith.constant 0 : i32
    %c0_i32_0 = arith.constant 0 : i32
    return %arg0, %arg1, %c0_i32 : i32, i32, i32
  }
  func.func @transform_1(%arg0: i32, %arg1: i32) -> (i32, i32, i32) {
    %c0_i32 = arith.constant 0 : i32
    %c0_i32_0 = arith.constant 0 : i32
    %c0_i32_1 = arith.constant 0 : i32
    return %arg0, %c0_i32, %c0_i32_0 : i32, i32, i32
  }
  func.func @transform_2(%arg0: i32, %arg1: i32) -> (i32, i32, i32) {
    %c0_i32 = arith.constant 0 : i32
    %c0_i32_0 = arith.constant 0 : i32
    %c0_i32_1 = arith.constant 0 : i32
    return %arg0, %c0_i32, %c0_i32_0 : i32, i32, i32
  }
  func.func @transform_3(%arg0: i32, %arg1: i32) -> (i32, i32, i32) {
    %c0_i32 = arith.constant 0 : i32
    %c0_i32_0 = arith.constant 0 : i32
    return %arg0, %arg1, %c0_i32 : i32, i32, i32
  }
  func.func @transform_4(%arg0: i32, %arg1: i32) -> (i32, i32) {
    %c0_i32 = arith.constant 0 : i32
    %c0_i32_0 = arith.constant 0 : i32
    return %arg1, %c0_i32 : i32, i32
  }
  func.func @transform_5(%arg0: i32, %arg1: i32) -> (i32, i32, i32) {
    %c0_i32 = arith.constant 0 : i32
    %c0_i32_0 = arith.constant 0 : i32
    return %arg0, %arg1, %c0_i32 : i32, i32, i32
  }
}

module attributes {stable_mosaic.version = 11 : i64} {
  func.func @_cross_ffn_gn_kernel(%arg0: i32, %arg1: i32, %arg2: memref<1x8x8x256xbf16, #tpu.memory_space<vmem>>, %arg3: memref<1x8x1x256xbf16, #tpu.memory_space<vmem>>, %arg4: memref<256x256xbf16, #tpu.memory_space<vmem>>, %arg5: memref<1x256xf32, #tpu.memory_space<vmem>>, %arg6: memref<256x256xbf16, #tpu.memory_space<vmem>>, %arg7: memref<1x256xf32, #tpu.memory_space<vmem>>, %arg8: memref<1x8x8x256xbf16, #tpu.memory_space<vmem>>, %arg9: memref<1x16x256xf32, #tpu.memory_space<vmem>>) attributes {dimension_semantics = [#tpu.dimension_semantics<parallel>, #tpu.dimension_semantics<parallel>], iteration_bounds = array<i64: 2, 1>, scalar_prefetch = 0 : i64, scratch_operands = 0 : i64, tpu.core_type = #tpu.core_type<tc>, window_params = [{transform_indices = @transform_0, window_bounds = array<i64: 1, 8, 8, 256>}, {transform_indices = @transform_1, window_bounds = array<i64: 1, 8, 1, 256>}, {pipeline_mode = #tpu.pipeline_mode<synchronous>, transform_indices = @transform_2, window_bounds = array<i64: 256, 256>}, {pipeline_mode = #tpu.pipeline_mode<synchronous>, transform_indices = @transform_3, window_bounds = array<i64: 1, 256>}, {pipeline_mode = #tpu.pipeline_mode<synchronous>, transform_indices = @transform_4, window_bounds = array<i64: 256, 256>}, {pipeline_mode = #tpu.pipeline_mode<synchronous>, transform_indices = @transform_5, window_bounds = array<i64: 1, 256>}, {transform_indices = @transform_6, window_bounds = array<i64: 1, 8, 8, 256>}, {transform_indices = @transform_7, window_bounds = array<i64: 1, 16, 256>}]} {
    %c0 = arith.constant 0 : index
    %c0_0 = arith.constant 0 : index
    %c0_1 = arith.constant 0 : index
    %c0_2 = arith.constant 0 : index
    %0 = vector.load %arg2[%c0, %c0_0, %c0_1, %c0_2] : memref<1x8x8x256xbf16, #tpu.memory_space<vmem>>, vector<1x8x8x256xbf16>
    %1 = vector.shape_cast %0 : vector<1x8x8x256xbf16> to vector<8x8x256xbf16>
    %c0_3 = arith.constant 0 : index
    %c0_4 = arith.constant 0 : index
    %c0_5 = arith.constant 0 : index
    %c0_6 = arith.constant 0 : index
    %2 = vector.load %arg3[%c0_3, %c0_4, %c0_5, %c0_6] : memref<1x8x1x256xbf16, #tpu.memory_space<vmem>>, vector<1x8x1x256xbf16>
    %3 = vector.shape_cast %2 : vector<1x8x1x256xbf16> to vector<8x1x256xbf16>
    %4 = vector.broadcast %3 : vector<8x1x256xbf16> to vector<8x8x256xbf16>
    %5 = arith.addf %1, %4 : vector<8x8x256xbf16>
    %6 = vector.shape_cast %5 : vector<8x8x256xbf16> to vector<64x256xbf16>
    %7 = vector.shape_cast %1 : vector<8x8x256xbf16> to vector<64x256xbf16>
    %c0_7 = arith.constant 0 : index
    %c0_8 = arith.constant 0 : index
    %8 = vector.load %arg4[%c0_7, %c0_8] : memref<256x256xbf16, #tpu.memory_space<vmem>>, vector<256x256xbf16>
    %cst = arith.constant dense<0.000000e+00> : vector<64x256xf32>
    %9 = tpu.matmul %6, %8, %cst {dimension_numbers = #tpu.dot_dimension_numbers<[1], [0], [0], [1], [0, 0, 1, 1], [], []>} : vector<64x256xbf16>, vector<256x256xbf16>, vector<64x256xf32> -> vector<64x256xf32>
    %c0_9 = arith.constant 0 : index
    %c0_10 = arith.constant 0 : index
    %10 = vector.load %arg5[%c0_9, %c0_10] : memref<1x256xf32, #tpu.memory_space<vmem>>, vector<1x256xf32>
    %11 = vector.broadcast %10 : vector<1x256xf32> to vector<64x256xf32>
    %12 = arith.addf %9, %11 : vector<64x256xf32>
    %cst_11 = arith.constant 0.000000e+00 : f32
    %13 = vector.broadcast %cst_11 : f32 to vector<64x256xf32>
    %14 = arith.maximumf %12, %13 : vector<64x256xf32>
    %15 = arith.truncf %14 : vector<64x256xf32> to vector<64x256xbf16>
    %c0_12 = arith.constant 0 : index
    %c0_13 = arith.constant 0 : index
    %16 = vector.load %arg6[%c0_12, %c0_13] : memref<256x256xbf16, #tpu.memory_space<vmem>>, vector<256x256xbf16>
    %cst_14 = arith.constant dense<0.000000e+00> : vector<64x256xf32>
    %17 = tpu.matmul %15, %16, %cst_14 {dimension_numbers = #tpu.dot_dimension_numbers<[1], [0], [0], [1], [0, 0, 1, 1], [], []>} : vector<64x256xbf16>, vector<256x256xbf16>, vector<64x256xf32> -> vector<64x256xf32>
    %c0_15 = arith.constant 0 : index
    %c0_16 = arith.constant 0 : index
    %18 = vector.load %arg7[%c0_15, %c0_16] : memref<1x256xf32, #tpu.memory_space<vmem>>, vector<1x256xf32>
    %19 = vector.broadcast %18 : vector<1x256xf32> to vector<64x256xf32>
    %20 = arith.addf %17, %19 : vector<64x256xf32>
    %21 = arith.extf %7 : vector<64x256xbf16> to vector<64x256xf32>
    %22 = arith.addf %20, %21 : vector<64x256xf32>
    %23 = vector.shape_cast %22 : vector<64x256xf32> to vector<8x8x256xf32>
    %24 = arith.truncf %23 : vector<8x8x256xf32> to vector<8x8x256xbf16>
    %c0_17 = arith.constant 0 : index
    %c0_18 = arith.constant 0 : index
    %c0_19 = arith.constant 0 : index
    %c0_20 = arith.constant 0 : index
    %25 = vector.load %arg8[%c0_17, %c0_18, %c0_19, %c0_20] : memref<1x8x8x256xbf16, #tpu.memory_space<vmem>>, vector<1x8x8x256xbf16>
    %26 = vector.shape_cast %25 : vector<1x8x8x256xbf16> to vector<8x8x256xbf16>
    %27 = vector.shape_cast %24 : vector<8x8x256xbf16> to vector<1x8x8x256xbf16>
    tpu.vector_store %arg8[%c0_17, %c0_18, %c0_19, %c0_20], %27 {strides = array<i32>} : memref<1x8x8x256xbf16, #tpu.memory_space<vmem>>, vector<1x8x8x256xbf16>,
    %28 = vector.shape_cast %22 : vector<64x256xf32> to vector<8x8x256xf32>
    %cst_21 = arith.constant dense<0.000000e+00> : vector<8x256xf32>
    %29 = vector.multi_reduction <add>, %28, %cst_21 [0] : vector<8x8x256xf32> to vector<8x256xf32>
    %30 = arith.mulf %28, %28 : vector<8x8x256xf32>
    %cst_22 = arith.constant dense<0.000000e+00> : vector<8x256xf32>
    %31 = vector.multi_reduction <add>, %30, %cst_22 [0] : vector<8x8x256xf32> to vector<8x256xf32>
    %32 = tpu.concatenate %29, %31 in 0 : vector<8x256xf32>, vector<8x256xf32> -> vector<16x256xf32>
    %c0_23 = arith.constant 0 : index
    %c0_24 = arith.constant 0 : index
    %c0_25 = arith.constant 0 : index
    %33 = vector.load %arg9[%c0_23, %c0_24, %c0_25] : memref<1x16x256xf32, #tpu.memory_space<vmem>>, vector<1x16x256xf32>
    %34 = vector.shape_cast %33 : vector<1x16x256xf32> to vector<16x256xf32>
    %35 = vector.shape_cast %32 : vector<16x256xf32> to vector<1x16x256xf32>
    tpu.vector_store %arg9[%c0_23, %c0_24, %c0_25], %35 {strides = array<i32>} : memref<1x16x256xf32, #tpu.memory_space<vmem>>, vector<1x16x256xf32>,
    return
  }
  func.func @transform_0(%arg0: i32, %arg1: i32) -> (i32, i32, i32, i32) {
    %c0_i32 = arith.constant 0 : i32
    %c0_i32_0 = arith.constant 0 : i32
    %c0_i32_1 = arith.constant 0 : i32
    return %arg0, %arg1, %c0_i32, %c0_i32_0 : i32, i32, i32, i32
  }
  func.func @transform_1(%arg0: i32, %arg1: i32) -> (i32, i32, i32, i32) {
    %c0_i32 = arith.constant 0 : i32
    %c0_i32_0 = arith.constant 0 : i32
    %c0_i32_1 = arith.constant 0 : i32
    return %arg0, %arg1, %c0_i32, %c0_i32_0 : i32, i32, i32, i32
  }
  func.func @transform_2(%arg0: i32, %arg1: i32) -> (i32, i32) {
    %c0_i32 = arith.constant 0 : i32
    %c0_i32_0 = arith.constant 0 : i32
    %c0_i32_1 = arith.constant 0 : i32
    return %c0_i32, %c0_i32_0 : i32, i32
  }
  func.func @transform_3(%arg0: i32, %arg1: i32) -> (i32, i32) {
    %c0_i32 = arith.constant 0 : i32
    %c0_i32_0 = arith.constant 0 : i32
    %c0_i32_1 = arith.constant 0 : i32
    return %c0_i32, %c0_i32_0 : i32, i32
  }
  func.func @transform_4(%arg0: i32, %arg1: i32) -> (i32, i32) {
    %c0_i32 = arith.constant 0 : i32
    %c0_i32_0 = arith.constant 0 : i32
    %c0_i32_1 = arith.constant 0 : i32
    return %c0_i32, %c0_i32_0 : i32, i32
  }
  func.func @transform_5(%arg0: i32, %arg1: i32) -> (i32, i32) {
    %c0_i32 = arith.constant 0 : i32
    %c0_i32_0 = arith.constant 0 : i32
    %c0_i32_1 = arith.constant 0 : i32
    return %c0_i32, %c0_i32_0 : i32, i32
  }
  func.func @transform_6(%arg0: i32, %arg1: i32) -> (i32, i32, i32, i32) {
    %c0_i32 = arith.constant 0 : i32
    %c0_i32_0 = arith.constant 0 : i32
    %c0_i32_1 = arith.constant 0 : i32
    return %arg0, %arg1, %c0_i32, %c0_i32_0 : i32, i32, i32, i32
  }
  func.func @transform_7(%arg0: i32, %arg1: i32) -> (i32, i32, i32) {
    %c0_i32 = arith.constant 0 : i32
    %c0_i32_0 = arith.constant 0 : i32
    return %arg0, %arg1, %c0_i32 : i32, i32, i32
  }
}

module attributes {stable_mosaic.version = 11 : i64} {
  func.func @_gn_apply_kernel(%arg0: i32, %arg1: i32, %arg2: memref<1x64x256xbf16, #tpu.memory_space<vmem>>, %arg3: memref<1x1x256xf32, #tpu.memory_space<vmem>>, %arg4: memref<1x1x256xf32, #tpu.memory_space<vmem>>, %arg5: memref<1x64x256xbf16, #tpu.memory_space<vmem>>, %arg6: memref<1x64x256xbf16, #tpu.memory_space<vmem>>) attributes {dimension_semantics = [#tpu.dimension_semantics<parallel>, #tpu.dimension_semantics<parallel>], iteration_bounds = array<i64: 2, 1>, scalar_prefetch = 0 : i64, scratch_operands = 0 : i64, tpu.core_type = #tpu.core_type<tc>, window_params = [{transform_indices = @transform_0, window_bounds = array<i64: 1, 64, 256>}, {transform_indices = @transform_1, window_bounds = array<i64: 1, 1, 256>}, {transform_indices = @transform_2, window_bounds = array<i64: 1, 1, 256>}, {transform_indices = @transform_3, window_bounds = array<i64: 1, 64, 256>}, {transform_indices = @transform_4, window_bounds = array<i64: 1, 64, 256>}]} {
    %c0 = arith.constant 0 : index
    %c0_0 = arith.constant 0 : index
    %c0_1 = arith.constant 0 : index
    %0 = vector.load %arg2[%c0, %c0_0, %c0_1] : memref<1x64x256xbf16, #tpu.memory_space<vmem>>, vector<1x64x256xbf16>
    %1 = vector.shape_cast %0 : vector<1x64x256xbf16> to vector<64x256xbf16>
    %2 = arith.extf %1 : vector<64x256xbf16> to vector<64x256xf32>
    %c0_2 = arith.constant 0 : index
    %c0_3 = arith.constant 0 : index
    %c0_4 = arith.constant 0 : index
    %3 = vector.load %arg3[%c0_2, %c0_3, %c0_4] : memref<1x1x256xf32, #tpu.memory_space<vmem>>, vector<1x1x256xf32>
    %4 = vector.shape_cast %3 : vector<1x1x256xf32> to vector<1x256xf32>
    %5 = vector.broadcast %4 : vector<1x256xf32> to vector<64x256xf32>
    %6 = arith.mulf %2, %5 : vector<64x256xf32>
    %c0_5 = arith.constant 0 : index
    %c0_6 = arith.constant 0 : index
    %c0_7 = arith.constant 0 : index
    %7 = vector.load %arg4[%c0_5, %c0_6, %c0_7] : memref<1x1x256xf32, #tpu.memory_space<vmem>>, vector<1x1x256xf32>
    %8 = vector.shape_cast %7 : vector<1x1x256xf32> to vector<1x256xf32>
    %9 = vector.broadcast %8 : vector<1x256xf32> to vector<64x256xf32>
    %10 = arith.addf %6, %9 : vector<64x256xf32>
    %c0_8 = arith.constant 0 : index
    %c0_9 = arith.constant 0 : index
    %c0_10 = arith.constant 0 : index
    %11 = vector.load %arg5[%c0_8, %c0_9, %c0_10] : memref<1x64x256xbf16, #tpu.memory_space<vmem>>, vector<1x64x256xbf16>
    %12 = vector.shape_cast %11 : vector<1x64x256xbf16> to vector<64x256xbf16>
    %13 = arith.extf %12 : vector<64x256xbf16> to vector<64x256xf32>
    %14 = arith.addf %10, %13 : vector<64x256xf32>
    %15 = arith.truncf %14 : vector<64x256xf32> to vector<64x256xbf16>
    %c0_11 = arith.constant 0 : index
    %c0_12 = arith.constant 0 : index
    %c0_13 = arith.constant 0 : index
    %16 = vector.load %arg6[%c0_11, %c0_12, %c0_13] : memref<1x64x256xbf16, #tpu.memory_space<vmem>>, vector<1x64x256xbf16>
    %17 = vector.shape_cast %16 : vector<1x64x256xbf16> to vector<64x256xbf16>
    %18 = vector.shape_cast %15 : vector<64x256xbf16> to vector<1x64x256xbf16>
    tpu.vector_store %arg6[%c0_11, %c0_12, %c0_13], %18 {strides = array<i32>} : memref<1x64x256xbf16, #tpu.memory_space<vmem>>, vector<1x64x256xbf16>,
    return
  }
  func.func @transform_0(%arg0: i32, %arg1: i32) -> (i32, i32, i32) {
    %c0_i32 = arith.constant 0 : i32
    %c0_i32_0 = arith.constant 0 : i32
    return %arg0, %arg1, %c0_i32 : i32, i32, i32
  }
  func.func @transform_1(%arg0: i32, %arg1: i32) -> (i32, i32, i32) {
    %c0_i32 = arith.constant 0 : i32
    %c0_i32_0 = arith.constant 0 : i32
    %c0_i32_1 = arith.constant 0 : i32
    return %arg0, %c0_i32, %c0_i32_0 : i32, i32, i32
  }
  func.func @transform_2(%arg0: i32, %arg1: i32) -> (i32, i32, i32) {
    %c0_i32 = arith.constant 0 : i32
    %c0_i32_0 = arith.constant 0 : i32
    %c0_i32_1 = arith.constant 0 : i32
    return %arg0, %c0_i32, %c0_i32_0 : i32, i32, i32
  }
  func.func @transform_3(%arg0: i32, %arg1: i32) -> (i32, i32, i32) {
    %c0_i32 = arith.constant 0 : i32
    %c0_i32_0 = arith.constant 0 : i32
    return %arg0, %arg1, %c0_i32 : i32, i32, i32
  }
  func.func @transform_4(%arg0: i32, %arg1: i32) -> (i32, i32, i32) {
    %c0_i32 = arith.constant 0 : i32
    %c0_i32_0 = arith.constant 0 : i32
    return %arg0, %arg1, %c0_i32 : i32, i32, i32
  }
}

module attributes {stable_mosaic.version = 11 : i64} {
  func.func @_mm_kernel(%arg0: i32, %arg1: memref<128x256xbf16, #tpu.memory_space<vmem>>, %arg2: memref<256x512xbf16, #tpu.memory_space<vmem>>, %arg3: memref<1x512xf32, #tpu.memory_space<vmem>>, %arg4: memref<1xf32, #tpu.memory_space<smem>>, %arg5: memref<128x512xbf16, #tpu.memory_space<vmem>>) attributes {dimension_semantics = [#tpu.dimension_semantics<parallel>], iteration_bounds = array<i64: 1>, scalar_prefetch = 0 : i64, scratch_operands = 0 : i64, tpu.core_type = #tpu.core_type<tc>, window_params = [{transform_indices = @transform_0, window_bounds = array<i64: 128, 256>}, {pipeline_mode = #tpu.pipeline_mode<synchronous>, transform_indices = @transform_1, window_bounds = array<i64: 256, 512>}, {pipeline_mode = #tpu.pipeline_mode<synchronous>, transform_indices = @transform_2, window_bounds = array<i64: 1, 512>}, {transform_indices = @transform_3, window_bounds = array<i64: 1>}, {transform_indices = @transform_4, window_bounds = array<i64: 128, 512>}]} {
    %c0 = arith.constant 0 : index
    %c0_0 = arith.constant 0 : index
    %0 = vector.load %arg1[%c0, %c0_0] : memref<128x256xbf16, #tpu.memory_space<vmem>>, vector<128x256xbf16>
    %c0_1 = arith.constant 0 : index
    %1 = memref.load %arg4[%c0_1] : memref<1xf32, #tpu.memory_space<smem>>
    %2 = arith.truncf %1 : f32 to bf16
    %cst = arith.constant 0.000000e+00 : bf16
    %3 = vector.broadcast %cst : bf16 to vector<128x256xbf16>
    %4 = arith.cmpf oge, %0, %3 : vector<128x256xbf16>
    %5 = vector.broadcast %2 : bf16 to vector<128x256xbf16>
    %6 = arith.mulf %5, %0 : vector<128x256xbf16>
    %7 = arith.select %4, %0, %6 : vector<128x256xi1>, vector<128x256xbf16>
    %c0_2 = arith.constant 0 : index
    %c0_3 = arith.constant 0 : index
    %8 = vector.load %arg2[%c0_2, %c0_3] : memref<256x512xbf16, #tpu.memory_space<vmem>>, vector<256x512xbf16>
    %cst_4 = arith.constant dense<0.000000e+00> : vector<128x512xf32>
    %9 = tpu.matmul %7, %8, %cst_4 {dimension_numbers = #tpu.dot_dimension_numbers<[1], [0], [0], [1], [0, 0, 1, 1], [], []>} : vector<128x256xbf16>, vector<256x512xbf16>, vector<128x512xf32> -> vector<128x512xf32>
    %c0_5 = arith.constant 0 : index
    %c0_6 = arith.constant 0 : index
    %10 = vector.load %arg3[%c0_5, %c0_6] : memref<1x512xf32, #tpu.memory_space<vmem>>, vector<1x512xf32>
    %11 = vector.broadcast %10 : vector<1x512xf32> to vector<128x512xf32>
    %12 = arith.addf %9, %11 : vector<128x512xf32>
    %13 = arith.truncf %12 : vector<128x512xf32> to vector<128x512xbf16>
    %c0_7 = arith.constant 0 : index
    %c0_8 = arith.constant 0 : index
    %14 = vector.load %arg5[%c0_7, %c0_8] : memref<128x512xbf16, #tpu.memory_space<vmem>>, vector<128x512xbf16>
    tpu.vector_store %arg5[%c0_7, %c0_8], %13 {strides = array<i32>} : memref<128x512xbf16, #tpu.memory_space<vmem>>, vector<128x512xbf16>,
    return
  }
  func.func @transform_0(%arg0: i32) -> (i32, i32) {
    %c0_i32 = arith.constant 0 : i32
    %c0_i32_0 = arith.constant 0 : i32
    return %arg0, %c0_i32 : i32, i32
  }
  func.func @transform_1(%arg0: i32) -> (i32, i32) {
    %c0_i32 = arith.constant 0 : i32
    %c0_i32_0 = arith.constant 0 : i32
    %c0_i32_1 = arith.constant 0 : i32
    return %c0_i32, %c0_i32_0 : i32, i32
  }
  func.func @transform_2(%arg0: i32) -> (i32, i32) {
    %c0_i32 = arith.constant 0 : i32
    %c0_i32_0 = arith.constant 0 : i32
    %c0_i32_1 = arith.constant 0 : i32
    return %c0_i32, %c0_i32_0 : i32, i32
  }
  func.func @transform_3(%arg0: i32) -> i32 {
    %c0_i32 = arith.constant 0 : i32
    %c0_i32_0 = arith.constant 0 : i32
    return %c0_i32 : i32
  }
  func.func @transform_4(%arg0: i32) -> (i32, i32) {
    %c0_i32 = arith.constant 0 : i32
    %c0_i32_0 = arith.constant 0 : i32
    return %arg0, %c0_i32 : i32, i32
  }
}

module attributes {stable_mosaic.version = 11 : i64} {
  func.func @_gate_end_kernel(%arg0: i32, %arg1: memref<80x256xbf16, #tpu.memory_space<vmem>>, %arg2: memref<256x512xbf16, #tpu.memory_space<vmem>>, %arg3: memref<1x512xf32, #tpu.memory_space<vmem>>, %arg4: memref<256x128xbf16, #tpu.memory_space<vmem>>, %arg5: memref<80x128xf32, #tpu.memory_space<vmem>>) attributes {dimension_semantics = [#tpu.dimension_semantics<parallel>], iteration_bounds = array<i64: 1>, scalar_prefetch = 0 : i64, scratch_operands = 0 : i64, tpu.core_type = #tpu.core_type<tc>, window_params = [{transform_indices = @transform_0, window_bounds = array<i64: 80, 256>}, {pipeline_mode = #tpu.pipeline_mode<synchronous>, transform_indices = @transform_1, window_bounds = array<i64: 256, 512>}, {pipeline_mode = #tpu.pipeline_mode<synchronous>, transform_indices = @transform_2, window_bounds = array<i64: 1, 512>}, {pipeline_mode = #tpu.pipeline_mode<synchronous>, transform_indices = @transform_3, window_bounds = array<i64: 256, 128>}, {transform_indices = @transform_4, window_bounds = array<i64: 80, 128>}]} {
    %c0 = arith.constant 0 : index
    %c0_0 = arith.constant 0 : index
    %0 = vector.load %arg1[%c0, %c0_0] : memref<80x256xbf16, #tpu.memory_space<vmem>>, vector<80x256xbf16>
    %c0_1 = arith.constant 0 : index
    %c0_2 = arith.constant 0 : index
    %1 = vector.load %arg2[%c0_1, %c0_2] : memref<256x512xbf16, #tpu.memory_space<vmem>>, vector<256x512xbf16>
    %cst = arith.constant dense<0.000000e+00> : vector<80x512xf32>
    %2 = tpu.matmul %0, %1, %cst {dimension_numbers = #tpu.dot_dimension_numbers<[1], [0], [0], [1], [0, 0, 1, 1], [], []>} : vector<80x256xbf16>, vector<256x512xbf16>, vector<80x512xf32> -> vector<80x512xf32>
    %c0_3 = arith.constant 0 : index
    %c0_4 = arith.constant 0 : index
    %3 = vector.load %arg3[%c0_3, %c0_4] : memref<1x512xf32, #tpu.memory_space<vmem>>, vector<1x512xf32>
    %4 = vector.broadcast %3 : vector<1x512xf32> to vector<80x512xf32>
    %5 = arith.addf %2, %4 : vector<80x512xf32>
    %6 = vector.extract_strided_slice %5 {offsets = [0, 0], sizes = [80, 256], strides = [1, 1]} : vector<80x512xf32> to vector<80x256xf32>
    %7 = math.tanh %6 : vector<80x256xf32>
    %8 = vector.extract_strided_slice %5 {offsets = [0, 256], sizes = [80, 256], strides = [1, 1]} : vector<80x512xf32> to vector<80x256xf32>
    %9 = arith.negf %8 : vector<80x256xf32>
    %10 = math.exp %9 : vector<80x256xf32>
    %cst_5 = arith.constant 1.000000e+00 : f32
    %11 = vector.broadcast %cst_5 : f32 to vector<80x256xf32>
    %12 = arith.addf %11, %10 : vector<80x256xf32>
    %13 = arith.divf %11, %12 : vector<80x256xf32>
    %14 = arith.mulf %7, %13 : vector<80x256xf32>
    %15 = arith.truncf %14 : vector<80x256xf32> to vector<80x256xbf16>
    %c0_6 = arith.constant 0 : index
    %c0_7 = arith.constant 0 : index
    %16 = vector.load %arg4[%c0_6, %c0_7] : memref<256x128xbf16, #tpu.memory_space<vmem>>, vector<256x128xbf16>
    %cst_8 = arith.constant dense<0.000000e+00> : vector<80x128xf32>
    %17 = tpu.matmul %15, %16, %cst_8 {dimension_numbers = #tpu.dot_dimension_numbers<[1], [0], [0], [1], [0, 0, 1, 1], [], []>} : vector<80x256xbf16>, vector<256x128xbf16>, vector<80x128xf32> -> vector<80x128xf32>
    %cst_9 = arith.constant 0.000000e+00 : f32
    %18 = vector.broadcast %cst_9 : f32 to vector<80x128xf32>
    %19 = arith.maximumf %17, %18 : vector<80x128xf32>
    %c0_10 = arith.constant 0 : index
    %c0_11 = arith.constant 0 : index
    %20 = vector.load %arg5[%c0_10, %c0_11] : memref<80x128xf32, #tpu.memory_space<vmem>>, vector<80x128xf32>
    tpu.vector_store %arg5[%c0_10, %c0_11], %19 {strides = array<i32>} : memref<80x128xf32, #tpu.memory_space<vmem>>, vector<80x128xf32>,
    return
  }
  func.func @transform_0(%arg0: i32) -> (i32, i32) {
    %c0_i32 = arith.constant 0 : i32
    %c0_i32_0 = arith.constant 0 : i32
    return %arg0, %c0_i32 : i32, i32
  }
  func.func @transform_1(%arg0: i32) -> (i32, i32) {
    %c0_i32 = arith.constant 0 : i32
    %c0_i32_0 = arith.constant 0 : i32
    %c0_i32_1 = arith.constant 0 : i32
    return %c0_i32, %c0_i32_0 : i32, i32
  }
  func.func @transform_2(%arg0: i32) -> (i32, i32) {
    %c0_i32 = arith.constant 0 : i32
    %c0_i32_0 = arith.constant 0 : i32
    %c0_i32_1 = arith.constant 0 : i32
    return %c0_i32, %c0_i32_0 : i32, i32
  }
  func.func @transform_3(%arg0: i32) -> (i32, i32) {
    %c0_i32 = arith.constant 0 : i32
    %c0_i32_0 = arith.constant 0 : i32
    %c0_i32_1 = arith.constant 0 : i32
    return %c0_i32, %c0_i32_0 : i32, i32
  }
  func.func @transform_4(%arg0: i32) -> (i32, i32) {
    %c0_i32 = arith.constant 0 : i32
    %c0_i32_0 = arith.constant 0 : i32
    return %arg0, %c0_i32 : i32, i32
  }
}

</mosaic_0001>

<llo_original>
// kernel: cross_dual_path_forward.19
$region0: #{cross_dual_path_forward.19}
  #allocation0 [shape = 'u32[]', space=smem, size = 0x4, offset = 0x4, fixed_abs, tag = 'smem constant byte address 0x4 - core index']
  #allocation1 [shape = 'u32[144,128]{1,0:T(1,128)}', space=vmem, size = 0x12000, scoped, tag = 'internal scratch']
  %s0 = inlined_call_operand.vmem [shape: bf16[8,512], index: 0, kind: input, shape index: {}]
  %s1 = inlined_call_operand.vmem [shape: bf16[512,512], index: 1, kind: input, shape index: {}]
  %s2 = inlined_call_operand.vmem [shape: f32[1,512], index: 2, kind: input, shape index: {}]
  %s3 = inlined_call_operand.vmem [shape: bf16[8,512], index: 3, kind: input, shape index: {}]
  %s4 = inlined_call_operand.vmem [shape: bf16[8,512], index: 4, kind: output, shape index: {}]
  %s5 = sld [smem:[#allocation0]]
  $region26: #{cross_dual_path_forward.19} parent=0
    _
  %s7 = ssub.s32 1, %s5
  %s8 = scalar_select 0, %s7, %s5
  // Predicated region
  $region2: #{cross_dual_path_forward.19} parent=0 // pred_check
    _
  $region3: #{cross_dual_path_forward.19} parent=0 // pred_check_branch
    %10 = sbr.rel (0) target = $region5
  $region4: #{cross_dual_path_forward.19} parent=0 // pred_region
    _
  $region5: #{cross_dual_path_forward.19} parent=0 // pred_fallthru
    _
  // Predicated region
  $region6: #{cross_dual_path_forward.19} parent=0 // pred_check
    _
  $region7: #{cross_dual_path_forward.19} parent=0 // pred_check_branch
    %12 = sbr.rel (0) target = $region9
  $region8: #{cross_dual_path_forward.19} parent=0 // pred_region
    _
  $region9: #{cross_dual_path_forward.19} parent=0 // pred_fallthru
    _
  // Predicated region
  $region10: #{cross_dual_path_forward.19} parent=0 // pred_check
    _
  $region11: #{cross_dual_path_forward.19} parent=0 // pred_check_branch
    %14 = sbr.rel (0) target = $region13
  $region12: #{cross_dual_path_forward.19} parent=0 // pred_region
    _
  $region13: #{cross_dual_path_forward.19} parent=0 // pred_fallthru
    _
  // Predicated region
  $region14: #{cross_dual_path_forward.19} parent=0 // pred_check
    _
  $region15: #{cross_dual_path_forward.19} parent=0 // pred_check_branch
    %16 = sbr.rel (0) target = $region17
  $region16: #{cross_dual_path_forward.19} parent=0 // pred_region
    _
  $region17: #{cross_dual_path_forward.19} parent=0 // pred_fallthru
    _
  %v17 = vld [vmem:[%s0] sm:$0xff]
  %v18 = vld [vmem:[%s0 + $0x8] sm:$0xff]
  %v19 = vld [vmem:[%s1] sm:$0xff]
  %v20 = vld [vmem:[%s1 + $0x8] sm:$0xff]
  %v21 = vld [vmem:[%s1 + $0x10] sm:$0xff]
  %v22 = vld [vmem:[%s1 + $0x18] sm:$0xff]
  %v23 = vld [vmem:[%s1 + $0x20] sm:$0xff]
  %v24 = vld [vmem:[%s1 + $0x28] sm:$0xff]
  %v25 = vld [vmem:[%s1 + $0x30] sm:$0xff]
  %v26 = vld [vmem:[%s1 + $0x38] sm:$0xff]
  %v27 = vld [vmem:[%s1 + $0x40] sm:$0xff]
  %v28 = vld [vmem:[%s1 + $0x48] sm:$0xff]
  %v29 = vld [vmem:[%s1 + $0x50] sm:$0xff]
  %v30 = vld [vmem:[%s1 + $0x58] sm:$0xff]
  %v31 = vld [vmem:[%s1 + $0x60] sm:$0xff]
  %v32 = vld [vmem:[%s1 + $0x68] sm:$0xff]
  %v33 = vld [vmem:[%s1 + $0x70] sm:$0xff]
  %v34 = vld [vmem:[%s1 + $0x78] sm:$0xff]
  %v35 = vld [vmem:[%s1 + $0x80] sm:$0xff]
  %v36 = vld [vmem:[%s1 + $0x88] sm:$0xff]
  %v37 = vld [vmem:[%s1 + $0x90] sm:$0xff]
  %v38 = vld [vmem:[%s1 + $0x98] sm:$0xff]
  %v39 = vld [vmem:[%s1 + $0xa0] sm:$0xff]
  %v40 = vld [vmem:[%s1 + $0xa8] sm:$0xff]
  %v41 = vld [vmem:[%s1 + $0xb0] sm:$0xff]
  %v42 = vld [vmem:[%s1 + $0xb8] sm:$0xff]
  %v43 = vld [vmem:[%s1 + $0xc0] sm:$0xff]
  %v44 = vld [vmem:[%s1 + $0xc8] sm:$0xff]
  %v45 = vld [vmem:[%s1 + $0xd0] sm:$0xff]
  %v46 = vld [vmem:[%s1 + $0xd8] sm:$0xff]
  %v47 = vld [vmem:[%s1 + $0xe0] sm:$0xff]
  %v48 = vld [vmem:[%s1 + $0xe8] sm:$0xff]
  %v49 = vld [vmem:[%s1 + $0xf0] sm:$0xff]
  %v50 = vld [vmem:[%s1 + $0xf8] sm:$0xff]
  %v51 = vld [vmem:[%s1 + $0x100] sm:$0xff]
  %v52 = vld [vmem:[%s1 + $0x108] sm:$0xff]
  %v53 = vld [vmem:[%s1 + $0x110] sm:$0xff]
  %v54 = vld [vmem:[%s1 + $0x118] sm:$0xff]
  %v55 = vld [vmem:[%s1 + $0x120] sm:$0xff]
  %v56 = vld [vmem:[%s1 + $0x128] sm:$0xff]
  %v57 = vld [vmem:[%s1 + $0x130] sm:$0xff]
  %v58 = vld [vmem:[%s1 + $0x138] sm:$0xff]
  %v59 = vld [vmem:[%s1 + $0x140] sm:$0xff]
  %v60 = vld [vmem:[%s1 + $0x148] sm:$0xff]
  %v61 = vld [vmem:[%s1 + $0x150] sm:$0xff]
  %v62 = vld [vmem:[%s1 + $0x158] sm:$0xff]
  %v63 = vld [vmem:[%s1 + $0x160] sm:$0xff]
  %v64 = vld [vmem:[%s1 + $0x168] sm:$0xff]
  %v65 = vld [vmem:[%s1 + $0x170] sm:$0xff]
  %v66 = vld [vmem:[%s1 + $0x178] sm:$0xff]
  %v67 = vld [vmem:[%s1 + $0x180] sm:$0xff]
  %v68 = vld [vmem:[%s1 + $0x188] sm:$0xff]
  %v69 = vld [vmem:[%s1 + $0x190] sm:$0xff]
  %v70 = vld [vmem:[%s1 + $0x198] sm:$0xff]
  %v71 = vld [vmem:[%s1 + $0x1a0] sm:$0xff]
  %v72 = vld [vmem:[%s1 + $0x1a8] sm:$0xff]
  %v73 = vld [vmem:[%s1 + $0x1b0] sm:$0xff]
  %v74 = vld [vmem:[%s1 + $0x1b8] sm:$0xff]
  %v75 = vld [vmem:[%s1 + $0x1c0] sm:$0xff]
  %v76 = vld [vmem:[%s1 + $0x1c8] sm:$0xff]
  %v77 = vld [vmem:[%s1 + $0x1d0] sm:$0xff]
  %v78 = vld [vmem:[%s1 + $0x1d8] sm:$0xff]
  %v79 = vld [vmem:[%s1 + $0x1e0] sm:$0xff]
  %v80 = vld [vmem:[%s1 + $0x1e8] sm:$0xff]
  %v81 = vld [vmem:[%s1 + $0x1f0] sm:$0xff]
  %v82 = vld [vmem:[%s1 + $0x1f8] sm:$0xff]
  %v83 = vld [vmem:[%s1 + $0x200] sm:$0xff]
  %v84 = vld [vmem:[%s1 + $0x208] sm:$0xff]
  %v85 = vld [vmem:[%s1 + $0x210] sm:$0xff]
  %v86 = vld [vmem:[%s1 + $0x218] sm:$0xff]
  %v87 = vld [vmem:[%s1 + $0x220] sm:$0xff]
  %v88 = vld [vmem:[%s1 + $0x228] sm:$0xff]
  %v89 = vld [vmem:[%s1 + $0x230] sm:$0xff]
  %v90 = vld [vmem:[%s1 + $0x238] sm:$0xff]
  %v91 = vld [vmem:[%s1 + $0x240] sm:$0xff]
  %v92 = vld [vmem:[%s1 + $0x248] sm:$0xff]
  %v93 = vld [vmem:[%s1 + $0x250] sm:$0xff]
  %v94 = vld [vmem:[%s1 + $0x258] sm:$0xff]
  %v95 = vld [vmem:[%s1 + $0x260] sm:$0xff]
  %v96 = vld [vmem:[%s1 + $0x268] sm:$0xff]
  %v97 = vld [vmem:[%s1 + $0x270] sm:$0xff]
  %v98 = vld [vmem:[%s1 + $0x278] sm:$0xff]
  %v99 = vld [vmem:[%s1 + $0x280] sm:$0xff]
  %v100 = vld [vmem:[%s1 + $0x288] sm:$0xff]
  %v101 = vld [vmem:[%s1 + $0x290] sm:$0xff]
  %v102 = vld [vmem:[%s1 + $0x298] sm:$0xff]
  %v103 = vld [vmem:[%s1 + $0x2a0] sm:$0xff]
  %v104 = vld [vmem:[%s1 + $0x2a8] sm:$0xff]
  %v105 = vld [vmem:[%s1 + $0x2b0] sm:$0xff]
  %v106 = vld [vmem:[%s1 + $0x2b8] sm:$0xff]
  %v107 = vld [vmem:[%s1 + $0x2c0] sm:$0xff]
  %v108 = vld [vmem:[%s1 + $0x2c8] sm:$0xff]
  %v109 = vld [vmem:[%s1 + $0x2d0] sm:$0xff]
  %v110 = vld [vmem:[%s1 + $0x2d8] sm:$0xff]
  %v111 = vld [vmem:[%s1 + $0x2e0] sm:$0xff]
  %v112 = vld [vmem:[%s1 + $0x2e8] sm:$0xff]
  %v113 = vld [vmem:[%s1 + $0x2f0] sm:$0xff]
  %v114 = vld [vmem:[%s1 + $0x2f8] sm:$0xff]
  %v115 = vld [vmem:[%s1 + $0x300] sm:$0xff]
  %v116 = vld [vmem:[%s1 + $0x308] sm:$0xff]
  %v117 = vld [vmem:[%s1 + $0x310] sm:$0xff]
  %v118 = vld [vmem:[%s1 + $0x318] sm:$0xff]
  %v119 = vld [vmem:[%s1 + $0x320] sm:$0xff]
  %v120 = vld [vmem:[%s1 + $0x328] sm:$0xff]
  %v121 = vld [vmem:[%s1 + $0x330] sm:$0xff]
  %v122 = vld [vmem:[%s1 + $0x338] sm:$0xff]
  %v123 = vld [vmem:[%s1 + $0x340] sm:$0xff]
  %v124 = vld [vmem:[%s1 + $0x348] sm:$0xff]
  %v125 = vld [vmem:[%s1 + $0x350] sm:$0xff]
  %v126 = vld [vmem:[%s1 + $0x358] sm:$0xff]
  %v127 = vld [vmem:[%s1 + $0x360] sm:$0xff]
  %v128 = vld [vmem:[%s1 + $0x368] sm:$0xff]
  %v129 = vld [vmem:[%s1 + $0x370] sm:$0xff]
  %v130 = vld [vmem:[%s1 + $0x378] sm:$0xff]
  %v131 = vld [vmem:[%s1 + $0x380] sm:$0xff]
  %v132 = vld [vmem:[%s1 + $0x388] sm:$0xff]
  %v133 = vld [vmem:[%s1 + $0x390] sm:$0xff]
  %v134 = vld [vmem:[%s1 + $0x398] sm:$0xff]
  %v135 = vld [vmem:[%s1 + $0x3a0] sm:$0xff]
  %v136 = vld [vmem:[%s1 + $0x3a8] sm:$0xff]
  %v137 = vld [vmem:[%s1 + $0x3b0] sm:$0xff]
  %v138 = vld [vmem:[%s1 + $0x3b8] sm:$0xff]
  %v139 = vld [vmem:[%s1 + $0x3c0] sm:$0xff]
  %v140 = vld [vmem:[%s1 + $0x3c8] sm:$0xff]
  %v141 = vld [vmem:[%s1 + $0x3d0] sm:$0xff]
  %v142 = vld [vmem:[%s1 + $0x3d8] sm:$0xff]
  %v143 = vld [vmem:[%s1 + $0x3e0] sm:$0xff]
  %v144 = vld [vmem:[%s1 + $0x3e8] sm:$0xff]
  %v145 = vld [vmem:[%s1 + $0x3f0] sm:$0xff]
  %v146 = vld [vmem:[%s1 + $0x3f8] sm:$0xff]
  %v147 = vld [vmem:[%s2] sm:$0xf]
  %v149 = vlaneseq
  %v150 = vshrl.u32 %v149, 7
  %v151 = vsub.s32 0, %v150
  %v152 = vrot.slane %v147, %v151
  %v153 = vlaneseq
  %v154 = vshrl.u32 %v153, 7
  %v155 = vsub.s32 1, %v154
  %v156 = vrot.slane %v147, %v155
  %v157 = vlaneseq
  %v158 = vshrl.u32 %v157, 7
  %v159 = vsub.s32 2, %v158
  %v160 = vrot.slane %v147, %v159
  %v161 = vlaneseq
  %v162 = vshrl.u32 %v161, 7
  %v163 = vsub.s32 3, %v162
  %v164 = vrot.slane %v147, %v163
  %v171 = vunpack.c.l.b16 %v17
  %v172 = vunpack.c.h.b16 %v17
  %v173 = vunpack.c.l.b16 %v18
  %v174 = vunpack.c.h.b16 %v18
  %v175 = vpack.c.b16 %v171, %v171
  %v176 = vpack.c.b16 %v172, %v172
  %v177 = vpack.c.b16 %v173, %v173
  %v178 = vpack.c.b16 %v174, %v174
  %v311 = vunpack.c.l.b16 %v19
  %v312 = vunpack.c.h.b16 %v19
  %v313 = vunpack.c.l.b16 %v20
  %v314 = vunpack.c.h.b16 %v20
  %v315 = vunpack.c.l.b16 %v21
  %v316 = vunpack.c.h.b16 %v21
  %v317 = vunpack.c.l.b16 %v22
  %v318 = vunpack.c.h.b16 %v22
  %v319 = vunpack.c.l.b16 %v23
  %v320 = vunpack.c.h.b16 %v23
  %v321 = vunpack.c.l.b16 %v24
  %v322 = vunpack.c.h.b16 %v24
  %v323 = vunpack.c.l.b16 %v25
  %v324 = vunpack.c.h.b16 %v25
  %v325 = vunpack.c.l.b16 %v26
  %v326 = vunpack.c.h.b16 %v26
  %v327 = vunpack.c.l.b16 %v27
  %v328 = vunpack.c.h.b16 %v27
  %v329 = vunpack.c.l.b16 %v28
  %v330 = vunpack.c.h.b16 %v28
  %v331 = vunpack.c.l.b16 %v29
  %v332 = vunpack.c.h.b16 %v29
  %v333 = vunpack.c.l.b16 %v30
  %v334 = vunpack.c.h.b16 %v30
  %v335 = vunpack.c.l.b16 %v31
  %v336 = vunpack.c.h.b16 %v31
  %v337 = vunpack.c.l.b16 %v32
  %v338 = vunpack.c.h.b16 %v32
  %v339 = vunpack.c.l.b16 %v33
  %v340 = vunpack.c.h.b16 %v33
  %v341 = vunpack.c.l.b16 %v34
  %v342 = vunpack.c.h.b16 %v34
  %v343 = vunpack.c.l.b16 %v35
  %v344 = vunpack.c.h.b16 %v35
  %v345 = vunpack.c.l.b16 %v36
  %v346 = vunpack.c.h.b16 %v36
  %v347 = vunpack.c.l.b16 %v37
  %v348 = vunpack.c.h.b16 %v37
  %v349 = vunpack.c.l.b16 %v38
  %v350 = vunpack.c.h.b16 %v38
  %v351 = vunpack.c.l.b16 %v39
  %v352 = vunpack.c.h.b16 %v39
  %v353 = vunpack.c.l.b16 %v40
  %v354 = vunpack.c.h.b16 %v40
  %v355 = vunpack.c.l.b16 %v41
  %v356 = vunpack.c.h.b16 %v41
  %v357 = vunpack.c.l.b16 %v42
  %v358 = vunpack.c.h.b16 %v42
  %v359 = vunpack.c.l.b16 %v43
  %v360 = vunpack.c.h.b16 %v43
  %v361 = vunpack.c.l.b16 %v44
  %v362 = vunpack.c.h.b16 %v44
  %v363 = vunpack.c.l.b16 %v45
  %v364 = vunpack.c.h.b16 %v45
  %v365 = vunpack.c.l.b16 %v46
  %v366 = vunpack.c.h.b16 %v46
  %v367 = vunpack.c.l.b16 %v47
  %v368 = vunpack.c.h.b16 %v47
  %v369 = vunpack.c.l.b16 %v48
  %v370 = vunpack.c.h.b16 %v48
  %v371 = vunpack.c.l.b16 %v49
  %v372 = vunpack.c.h.b16 %v49
  %v373 = vunpack.c.l.b16 %v50
  %v374 = vunpack.c.h.b16 %v50
  %v375 = vunpack.c.l.b16 %v51
  %v376 = vunpack.c.h.b16 %v51
  %v377 = vunpack.c.l.b16 %v52
  %v378 = vunpack.c.h.b16 %v52
  %v379 = vunpack.c.l.b16 %v53
  %v380 = vunpack.c.h.b16 %v53
  %v381 = vunpack.c.l.b16 %v54
  %v382 = vunpack.c.h.b16 %v54
  %v383 = vunpack.c.l.b16 %v55
  %v384 = vunpack.c.h.b16 %v55
  %v385 = vunpack.c.l.b16 %v56
  %v386 = vunpack.c.h.b16 %v56
  %v387 = vunpack.c.l.b16 %v57
  %v388 = vunpack.c.h.b16 %v57
  %v389 = vunpack.c.l.b16 %v58
  %v390 = vunpack.c.h.b16 %v58
  %v391 = vunpack.c.l.b16 %v59
  %v392 = vunpack.c.h.b16 %v59
  %v393 = vunpack.c.l.b16 %v60
  %v394 = vunpack.c.h.b16 %v60
  %v395 = vunpack.c.l.b16 %v61
  %v396 = vunpack.c.h.b16 %v61
  %v397 = vunpack.c.l.b16 %v62
  %v398 = vunpack.c.h.b16 %v62
  %v399 = vunpack.c.l.b16 %v63
  %v400 = vunpack.c.h.b16 %v63
  %v401 = vunpack.c.l.b16 %v64
  %v402 = vunpack.c.h.b16 %v64
  %v403 = vunpack.c.l.b16 %v65
  %v404 = vunpack.c.h.b16 %v65
  %v405 = vunpack.c.l.b16 %v66
  %v406 = vunpack.c.h.b16 %v66
  %v407 = vunpack.c.l.b16 %v67
  %v408 = vunpack.c.h.b16 %v67
  %v409 = vunpack.c.l.b16 %v68
  %v410 = vunpack.c.h.b16 %v68
  %v411 = vunpack.c.l.b16 %v69
  %v412 = vunpack.c.h.b16 %v69
  %v413 = vunpack.c.l.b16 %v70
  %v414 = vunpack.c.h.b16 %v70
  %v415 = vunpack.c.l.b16 %v71
  %v416 = vunpack.c.h.b16 %v71
  %v417 = vunpack.c.l.b16 %v72
  %v418 = vunpack.c.h.b16 %v72
  %v419 = vunpack.c.l.b16 %v73
  %v420 = vunpack.c.h.b16 %v73
  %v421 = vunpack.c.l.b16 %v74
  %v422 = vunpack.c.h.b16 %v74
  %v423 = vunpack.c.l.b16 %v75
  %v424 = vunpack.c.h.b16 %v75
  %v425 = vunpack.c.l.b16 %v76
  %v426 = vunpack.c.h.b16 %v76
  %v427 = vunpack.c.l.b16 %v77
  %v428 = vunpack.c.h.b16 %v77
  %v429 = vunpack.c.l.b16 %v78
  %v430 = vunpack.c.h.b16 %v78
  %v431 = vunpack.c.l.b16 %v79
  %v432 = vunpack.c.h.b16 %v79
  %v433 = vunpack.c.l.b16 %v80
  %v434 = vunpack.c.h.b16 %v80
  %v435 = vunpack.c.l.b16 %v81
  %v436 = vunpack.c.h.b16 %v81
  %v437 = vunpack.c.l.b16 %v82
  %v438 = vunpack.c.h.b16 %v82
  %v439 = vunpack.c.l.b16 %v83
  %v440 = vunpack.c.h.b16 %v83
  %v441 = vunpack.c.l.b16 %v84
  %v442 = vunpack.c.h.b16 %v84
  %v443 = vunpack.c.l.b16 %v85
  %v444 = vunpack.c.h.b16 %v85
  %v445 = vunpack.c.l.b16 %v86
  %v446 = vunpack.c.h.b16 %v86
  %v447 = vunpack.c.l.b16 %v87
  %v448 = vunpack.c.h.b16 %v87
  %v449 = vunpack.c.l.b16 %v88
  %v450 = vunpack.c.h.b16 %v88
  %v451 = vunpack.c.l.b16 %v89
  %v452 = vunpack.c.h.b16 %v89
  %v453 = vunpack.c.l.b16 %v90
  %v454 = vunpack.c.h.b16 %v90
  %v455 = vunpack.c.l.b16 %v91
  %v456 = vunpack.c.h.b16 %v91
  %v457 = vunpack.c.l.b16 %v92
  %v458 = vunpack.c.h.b16 %v92
  %v459 = vunpack.c.l.b16 %v93
  %v460 = vunpack.c.h.b16 %v93
  %v461 = vunpack.c.l.b16 %v94
  %v462 = vunpack.c.h.b16 %v94
  %v463 = vunpack.c.l.b16 %v95
  %v464 = vunpack.c.h.b16 %v95
  %v465 = vunpack.c.l.b16 %v96
  %v466 = vunpack.c.h.b16 %v96
  %v467 = vunpack.c.l.b16 %v97
  %v468 = vunpack.c.h.b16 %v97
  %v469 = vunpack.c.l.b16 %v98
  %v470 = vunpack.c.h.b16 %v98
  %v471 = vunpack.c.l.b16 %v99
  %v472 = vunpack.c.h.b16 %v99
  %v473 = vunpack.c.l.b16 %v100
  %v474 = vunpack.c.h.b16 %v100
  %v475 = vunpack.c.l.b16 %v101
  %v476 = vunpack.c.h.b16 %v101
  %v477 = vunpack.c.l.b16 %v102
  %v478 = vunpack.c.h.b16 %v102
  %v479 = vunpack.c.l.b16 %v103
  %v480 = vunpack.c.h.b16 %v103
  %v481 = vunpack.c.l.b16 %v104
  %v482 = vunpack.c.h.b16 %v104
  %v483 = vunpack.c.l.b16 %v105
  %v484 = vunpack.c.h.b16 %v105
  %v485 = vunpack.c.l.b16 %v106
  %v486 = vunpack.c.h.b16 %v106
  %v487 = vunpack.c.l.b16 %v107
  %v488 = vunpack.c.h.b16 %v107
  %v489 = vunpack.c.l.b16 %v108
  %v490 = vunpack.c.h.b16 %v108
  %v491 = vunpack.c.l.b16 %v109
  %v492 = vunpack.c.h.b16 %v109
  %v493 = vunpack.c.l.b16 %v110
  %v494 = vunpack.c.h.b16 %v110
  %v495 = vunpack.c.l.b16 %v111
  %v496 = vunpack.c.h.b16 %v111
  %v497 = vunpack.c.l.b16 %v112
  %v498 = vunpack.c.h.b16 %v112
  %v499 = vunpack.c.l.b16 %v113
  %v500 = vunpack.c.h.b16 %v113
  %v501 = vunpack.c.l.b16 %v114
  %v502 = vunpack.c.h.b16 %v114
  %v503 = vunpack.c.l.b16 %v115
  %v504 = vunpack.c.h.b16 %v115
  %v505 = vunpack.c.l.b16 %v116
  %v506 = vunpack.c.h.b16 %v116
  %v507 = vunpack.c.l.b16 %v117
  %v508 = vunpack.c.h.b16 %v117
  %v509 = vunpack.c.l.b16 %v118
  %v510 = vunpack.c.h.b16 %v118
  %v511 = vunpack.c.l.b16 %v119
  %v512 = vunpack.c.h.b16 %v119
  %v513 = vunpack.c.l.b16 %v120
  %v514 = vunpack.c.h.b16 %v120
  %v515 = vunpack.c.l.b16 %v121
  %v516 = vunpack.c.h.b16 %v121
  %v517 = vunpack.c.l.b16 %v122
  %v518 = vunpack.c.h.b16 %v122
  %v519 = vunpack.c.l.b16 %v123
  %v520 = vunpack.c.h.b16 %v123
  %v521 = vunpack.c.l.b16 %v124
  %v522 = vunpack.c.h.b16 %v124
  %v523 = vunpack.c.l.b16 %v125
  %v524 = vunpack.c.h.b16 %v125
  %v525 = vunpack.c.l.b16 %v126
  %v526 = vunpack.c.h.b16 %v126
  %v527 = vunpack.c.l.b16 %v127
  %v528 = vunpack.c.h.b16 %v127
  %v529 = vunpack.c.l.b16 %v128
  %v530 = vunpack.c.h.b16 %v128
  %v531 = vunpack.c.l.b16 %v129
  %v532 = vunpack.c.h.b16 %v129
  %v533 = vunpack.c.l.b16 %v130
  %v534 = vunpack.c.h.b16 %v130
  %v535 = vunpack.c.l.b16 %v131
  %v536 = vunpack.c.h.b16 %v131
  %v537 = vunpack.c.l.b16 %v132
  %v538 = vunpack.c.h.b16 %v132
  %v539 = vunpack.c.l.b16 %v133
  %v540 = vunpack.c.h.b16 %v133
  %v541 = vunpack.c.l.b16 %v134
  %v542 = vunpack.c.h.b16 %v134
  %v543 = vunpack.c.l.b16 %v135
  %v544 = vunpack.c.h.b16 %v135
  %v545 = vunpack.c.l.b16 %v136
  %v546 = vunpack.c.h.b16 %v136
  %v547 = vunpack.c.l.b16 %v137
  %v548 = vunpack.c.h.b16 %v137
  %v549 = vunpack.c.l.b16 %v138
  %v550 = vunpack.c.h.b16 %v138
  %v551 = vunpack.c.l.b16 %v139
  %v552 = vunpack.c.h.b16 %v139
  %v553 = vunpack.c.l.b16 %v140
  %v554 = vunpack.c.h.b16 %v140
  %v555 = vunpack.c.l.b16 %v141
  %v556 = vunpack.c.h.b16 %v141
  %v557 = vunpack.c.l.b16 %v142
  %v558 = vunpack.c.h.b16 %v142
  %v559 = vunpack.c.l.b16 %v143
  %v560 = vunpack.c.h.b16 %v143
  %v561 = vunpack.c.l.b16 %v144
  %v562 = vunpack.c.h.b16 %v144
  %v563 = vunpack.c.l.b16 %v145
  %v564 = vunpack.c.h.b16 %v145
  %v565 = vunpack.c.l.b16 %v146
  %v566 = vunpack.c.h.b16 %v146
  %v567 = vpack.c.b16 %v315, %v311
  %v568 = vpack.c.b16 %v316, %v312
  %v569 = vpack.c.b16 %v317, %v313
  %v570 = vpack.c.b16 %v318, %v314
  %v571 = vpack.c.b16 %v323, %v319
  %v572 = vpack.c.b16 %v324, %v320
  %v573 = vpack.c.b16 %v325, %v321
  %v574 = vpack.c.b16 %v326, %v322
  %v575 = vpack.c.b16 %v331, %v327
  %v576 = vpack.c.b16 %v332, %v328
  %v577 = vpack.c.b16 %v333, %v329
  %v578 = vpack.c.b16 %v334, %v330
  %v579 = vpack.c.b16 %v339, %v335
  %v580 = vpack.c.b16 %v340, %v336
  %v581 = vpack.c.b16 %v341, %v337
  %v582 = vpack.c.b16 %v342, %v338
  %v583 = vpack.c.b16 %v347, %v343
  %v584 = vpack.c.b16 %v348, %v344
  %v585 = vpack.c.b16 %v349, %v345
  %v586 = vpack.c.b16 %v350, %v346
  %v587 = vpack.c.b16 %v355, %v351
  %v588 = vpack.c.b16 %v356, %v352
  %v589 = vpack.c.b16 %v357, %v353
  %v590 = vpack.c.b16 %v358, %v354
  %v591 = vpack.c.b16 %v363, %v359
  %v592 = vpack.c.b16 %v364, %v360
  %v593 = vpack.c.b16 %v365, %v361
  %v594 = vpack.c.b16 %v366, %v362
  %v595 = vpack.c.b16 %v371, %v367
  %v596 = vpack.c.b16 %v372, %v368
  %v597 = vpack.c.b16 %v373, %v369
  %v598 = vpack.c.b16 %v374, %v370
  %v599 = vpack.c.b16 %v379, %v375
  %v600 = vpack.c.b16 %v380, %v376
  %v601 = vpack.c.b16 %v381, %v377
  %v602 = vpack.c.b16 %v382, %v378
  %v603 = vpack.c.b16 %v387, %v383
  %v604 = vpack.c.b16 %v388, %v384
  %v605 = vpack.c.b16 %v389, %v385
  %v606 = vpack.c.b16 %v390, %v386
  %v607 = vpack.c.b16 %v395, %v391
  %v608 = vpack.c.b16 %v396, %v392
  %v609 = vpack.c.b16 %v397, %v393
  %v610 = vpack.c.b16 %v398, %v394
  %v611 = vpack.c.b16 %v403, %v399
  %v612 = vpack.c.b16 %v404, %v400
  %v613 = vpack.c.b16 %v405, %v401
  %v614 = vpack.c.b16 %v406, %v402
  %v615 = vpack.c.b16 %v411, %v407
  %v616 = vpack.c.b16 %v412, %v408
  %v617 = vpack.c.b16 %v413, %v409
  %v618 = vpack.c.b16 %v414, %v410
  %v619 = vpack.c.b16 %v419, %v415
  %v620 = vpack.c.b16 %v420, %v416
  %v621 = vpack.c.b16 %v421, %v417
  %v622 = vpack.c.b16 %v422, %v418
  %v623 = vpack.c.b16 %v427, %v423
  %v624 = vpack.c.b16 %v428, %v424
  %v625 = vpack.c.b16 %v429, %v425
  %v626 = vpack.c.b16 %v430, %v426
  %v627 = vpack.c.b16 %v435, %v431
  %v628 = vpack.c.b16 %v436, %v432
  %v629 = vpack.c.b16 %v437, %v433
  %v630 = vpack.c.b16 %v438, %v434
  %v631 = vpack.c.b16 %v443, %v439
  %v632 = vpack.c.b16 %v444, %v440
  %v633 = vpack.c.b16 %v445, %v441
  %v634 = vpack.c.b16 %v446, %v442
  %v635 = vpack.c.b16 %v451, %v447
  %v636 = vpack.c.b16 %v452, %v448
  %v637 = vpack.c.b16 %v453, %v449
  %v638 = vpack.c.b16 %v454, %v450
  %v639 = vpack.c.b16 %v459, %v455
  %v640 = vpack.c.b16 %v460, %v456
  %v641 = vpack.c.b16 %v461, %v457
  %v642 = vpack.c.b16 %v462, %v458
  %v643 = vpack.c.b16 %v467, %v463
  %v644 = vpack.c.b16 %v468, %v464
  %v645 = vpack.c.b16 %v469, %v465
  %v646 = vpack.c.b16 %v470, %v466
  %v647 = vpack.c.b16 %v475, %v471
  %v648 = vpack.c.b16 %v476, %v472
  %v649 = vpack.c.b16 %v477, %v473
  %v650 = vpack.c.b16 %v478, %v474
  %v651 = vpack.c.b16 %v483, %v479
  %v652 = vpack.c.b16 %v484, %v480
  %v653 = vpack.c.b16 %v485, %v481
  %v654 = vpack.c.b16 %v486, %v482
  %v655 = vpack.c.b16 %v491, %v487
  %v656 = vpack.c.b16 %v492, %v488
  %v657 = vpack.c.b16 %v493, %v489
  %v658 = vpack.c.b16 %v494, %v490
  %v659 = vpack.c.b16 %v499, %v495
  %v660 = vpack.c.b16 %v500, %v496
  %v661 = vpack.c.b16 %v501, %v497
  %v662 = vpack.c.b16 %v502, %v498
  %v663 = vpack.c.b16 %v507, %v503
  %v664 = vpack.c.b16 %v508, %v504
  %v665 = vpack.c.b16 %v509, %v505
  %v666 = vpack.c.b16 %v510, %v506
  %v667 = vpack.c.b16 %v515, %v511
  %v668 = vpack.c.b16 %v516, %v512
  %v669 = vpack.c.b16 %v517, %v513
  %v670 = vpack.c.b16 %v518, %v514
  %v671 = vpack.c.b16 %v523, %v519
  %v672 = vpack.c.b16 %v524, %v520
  %v673 = vpack.c.b16 %v525, %v521
  %v674 = vpack.c.b16 %v526, %v522
  %v675 = vpack.c.b16 %v531, %v527
  %v676 = vpack.c.b16 %v532, %v528
  %v677 = vpack.c.b16 %v533, %v529
  %v678 = vpack.c.b16 %v534, %v530
  %v679 = vpack.c.b16 %v539, %v535
  %v680 = vpack.c.b16 %v540, %v536
  %v681 = vpack.c.b16 %v541, %v537
  %v682 = vpack.c.b16 %v542, %v538
  %v683 = vpack.c.b16 %v547, %v543
  %v684 = vpack.c.b16 %v548, %v544
  %v685 = vpack.c.b16 %v549, %v545
  %v686 = vpack.c.b16 %v550, %v546
  %v687 = vpack.c.b16 %v555, %v551
  %v688 = vpack.c.b16 %v556, %v552
  %v689 = vpack.c.b16 %v557, %v553
  %v690 = vpack.c.b16 %v558, %v554
  %v691 = vpack.c.b16 %v563, %v559
  %v692 = vpack.c.b16 %v564, %v560
  %v693 = vpack.c.b16 %v565, %v561
  %v694 = vpack.c.b16 %v566, %v562
  %823 = vmatprep.subr.bf16.mxu0 %v596
  %824 = vmatpush1.bf16.msra.mxu0 %v595
  %825 = vmatprep.subr.bf16.mxu0 %v592
  %826 = vmatpush1.bf16.msra.mxu0 %v591
  %827 = vmatprep.subr.bf16.mxu0 %v588
  %828 = vmatpush1.bf16.msra.mxu0 %v587
  %829 = vmatprep.subr.bf16.mxu0 %v584
  %830 = vmatpush1.bf16.msra.mxu0 %v583
  %831 = vmatprep.subr.bf16.mxu0 %v580
  %832 = vmatpush1.bf16.msra.mxu0 %v579
  %833 = vmatprep.subr.bf16.mxu0 %v576
  %834 = vmatpush1.bf16.msra.mxu0 %v575
  %835 = vmatprep.subr.bf16.mxu0 %v572
  %836 = vmatpush1.bf16.msra.mxu0 %v571
  %837 = vmatprep.subr.bf16.mxu0 %v568
  %838 = vmatpush1.bf16.msra.mxu0 %v567
  %839 = vmatprep.subr.bf16.mxu0 %v628
  %840 = vmatpush2.bf16.msra.mxu0 %v627
  %841 = vmatprep.subr.bf16.mxu0 %v624
  %842 = vmatpush2.bf16.msra.mxu0 %v623
  %843 = vmatprep.subr.bf16.mxu0 %v620
  %844 = vmatpush2.bf16.msra.mxu0 %v619
  %845 = vmatprep.subr.bf16.mxu0 %v616
  %846 = vmatpush2.bf16.msra.mxu0 %v615
  %847 = vmatprep.subr.bf16.mxu0 %v612
  %848 = vmatpush2.bf16.msra.mxu0 %v611
  %849 = vmatprep.subr.bf16.mxu0 %v608
  %850 = vmatpush2.bf16.msra.mxu0 %v607
  %851 = vmatprep.subr.bf16.mxu0 %v604
  %852 = vmatpush2.bf16.msra.mxu0 %v603
  %853 = vmatprep.subr.bf16.mxu0 %v600
  %854 = vmatpush2.bf16.msra.mxu0 %v599
  %855 = vmatprep.mubr.bf16.mxu0 %v176
  %856 = vmatmul.mubr.bf16.gmra.mxu0 %v175
  %v857 = vpop.f32.mrf.mxu0
  %v858 = vadd.f32 %v152, %v857
  %v859 = vpop.f32.mrf.mxu0
  %v860 = vadd.f32 %v156, %v859
  %v861 = vpop.f32.mrf.mxu0
  %v862 = vpop.f32.mrf.mxu0
  %863 = vdwg.mxu0
  %864 = vmatprep.subr.bf16.mxu0 %v660
  %865 = vmatpush1.bf16.msra.mxu0 %v659
  %866 = vmatprep.subr.bf16.mxu0 %v656
  %867 = vmatpush1.bf16.msra.mxu0 %v655
  %868 = vmatprep.subr.bf16.mxu0 %v652
  %869 = vmatpush1.bf16.msra.mxu0 %v651
  %870 = vmatprep.subr.bf16.mxu0 %v648
  %871 = vmatpush1.bf16.msra.mxu0 %v647
  %872 = vmatprep.subr.bf16.mxu0 %v644
  %873 = vmatpush1.bf16.msra.mxu0 %v643
  %874 = vmatprep.subr.bf16.mxu0 %v640
  %875 = vmatpush1.bf16.msra.mxu0 %v639
  %876 = vmatprep.subr.bf16.mxu0 %v636
  %877 = vmatpush1.bf16.msra.mxu0 %v635
  %878 = vmatprep.subr.bf16.mxu0 %v632
  %879 = vmatpush1.bf16.msra.mxu0 %v631
  %880 = vmatprep.subr.bf16.mxu0 %v692
  %881 = vmatpush2.bf16.msra.mxu0 %v691
  %882 = vmatprep.subr.bf16.mxu0 %v688
  %883 = vmatpush2.bf16.msra.mxu0 %v687
  %884 = vmatprep.subr.bf16.mxu0 %v684
  %885 = vmatpush2.bf16.msra.mxu0 %v683
  %886 = vmatprep.subr.bf16.mxu0 %v680
  %887 = vmatpush2.bf16.msra.mxu0 %v679
  %888 = vmatprep.subr.bf16.mxu0 %v676
  %889 = vmatpush2.bf16.msra.mxu0 %v675
  %890 = vmatprep.subr.bf16.mxu0 %v672
  %891 = vmatpush2.bf16.msra.mxu0 %v671
  %892 = vmatprep.subr.bf16.mxu0 %v668
  %893 = vmatpush2.bf16.msra.mxu0 %v667
  %894 = vmatprep.subr.bf16.mxu0 %v664
  %895 = vmatpush2.bf16.msra.mxu0 %v663
  %896 = vmatprep.mubr.bf16.mxu0 %v178
  %897 = vmatmul.mubr.bf16.gmra.mxu0 %v177
  %v898 = vpop.f32.mrf.mxu0
  %v899 = vadd.f32 %v858, %v898
  %v900 = vpop.f32.mrf.mxu0
  %v901 = vadd.f32 %v860, %v900
  %v902 = vpop.f32.mrf.mxu0
  %v903 = vpop.f32.mrf.mxu0
  %904 = vdwg.mxu0
  %905 = vmatprep.subr.bf16.mxu0 %v598
  %906 = vmatpush1.bf16.msra.mxu0 %v597
  %907 = vmatprep.subr.bf16.mxu0 %v594
  %908 = vmatpush1.bf16.msra.mxu0 %v593
  %909 = vmatprep.subr.bf16.mxu0 %v590
  %910 = vmatpush1.bf16.msra.mxu0 %v589
  %911 = vmatprep.subr.bf16.mxu0 %v586
  %912 = vmatpush1.bf16.msra.mxu0 %v585
  %913 = vmatprep.subr.bf16.mxu0 %v582
  %914 = vmatpush1.bf16.msra.mxu0 %v581
  %915 = vmatprep.subr.bf16.mxu0 %v578
  %916 = vmatpush1.bf16.msra.mxu0 %v577
  %917 = vmatprep.subr.bf16.mxu0 %v574
  %918 = vmatpush1.bf16.msra.mxu0 %v573
  %919 = vmatprep.subr.bf16.mxu0 %v570
  %920 = vmatpush1.bf16.msra.mxu0 %v569
  %921 = vmatprep.subr.bf16.mxu0 %v630
  %922 = vmatpush2.bf16.msra.mxu0 %v629
  %923 = vmatprep.subr.bf16.mxu0 %v626
  %924 = vmatpush2.bf16.msra.mxu0 %v625
  %925 = vmatprep.subr.bf16.mxu0 %v622
  %926 = vmatpush2.bf16.msra.mxu0 %v621
  %927 = vmatprep.subr.bf16.mxu0 %v618
  %928 = vmatpush2.bf16.msra.mxu0 %v617
  %929 = vmatprep.subr.bf16.mxu0 %v614
  %930 = vmatpush2.bf16.msra.mxu0 %v613
  %931 = vmatprep.subr.bf16.mxu0 %v610
  %932 = vmatpush2.bf16.msra.mxu0 %v609
  %933 = vmatprep.subr.bf16.mxu0 %v606
  %934 = vmatpush2.bf16.msra.mxu0 %v605
  %935 = vmatprep.subr.bf16.mxu0 %v602
  %936 = vmatpush2.bf16.msra.mxu0 %v601
  %937 = vmatprep.mubr.bf16.mxu0 %v176
  %938 = vmatmul.mubr.bf16.gmra.mxu0 %v175
  %v939 = vpop.f32.mrf.mxu0
  %v940 = vadd.f32 %v160, %v939
  %v941 = vpop.f32.mrf.mxu0
  %v942 = vadd.f32 %v164, %v941
  %v943 = vpop.f32.mrf.mxu0
  %v944 = vpop.f32.mrf.mxu0
  %945 = vdwg.mxu0
  %946 = vmatprep.subr.bf16.mxu0 %v662
  %947 = vmatpush1.bf16.msra.mxu0 %v661
  %948 = vmatprep.subr.bf16.mxu0 %v658
  %949 = vmatpush1.bf16.msra.mxu0 %v657
  %950 = vmatprep.subr.bf16.mxu0 %v654
  %951 = vmatpush1.bf16.msra.mxu0 %v653
  %952 = vmatprep.subr.bf16.mxu0 %v650
  %953 = vmatpush1.bf16.msra.mxu0 %v649
  %954 = vmatprep.subr.bf16.mxu0 %v646
  %955 = vmatpush1.bf16.msra.mxu0 %v645
  %956 = vmatprep.subr.bf16.mxu0 %v642
  %957 = vmatpush1.bf16.msra.mxu0 %v641
  %958 = vmatprep.subr.bf16.mxu0 %v638
  %959 = vmatpush1.bf16.msra.mxu0 %v637
  %960 = vmatprep.subr.bf16.mxu0 %v634
  %961 = vmatpush1.bf16.msra.mxu0 %v633
  %962 = vmatprep.subr.bf16.mxu0 %v694
  %963 = vmatpush2.bf16.msra.mxu0 %v693
  %964 = vmatprep.subr.bf16.mxu0 %v690
  %965 = vmatpush2.bf16.msra.mxu0 %v689
  %966 = vmatprep.subr.bf16.mxu0 %v686
  %967 = vmatpush2.bf16.msra.mxu0 %v685
  %968 = vmatprep.subr.bf16.mxu0 %v682
  %969 = vmatpush2.bf16.msra.mxu0 %v681
  %970 = vmatprep.subr.bf16.mxu0 %v678
  %971 = vmatpush2.bf16.msra.mxu0 %v677
  %972 = vmatprep.subr.bf16.mxu0 %v674
  %973 = vmatpush2.bf16.msra.mxu0 %v673
  %974 = vmatprep.subr.bf16.mxu0 %v670
  %975 = vmatpush2.bf16.msra.mxu0 %v669
  %976 = vmatprep.subr.bf16.mxu0 %v666
  %977 = vmatpush2.bf16.msra.mxu0 %v665
  %978 = vmatprep.mubr.bf16.mxu0 %v178
  %979 = vmatmul.mubr.bf16.gmra.mxu0 %v177
  %v980 = vpop.f32.mrf.mxu0
  %v981 = vadd.f32 %v940, %v980
  %v982 = vpop.f32.mrf.mxu0
  %v983 = vadd.f32 %v942, %v982
  %v984 = vpop.f32.mrf.mxu0
  %v985 = vpop.f32.mrf.mxu0
  %986 = vdwg.mxu0
  %v987 = vld [vmem:[%s3] sm:$0xff]
  %v988 = vld [vmem:[%s3 + $0x8] sm:$0xff]
  %v989 = vunpack.c.l.bf16 %v987
  %v990 = vunpack.c.h.bf16 %v987
  %v991 = vunpack.c.l.bf16 %v988
  %v992 = vunpack.c.h.bf16 %v988
  %v993 = vadd.f32 %v899, %v989
  %v994 = vadd.f32 %v901, %v990
  %v995 = vadd.f32 %v981, %v991
  %v996 = vadd.f32 %v983, %v992
  %v997 = vpack.c.bf16 %v993, %v993
  %v998 = vpack.c.bf16 %v994, %v994
  %v999 = vpack.c.bf16 %v995, %v995
  %v1000 = vpack.c.bf16 %v996, %v996
  %v1005 = vunpack.c.l.b16 %v997
  %v1006 = vunpack.c.l.b16 %v998
  %v1007 = vunpack.c.l.b16 %v999
  %v1008 = vunpack.c.l.b16 %v1000
  %v1009 = vpack.c.b16 %v1006, %v1005
  %v1010 = vpack.c.b16 %v1008, %v1007
  %1013 = vst [vmem:[%s4] sm:$0xff] %v1009
  %1014 = vst [vmem:[%s4 + $0x8] sm:$0xff] %v1010
  // Predicated region
  $region18: #{cross_dual_path_forward.19} parent=0 // pred_check
    _
  $region19: #{cross_dual_path_forward.19} parent=0 // pred_check_branch
    %1016 = sbr.rel (0) target = $region21
  $region20: #{cross_dual_path_forward.19} parent=0 // pred_region
    _
  $region21: #{cross_dual_path_forward.19} parent=0 // pred_fallthru
    _
  // Predicated region
  $region22: #{cross_dual_path_forward.19} parent=0 // pred_check
    _
  $region23: #{cross_dual_path_forward.19} parent=0 // pred_check_branch
    %1018 = sbr.rel (0) target = $region25
  $region24: #{cross_dual_path_forward.19} parent=0 // pred_region
    _
  $region25: #{cross_dual_path_forward.19} parent=0 // pred_fallthru
    _

// kernel: cross_dual_path_forward.24
$region0: #{cross_dual_path_forward.24}
  #allocation0 [shape = 'u32[]', space=smem, size = 0x4, offset = 0x4, fixed_abs, tag = 'smem constant byte address 0x4 - core index']
  #allocation1 [shape = 'u32[144,128]{1,0:T(1,128)}', space=vmem, size = 0x12000, scoped, tag = 'internal scratch']
  %s0 = inlined_call_operand.vmem [shape: bf16[8,512], index: 0, kind: input, shape index: {}]
  %s1 = inlined_call_operand.vmem [shape: bf16[512,256], index: 1, kind: input, shape index: {}]
  %s2 = inlined_call_operand.vmem [shape: f32[1,256], index: 2, kind: input, shape index: {}]
  %s3 = inlined_call_operand.vmem [shape: bf16[8,256], index: 3, kind: output, shape index: {}]
  %s4 = sld [smem:[#allocation0]]
  $region22: #{cross_dual_path_forward.24} parent=0
    _
  %s6 = ssub.s32 1, %s4
  %s7 = scalar_select 0, %s6, %s4
  // Predicated region
  $region2: #{cross_dual_path_forward.24} parent=0 // pred_check
    _
  $region3: #{cross_dual_path_forward.24} parent=0 // pred_check_branch
    %9 = sbr.rel (0) target = $region5
  $region4: #{cross_dual_path_forward.24} parent=0 // pred_region
    _
  $region5: #{cross_dual_path_forward.24} parent=0 // pred_fallthru
    _
  // Predicated region
  $region6: #{cross_dual_path_forward.24} parent=0 // pred_check
    _
  $region7: #{cross_dual_path_forward.24} parent=0 // pred_check_branch
    %11 = sbr.rel (0) target = $region9
  $region8: #{cross_dual_path_forward.24} parent=0 // pred_region
    _
  $region9: #{cross_dual_path_forward.24} parent=0 // pred_fallthru
    _
  // Predicated region
  $region10: #{cross_dual_path_forward.24} parent=0 // pred_check
    _
  $region11: #{cross_dual_path_forward.24} parent=0 // pred_check_branch
    %13 = sbr.rel (0) target = $region13
  $region12: #{cross_dual_path_forward.24} parent=0 // pred_region
    _
  $region13: #{cross_dual_path_forward.24} parent=0 // pred_fallthru
    _
  %v14 = vld [vmem:[%s0] sm:$0xff]
  %v15 = vld [vmem:[%s0 + $0x8] sm:$0xff]
  %v16 = vld [vmem:[%s1] sm:$0xff]
  %v17 = vld [vmem:[%s1 + $0x8] sm:$0xff]
  %v18 = vld [vmem:[%s1 + $0x10] sm:$0xff]
  %v19 = vld [vmem:[%s1 + $0x18] sm:$0xff]
  %v20 = vld [vmem:[%s1 + $0x20] sm:$0xff]
  %v21 = vld [vmem:[%s1 + $0x28] sm:$0xff]
  %v22 = vld [vmem:[%s1 + $0x30] sm:$0xff]
  %v23 = vld [vmem:[%s1 + $0x38] sm:$0xff]
  %v24 = vld [vmem:[%s1 + $0x40] sm:$0xff]
  %v25 = vld [vmem:[%s1 + $0x48] sm:$0xff]
  %v26 = vld [vmem:[%s1 + $0x50] sm:$0xff]
  %v27 = vld [vmem:[%s1 + $0x58] sm:$0xff]
  %v28 = vld [vmem:[%s1 + $0x60] sm:$0xff]
  %v29 = vld [vmem:[%s1 + $0x68] sm:$0xff]
  %v30 = vld [vmem:[%s1 + $0x70] sm:$0xff]
  %v31 = vld [vmem:[%s1 + $0x78] sm:$0xff]
  %v32 = vld [vmem:[%s1 + $0x80] sm:$0xff]
  %v33 = vld [vmem:[%s1 + $0x88] sm:$0xff]
  %v34 = vld [vmem:[%s1 + $0x90] sm:$0xff]
  %v35 = vld [vmem:[%s1 + $0x98] sm:$0xff]
  %v36 = vld [vmem:[%s1 + $0xa0] sm:$0xff]
  %v37 = vld [vmem:[%s1 + $0xa8] sm:$0xff]
  %v38 = vld [vmem:[%s1 + $0xb0] sm:$0xff]
  %v39 = vld [vmem:[%s1 + $0xb8] sm:$0xff]
  %v40 = vld [vmem:[%s1 + $0xc0] sm:$0xff]
  %v41 = vld [vmem:[%s1 + $0xc8] sm:$0xff]
  %v42 = vld [vmem:[%s1 + $0xd0] sm:$0xff]
  %v43 = vld [vmem:[%s1 + $0xd8] sm:$0xff]
  %v44 = vld [vmem:[%s1 + $0xe0] sm:$0xff]
  %v45 = vld [vmem:[%s1 + $0xe8] sm:$0xff]
  %v46 = vld [vmem:[%s1 + $0xf0] sm:$0xff]
  %v47 = vld [vmem:[%s1 + $0xf8] sm:$0xff]
  %v48 = vld [vmem:[%s1 + $0x100] sm:$0xff]
  %v49 = vld [vmem:[%s1 + $0x108] sm:$0xff]
  %v50 = vld [vmem:[%s1 + $0x110] sm:$0xff]
  %v51 = vld [vmem:[%s1 + $0x118] sm:$0xff]
  %v52 = vld [vmem:[%s1 + $0x120] sm:$0xff]
  %v53 = vld [vmem:[%s1 + $0x128] sm:$0xff]
  %v54 = vld [vmem:[%s1 + $0x130] sm:$0xff]
  %v55 = vld [vmem:[%s1 + $0x138] sm:$0xff]
  %v56 = vld [vmem:[%s1 + $0x140] sm:$0xff]
  %v57 = vld [vmem:[%s1 + $0x148] sm:$0xff]
  %v58 = vld [vmem:[%s1 + $0x150] sm:$0xff]
  %v59 = vld [vmem:[%s1 + $0x158] sm:$0xff]
  %v60 = vld [vmem:[%s1 + $0x160] sm:$0xff]
  %v61 = vld [vmem:[%s1 + $0x168] sm:$0xff]
  %v62 = vld [vmem:[%s1 + $0x170] sm:$0xff]
  %v63 = vld [vmem:[%s1 + $0x178] sm:$0xff]
  %v64 = vld [vmem:[%s1 + $0x180] sm:$0xff]
  %v65 = vld [vmem:[%s1 + $0x188] sm:$0xff]
  %v66 = vld [vmem:[%s1 + $0x190] sm:$0xff]
  %v67 = vld [vmem:[%s1 + $0x198] sm:$0xff]
  %v68 = vld [vmem:[%s1 + $0x1a0] sm:$0xff]
  %v69 = vld [vmem:[%s1 + $0x1a8] sm:$0xff]
  %v70 = vld [vmem:[%s1 + $0x1b0] sm:$0xff]
  %v71 = vld [vmem:[%s1 + $0x1b8] sm:$0xff]
  %v72 = vld [vmem:[%s1 + $0x1c0] sm:$0xff]
  %v73 = vld [vmem:[%s1 + $0x1c8] sm:$0xff]
  %v74 = vld [vmem:[%s1 + $0x1d0] sm:$0xff]
  %v75 = vld [vmem:[%s1 + $0x1d8] sm:$0xff]
  %v76 = vld [vmem:[%s1 + $0x1e0] sm:$0xff]
  %v77 = vld [vmem:[%s1 + $0x1e8] sm:$0xff]
  %v78 = vld [vmem:[%s1 + $0x1f0] sm:$0xff]
  %v79 = vld [vmem:[%s1 + $0x1f8] sm:$0xff]
  %v80 = vld [vmem:[%s2] sm:$0x3]
  %v82 = vlaneseq
  %v83 = vshrl.u32 %v82, 7
  %v84 = vsub.s32 0, %v83
  %v85 = vrot.slane %v80, %v84
  %v86 = vlaneseq
  %v87 = vshrl.u32 %v86, 7
  %v88 = vsub.s32 1, %v87
  %v89 = vrot.slane %v80, %v88
  %v94 = vunpack.c.l.b16 %v14
  %v95 = vunpack.c.h.b16 %v14
  %v96 = vunpack.c.l.b16 %v15
  %v97 = vunpack.c.h.b16 %v15
  %v98 = vpack.c.b16 %v94, %v94
  %v99 = vpack.c.b16 %v95, %v95
  %v100 = vpack.c.b16 %v96, %v96
  %v101 = vpack.c.b16 %v97, %v97
  %v170 = vunpack.c.l.b16 %v16
  %v171 = vunpack.c.h.b16 %v16
  %v172 = vunpack.c.l.b16 %v17
  %v173 = vunpack.c.h.b16 %v17
  %v174 = vunpack.c.l.b16 %v18
  %v175 = vunpack.c.h.b16 %v18
  %v176 = vunpack.c.l.b16 %v19
  %v177 = vunpack.c.h.b16 %v19
  %v178 = vunpack.c.l.b16 %v20
  %v179 = vunpack.c.h.b16 %v20
  %v180 = vunpack.c.l.b16 %v21
  %v181 = vunpack.c.h.b16 %v21
  %v182 = vunpack.c.l.b16 %v22
  %v183 = vunpack.c.h.b16 %v22
  %v184 = vunpack.c.l.b16 %v23
  %v185 = vunpack.c.h.b16 %v23
  %v186 = vunpack.c.l.b16 %v24
  %v187 = vunpack.c.h.b16 %v24
  %v188 = vunpack.c.l.b16 %v25
  %v189 = vunpack.c.h.b16 %v25
  %v190 = vunpack.c.l.b16 %v26
  %v191 = vunpack.c.h.b16 %v26
  %v192 = vunpack.c.l.b16 %v27
  %v193 = vunpack.c.h.b16 %v27
  %v194 = vunpack.c.l.b16 %v28
  %v195 = vunpack.c.h.b16 %v28
  %v196 = vunpack.c.l.b16 %v29
  %v197 = vunpack.c.h.b16 %v29
  %v198 = vunpack.c.l.b16 %v30
  %v199 = vunpack.c.h.b16 %v30
  %v200 = vunpack.c.l.b16 %v31
  %v201 = vunpack.c.h.b16 %v31
  %v202 = vunpack.c.l.b16 %v32
  %v203 = vunpack.c.h.b16 %v32
  %v204 = vunpack.c.l.b16 %v33
  %v205 = vunpack.c.h.b16 %v33
  %v206 = vunpack.c.l.b16 %v34
  %v207 = vunpack.c.h.b16 %v34
  %v208 = vunpack.c.l.b16 %v35
  %v209 = vunpack.c.h.b16 %v35
  %v210 = vunpack.c.l.b16 %v36
  %v211 = vunpack.c.h.b16 %v36
  %v212 = vunpack.c.l.b16 %v37
  %v213 = vunpack.c.h.b16 %v37
  %v214 = vunpack.c.l.b16 %v38
  %v215 = vunpack.c.h.b16 %v38
  %v216 = vunpack.c.l.b16 %v39
  %v217 = vunpack.c.h.b16 %v39
  %v218 = vunpack.c.l.b16 %v40
  %v219 = vunpack.c.h.b16 %v40
  %v220 = vunpack.c.l.b16 %v41
  %v221 = vunpack.c.h.b16 %v41
  %v222 = vunpack.c.l.b16 %v42
  %v223 = vunpack.c.h.b16 %v42
  %v224 = vunpack.c.l.b16 %v43
  %v225 = vunpack.c.h.b16 %v43
  %v226 = vunpack.c.l.b16 %v44
  %v227 = vunpack.c.h.b16 %v44
  %v228 = vunpack.c.l.b16 %v45
  %v229 = vunpack.c.h.b16 %v45
  %v230 = vunpack.c.l.b16 %v46
  %v231 = vunpack.c.h.b16 %v46
  %v232 = vunpack.c.l.b16 %v47
  %v233 = vunpack.c.h.b16 %v47
  %v234 = vunpack.c.l.b16 %v48
  %v235 = vunpack.c.h.b16 %v48
  %v236 = vunpack.c.l.b16 %v49
  %v237 = vunpack.c.h.b16 %v49
  %v238 = vunpack.c.l.b16 %v50
  %v239 = vunpack.c.h.b16 %v50
  %v240 = vunpack.c.l.b16 %v51
  %v241 = vunpack.c.h.b16 %v51
  %v242 = vunpack.c.l.b16 %v52
  %v243 = vunpack.c.h.b16 %v52
  %v244 = vunpack.c.l.b16 %v53
  %v245 = vunpack.c.h.b16 %v53
  %v246 = vunpack.c.l.b16 %v54
  %v247 = vunpack.c.h.b16 %v54
  %v248 = vunpack.c.l.b16 %v55
  %v249 = vunpack.c.h.b16 %v55
  %v250 = vunpack.c.l.b16 %v56
  %v251 = vunpack.c.h.b16 %v56
  %v252 = vunpack.c.l.b16 %v57
  %v253 = vunpack.c.h.b16 %v57
  %v254 = vunpack.c.l.b16 %v58
  %v255 = vunpack.c.h.b16 %v58
  %v256 = vunpack.c.l.b16 %v59
  %v257 = vunpack.c.h.b16 %v59
  %v258 = vunpack.c.l.b16 %v60
  %v259 = vunpack.c.h.b16 %v60
  %v260 = vunpack.c.l.b16 %v61
  %v261 = vunpack.c.h.b16 %v61
  %v262 = vunpack.c.l.b16 %v62
  %v263 = vunpack.c.h.b16 %v62
  %v264 = vunpack.c.l.b16 %v63
  %v265 = vunpack.c.h.b16 %v63
  %v266 = vunpack.c.l.b16 %v64
  %v267 = vunpack.c.h.b16 %v64
  %v268 = vunpack.c.l.b16 %v65
  %v269 = vunpack.c.h.b16 %v65
  %v270 = vunpack.c.l.b16 %v66
  %v271 = vunpack.c.h.b16 %v66
  %v272 = vunpack.c.l.b16 %v67
  %v273 = vunpack.c.h.b16 %v67
  %v274 = vunpack.c.l.b16 %v68
  %v275 = vunpack.c.h.b16 %v68
  %v276 = vunpack.c.l.b16 %v69
  %v277 = vunpack.c.h.b16 %v69
  %v278 = vunpack.c.l.b16 %v70
  %v279 = vunpack.c.h.b16 %v70
  %v280 = vunpack.c.l.b16 %v71
  %v281 = vunpack.c.h.b16 %v71
  %v282 = vunpack.c.l.b16 %v72
  %v283 = vunpack.c.h.b16 %v72
  %v284 = vunpack.c.l.b16 %v73
  %v285 = vunpack.c.h.b16 %v73
  %v286 = vunpack.c.l.b16 %v74
  %v287 = vunpack.c.h.b16 %v74
  %v288 = vunpack.c.l.b16 %v75
  %v289 = vunpack.c.h.b16 %v75
  %v290 = vunpack.c.l.b16 %v76
  %v291 = vunpack.c.h.b16 %v76
  %v292 = vunpack.c.l.b16 %v77
  %v293 = vunpack.c.h.b16 %v77
  %v294 = vunpack.c.l.b16 %v78
  %v295 = vunpack.c.h.b16 %v78
  %v296 = vunpack.c.l.b16 %v79
  %v297 = vunpack.c.h.b16 %v79
  %v298 = vpack.c.b16 %v172, %v170
  %v299 = vpack.c.b16 %v173, %v171
  %v300 = vpack.c.b16 %v176, %v174
  %v301 = vpack.c.b16 %v177, %v175
  %v302 = vpack.c.b16 %v180, %v178
  %v303 = vpack.c.b16 %v181, %v179
  %v304 = vpack.c.b16 %v184, %v182
  %v305 = vpack.c.b16 %v185, %v183
  %v306 = vpack.c.b16 %v188, %v186
  %v307 = vpack.c.b16 %v189, %v187
  %v308 = vpack.c.b16 %v192, %v190
  %v309 = vpack.c.b16 %v193, %v191
  %v310 = vpack.c.b16 %v196, %v194
  %v311 = vpack.c.b16 %v197, %v195
  %v312 = vpack.c.b16 %v200, %v198
  %v313 = vpack.c.b16 %v201, %v199
  %v314 = vpack.c.b16 %v204, %v202
  %v315 = vpack.c.b16 %v205, %v203
  %v316 = vpack.c.b16 %v208, %v206
  %v317 = vpack.c.b16 %v209, %v207
  %v318 = vpack.c.b16 %v212, %v210
  %v319 = vpack.c.b16 %v213, %v211
  %v320 = vpack.c.b16 %v216, %v214
  %v321 = vpack.c.b16 %v217, %v215
  %v322 = vpack.c.b16 %v220, %v218
  %v323 = vpack.c.b16 %v221, %v219
  %v324 = vpack.c.b16 %v224, %v222
  %v325 = vpack.c.b16 %v225, %v223
  %v326 = vpack.c.b16 %v228, %v226
  %v327 = vpack.c.b16 %v229, %v227
  %v328 = vpack.c.b16 %v232, %v230
  %v329 = vpack.c.b16 %v233, %v231
  %v330 = vpack.c.b16 %v236, %v234
  %v331 = vpack.c.b16 %v237, %v235
  %v332 = vpack.c.b16 %v240, %v238
  %v333 = vpack.c.b16 %v241, %v239
  %v334 = vpack.c.b16 %v244, %v242
  %v335 = vpack.c.b16 %v245, %v243
  %v336 = vpack.c.b16 %v248, %v246
  %v337 = vpack.c.b16 %v249, %v247
  %v338 = vpack.c.b16 %v252, %v250
  %v339 = vpack.c.b16 %v253, %v251
  %v340 = vpack.c.b16 %v256, %v254
  %v341 = vpack.c.b16 %v257, %v255
  %v342 = vpack.c.b16 %v260, %v258
  %v343 = vpack.c.b16 %v261, %v259
  %v344 = vpack.c.b16 %v264, %v262
  %v345 = vpack.c.b16 %v265, %v263
  %v346 = vpack.c.b16 %v268, %v266
  %v347 = vpack.c.b16 %v269, %v267
  %v348 = vpack.c.b16 %v272, %v270
  %v349 = vpack.c.b16 %v273, %v271
  %v350 = vpack.c.b16 %v276, %v274
  %v351 = vpack.c.b16 %v277, %v275
  %v352 = vpack.c.b16 %v280, %v278
  %v353 = vpack.c.b16 %v281, %v279
  %v354 = vpack.c.b16 %v284, %v282
  %v355 = vpack.c.b16 %v285, %v283
  %v356 = vpack.c.b16 %v288, %v286
  %v357 = vpack.c.b16 %v289, %v287
  %v358 = vpack.c.b16 %v292, %v290
  %v359 = vpack.c.b16 %v293, %v291
  %v360 = vpack.c.b16 %v296, %v294
  %v361 = vpack.c.b16 %v297, %v295
  %426 = vmatprep.subr.bf16.mxu0 %v313
  %427 = vmatpush1.bf16.msra.mxu0 %v312
  %428 = vmatprep.subr.bf16.mxu0 %v311
  %429 = vmatpush1.bf16.msra.mxu0 %v310
  %430 = vmatprep.subr.bf16.mxu0 %v309
  %431 = vmatpush1.bf16.msra.mxu0 %v308
  %432 = vmatprep.subr.bf16.mxu0 %v307
  %433 = vmatpush1.bf16.msra.mxu0 %v306
  %434 = vmatprep.subr.bf16.mxu0 %v305
  %435 = vmatpush1.bf16.msra.mxu0 %v304
  %436 = vmatprep.subr.bf16.mxu0 %v303
  %437 = vmatpush1.bf16.msra.mxu0 %v302
  %438 = vmatprep.subr.bf16.mxu0 %v301
  %439 = vmatpush1.bf16.msra.mxu0 %v300
  %440 = vmatprep.subr.bf16.mxu0 %v299
  %441 = vmatpush1.bf16.msra.mxu0 %v298
  %442 = vmatprep.subr.bf16.mxu0 %v329
  %443 = vmatpush2.bf16.msra.mxu0 %v328
  %444 = vmatprep.subr.bf16.mxu0 %v327
  %445 = vmatpush2.bf16.msra.mxu0 %v326
  %446 = vmatprep.subr.bf16.mxu0 %v325
  %447 = vmatpush2.bf16.msra.mxu0 %v324
  %448 = vmatprep.subr.bf16.mxu0 %v323
  %449 = vmatpush2.bf16.msra.mxu0 %v322
  %450 = vmatprep.subr.bf16.mxu0 %v321
  %451 = vmatpush2.bf16.msra.mxu0 %v320
  %452 = vmatprep.subr.bf16.mxu0 %v319
  %453 = vmatpush2.bf16.msra.mxu0 %v318
  %454 = vmatprep.subr.bf16.mxu0 %v317
  %455 = vmatpush2.bf16.msra.mxu0 %v316
  %456 = vmatprep.subr.bf16.mxu0 %v315
  %457 = vmatpush2.bf16.msra.mxu0 %v314
  %458 = vmatprep.mubr.bf16.mxu0 %v99
  %459 = vmatmul.mubr.bf16.gmra.mxu0 %v98
  %v460 = vpop.f32.mrf.mxu0
  %v461 = vadd.f32 %v85, %v460
  %v462 = vpop.f32.mrf.mxu0
  %v463 = vadd.f32 %v89, %v462
  %v464 = vpop.f32.mrf.mxu0
  %v465 = vpop.f32.mrf.mxu0
  %466 = vdwg.mxu0
  %467 = vmatprep.subr.bf16.mxu0 %v345
  %468 = vmatpush1.bf16.msra.mxu0 %v344
  %469 = vmatprep.subr.bf16.mxu0 %v343
  %470 = vmatpush1.bf16.msra.mxu0 %v342
  %471 = vmatprep.subr.bf16.mxu0 %v341
  %472 = vmatpush1.bf16.msra.mxu0 %v340
  %473 = vmatprep.subr.bf16.mxu0 %v339
  %474 = vmatpush1.bf16.msra.mxu0 %v338
  %475 = vmatprep.subr.bf16.mxu0 %v337
  %476 = vmatpush1.bf16.msra.mxu0 %v336
  %477 = vmatprep.subr.bf16.mxu0 %v335
  %478 = vmatpush1.bf16.msra.mxu0 %v334
  %479 = vmatprep.subr.bf16.mxu0 %v333
  %480 = vmatpush1.bf16.msra.mxu0 %v332
  %481 = vmatprep.subr.bf16.mxu0 %v331
  %482 = vmatpush1.bf16.msra.mxu0 %v330
  %483 = vmatprep.subr.bf16.mxu0 %v361
  %484 = vmatpush2.bf16.msra.mxu0 %v360
  %485 = vmatprep.subr.bf16.mxu0 %v359
  %486 = vmatpush2.bf16.msra.mxu0 %v358
  %487 = vmatprep.subr.bf16.mxu0 %v357
  %488 = vmatpush2.bf16.msra.mxu0 %v356
  %489 = vmatprep.subr.bf16.mxu0 %v355
  %490 = vmatpush2.bf16.msra.mxu0 %v354
  %491 = vmatprep.subr.bf16.mxu0 %v353
  %492 = vmatpush2.bf16.msra.mxu0 %v352
  %493 = vmatprep.subr.bf16.mxu0 %v351
  %494 = vmatpush2.bf16.msra.mxu0 %v350
  %495 = vmatprep.subr.bf16.mxu0 %v349
  %496 = vmatpush2.bf16.msra.mxu0 %v348
  %497 = vmatprep.subr.bf16.mxu0 %v347
  %498 = vmatpush2.bf16.msra.mxu0 %v346
  %499 = vmatprep.mubr.bf16.mxu0 %v101
  %500 = vmatmul.mubr.bf16.gmra.mxu0 %v100
  %v501 = vpop.f32.mrf.mxu0
  %v502 = vadd.f32 %v461, %v501
  %v503 = vpop.f32.mrf.mxu0
  %v504 = vadd.f32 %v463, %v503
  %v505 = vpop.f32.mrf.mxu0
  %v506 = vpop.f32.mrf.mxu0
  %507 = vdwg.mxu0
  %v508 = vpack.c.bf16 %v502, %v502
  %v509 = vpack.c.bf16 %v504, %v504
  %v512 = vunpack.c.l.b16 %v508
  %v513 = vunpack.c.l.b16 %v509
  %v514 = vpack.c.b16 %v513, %v512
  %516 = vst [vmem:[%s3] sm:$0xff] %v514
  // Predicated region
  $region14: #{cross_dual_path_forward.24} parent=0 // pred_check
    _
  $region15: #{cross_dual_path_forward.24} parent=0 // pred_check_branch
    %518 = sbr.rel (0) target = $region17
  $region16: #{cross_dual_path_forward.24} parent=0 // pred_region
    _
  $region17: #{cross_dual_path_forward.24} parent=0 // pred_fallthru
    _
  // Predicated region
  $region18: #{cross_dual_path_forward.24} parent=0 // pred_check
    _
  $region19: #{cross_dual_path_forward.24} parent=0 // pred_check_branch
    %520 = sbr.rel (0) target = $region21
  $region20: #{cross_dual_path_forward.24} parent=0 // pred_region
    _
  $region21: #{cross_dual_path_forward.24} parent=0 // pred_fallthru
    _

// kernel: cross_dual_path_forward.27
$region0: #{cross_dual_path_forward.27}
  #allocation0 [shape = 'u32[]', space=smem, size = 0x4, offset = 0x4, fixed_abs, tag = 'smem constant byte address 0x4 - core index']
  #allocation1 [shape = 'u32[144,128]{1,0:T(1,128)}', space=vmem, size = 0x12000, scoped, tag = 'internal scratch']
  %s0 = inlined_call_operand.vmem [shape: bf16[16,256], index: 0, kind: input, shape index: {}]
  %s1 = inlined_call_operand.vmem [shape: bf16[256,256], index: 1, kind: input, shape index: {}]
  %s2 = inlined_call_operand.vmem [shape: f32[1,256], index: 2, kind: input, shape index: {}]
  %s3 = inlined_call_operand.vmem [shape: bf16[16,256], index: 3, kind: output, shape index: {}]
  %s4 = sld [smem:[#allocation0]]
  $region22: #{cross_dual_path_forward.27} parent=0
    _
  %s6 = ssub.s32 1, %s4
  %s7 = scalar_select 0, %s6, %s4
  // Predicated region
  $region2: #{cross_dual_path_forward.27} parent=0 // pred_check
    _
  $region3: #{cross_dual_path_forward.27} parent=0 // pred_check_branch
    %9 = sbr.rel (0) target = $region5
  $region4: #{cross_dual_path_forward.27} parent=0 // pred_region
    _
  $region5: #{cross_dual_path_forward.27} parent=0 // pred_fallthru
    _
  // Predicated region
  $region6: #{cross_dual_path_forward.27} parent=0 // pred_check
    _
  $region7: #{cross_dual_path_forward.27} parent=0 // pred_check_branch
    %11 = sbr.rel (0) target = $region9
  $region8: #{cross_dual_path_forward.27} parent=0 // pred_region
    _
  $region9: #{cross_dual_path_forward.27} parent=0 // pred_fallthru
    _
  // Predicated region
  $region10: #{cross_dual_path_forward.27} parent=0 // pred_check
    _
  $region11: #{cross_dual_path_forward.27} parent=0 // pred_check_branch
    %13 = sbr.rel (0) target = $region13
  $region12: #{cross_dual_path_forward.27} parent=0 // pred_region
    _
  $region13: #{cross_dual_path_forward.27} parent=0 // pred_fallthru
    _
  %v14 = vld [vmem:[%s0] sm:$0xff]
  %v15 = vld [vmem:[%s0 + $0x8] sm:$0xff]
  %v16 = vld [vmem:[%s1] sm:$0xff]
  %v17 = vld [vmem:[%s1 + $0x8] sm:$0xff]
  %v18 = vld [vmem:[%s1 + $0x10] sm:$0xff]
  %v19 = vld [vmem:[%s1 + $0x18] sm:$0xff]
  %v20 = vld [vmem:[%s1 + $0x20] sm:$0xff]
  %v21 = vld [vmem:[%s1 + $0x28] sm:$0xff]
  %v22 = vld [vmem:[%s1 + $0x30] sm:$0xff]
  %v23 = vld [vmem:[%s1 + $0x38] sm:$0xff]
  %v24 = vld [vmem:[%s1 + $0x40] sm:$0xff]
  %v25 = vld [vmem:[%s1 + $0x48] sm:$0xff]
  %v26 = vld [vmem:[%s1 + $0x50] sm:$0xff]
  %v27 = vld [vmem:[%s1 + $0x58] sm:$0xff]
  %v28 = vld [vmem:[%s1 + $0x60] sm:$0xff]
  %v29 = vld [vmem:[%s1 + $0x68] sm:$0xff]
  %v30 = vld [vmem:[%s1 + $0x70] sm:$0xff]
  %v31 = vld [vmem:[%s1 + $0x78] sm:$0xff]
  %v32 = vld [vmem:[%s1 + $0x80] sm:$0xff]
  %v33 = vld [vmem:[%s1 + $0x88] sm:$0xff]
  %v34 = vld [vmem:[%s1 + $0x90] sm:$0xff]
  %v35 = vld [vmem:[%s1 + $0x98] sm:$0xff]
  %v36 = vld [vmem:[%s1 + $0xa0] sm:$0xff]
  %v37 = vld [vmem:[%s1 + $0xa8] sm:$0xff]
  %v38 = vld [vmem:[%s1 + $0xb0] sm:$0xff]
  %v39 = vld [vmem:[%s1 + $0xb8] sm:$0xff]
  %v40 = vld [vmem:[%s1 + $0xc0] sm:$0xff]
  %v41 = vld [vmem:[%s1 + $0xc8] sm:$0xff]
  %v42 = vld [vmem:[%s1 + $0xd0] sm:$0xff]
  %v43 = vld [vmem:[%s1 + $0xd8] sm:$0xff]
  %v44 = vld [vmem:[%s1 + $0xe0] sm:$0xff]
  %v45 = vld [vmem:[%s1 + $0xe8] sm:$0xff]
  %v46 = vld [vmem:[%s1 + $0xf0] sm:$0xff]
  %v47 = vld [vmem:[%s1 + $0xf8] sm:$0xff]
  %v48 = vld [vmem:[%s2] sm:$0x3]
  %v50 = vlaneseq
  %v51 = vshrl.u32 %v50, 7
  %v52 = vsub.s32 0, %v51
  %v53 = vrot.slane %v48, %v52
  %v54 = vlaneseq
  %v55 = vshrl.u32 %v54, 7
  %v56 = vsub.s32 1, %v55
  %v57 = vrot.slane %v48, %v56
  %v62 = vunpack.c.l.b16 %v14
  %v63 = vunpack.c.h.b16 %v14
  %v64 = vunpack.c.l.b16 %v15
  %v65 = vunpack.c.h.b16 %v15
  %v66 = vpack.c.b16 %v64, %v62
  %v67 = vpack.c.b16 %v65, %v63
  %v102 = vunpack.c.l.b16 %v16
  %v103 = vunpack.c.h.b16 %v16
  %v104 = vunpack.c.l.b16 %v17
  %v105 = vunpack.c.h.b16 %v17
  %v106 = vunpack.c.l.b16 %v18
  %v107 = vunpack.c.h.b16 %v18
  %v108 = vunpack.c.l.b16 %v19
  %v109 = vunpack.c.h.b16 %v19
  %v110 = vunpack.c.l.b16 %v20
  %v111 = vunpack.c.h.b16 %v20
  %v112 = vunpack.c.l.b16 %v21
  %v113 = vunpack.c.h.b16 %v21
  %v114 = vunpack.c.l.b16 %v22
  %v115 = vunpack.c.h.b16 %v22
  %v116 = vunpack.c.l.b16 %v23
  %v117 = vunpack.c.h.b16 %v23
  %v118 = vunpack.c.l.b16 %v24
  %v119 = vunpack.c.h.b16 %v24
  %v120 = vunpack.c.l.b16 %v25
  %v121 = vunpack.c.h.b16 %v25
  %v122 = vunpack.c.l.b16 %v26
  %v123 = vunpack.c.h.b16 %v26
  %v124 = vunpack.c.l.b16 %v27
  %v125 = vunpack.c.h.b16 %v27
  %v126 = vunpack.c.l.b16 %v28
  %v127 = vunpack.c.h.b16 %v28
  %v128 = vunpack.c.l.b16 %v29
  %v129 = vunpack.c.h.b16 %v29
  %v130 = vunpack.c.l.b16 %v30
  %v131 = vunpack.c.h.b16 %v30
  %v132 = vunpack.c.l.b16 %v31
  %v133 = vunpack.c.h.b16 %v31
  %v134 = vunpack.c.l.b16 %v32
  %v135 = vunpack.c.h.b16 %v32
  %v136 = vunpack.c.l.b16 %v33
  %v137 = vunpack.c.h.b16 %v33
  %v138 = vunpack.c.l.b16 %v34
  %v139 = vunpack.c.h.b16 %v34
  %v140 = vunpack.c.l.b16 %v35
  %v141 = vunpack.c.h.b16 %v35
  %v142 = vunpack.c.l.b16 %v36
  %v143 = vunpack.c.h.b16 %v36
  %v144 = vunpack.c.l.b16 %v37
  %v145 = vunpack.c.h.b16 %v37
  %v146 = vunpack.c.l.b16 %v38
  %v147 = vunpack.c.h.b16 %v38
  %v148 = vunpack.c.l.b16 %v39
  %v149 = vunpack.c.h.b16 %v39
  %v150 = vunpack.c.l.b16 %v40
  %v151 = vunpack.c.h.b16 %v40
  %v152 = vunpack.c.l.b16 %v41
  %v153 = vunpack.c.h.b16 %v41
  %v154 = vunpack.c.l.b16 %v42
  %v155 = vunpack.c.h.b16 %v42
  %v156 = vunpack.c.l.b16 %v43
  %v157 = vunpack.c.h.b16 %v43
  %v158 = vunpack.c.l.b16 %v44
  %v159 = vunpack.c.h.b16 %v44
  %v160 = vunpack.c.l.b16 %v45
  %v161 = vunpack.c.h.b16 %v45
  %v162 = vunpack.c.l.b16 %v46
  %v163 = vunpack.c.h.b16 %v46
  %v164 = vunpack.c.l.b16 %v47
  %v165 = vunpack.c.h.b16 %v47
  %v166 = vpack.c.b16 %v104, %v102
  %v167 = vpack.c.b16 %v105, %v103
  %v168 = vpack.c.b16 %v108, %v106
  %v169 = vpack.c.b16 %v109, %v107
  %v170 = vpack.c.b16 %v112, %v110
  %v171 = vpack.c.b16 %v113, %v111
  %v172 = vpack.c.b16 %v116, %v114
  %v173 = vpack.c.b16 %v117, %v115
  %v174 = vpack.c.b16 %v120, %v118
  %v175 = vpack.c.b16 %v121, %v119
  %v176 = vpack.c.b16 %v124, %v122
  %v177 = vpack.c.b16 %v125, %v123
  %v178 = vpack.c.b16 %v128, %v126
  %v179 = vpack.c.b16 %v129, %v127
  %v180 = vpack.c.b16 %v132, %v130
  %v181 = vpack.c.b16 %v133, %v131
  %v182 = vpack.c.b16 %v136, %v134
  %v183 = vpack.c.b16 %v137, %v135
  %v184 = vpack.c.b16 %v140, %v138
  %v185 = vpack.c.b16 %v141, %v139
  %v186 = vpack.c.b16 %v144, %v142
  %v187 = vpack.c.b16 %v145, %v143
  %v188 = vpack.c.b16 %v148, %v146
  %v189 = vpack.c.b16 %v149, %v147
  %v190 = vpack.c.b16 %v152, %v150
  %v191 = vpack.c.b16 %v153, %v151
  %v192 = vpack.c.b16 %v156, %v154
  %v193 = vpack.c.b16 %v157, %v155
  %v194 = vpack.c.b16 %v160, %v158
  %v195 = vpack.c.b16 %v161, %v159
  %v196 = vpack.c.b16 %v164, %v162
  %v197 = vpack.c.b16 %v165, %v163
  %230 = vmatprep.subr.bf16.mxu0 %v181
  %231 = vmatpush1.bf16.msra.mxu0 %v180
  %232 = vmatprep.subr.bf16.mxu0 %v179
  %233 = vmatpush1.bf16.msra.mxu0 %v178
  %234 = vmatprep.subr.bf16.mxu0 %v177
  %235 = vmatpush1.bf16.msra.mxu0 %v176
  %236 = vmatprep.subr.bf16.mxu0 %v175
  %237 = vmatpush1.bf16.msra.mxu0 %v174
  %238 = vmatprep.subr.bf16.mxu0 %v173
  %239 = vmatpush1.bf16.msra.mxu0 %v172
  %240 = vmatprep.subr.bf16.mxu0 %v171
  %241 = vmatpush1.bf16.msra.mxu0 %v170
  %242 = vmatprep.subr.bf16.mxu0 %v169
  %243 = vmatpush1.bf16.msra.mxu0 %v168
  %244 = vmatprep.subr.bf16.mxu0 %v167
  %245 = vmatpush1.bf16.msra.mxu0 %v166
  %246 = vmatprep.subr.bf16.mxu0 %v197
  %247 = vmatpush2.bf16.msra.mxu0 %v196
  %248 = vmatprep.subr.bf16.mxu0 %v195
  %249 = vmatpush2.bf16.msra.mxu0 %v194
  %250 = vmatprep.subr.bf16.mxu0 %v193
  %251 = vmatpush2.bf16.msra.mxu0 %v192
  %252 = vmatprep.subr.bf16.mxu0 %v191
  %253 = vmatpush2.bf16.msra.mxu0 %v190
  %254 = vmatprep.subr.bf16.mxu0 %v189
  %255 = vmatpush2.bf16.msra.mxu0 %v188
  %256 = vmatprep.subr.bf16.mxu0 %v187
  %257 = vmatpush2.bf16.msra.mxu0 %v186
  %258 = vmatprep.subr.bf16.mxu0 %v185
  %259 = vmatpush2.bf16.msra.mxu0 %v184
  %260 = vmatprep.subr.bf16.mxu0 %v183
  %261 = vmatpush2.bf16.msra.mxu0 %v182
  %262 = vmatprep.mubr.bf16.mxu0 %v67
  %263 = vmatmul.mubr.bf16.gmra.mxu0 %v66
  %v264 = vpop.f32.mrf.mxu0
  %v265 = vadd.f32 %v53, %v264
  %v266 = vpop.f32.mrf.mxu0
  %v267 = vadd.f32 %v57, %v266
  %v268 = vpop.f32.mrf.mxu0
  %v269 = vadd.f32 %v53, %v268
  %v270 = vpop.f32.mrf.mxu0
  %v271 = vadd.f32 %v57, %v270
  %272 = vdwg.mxu0
  %v273 = vpack.c.bf16 %v269, %v265
  %v274 = vpack.c.bf16 %v271, %v267
  %v277 = vunpack.c.l.b16 %v273
  %v278 = vunpack.c.l.b16 %v274
  %v279 = vunpack.c.h.b16 %v273
  %v280 = vunpack.c.h.b16 %v274
  %v281 = vpack.c.b16 %v278, %v277
  %v282 = vpack.c.b16 %v280, %v279
  %285 = vst [vmem:[%s3] sm:$0xff] %v281
  %286 = vst [vmem:[%s3 + $0x8] sm:$0xff] %v282
  // Predicated region
  $region14: #{cross_dual_path_forward.27} parent=0 // pred_check
    _
  $region15: #{cross_dual_path_forward.27} parent=0 // pred_check_branch
    %288 = sbr.rel (0) target = $region17
  $region16: #{cross_dual_path_forward.27} parent=0 // pred_region
    _
  $region17: #{cross_dual_path_forward.27} parent=0 // pred_fallthru
    _
  // Predicated region
  $region18: #{cross_dual_path_forward.27} parent=0 // pred_check
    _
  $region19: #{cross_dual_path_forward.27} parent=0 // pred_check_branch
    %290 = sbr.rel (0) target = $region21
  $region20: #{cross_dual_path_forward.27} parent=0 // pred_region
    _
  $region21: #{cross_dual_path_forward.27} parent=0 // pred_fallthru
    _

// kernel: cross_dual_path_forward.16
$region0: #{cross_dual_path_forward.16}
  #allocation0 [shape = 'u32[]', space=smem, size = 0x4, offset = 0x4, fixed_abs, tag = 'smem constant byte address 0x4 - core index']
  #allocation1 [shape = 'u32[144,128]{1,0:T(1,128)}', space=vmem, size = 0x12000, scoped, tag = 'internal scratch']
  %s0 = inlined_call_operand.vmem [shape: f32[2,24,64], index: 0, kind: input, shape index: {}]
  %s1 = inlined_call_operand.vmem [shape: f32[2,16,64], index: 1, kind: output, shape index: {}]
  %s2 = sld [smem:[#allocation0]]
  $region37: #{cross_dual_path_forward.16} parent=0
    _
  %s4 = ssub.s32 1, %s2
  %s5 = scalar_select 0, %s4, %s2
  loop: start=0, step=1, limit=4
  $region2: #{cross_dual_path_forward.16} parent=0 // loop_pre_header
    _
  $region3: #{cross_dual_path_forward.16} parent=0 // loop_header
    %s7 = sphi 0, %s11
    %p8 = scmp.ge.s32.totalorder %s7, 4
    %s14 = sphi 0, %s26
    %s15 = sphi 0, %s22
    %s16 = sphi 0, %s14
    %s17 = sphi 0, %s15
    %s18 = sphi 0, %s16
    %s19 = sphi 0, %s17
    %s31 = sphi 0, %s33
    %s34 = sphi 0, %s31
    %s35 = sphi 0, %s34
    %s51 = sphi 0, %s35
    %s59 = sphi 0, %s61
    %s62 = sphi 0, %s59
    %s63 = sphi 0, %s62
    %s79 = sphi 0, %s63
  $region4: #{cross_dual_path_forward.16} parent=0 // loop_header_branch
    %10 = sbr.rel (%p8) target = $region8
  $region5: #{cross_dual_path_forward.16} parent=0 // loop_body
    %s12 = ssub.s32 %s7, 1
    %s13 = ssub.s32 %s7, 2
    %s20 = sadd.s32 1, %s15
    %p21 = scmp.ge.s32.totalorder %s20, 1
    %s22 = scalar_select %p21, 0, %s20
    %s23 = sadd.s32 1, %s14
    %s24 = scalar_select %p21, %s23, %s14
    %p25 = scmp.ge.s32.totalorder %s24, 2
    %s26 = scalar_select %p25, 0, %s24
    %s27 = ssub.s32 %s14, %s26
    %s28 = ssub.s32 %s15, %s22
    %s29 = sor.u32 %s27, %s28
    %p30 = scmp.eq.s32.totalorder %s29, 0
    %s32 = sadd.s32 %s31, 1
    %s33 = scalar_select %p30, %s31, %s32
    %p36 = pneg %p30
    %p37 = scmp.eq.s32.totalorder %s7, 1
    %p38 = por %p36, %p37
    %p39 = scmp.ne.s32.totalorder %s31, %s34
    %p40 = scmp.eq.s32.totalorder %s7, 0
    %p41 = por %p39, %p40
    %p42 = scmp.ne.s32.totalorder %s31, %s34
    %p43 = scmp.eq.s32.totalorder %s12, 1
    %p44 = por %p42, %p43
    %p45 = scmp.ne.s32.totalorder %s34, %s35
    %p46 = scmp.eq.s32.totalorder %s12, 0
    %p47 = por %p45, %p46
    %p48 = scmp.ne.s32.totalorder %s34, %s35
    %p49 = scmp.eq.s32.totalorder %s13, 1
    %p50 = por %p48, %p49
    %p52 = scmp.ne.s32.totalorder %s35, %s51
    %p53 = scmp.eq.s32.totalorder %s13, 0
    %p54 = por %p52, %p53
    %s55 = ssub.s32 %s14, %s26
    %s56 = ssub.s32 %s15, %s22
    %s57 = sor.u32 %s55, %s56
    %p58 = scmp.eq.s32.totalorder %s57, 0
    %s60 = sadd.s32 %s59, 1
    %s61 = scalar_select %p58, %s59, %s60
    %p64 = pneg %p58
    %p65 = scmp.eq.s32.totalorder %s7, 1
    %p66 = por %p64, %p65
    %p67 = scmp.ne.s32.totalorder %s59, %s62
    %p68 = scmp.eq.s32.totalorder %s7, 0
    %p69 = por %p67, %p68
    %p70 = scmp.ne.s32.totalorder %s59, %s62
    %p71 = scmp.eq.s32.totalorder %s12, 1
    %p72 = por %p70, %p71
    %p73 = scmp.ne.s32.totalorder %s62, %s63
    %p74 = scmp.eq.s32.totalorder %s12, 0
    %p75 = por %p73, %p74
    %p76 = scmp.ne.s32.totalorder %s62, %s63
    %p77 = scmp.eq.s32.totalorder %s13, 1
    %p78 = por %p76, %p77
    %p80 = scmp.ne.s32.totalorder %s63, %s79
    %p81 = scmp.eq.s32.totalorder %s13, 0
    %p82 = por %p80, %p81
    %p83 = scmp.le.s32.totalorder 1, %s7
    %p84 = scmp.lt.s32.totalorder %s7, 3
    %p85 = pnand %p83, %p84
    %p86 = pneg %p85
    // Predicated region
    $region9: #{cross_dual_path_forward.16} parent=5 // pred_check
      _
    $region10: #{cross_dual_path_forward.16} parent=5 // pred_check_branch
      %88 = sbr.rel (%p85) target = $region12
    $region11: #{cross_dual_path_forward.16} parent=5 // pred_region
      %s89 = ssub.s32 %s7, 1
    $region12: #{cross_dual_path_forward.16} parent=5 // pred_fallthru
      _
    %p90 = scmp.lt.s32.totalorder %s7, 2
    // Predicated region
    $region13: #{cross_dual_path_forward.16} parent=5 // pred_check
      %p91 = pneg %p90
    $region14: #{cross_dual_path_forward.16} parent=5 // pred_check_branch
      %93 = sbr.rel (%p91) target = $region16
    $region15: #{cross_dual_path_forward.16} parent=5 // pred_region
      // Predicated region
      $region17: #{cross_dual_path_forward.16} parent=15 // pred_check
        %p94 = pneg %p41
      $region18: #{cross_dual_path_forward.16} parent=15 // pred_check_branch
        %96 = sbr.rel (%p94) target = $region20
      $region19: #{cross_dual_path_forward.16} parent=15 // pred_region
        %s97 = smul.u32 3, %s15
        %p98 = scmp.lt.s32.totalorder %s14, 1
        %s99 = scalar_select %p98, %s14, 1
        %p100 = scmp.lt.s32.totalorder %s97, 2
        %s101 = scalar_select %p100, %s97, 2
        %s102 = smul.addr %s99, 3
        %s103 = sadd.s32 %s101, %s102
        %s104 = smul.addr %s103, 8
        %s105 = scalar_lea.vmem %s0, %s104
        %s106 = smul.u32 3, %s15
      $region20: #{cross_dual_path_forward.16} parent=15 // pred_fallthru
        _
    $region16: #{cross_dual_path_forward.16} parent=5 // pred_fallthru
      _
    %p107 = scmp.le.s32.totalorder 1, %s7
    %p108 = scmp.lt.s32.totalorder %s7, 3
    %p109 = pnand %p107, %p108
    %p110 = pneg %p109
    // Predicated region
    $region21: #{cross_dual_path_forward.16} parent=5 // pred_check
      _
    $region22: #{cross_dual_path_forward.16} parent=5 // pred_check_branch
      %112 = sbr.rel (%p109) target = $region24
    $region23: #{cross_dual_path_forward.16} parent=5 // pred_region
      %s113 = ssub.s32 %s7, 1
      %s114 = smul.u32 3, %s17
      %p115 = scmp.lt.s32.totalorder %s16, 1
      %s116 = scalar_select %p115, %s16, 1
      %p117 = scmp.lt.s32.totalorder %s114, 2
      %s118 = scalar_select %p117, %s114, 2
      %s119 = smul.addr %s116, 3
      %s120 = sadd.s32 %s118, %s119
      %s121 = smul.addr %s120, 8
      %s122 = scalar_lea.vmem %s0, %s121
      %p123 = pneg %p47
      %p124 = pneg %p44
      %p125 = pneg %p75
      %p126 = pneg %p72
      %s127 = smul.u32 2, %s17
      %p128 = scmp.lt.s32.totalorder %s16, 1
      %s129 = scalar_select %p128, %s16, 1
      %p130 = scmp.lt.s32.totalorder %s127, 1
      %s131 = scalar_select %p130, %s127, 1
      %s132 = smul.addr %s129, 2
      %s133 = sadd.s32 %s131, %s132
      %s134 = smul.addr %s133, 8
      %s135 = scalar_lea.vmem %s1, %s134
      %s136 = smul.u32 3, %s17
      %p137 = scmp.lt.s32.totalorder %s16, 1
      %s138 = scalar_select %p137, %s16, 1
      %p139 = scmp.lt.s32.totalorder %s136, 2
      %s140 = scalar_select %p139, %s136, 2
      %s141 = smul.addr %s138, 3
      %s142 = sadd.s32 %s140, %s141
      %s143 = smul.addr %s142, 8
      %s144 = scalar_lea.vmem %s0, %s143
      %s145 = smul.u32 3, %s17
      %s146 = smul.u32 2, %s17
      %p147 = scmp.lt.s32.totalorder %s16, 1
      %s148 = scalar_select %p147, %s16, 1
      %p149 = scmp.lt.s32.totalorder %s146, 1
      %s150 = scalar_select %p149, %s146, 1
      %s151 = smul.addr %s148, 2
      %s152 = sadd.s32 %s150, %s151
      %s153 = smul.addr %s152, 8
      %s154 = scalar_lea.vmem %s1, %s153
      %s155 = smul.u32 2, %s17
      %v156 = vld [vmem:[%s144] sm:$0xff]
      %v157 = vld [vmem:[%s144 + $0x8] sm:$0xff]
      %v158 = vld [vmem:[%s144 + $0x10] sm:$0xff]
      %vm159 = vcmask 523264
      %v160 = vsel %vm159, %v156, 0.0
      %v161 = vsel %vm159, %v157, 0.0
      %v162 = vadd.f32 %v160, %v161
      %v163 = vsel %vm159, %v158, 0.0
      %v164 = vadd.f32 %v162, %v163
      %v165 = vmul.f32 %v156, %v156
      %v166 = vmul.f32 %v157, %v157
      %v167 = vmul.f32 %v158, %v158
      %v168 = vsel %vm159, %v165, 0.0
      %v169 = vsel %vm159, %v166, 0.0
      %v170 = vadd.f32 %v168, %v169
      %v171 = vsel %vm159, %v167, 0.0
      %v172 = vadd.f32 %v170, %v171
      %173 = vst.msk [vmem:[%s154] sm:$0xff] %vm159, %v164
      %174 = vst.msk [vmem:[%s154 + $0x8] sm:$0xff] %vm159, %v172
      %s175 = smul.u32 2, %s17
      %p176 = scmp.lt.s32.totalorder %s16, 1
      %s177 = scalar_select %p176, %s16, 1
      %p178 = scmp.lt.s32.totalorder %s175, 1
      %s179 = scalar_select %p178, %s175, 1
      %s180 = smul.addr %s177, 2
      %s181 = sadd.s32 %s179, %s180
      %s182 = smul.addr %s181, 8
      %s183 = scalar_lea.vmem %s1, %s182
      // Predicated region
      $region25: #{cross_dual_path_forward.16} parent=23 // pred_check
        %p184 = pneg %p72
      $region26: #{cross_dual_path_forward.16} parent=23 // pred_check_branch
        %186 = sbr.rel (%p184) target = $region28
      $region27: #{cross_dual_path_forward.16} parent=23 // pred_region
        %s187 = smul.u32 2, %s17
      $region28: #{cross_dual_path_forward.16} parent=23 // pred_fallthru
        _
    $region24: #{cross_dual_path_forward.16} parent=5 // pred_fallthru
      _
    %p188 = scmp.le.s32.totalorder 2, %s7
    // Predicated region
    $region29: #{cross_dual_path_forward.16} parent=5 // pred_check
      %p189 = pneg %p188
    $region30: #{cross_dual_path_forward.16} parent=5 // pred_check_branch
      %191 = sbr.rel (%p189) target = $region32
    $region31: #{cross_dual_path_forward.16} parent=5 // pred_region
      %s192 = ssub.s32 %s7, 2
      // Predicated region
      $region33: #{cross_dual_path_forward.16} parent=31 // pred_check
        %p193 = pneg %p78
      $region34: #{cross_dual_path_forward.16} parent=31 // pred_check_branch
        %195 = sbr.rel (%p193) target = $region36
      $region35: #{cross_dual_path_forward.16} parent=31 // pred_region
        %s196 = smul.u32 2, %s19
        %p197 = scmp.lt.s32.totalorder %s18, 1
        %s198 = scalar_select %p197, %s18, 1
        %p199 = scmp.lt.s32.totalorder %s196, 1
        %s200 = scalar_select %p199, %s196, 1
        %s201 = smul.addr %s198, 2
        %s202 = sadd.s32 %s200, %s201
        %s203 = smul.addr %s202, 8
        %s204 = scalar_lea.vmem %s1, %s203
      $region36: #{cross_dual_path_forward.16} parent=31 // pred_fallthru
        _
    $region32: #{cross_dual_path_forward.16} parent=5 // pred_fallthru
      _
  $region6: #{cross_dual_path_forward.16} parent=0 // loop_footer
    %s11 = sadd.s32 1, %s7
  $region7: #{cross_dual_path_forward.16} parent=0 // loop_footer_branch
    %6 = sbr.rel target = $region3
  $region8: #{cross_dual_path_forward.16} parent=0 // loop_exit
    _

// kernel: cross_dual_path_forward.17
$region0: #{cross_dual_path_forward.17}
  #allocation0 [shape = 'u32[]', space=smem, size = 0x4, offset = 0x4, fixed_abs, tag = 'smem constant byte address 0x4 - core index']
  #allocation1 [shape = 'u32[144,128]{1,0:T(1,128)}', space=vmem, size = 0x12000, scoped, tag = 'internal scratch']
  %s0 = inlined_call_operand.vmem [shape: f32[2,24,64], index: 0, kind: input, shape index: {}]
  %s1 = inlined_call_operand.vmem [shape: f32[2,1,64], index: 1, kind: input, shape index: {}]
  %s2 = inlined_call_operand.vmem [shape: f32[2,1,64], index: 2, kind: input, shape index: {}]
  %s3 = inlined_call_operand.vmem [shape: bf16[2,24,64], index: 3, kind: output, shape index: {}]
  %s4 = sld [smem:[#allocation0]]
  $region45: #{cross_dual_path_forward.17} parent=0
    _
  %s6 = ssub.s32 1, %s4
  %s7 = scalar_select 0, %s6, %s4
  loop: start=0, step=1, limit=4
  $region2: #{cross_dual_path_forward.17} parent=0 // loop_pre_header
    _
  $region3: #{cross_dual_path_forward.17} parent=0 // loop_header
    %s9 = sphi 0, %s13
    %p10 = scmp.ge.s32.totalorder %s9, 4
    %s16 = sphi 0, %s28
    %s17 = sphi 0, %s24
    %s18 = sphi 0, %s16
    %s19 = sphi 0, %s17
    %s20 = sphi 0, %s18
    %s21 = sphi 0, %s19
    %s33 = sphi 0, %s35
    %s36 = sphi 0, %s33
    %s37 = sphi 0, %s36
    %s53 = sphi 0, %s37
    %s59 = sphi 0, %s61
    %s62 = sphi 0, %s59
    %s63 = sphi 0, %s62
    %s79 = sphi 0, %s63
    %s85 = sphi 0, %s87
    %s88 = sphi 0, %s85
    %s89 = sphi 0, %s88
    %s105 = sphi 0, %s89
    %s113 = sphi 0, %s115
    %s116 = sphi 0, %s113
    %s117 = sphi 0, %s116
    %s133 = sphi 0, %s117
  $region4: #{cross_dual_path_forward.17} parent=0 // loop_header_branch
    %12 = sbr.rel (%p10) target = $region8
  $region5: #{cross_dual_path_forward.17} parent=0 // loop_body
    %s14 = ssub.s32 %s9, 1
    %s15 = ssub.s32 %s9, 2
    %s22 = sadd.s32 1, %s17
    %p23 = scmp.ge.s32.totalorder %s22, 1
    %s24 = scalar_select %p23, 0, %s22
    %s25 = sadd.s32 1, %s16
    %s26 = scalar_select %p23, %s25, %s16
    %p27 = scmp.ge.s32.totalorder %s26, 2
    %s28 = scalar_select %p27, 0, %s26
    %s29 = ssub.s32 %s16, %s28
    %s30 = ssub.s32 %s17, %s24
    %s31 = sor.u32 %s29, %s30
    %p32 = scmp.eq.s32.totalorder %s31, 0
    %s34 = sadd.s32 %s33, 1
    %s35 = scalar_select %p32, %s33, %s34
    %p38 = pneg %p32
    %p39 = scmp.eq.s32.totalorder %s9, 1
    %p40 = por %p38, %p39
    %p41 = scmp.ne.s32.totalorder %s33, %s36
    %p42 = scmp.eq.s32.totalorder %s9, 0
    %p43 = por %p41, %p42
    %p44 = scmp.ne.s32.totalorder %s33, %s36
    %p45 = scmp.eq.s32.totalorder %s14, 1
    %p46 = por %p44, %p45
    %p47 = scmp.ne.s32.totalorder %s36, %s37
    %p48 = scmp.eq.s32.totalorder %s14, 0
    %p49 = por %p47, %p48
    %p50 = scmp.ne.s32.totalorder %s36, %s37
    %p51 = scmp.eq.s32.totalorder %s15, 1
    %p52 = por %p50, %p51
    %p54 = scmp.ne.s32.totalorder %s37, %s53
    %p55 = scmp.eq.s32.totalorder %s15, 0
    %p56 = por %p54, %p55
    %s57 = ssub.s32 %s16, %s28
    %p58 = scmp.eq.s32.totalorder %s57, 0
    %s60 = sadd.s32 %s59, 1
    %s61 = scalar_select %p58, %s59, %s60
    %p64 = pneg %p58
    %p65 = scmp.eq.s32.totalorder %s9, 1
    %p66 = por %p64, %p65
    %p67 = scmp.ne.s32.totalorder %s59, %s62
    %p68 = scmp.eq.s32.totalorder %s9, 0
    %p69 = por %p67, %p68
    %p70 = scmp.ne.s32.totalorder %s59, %s62
    %p71 = scmp.eq.s32.totalorder %s14, 1
    %p72 = por %p70, %p71
    %p73 = scmp.ne.s32.totalorder %s62, %s63
    %p74 = scmp.eq.s32.totalorder %s14, 0
    %p75 = por %p73, %p74
    %p76 = scmp.ne.s32.totalorder %s62, %s63
    %p77 = scmp.eq.s32.totalorder %s15, 1
    %p78 = por %p76, %p77
    %p80 = scmp.ne.s32.totalorder %s63, %s79
    %p81 = scmp.eq.s32.totalorder %s15, 0
    %p82 = por %p80, %p81
    %s83 = ssub.s32 %s16, %s28
    %p84 = scmp.eq.s32.totalorder %s83, 0
    %s86 = sadd.s32 %s85, 1
    %s87 = scalar_select %p84, %s85, %s86
    %p90 = pneg %p84
    %p91 = scmp.eq.s32.totalorder %s9, 1
    %p92 = por %p90, %p91
    %p93 = scmp.ne.s32.totalorder %s85, %s88
    %p94 = scmp.eq.s32.totalorder %s9, 0
    %p95 = por %p93, %p94
    %p96 = scmp.ne.s32.totalorder %s85, %s88
    %p97 = scmp.eq.s32.totalorder %s14, 1
    %p98 = por %p96, %p97
    %p99 = scmp.ne.s32.totalorder %s88, %s89
    %p100 = scmp.eq.s32.totalorder %s14, 0
    %p101 = por %p99, %p100
    %p102 = scmp.ne.s32.totalorder %s88, %s89
    %p103 = scmp.eq.s32.totalorder %s15, 1
    %p104 = por %p102, %p103
    %p106 = scmp.ne.s32.totalorder %s89, %s105
    %p107 = scmp.eq.s32.totalorder %s15, 0
    %p108 = por %p106, %p107
    %s109 = ssub.s32 %s16, %s28
    %s110 = ssub.s32 %s17, %s24
    %s111 = sor.u32 %s109, %s110
    %p112 = scmp.eq.s32.totalorder %s111, 0
    %s114 = sadd.s32 %s113, 1
    %s115 = scalar_select %p112, %s113, %s114
    %p118 = pneg %p112
    %p119 = scmp.eq.s32.totalorder %s9, 1
    %p120 = por %p118, %p119
    %p121 = scmp.ne.s32.totalorder %s113, %s116
    %p122 = scmp.eq.s32.totalorder %s9, 0
    %p123 = por %p121, %p122
    %p124 = scmp.ne.s32.totalorder %s113, %s116
    %p125 = scmp.eq.s32.totalorder %s14, 1
    %p126 = por %p124, %p125
    %p127 = scmp.ne.s32.totalorder %s116, %s117
    %p128 = scmp.eq.s32.totalorder %s14, 0
    %p129 = por %p127, %p128
    %p130 = scmp.ne.s32.totalorder %s116, %s117
    %p131 = scmp.eq.s32.totalorder %s15, 1
    %p132 = por %p130, %p131
    %p134 = scmp.ne.s32.totalorder %s117, %s133
    %p135 = scmp.eq.s32.totalorder %s15, 0
    %p136 = por %p134, %p135
    %p137 = scmp.le.s32.totalorder 1, %s9
    %p138 = scmp.lt.s32.totalorder %s9, 3
    %p139 = pnand %p137, %p138
    %p140 = pneg %p139
    // Predicated region
    $region9: #{cross_dual_path_forward.17} parent=5 // pred_check
      _
    $region10: #{cross_dual_path_forward.17} parent=5 // pred_check_branch
      %142 = sbr.rel (%p139) target = $region12
    $region11: #{cross_dual_path_forward.17} parent=5 // pred_region
      %s143 = ssub.s32 %s9, 1
    $region12: #{cross_dual_path_forward.17} parent=5 // pred_fallthru
      _
    %p144 = scmp.lt.s32.totalorder %s9, 2
    // Predicated region
    $region13: #{cross_dual_path_forward.17} parent=5 // pred_check
      %p145 = pneg %p144
    $region14: #{cross_dual_path_forward.17} parent=5 // pred_check_branch
      %147 = sbr.rel (%p145) target = $region16
    $region15: #{cross_dual_path_forward.17} parent=5 // pred_region
      // Predicated region
      $region17: #{cross_dual_path_forward.17} parent=15 // pred_check
        %p148 = pneg %p43
      $region18: #{cross_dual_path_forward.17} parent=15 // pred_check_branch
        %150 = sbr.rel (%p148) target = $region20
      $region19: #{cross_dual_path_forward.17} parent=15 // pred_region
        %s151 = smul.u32 3, %s17
        %p152 = scmp.lt.s32.totalorder %s16, 1
        %s153 = scalar_select %p152, %s16, 1
        %p154 = scmp.lt.s32.totalorder %s151, 2
        %s155 = scalar_select %p154, %s151, 2
        %s156 = smul.addr %s153, 3
        %s157 = sadd.s32 %s155, %s156
        %s158 = smul.addr %s157, 8
        %s159 = scalar_lea.vmem %s0, %s158
        %s160 = smul.u32 3, %s17
      $region20: #{cross_dual_path_forward.17} parent=15 // pred_fallthru
        _
      // Predicated region
      $region21: #{cross_dual_path_forward.17} parent=15 // pred_check
        %p161 = pneg %p69
      $region22: #{cross_dual_path_forward.17} parent=15 // pred_check_branch
        %163 = sbr.rel (%p161) target = $region24
      $region23: #{cross_dual_path_forward.17} parent=15 // pred_region
        %p164 = scmp.lt.s32.totalorder %s16, 1
        %s165 = scalar_select %p164, %s16, 1
        %s166 = scalar_lea.vmem %s1, %s165
      $region24: #{cross_dual_path_forward.17} parent=15 // pred_fallthru
        _
      // Predicated region
      $region25: #{cross_dual_path_forward.17} parent=15 // pred_check
        %p167 = pneg %p95
      $region26: #{cross_dual_path_forward.17} parent=15 // pred_check_branch
        %169 = sbr.rel (%p167) target = $region28
      $region27: #{cross_dual_path_forward.17} parent=15 // pred_region
        %p170 = scmp.lt.s32.totalorder %s16, 1
        %s171 = scalar_select %p170, %s16, 1
        %s172 = scalar_lea.vmem %s2, %s171
      $region28: #{cross_dual_path_forward.17} parent=15 // pred_fallthru
        _
    $region16: #{cross_dual_path_forward.17} parent=5 // pred_fallthru
      _
    %p173 = scmp.le.s32.totalorder 1, %s9
    %p174 = scmp.lt.s32.totalorder %s9, 3
    %p175 = pnand %p173, %p174
    %p176 = pneg %p175
    // Predicated region
    $region29: #{cross_dual_path_forward.17} parent=5 // pred_check
      _
    $region30: #{cross_dual_path_forward.17} parent=5 // pred_check_branch
      %178 = sbr.rel (%p175) target = $region32
    $region31: #{cross_dual_path_forward.17} parent=5 // pred_region
      %s179 = ssub.s32 %s9, 1
      %s180 = smul.u32 3, %s19
      %p181 = scmp.lt.s32.totalorder %s18, 1
      %s182 = scalar_select %p181, %s18, 1
      %p183 = scmp.lt.s32.totalorder %s180, 2
      %s184 = scalar_select %p183, %s180, 2
      %s185 = smul.addr %s182, 3
      %s186 = sadd.s32 %s184, %s185
      %s187 = smul.addr %s186, 8
      %s188 = scalar_lea.vmem %s0, %s187
      %p189 = pneg %p49
      %p190 = pneg %p46
      %p191 = scmp.lt.s32.totalorder %s18, 1
      %s192 = scalar_select %p191, %s18, 1
      %s193 = scalar_lea.vmem %s1, %s192
      %p194 = pneg %p75
      %p195 = pneg %p72
      %p196 = scmp.lt.s32.totalorder %s18, 1
      %s197 = scalar_select %p196, %s18, 1
      %s198 = scalar_lea.vmem %s2, %s197
      %p199 = pneg %p101
      %p200 = pneg %p98
      %p201 = pneg %p129
      %p202 = pneg %p126
      %s203 = smul.u32 3, %s19
      %p204 = scmp.lt.s32.totalorder %s18, 1
      %s205 = scalar_select %p204, %s18, 1
      %p206 = scmp.lt.s32.totalorder %s203, 2
      %s207 = scalar_select %p206, %s203, 2
      %s208 = smul.addr %s205, 3
      %s209 = sadd.s32 %s207, %s208
      %s210 = smul.addr %s209, 4
      %s211 = scalar_lea.vmem %s3, %s210
      %s212 = smul.u32 3, %s19
      %p213 = scmp.lt.s32.totalorder %s18, 1
      %s214 = scalar_select %p213, %s18, 1
      %p215 = scmp.lt.s32.totalorder %s212, 2
      %s216 = scalar_select %p215, %s212, 2
      %s217 = smul.addr %s214, 3
      %s218 = sadd.s32 %s216, %s217
      %s219 = smul.addr %s218, 8
      %s220 = scalar_lea.vmem %s0, %s219
      %s221 = smul.u32 3, %s19
      %p222 = scmp.lt.s32.totalorder %s18, 1
      %s223 = scalar_select %p222, %s18, 1
      %s224 = scalar_lea.vmem %s1, %s223
      %p225 = scmp.lt.s32.totalorder %s18, 1
      %s226 = scalar_select %p225, %s18, 1
      %s227 = scalar_lea.vmem %s2, %s226
      %s228 = smul.u32 3, %s19
      %p229 = scmp.lt.s32.totalorder %s18, 1
      %s230 = scalar_select %p229, %s18, 1
      %p231 = scmp.lt.s32.totalorder %s228, 2
      %s232 = scalar_select %p231, %s228, 2
      %s233 = smul.addr %s230, 3
      %s234 = sadd.s32 %s232, %s233
      %s235 = smul.addr %s234, 4
      %s236 = scalar_lea.vmem %s3, %s235
      %s237 = smul.u32 3, %s19
      %v238 = vld [vmem:[%s220] sm:$0xff]
      %v239 = vld [vmem:[%s220 + $0x8] sm:$0xff]
      %v240 = vld [vmem:[%s220 + $0x10] sm:$0xff]
      %v241 = vld [vmem:[%s224] sm:$0x1]
      %v243 = vlaneseq
      %v244 = vshrl.u32 %v243, 7
      %v245 = vsub.s32 0, %v244
      %v246 = vrot.slane %v241, %v245
      %v248 = vmul.f32 %v238, %v246
      %v249 = vmul.f32 %v239, %v246
      %v250 = vmul.f32 %v240, %v246
      %v251 = vld [vmem:[%s227] sm:$0x1]
      %v253 = vlaneseq
      %v254 = vshrl.u32 %v253, 7
      %v255 = vsub.s32 0, %v254
      %v256 = vrot.slane %v251, %v255
      %v258 = vadd.f32 %v248, %v256
      %v259 = vadd.f32 %v249, %v256
      %v260 = vadd.f32 %v250, %v256
      %v261 = vpack.c.bf16 %v259, %v258
      %v262 = vpack.c.bf16 %v260, %v260
      %v265 = vunpack.c.l.b16 %v261
      %v266 = vunpack.c.h.b16 %v261
      %v267 = vunpack.c.l.b16 %v262
      %v268 = vpack.c.b16 %v265, %v265
      %v269 = vpack.c.b16 %v266, %v266
      %v270 = vpack.c.b16 %v267, %v267
      %vm274 = vcmask 519168
      %275 = vst.msk [vmem:[%s236] sm:$0xf] %vm274, %v268
      %276 = vst.msk [vmem:[%s236 + $0x4] sm:$0xf] %vm274, %v269
      %277 = vst.msk [vmem:[%s236 + $0x8] sm:$0xf] %vm274, %v270
      %s278 = smul.u32 3, %s19
      %p279 = scmp.lt.s32.totalorder %s18, 1
      %s280 = scalar_select %p279, %s18, 1
      %p281 = scmp.lt.s32.totalorder %s278, 2
      %s282 = scalar_select %p281, %s278, 2
      %s283 = smul.addr %s280, 3
      %s284 = sadd.s32 %s282, %s283
      %s285 = smul.addr %s284, 4
      %s286 = scalar_lea.vmem %s3, %s285
      // Predicated region
      $region33: #{cross_dual_path_forward.17} parent=31 // pred_check
        %p287 = pneg %p126
      $region34: #{cross_dual_path_forward.17} parent=31 // pred_check_branch
        %289 = sbr.rel (%p287) target = $region36
      $region35: #{cross_dual_path_forward.17} parent=31 // pred_region
        %s290 = smul.u32 3, %s19
      $region36: #{cross_dual_path_forward.17} parent=31 // pred_fallthru
        _
    $region32: #{cross_dual_path_forward.17} parent=5 // pred_fallthru
      _
    %p291 = scmp.le.s32.totalorder 2, %s9
    // Predicated region
    $region37: #{cross_dual_path_forward.17} parent=5 // pred_check
      %p292 = pneg %p291
    $region38: #{cross_dual_path_forward.17} parent=5 // pred_check_branch
      %294 = sbr.rel (%p292) target = $region40
    $region39: #{cross_dual_path_forward.17} parent=5 // pred_region
      %s295 = ssub.s32 %s9, 2
      // Predicated region
      $region41: #{cross_dual_path_forward.17} parent=39 // pred_check
        %p296 = pneg %p132
      $region42: #{cross_dual_path_forward.17} parent=39 // pred_check_branch
        %298 = sbr.rel (%p296) target = $region44
      $region43: #{cross_dual_path_forward.17} parent=39 // pred_region
        %s299 = smul.u32 3, %s21
        %p300 = scmp.lt.s32.totalorder %s20, 1
        %s301 = scalar_select %p300, %s20, 1
        %p302 = scmp.lt.s32.totalorder %s299, 2
        %s303 = scalar_select %p302, %s299, 2
        %s304 = smul.addr %s301, 3
        %s305 = sadd.s32 %s303, %s304
        %s306 = smul.addr %s305, 4
        %s307 = scalar_lea.vmem %s3, %s306
      $region44: #{cross_dual_path_forward.17} parent=39 // pred_fallthru
        _
    $region40: #{cross_dual_path_forward.17} parent=5 // pred_fallthru
      _
  $region6: #{cross_dual_path_forward.17} parent=0 // loop_footer
    %s13 = sadd.s32 1, %s9
  $region7: #{cross_dual_path_forward.17} parent=0 // loop_footer_branch
    %8 = sbr.rel target = $region3
  $region8: #{cross_dual_path_forward.17} parent=0 // loop_exit
    _

// kernel: cross_dual_path_forward.18
$region0: #{cross_dual_path_forward.18}
  #allocation0 [shape = 'u32[]', space=smem, size = 0x4, offset = 0x4, fixed_abs, tag = 'smem constant byte address 0x4 - core index']
  #allocation1 [shape = 'u32[144,128]{1,0:T(1,128)}', space=vmem, size = 0x12000, scoped, tag = 'internal scratch']
  %s0 = inlined_call_operand.vmem [shape: bf16[40,64], index: 0, kind: input, shape index: {}]
  %s1 = inlined_call_operand.vmem [shape: bf16[64,256], index: 1, kind: input, shape index: {}]
  %s2 = inlined_call_operand.vmem [shape: f32[1,256], index: 2, kind: input, shape index: {}]
  %s3 = inlined_call_operand.vmem [shape: bf16[40,256], index: 3, kind: output, shape index: {}]
  %s4 = sld [smem:[#allocation0]]
  $region22: #{cross_dual_path_forward.18} parent=0
    _
  %s6 = ssub.s32 1, %s4
  %s7 = scalar_select 0, %s6, %s4
  // Predicated region
  $region2: #{cross_dual_path_forward.18} parent=0 // pred_check
    _
  $region3: #{cross_dual_path_forward.18} parent=0 // pred_check_branch
    %9 = sbr.rel (0) target = $region5
  $region4: #{cross_dual_path_forward.18} parent=0 // pred_region
    _
  $region5: #{cross_dual_path_forward.18} parent=0 // pred_fallthru
    _
  // Predicated region
  $region6: #{cross_dual_path_forward.18} parent=0 // pred_check
    _
  $region7: #{cross_dual_path_forward.18} parent=0 // pred_check_branch
    %11 = sbr.rel (0) target = $region9
  $region8: #{cross_dual_path_forward.18} parent=0 // pred_region
    _
  $region9: #{cross_dual_path_forward.18} parent=0 // pred_fallthru
    _
  // Predicated region
  $region10: #{cross_dual_path_forward.18} parent=0 // pred_check
    _
  $region11: #{cross_dual_path_forward.18} parent=0 // pred_check_branch
    %13 = sbr.rel (0) target = $region13
  $region12: #{cross_dual_path_forward.18} parent=0 // pred_region
    _
  $region13: #{cross_dual_path_forward.18} parent=0 // pred_fallthru
    _
  %v15 = vld [vmem:[%s0] sm:$0xf]
  %v16 = vld [vmem:[%s0 + $0x4] sm:$0xf]
  %v17 = vld [vmem:[%s0 + $0x8] sm:$0xf]
  %v18 = vld [vmem:[%s0 + $0xc] sm:$0xf]
  %v19 = vld [vmem:[%s0 + $0x10] sm:$0xf]
  %v20 = vld [vmem:[%s1] sm:$0xff]
  %v21 = vld [vmem:[%s1 + $0x8] sm:$0xff]
  %v22 = vld [vmem:[%s1 + $0x10] sm:$0xff]
  %v23 = vld [vmem:[%s1 + $0x18] sm:$0xff]
  %v24 = vld [vmem:[%s1 + $0x20] sm:$0xff]
  %v25 = vld [vmem:[%s1 + $0x28] sm:$0xff]
  %v26 = vld [vmem:[%s1 + $0x30] sm:$0xff]
  %v27 = vld [vmem:[%s1 + $0x38] sm:$0xff]
  %v28 = vld [vmem:[%s2] sm:$0x3]
  %v30 = vlaneseq
  %v31 = vshrl.u32 %v30, 7
  %v32 = vsub.s32 0, %v31
  %v33 = vrot.slane %v28, %v32
  %v34 = vlaneseq
  %v35 = vshrl.u32 %v34, 7
  %v36 = vsub.s32 1, %v35
  %v37 = vrot.slane %v28, %v36
  %v45 = vunpack.c.l.b16 %v15
  %v46 = vunpack.c.l.b16 %v16
  %v47 = vunpack.c.l.b16 %v17
  %v48 = vunpack.c.l.b16 %v18
  %v49 = vunpack.c.l.b16 %v19
  %v50 = vpack.c.b16 %v46, %v45
  %v51 = vpack.c.b16 %v48, %v47
  %v52 = vpack.c.b16 %v49, %v49
  %v61 = vunpack.c.l.b16 %v20
  %v62 = vunpack.c.h.b16 %v20
  %v63 = vunpack.c.l.b16 %v21
  %v64 = vunpack.c.h.b16 %v21
  %v65 = vunpack.c.l.b16 %v22
  %v66 = vunpack.c.h.b16 %v22
  %v67 = vunpack.c.l.b16 %v23
  %v68 = vunpack.c.h.b16 %v23
  %v69 = vunpack.c.l.b16 %v24
  %v70 = vunpack.c.h.b16 %v24
  %v71 = vunpack.c.l.b16 %v25
  %v72 = vunpack.c.h.b16 %v25
  %v73 = vunpack.c.l.b16 %v26
  %v74 = vunpack.c.h.b16 %v26
  %v75 = vunpack.c.l.b16 %v27
  %v76 = vunpack.c.h.b16 %v27
  %v77 = vpack.c.b16 %v63, %v61
  %v78 = vpack.c.b16 %v64, %v62
  %v79 = vpack.c.b16 %v67, %v65
  %v80 = vpack.c.b16 %v68, %v66
  %v81 = vpack.c.b16 %v71, %v69
  %v82 = vpack.c.b16 %v72, %v70
  %v83 = vpack.c.b16 %v75, %v73
  %v84 = vpack.c.b16 %v76, %v74
  %vm93 = vcmask 523264
  %v95 = vsel %vm93, %v50, 0
  %v98 = vsel %vm93, %v51, 0
  %v101 = vsel %vm93, %v52, 0
  %103 = vmatprep.subr.bf16.mxu0 0
  %104 = vmatpush1.bf16.msra.mxu0 0
  %105 = vmatprep.subr.bf16.mxu0 0
  %106 = vmatpush1.bf16.msra.mxu0 0
  %107 = vmatprep.subr.bf16.mxu0 0
  %108 = vmatpush1.bf16.msra.mxu0 0
  %109 = vmatprep.subr.bf16.mxu0 0
  %110 = vmatpush1.bf16.msra.mxu0 0
  %111 = vmatprep.subr.bf16.mxu0 %v84
  %112 = vmatpush1.bf16.msra.mxu0 %v83
  %113 = vmatprep.subr.bf16.mxu0 %v82
  %114 = vmatpush1.bf16.msra.mxu0 %v81
  %115 = vmatprep.subr.bf16.mxu0 %v80
  %116 = vmatpush1.bf16.msra.mxu0 %v79
  %117 = vmatprep.subr.bf16.mxu0 %v78
  %118 = vmatpush1.bf16.msra.mxu0 %v77
  %119 = vmatprep.subr.bf16.mxu0 0
  %120 = vmatpush2.bf16.msra.mxu0 0
  %121 = vmatprep.subr.bf16.mxu0 0
  %122 = vmatpush2.bf16.msra.mxu0 0
  %123 = vmatprep.subr.bf16.mxu0 0
  %124 = vmatpush2.bf16.msra.mxu0 0
  %125 = vmatprep.subr.bf16.mxu0 0
  %126 = vmatpush2.bf16.msra.mxu0 0
  %127 = vmatprep.subr.bf16.mxu0 0
  %128 = vmatpush2.bf16.msra.mxu0 0
  %129 = vmatprep.subr.bf16.mxu0 0
  %130 = vmatpush2.bf16.msra.mxu0 0
  %131 = vmatprep.subr.bf16.mxu0 0
  %132 = vmatpush2.bf16.msra.mxu0 0
  %133 = vmatprep.subr.bf16.mxu0 0
  %134 = vmatpush2.bf16.msra.mxu0 0
  %135 = vmatprep.mubr.bf16.mxu0 0
  %136 = vmatmul.mubr.bf16.gmra.mxu0 %v95
  %v137 = vpop.f32.mrf.mxu0
  %v138 = vadd.f32 %v33, %v137
  %v139 = vpop.f32.mrf.mxu0
  %v140 = vadd.f32 %v37, %v139
  %v141 = vpop.f32.mrf.mxu0
  %v142 = vadd.f32 %v33, %v141
  %v143 = vpop.f32.mrf.mxu0
  %v144 = vadd.f32 %v37, %v143
  %145 = vmatprep.mubr.bf16.mxu0 0
  %146 = vmatmul.mubr.bf16.gmra.mxu0 %v98
  %v147 = vpop.f32.mrf.mxu0
  %v148 = vadd.f32 %v33, %v147
  %v149 = vpop.f32.mrf.mxu0
  %v150 = vadd.f32 %v37, %v149
  %v151 = vpop.f32.mrf.mxu0
  %v152 = vadd.f32 %v33, %v151
  %v153 = vpop.f32.mrf.mxu0
  %v154 = vadd.f32 %v37, %v153
  %155 = vmatprep.mubr.bf16.mxu0 0
  %156 = vmatmul.mubr.bf16.gmra.mxu0 %v101
  %v157 = vpop.f32.mrf.mxu0
  %v158 = vadd.f32 %v33, %v157
  %v159 = vpop.f32.mrf.mxu0
  %v160 = vadd.f32 %v37, %v159
  %v161 = vpop.f32.mrf.mxu0
  %v162 = vpop.f32.mrf.mxu0
  %163 = vdwg.mxu0
  %v164 = vpack.c.bf16 %v142, %v138
  %v165 = vpack.c.bf16 %v144, %v140
  %v166 = vpack.c.bf16 %v152, %v148
  %v167 = vpack.c.bf16 %v154, %v150
  %v168 = vpack.c.bf16 %v158, %v158
  %v169 = vpack.c.bf16 %v160, %v160
  %v176 = vunpack.c.l.b16 %v164
  %v177 = vunpack.c.l.b16 %v165
  %v178 = vunpack.c.h.b16 %v164
  %v179 = vunpack.c.h.b16 %v165
  %v180 = vunpack.c.l.b16 %v166
  %v181 = vunpack.c.l.b16 %v167
  %v182 = vunpack.c.h.b16 %v166
  %v183 = vunpack.c.h.b16 %v167
  %v184 = vunpack.c.l.b16 %v168
  %v185 = vunpack.c.l.b16 %v169
  %v186 = vpack.c.b16 %v177, %v176
  %v187 = vpack.c.b16 %v179, %v178
  %v188 = vpack.c.b16 %v181, %v180
  %v189 = vpack.c.b16 %v183, %v182
  %v190 = vpack.c.b16 %v185, %v184
  %196 = vst [vmem:[%s3] sm:$0xff] %v186
  %197 = vst [vmem:[%s3 + $0x8] sm:$0xff] %v187
  %198 = vst [vmem:[%s3 + $0x10] sm:$0xff] %v188
  %199 = vst [vmem:[%s3 + $0x18] sm:$0xff] %v189
  %200 = vst [vmem:[%s3 + $0x20] sm:$0xff] %v190
  // Predicated region
  $region14: #{cross_dual_path_forward.18} parent=0 // pred_check
    _
  $region15: #{cross_dual_path_forward.18} parent=0 // pred_check_branch
    %202 = sbr.rel (0) target = $region17
  $region16: #{cross_dual_path_forward.18} parent=0 // pred_region
    _
  $region17: #{cross_dual_path_forward.18} parent=0 // pred_fallthru
    _
  // Predicated region
  $region18: #{cross_dual_path_forward.18} parent=0 // pred_check
    _
  $region19: #{cross_dual_path_forward.18} parent=0 // pred_check_branch
    %204 = sbr.rel (0) target = $region21
  $region20: #{cross_dual_path_forward.18} parent=0 // pred_region
    _
  $region21: #{cross_dual_path_forward.18} parent=0 // pred_fallthru
    _

// kernel: cross_dual_path_forward.26
$region0: #{cross_dual_path_forward.26}
  #allocation0 [shape = 'u32[]', space=smem, size = 0x4, offset = 0x4, fixed_abs, tag = 'smem constant byte address 0x4 - core index']
  #allocation1 [shape = 'u32[144,128]{1,0:T(1,128)}', space=vmem, size = 0x12000, scoped, tag = 'internal scratch']
  %s0 = inlined_call_operand.vmem [shape: bf16[2,64,256], index: 0, kind: input, shape index: {}]
  %s1 = inlined_call_operand.vmem [shape: f32[2,1,256], index: 1, kind: input, shape index: {}]
  %s2 = inlined_call_operand.vmem [shape: f32[2,1,256], index: 2, kind: input, shape index: {}]
  %s3 = inlined_call_operand.vmem [shape: bf16[2,64,256], index: 3, kind: input, shape index: {}]
  %s4 = inlined_call_operand.vmem [shape: bf16[64,256], index: 4, kind: input, shape index: {}]
  %s5 = inlined_call_operand.vmem [shape: bf16[2,64,256], index: 5, kind: output, shape index: {}]
  %s6 = sld [smem:[#allocation0]]
  $region53: #{cross_dual_path_forward.26} parent=0
    _
  %s8 = ssub.s32 1, %s6
  %s9 = scalar_select 0, %s8, %s6
  loop: start=0, step=1, limit=4
  $region2: #{cross_dual_path_forward.26} parent=0 // loop_pre_header
    _
  $region3: #{cross_dual_path_forward.26} parent=0 // loop_header
    %s11 = sphi 0, %s15
    %p12 = scmp.ge.s32.totalorder %s11, 4
    %s18 = sphi 0, %s30
    %s19 = sphi 0, %s26
    %s20 = sphi 0, %s18
    %s21 = sphi 0, %s19
    %s22 = sphi 0, %s20
    %s23 = sphi 0, %s21
    %s35 = sphi 0, %s37
    %s38 = sphi 0, %s35
    %s39 = sphi 0, %s38
    %s55 = sphi 0, %s39
    %s61 = sphi 0, %s63
    %s64 = sphi 0, %s61
    %s65 = sphi 0, %s64
    %s81 = sphi 0, %s65
    %s87 = sphi 0, %s89
    %s90 = sphi 0, %s87
    %s91 = sphi 0, %s90
    %s107 = sphi 0, %s91
    %s115 = sphi 0, %s117
    %s118 = sphi 0, %s115
    %s119 = sphi 0, %s118
    %s135 = sphi 0, %s119
    %s141 = sphi 0, %s143
    %s144 = sphi 0, %s141
    %s145 = sphi 0, %s144
    %s161 = sphi 0, %s145
    %s169 = sphi 0, %s171
    %s172 = sphi 0, %s169
    %s173 = sphi 0, %s172
    %s189 = sphi 0, %s173
  $region4: #{cross_dual_path_forward.26} parent=0 // loop_header_branch
    %14 = sbr.rel (%p12) target = $region8
  $region5: #{cross_dual_path_forward.26} parent=0 // loop_body
    %s16 = ssub.s32 %s11, 1
    %s17 = ssub.s32 %s11, 2
    %s24 = sadd.s32 1, %s19
    %p25 = scmp.ge.s32.totalorder %s24, 1
    %s26 = scalar_select %p25, 0, %s24
    %s27 = sadd.s32 1, %s18
    %s28 = scalar_select %p25, %s27, %s18
    %p29 = scmp.ge.s32.totalorder %s28, 2
    %s30 = scalar_select %p29, 0, %s28
    %s31 = ssub.s32 %s18, %s30
    %s32 = ssub.s32 %s19, %s26
    %s33 = sor.u32 %s31, %s32
    %p34 = scmp.eq.s32.totalorder %s33, 0
    %s36 = sadd.s32 %s35, 1
    %s37 = scalar_select %p34, %s35, %s36
    %p40 = pneg %p34
    %p41 = scmp.eq.s32.totalorder %s11, 1
    %p42 = por %p40, %p41
    %p43 = scmp.ne.s32.totalorder %s35, %s38
    %p44 = scmp.eq.s32.totalorder %s11, 0
    %p45 = por %p43, %p44
    %p46 = scmp.ne.s32.totalorder %s35, %s38
    %p47 = scmp.eq.s32.totalorder %s16, 1
    %p48 = por %p46, %p47
    %p49 = scmp.ne.s32.totalorder %s38, %s39
    %p50 = scmp.eq.s32.totalorder %s16, 0
    %p51 = por %p49, %p50
    %p52 = scmp.ne.s32.totalorder %s38, %s39
    %p53 = scmp.eq.s32.totalorder %s17, 1
    %p54 = por %p52, %p53
    %p56 = scmp.ne.s32.totalorder %s39, %s55
    %p57 = scmp.eq.s32.totalorder %s17, 0
    %p58 = por %p56, %p57
    %s59 = ssub.s32 %s18, %s30
    %p60 = scmp.eq.s32.totalorder %s59, 0
    %s62 = sadd.s32 %s61, 1
    %s63 = scalar_select %p60, %s61, %s62
    %p66 = pneg %p60
    %p67 = scmp.eq.s32.totalorder %s11, 1
    %p68 = por %p66, %p67
    %p69 = scmp.ne.s32.totalorder %s61, %s64
    %p70 = scmp.eq.s32.totalorder %s11, 0
    %p71 = por %p69, %p70
    %p72 = scmp.ne.s32.totalorder %s61, %s64
    %p73 = scmp.eq.s32.totalorder %s16, 1
    %p74 = por %p72, %p73
    %p75 = scmp.ne.s32.totalorder %s64, %s65
    %p76 = scmp.eq.s32.totalorder %s16, 0
    %p77 = por %p75, %p76
    %p78 = scmp.ne.s32.totalorder %s64, %s65
    %p79 = scmp.eq.s32.totalorder %s17, 1
    %p80 = por %p78, %p79
    %p82 = scmp.ne.s32.totalorder %s65, %s81
    %p83 = scmp.eq.s32.totalorder %s17, 0
    %p84 = por %p82, %p83
    %s85 = ssub.s32 %s18, %s30
    %p86 = scmp.eq.s32.totalorder %s85, 0
    %s88 = sadd.s32 %s87, 1
    %s89 = scalar_select %p86, %s87, %s88
    %p92 = pneg %p86
    %p93 = scmp.eq.s32.totalorder %s11, 1
    %p94 = por %p92, %p93
    %p95 = scmp.ne.s32.totalorder %s87, %s90
    %p96 = scmp.eq.s32.totalorder %s11, 0
    %p97 = por %p95, %p96
    %p98 = scmp.ne.s32.totalorder %s87, %s90
    %p99 = scmp.eq.s32.totalorder %s16, 1
    %p100 = por %p98, %p99
    %p101 = scmp.ne.s32.totalorder %s90, %s91
    %p102 = scmp.eq.s32.totalorder %s16, 0
    %p103 = por %p101, %p102
    %p104 = scmp.ne.s32.totalorder %s90, %s91
    %p105 = scmp.eq.s32.totalorder %s17, 1
    %p106 = por %p104, %p105
    %p108 = scmp.ne.s32.totalorder %s91, %s107
    %p109 = scmp.eq.s32.totalorder %s17, 0
    %p110 = por %p108, %p109
    %s111 = ssub.s32 %s18, %s30
    %s112 = ssub.s32 %s19, %s26
    %s113 = sor.u32 %s111, %s112
    %p114 = scmp.eq.s32.totalorder %s113, 0
    %s116 = sadd.s32 %s115, 1
    %s117 = scalar_select %p114, %s115, %s116
    %p120 = pneg %p114
    %p121 = scmp.eq.s32.totalorder %s11, 1
    %p122 = por %p120, %p121
    %p123 = scmp.ne.s32.totalorder %s115, %s118
    %p124 = scmp.eq.s32.totalorder %s11, 0
    %p125 = por %p123, %p124
    %p126 = scmp.ne.s32.totalorder %s115, %s118
    %p127 = scmp.eq.s32.totalorder %s16, 1
    %p128 = por %p126, %p127
    %p129 = scmp.ne.s32.totalorder %s118, %s119
    %p130 = scmp.eq.s32.totalorder %s16, 0
    %p131 = por %p129, %p130
    %p132 = scmp.ne.s32.totalorder %s118, %s119
    %p133 = scmp.eq.s32.totalorder %s17, 1
    %p134 = por %p132, %p133
    %p136 = scmp.ne.s32.totalorder %s119, %s135
    %p137 = scmp.eq.s32.totalorder %s17, 0
    %p138 = por %p136, %p137
    %s139 = ssub.s32 %s19, %s26
    %p140 = scmp.eq.s32.totalorder %s139, 0
    %s142 = sadd.s32 %s141, 1
    %s143 = scalar_select %p140, %s141, %s142
    %p146 = pneg %p140
    %p147 = scmp.eq.s32.totalorder %s11, 1
    %p148 = por %p146, %p147
    %p149 = scmp.ne.s32.totalorder %s141, %s144
    %p150 = scmp.eq.s32.totalorder %s11, 0
    %p151 = por %p149, %p150
    %p152 = scmp.ne.s32.totalorder %s141, %s144
    %p153 = scmp.eq.s32.totalorder %s16, 1
    %p154 = por %p152, %p153
    %p155 = scmp.ne.s32.totalorder %s144, %s145
    %p156 = scmp.eq.s32.totalorder %s16, 0
    %p157 = por %p155, %p156
    %p158 = scmp.ne.s32.totalorder %s144, %s145
    %p159 = scmp.eq.s32.totalorder %s17, 1
    %p160 = por %p158, %p159
    %p162 = scmp.ne.s32.totalorder %s145, %s161
    %p163 = scmp.eq.s32.totalorder %s17, 0
    %p164 = por %p162, %p163
    %s165 = ssub.s32 %s18, %s30
    %s166 = ssub.s32 %s19, %s26
    %s167 = sor.u32 %s165, %s166
    %p168 = scmp.eq.s32.totalorder %s167, 0
    %s170 = sadd.s32 %s169, 1
    %s171 = scalar_select %p168, %s169, %s170
    %p174 = pneg %p168
    %p175 = scmp.eq.s32.totalorder %s11, 1
    %p176 = por %p174, %p175
    %p177 = scmp.ne.s32.totalorder %s169, %s172
    %p178 = scmp.eq.s32.totalorder %s11, 0
    %p179 = por %p177, %p178
    %p180 = scmp.ne.s32.totalorder %s169, %s172
    %p181 = scmp.eq.s32.totalorder %s16, 1
    %p182 = por %p180, %p181
    %p183 = scmp.ne.s32.totalorder %s172, %s173
    %p184 = scmp.eq.s32.totalorder %s16, 0
    %p185 = por %p183, %p184
    %p186 = scmp.ne.s32.totalorder %s172, %s173
    %p187 = scmp.eq.s32.totalorder %s17, 1
    %p188 = por %p186, %p187
    %p190 = scmp.ne.s32.totalorder %s173, %s189
    %p191 = scmp.eq.s32.totalorder %s17, 0
    %p192 = por %p190, %p191
    %p193 = scmp.le.s32.totalorder 1, %s11
    %p194 = scmp.lt.s32.totalorder %s11, 3
    %p195 = pnand %p193, %p194
    %p196 = pneg %p195
    // Predicated region
    $region9: #{cross_dual_path_forward.26} parent=5 // pred_check
      _
    $region10: #{cross_dual_path_forward.26} parent=5 // pred_check_branch
      %198 = sbr.rel (%p195) target = $region12
    $region11: #{cross_dual_path_forward.26} parent=5 // pred_region
      %s199 = ssub.s32 %s11, 1
      // Predicated region
      $region13: #{cross_dual_path_forward.26} parent=11 // pred_check
        %p200 = pneg %p157
      $region14: #{cross_dual_path_forward.26} parent=11 // pred_check_branch
        %202 = sbr.rel (%p200) target = $region16
      $region15: #{cross_dual_path_forward.26} parent=11 // pred_region
        %s203 = smul.u32 8, %s21
        %p204 = scmp.lt.s32.totalorder %s203, 7
        %s205 = scalar_select %p204, %s203, 7
        %s206 = smul.addr %s205, 2
        %s207 = smul.addr %s206, 4
        %s208 = scalar_lea.vmem %s4, %s207
        %s209 = smul.u32 8, %s21
      $region16: #{cross_dual_path_forward.26} parent=11 // pred_fallthru
        _
    $region12: #{cross_dual_path_forward.26} parent=5 // pred_fallthru
      _
    %p210 = scmp.lt.s32.totalorder %s11, 2
    // Predicated region
    $region17: #{cross_dual_path_forward.26} parent=5 // pred_check
      %p211 = pneg %p210
    $region18: #{cross_dual_path_forward.26} parent=5 // pred_check_branch
      %213 = sbr.rel (%p211) target = $region20
    $region19: #{cross_dual_path_forward.26} parent=5 // pred_region
      // Predicated region
      $region21: #{cross_dual_path_forward.26} parent=19 // pred_check
        %p214 = pneg %p45
      $region22: #{cross_dual_path_forward.26} parent=19 // pred_check_branch
        %216 = sbr.rel (%p214) target = $region24
      $region23: #{cross_dual_path_forward.26} parent=19 // pred_region
        %s217 = smul.u32 8, %s19
        %p218 = scmp.lt.s32.totalorder %s18, 1
        %s219 = scalar_select %p218, %s18, 1
        %p220 = scmp.lt.s32.totalorder %s217, 7
        %s221 = scalar_select %p220, %s217, 7
        %s222 = smul.addr %s221, 2
        %s223 = smul.addr %s219, 16
        %s224 = sadd.s32 %s222, %s223
        %s225 = smul.addr %s224, 4
        %s226 = scalar_lea.vmem %s0, %s225
        %s227 = smul.u32 8, %s19
      $region24: #{cross_dual_path_forward.26} parent=19 // pred_fallthru
        _
      // Predicated region
      $region25: #{cross_dual_path_forward.26} parent=19 // pred_check
        %p228 = pneg %p71
      $region26: #{cross_dual_path_forward.26} parent=19 // pred_check_branch
        %230 = sbr.rel (%p228) target = $region28
      $region27: #{cross_dual_path_forward.26} parent=19 // pred_region
        %p231 = scmp.lt.s32.totalorder %s18, 1
        %s232 = scalar_select %p231, %s18, 1
        %s233 = smul.addr %s232, 2
        %s234 = scalar_lea.vmem %s1, %s233
      $region28: #{cross_dual_path_forward.26} parent=19 // pred_fallthru
        _
      // Predicated region
      $region29: #{cross_dual_path_forward.26} parent=19 // pred_check
        %p235 = pneg %p97
      $region30: #{cross_dual_path_forward.26} parent=19 // pred_check_branch
        %237 = sbr.rel (%p235) target = $region32
      $region31: #{cross_dual_path_forward.26} parent=19 // pred_region
        %p238 = scmp.lt.s32.totalorder %s18, 1
        %s239 = scalar_select %p238, %s18, 1
        %s240 = smul.addr %s239, 2
        %s241 = scalar_lea.vmem %s2, %s240
      $region32: #{cross_dual_path_forward.26} parent=19 // pred_fallthru
        _
      // Predicated region
      $region33: #{cross_dual_path_forward.26} parent=19 // pred_check
        %p242 = pneg %p125
      $region34: #{cross_dual_path_forward.26} parent=19 // pred_check_branch
        %244 = sbr.rel (%p242) target = $region36
      $region35: #{cross_dual_path_forward.26} parent=19 // pred_region
        %s245 = smul.u32 8, %s19
        %p246 = scmp.lt.s32.totalorder %s18, 1
        %s247 = scalar_select %p246, %s18, 1
        %p248 = scmp.lt.s32.totalorder %s245, 7
        %s249 = scalar_select %p248, %s245, 7
        %s250 = smul.addr %s249, 2
        %s251 = smul.addr %s247, 16
        %s252 = sadd.s32 %s250, %s251
        %s253 = smul.addr %s252, 4
        %s254 = scalar_lea.vmem %s3, %s253
        %s255 = smul.u32 8, %s19
      $region36: #{cross_dual_path_forward.26} parent=19 // pred_fallthru
        _
    $region20: #{cross_dual_path_forward.26} parent=5 // pred_fallthru
      _
    %p256 = scmp.le.s32.totalorder 1, %s11
    %p257 = scmp.lt.s32.totalorder %s11, 3
    %p258 = pnand %p256, %p257
    %p259 = pneg %p258
    // Predicated region
    $region37: #{cross_dual_path_forward.26} parent=5 // pred_check
      _
    $region38: #{cross_dual_path_forward.26} parent=5 // pred_check_branch
      %261 = sbr.rel (%p258) target = $region40
    $region39: #{cross_dual_path_forward.26} parent=5 // pred_region
      %s262 = ssub.s32 %s11, 1
      %s263 = smul.u32 8, %s21
      %p264 = scmp.lt.s32.totalorder %s20, 1
      %s265 = scalar_select %p264, %s20, 1
      %p266 = scmp.lt.s32.totalorder %s263, 7
      %s267 = scalar_select %p266, %s263, 7
      %s268 = smul.addr %s267, 2
      %s269 = smul.addr %s265, 16
      %s270 = sadd.s32 %s268, %s269
      %s271 = smul.addr %s270, 4
      %s272 = scalar_lea.vmem %s0, %s271
      %p273 = pneg %p51
      %p274 = pneg %p48
      %p275 = scmp.lt.s32.totalorder %s20, 1
      %s276 = scalar_select %p275, %s20, 1
      %s277 = smul.addr %s276, 2
      %s278 = scalar_lea.vmem %s1, %s277
      %p279 = pneg %p77
      %p280 = pneg %p74
      %p281 = scmp.lt.s32.totalorder %s20, 1
      %s282 = scalar_select %p281, %s20, 1
      %s283 = smul.addr %s282, 2
      %s284 = scalar_lea.vmem %s2, %s283
      %p285 = pneg %p103
      %p286 = pneg %p100
      %s287 = smul.u32 8, %s21
      %p288 = scmp.lt.s32.totalorder %s20, 1
      %s289 = scalar_select %p288, %s20, 1
      %p290 = scmp.lt.s32.totalorder %s287, 7
      %s291 = scalar_select %p290, %s287, 7
      %s292 = smul.addr %s291, 2
      %s293 = smul.addr %s289, 16
      %s294 = sadd.s32 %s292, %s293
      %s295 = smul.addr %s294, 4
      %s296 = scalar_lea.vmem %s3, %s295
      %p297 = pneg %p131
      %p298 = pneg %p128
      %s299 = smul.u32 8, %s21
      %p300 = scmp.lt.s32.totalorder %s299, 7
      %s301 = scalar_select %p300, %s299, 7
      %s302 = smul.addr %s301, 2
      %s303 = smul.addr %s302, 4
      %s304 = scalar_lea.vmem %s4, %s303
      %p305 = pneg %p157
      %p306 = pneg %p154
      %p307 = pneg %p185
      %p308 = pneg %p182
      %s309 = smul.u32 8, %s21
      %p310 = scmp.lt.s32.totalorder %s20, 1
      %s311 = scalar_select %p310, %s20, 1
      %p312 = scmp.lt.s32.totalorder %s309, 7
      %s313 = scalar_select %p312, %s309, 7
      %s314 = smul.addr %s313, 2
      %s315 = smul.addr %s311, 16
      %s316 = sadd.s32 %s314, %s315
      %s317 = smul.addr %s316, 4
      %s318 = scalar_lea.vmem %s5, %s317
      %s319 = smul.u32 8, %s21
      %p320 = scmp.lt.s32.totalorder %s20, 1
      %s321 = scalar_select %p320, %s20, 1
      %p322 = scmp.lt.s32.totalorder %s319, 7
      %s323 = scalar_select %p322, %s319, 7
      %s324 = smul.addr %s323, 2
      %s325 = smul.addr %s321, 16
      %s326 = sadd.s32 %s324, %s325
      %s327 = smul.addr %s326, 4
      %s328 = scalar_lea.vmem %s0, %s327
      %s329 = smul.u32 8, %s21
      %p330 = scmp.lt.s32.totalorder %s20, 1
      %s331 = scalar_select %p330, %s20, 1
      %s332 = smul.addr %s331, 2
      %s333 = scalar_lea.vmem %s1, %s332
      %p334 = scmp.lt.s32.totalorder %s20, 1
      %s335 = scalar_select %p334, %s20, 1
      %s336 = smul.addr %s335, 2
      %s337 = scalar_lea.vmem %s2, %s336
      %s338 = smul.u32 8, %s21
      %p339 = scmp.lt.s32.totalorder %s20, 1
      %s340 = scalar_select %p339, %s20, 1
      %p341 = scmp.lt.s32.totalorder %s338, 7
      %s342 = scalar_select %p341, %s338, 7
      %s343 = smul.addr %s342, 2
      %s344 = smul.addr %s340, 16
      %s345 = sadd.s32 %s343, %s344
      %s346 = smul.addr %s345, 4
      %s347 = scalar_lea.vmem %s3, %s346
      %s348 = smul.u32 8, %s21
      %s349 = smul.u32 8, %s21
      %p350 = scmp.lt.s32.totalorder %s349, 7
      %s351 = scalar_select %p350, %s349, 7
      %s352 = smul.addr %s351, 2
      %s353 = smul.addr %s352, 4
      %s354 = scalar_lea.vmem %s4, %s353
      %s355 = smul.u32 8, %s21
      %s356 = smul.u32 8, %s21
      %p357 = scmp.lt.s32.totalorder %s20, 1
      %s358 = scalar_select %p357, %s20, 1
      %p359 = scmp.lt.s32.totalorder %s356, 7
      %s360 = scalar_select %p359, %s356, 7
      %s361 = smul.addr %s360, 2
      %s362 = smul.addr %s358, 16
      %s363 = sadd.s32 %s361, %s362
      %s364 = smul.addr %s363, 4
      %s365 = scalar_lea.vmem %s5, %s364
      %s366 = smul.u32 8, %s21
      %v367 = vld [vmem:[%s328] sm:$0xff]
      %v368 = vld [vmem:[%s328 + $0x8] sm:$0xff]
      %v369 = vld [vmem:[%s328 + $0x10] sm:$0xff]
      %v370 = vld [vmem:[%s328 + $0x18] sm:$0xff]
      %v371 = vld [vmem:[%s328 + $0x20] sm:$0xff]
      %v372 = vld [vmem:[%s328 + $0x28] sm:$0xff]
      %v373 = vld [vmem:[%s328 + $0x30] sm:$0xff]
      %v374 = vld [vmem:[%s328 + $0x38] sm:$0xff]
      %v375 = vunpack.c.l.bf16 %v367
      %v376 = vunpack.c.h.bf16 %v367
      %v377 = vunpack.c.l.bf16 %v368
      %v378 = vunpack.c.h.bf16 %v368
      %v379 = vunpack.c.l.bf16 %v369
      %v380 = vunpack.c.h.bf16 %v369
      %v381 = vunpack.c.l.bf16 %v370
      %v382 = vunpack.c.h.bf16 %v370
      %v383 = vunpack.c.l.bf16 %v371
      %v384 = vunpack.c.h.bf16 %v371
      %v385 = vunpack.c.l.bf16 %v372
      %v386 = vunpack.c.h.bf16 %v372
      %v387 = vunpack.c.l.bf16 %v373
      %v388 = vunpack.c.h.bf16 %v373
      %v389 = vunpack.c.l.bf16 %v374
      %v390 = vunpack.c.h.bf16 %v374
      %v391 = vld [vmem:[%s333] sm:$0x3]
      %v393 = vlaneseq
      %v394 = vshrl.u32 %v393, 7
      %v395 = vsub.s32 0, %v394
      %v396 = vrot.slane %v391, %v395
      %v397 = vlaneseq
      %v398 = vshrl.u32 %v397, 7
      %v399 = vsub.s32 1, %v398
      %v400 = vrot.slane %v391, %v399
      %v403 = vmul.f32 %v375, %v396
      %v404 = vmul.f32 %v376, %v400
      %v405 = vmul.f32 %v377, %v396
      %v406 = vmul.f32 %v378, %v400
      %v407 = vmul.f32 %v379, %v396
      %v408 = vmul.f32 %v380, %v400
      %v409 = vmul.f32 %v381, %v396
      %v410 = vmul.f32 %v382, %v400
      %v411 = vmul.f32 %v383, %v396
      %v412 = vmul.f32 %v384, %v400
      %v413 = vmul.f32 %v385, %v396
      %v414 = vmul.f32 %v386, %v400
      %v415 = vmul.f32 %v387, %v396
      %v416 = vmul.f32 %v388, %v400
      %v417 = vmul.f32 %v389, %v396
      %v418 = vmul.f32 %v390, %v400
      %v419 = vld [vmem:[%s337] sm:$0x3]
      %v421 = vlaneseq
      %v422 = vshrl.u32 %v421, 7
      %v423 = vsub.s32 0, %v422
      %v424 = vrot.slane %v419, %v423
      %v425 = vlaneseq
      %v426 = vshrl.u32 %v425, 7
      %v427 = vsub.s32 1, %v426
      %v428 = vrot.slane %v419, %v427
      %v431 = vadd.f32 %v403, %v424
      %v432 = vadd.f32 %v404, %v428
      %v433 = vadd.f32 %v405, %v424
      %v434 = vadd.f32 %v406, %v428
      %v435 = vadd.f32 %v407, %v424
      %v436 = vadd.f32 %v408, %v428
      %v437 = vadd.f32 %v409, %v424
      %v438 = vadd.f32 %v410, %v428
      %v439 = vadd.f32 %v411, %v424
      %v440 = vadd.f32 %v412, %v428
      %v441 = vadd.f32 %v413, %v424
      %v442 = vadd.f32 %v414, %v428
      %v443 = vadd.f32 %v415, %v424
      %v444 = vadd.f32 %v416, %v428
      %v445 = vadd.f32 %v417, %v424
      %v446 = vadd.f32 %v418, %v428
      %v447 = vld [vmem:[%s347] sm:$0xff]
      %v448 = vld [vmem:[%s347 + $0x8] sm:$0xff]
      %v449 = vld [vmem:[%s347 + $0x10] sm:$0xff]
      %v450 = vld [vmem:[%s347 + $0x18] sm:$0xff]
      %v451 = vld [vmem:[%s347 + $0x20] sm:$0xff]
      %v452 = vld [vmem:[%s347 + $0x28] sm:$0xff]
      %v453 = vld [vmem:[%s347 + $0x30] sm:$0xff]
      %v454 = vld [vmem:[%s347 + $0x38] sm:$0xff]
      %v455 = vunpack.c.l.bf16 %v447
      %v456 = vunpack.c.h.bf16 %v447
      %v457 = vunpack.c.l.bf16 %v448
      %v458 = vunpack.c.h.bf16 %v448
      %v459 = vunpack.c.l.bf16 %v449
      %v460 = vunpack.c.h.bf16 %v449
      %v461 = vunpack.c.l.bf16 %v450
      %v462 = vunpack.c.h.bf16 %v450
      %v463 = vunpack.c.l.bf16 %v451
      %v464 = vunpack.c.h.bf16 %v451
      %v465 = vunpack.c.l.bf16 %v452
      %v466 = vunpack.c.h.bf16 %v452
      %v467 = vunpack.c.l.bf16 %v453
      %v468 = vunpack.c.h.bf16 %v453
      %v469 = vunpack.c.l.bf16 %v454
      %v470 = vunpack.c.h.bf16 %v454
      %v471 = vadd.f32 %v431, %v455
      %v472 = vadd.f32 %v432, %v456
      %v473 = vadd.f32 %v433, %v457
      %v474 = vadd.f32 %v434, %v458
      %v475 = vadd.f32 %v435, %v459
      %v476 = vadd.f32 %v436, %v460
      %v477 = vadd.f32 %v437, %v461
      %v478 = vadd.f32 %v438, %v462
      %v479 = vadd.f32 %v439, %v463
      %v480 = vadd.f32 %v440, %v464
      %v481 = vadd.f32 %v441, %v465
      %v482 = vadd.f32 %v442, %v466
      %v483 = vadd.f32 %v443, %v467
      %v484 = vadd.f32 %v444, %v468
      %v485 = vadd.f32 %v445, %v469
      %v486 = vadd.f32 %v446, %v470
      %v487 = vld [vmem:[%s354] sm:$0xff]
      %v488 = vld [vmem:[%s354 + $0x8] sm:$0xff]
      %v489 = vld [vmem:[%s354 + $0x10] sm:$0xff]
      %v490 = vld [vmem:[%s354 + $0x18] sm:$0xff]
      %v491 = vld [vmem:[%s354 + $0x20] sm:$0xff]
      %v492 = vld [vmem:[%s354 + $0x28] sm:$0xff]
      %v493 = vld [vmem:[%s354 + $0x30] sm:$0xff]
      %v494 = vld [vmem:[%s354 + $0x38] sm:$0xff]
      %v495 = vunpack.c.l.bf16 %v487
      %v496 = vunpack.c.h.bf16 %v487
      %v497 = vunpack.c.l.bf16 %v488
      %v498 = vunpack.c.h.bf16 %v488
      %v499 = vunpack.c.l.bf16 %v489
      %v500 = vunpack.c.h.bf16 %v489
      %v501 = vunpack.c.l.bf16 %v490
      %v502 = vunpack.c.h.bf16 %v490
      %v503 = vunpack.c.l.bf16 %v491
      %v504 = vunpack.c.h.bf16 %v491
      %v505 = vunpack.c.l.bf16 %v492
      %v506 = vunpack.c.h.bf16 %v492
      %v507 = vunpack.c.l.bf16 %v493
      %v508 = vunpack.c.h.bf16 %v493
      %v509 = vunpack.c.l.bf16 %v494
      %v510 = vunpack.c.h.bf16 %v494
      %v511 = vadd.f32 %v471, %v495
      %v512 = vadd.f32 %v472, %v496
      %v513 = vadd.f32 %v473, %v497
      %v514 = vadd.f32 %v474, %v498
      %v515 = vadd.f32 %v475, %v499
      %v516 = vadd.f32 %v476, %v500
      %v517 = vadd.f32 %v477, %v501
      %v518 = vadd.f32 %v478, %v502
      %v519 = vadd.f32 %v479, %v503
      %v520 = vadd.f32 %v480, %v504
      %v521 = vadd.f32 %v481, %v505
      %v522 = vadd.f32 %v482, %v506
      %v523 = vadd.f32 %v483, %v507
      %v524 = vadd.f32 %v484, %v508
      %v525 = vadd.f32 %v485, %v509
      %v526 = vadd.f32 %v486, %v510
      %v527 = vpack.c.bf16 %v513, %v511
      %v528 = vpack.c.bf16 %v514, %v512
      %v529 = vpack.c.bf16 %v517, %v515
      %v530 = vpack.c.bf16 %v518, %v516
      %v531 = vpack.c.bf16 %v521, %v519
      %v532 = vpack.c.bf16 %v522, %v520
      %v533 = vpack.c.bf16 %v525, %v523
      %v534 = vpack.c.bf16 %v526, %v524
      %v543 = vunpack.c.l.b16 %v527
      %v544 = vunpack.c.l.b16 %v528
      %v545 = vunpack.c.h.b16 %v527
      %v546 = vunpack.c.h.b16 %v528
      %v547 = vunpack.c.l.b16 %v529
      %v548 = vunpack.c.l.b16 %v530
      %v549 = vunpack.c.h.b16 %v529
      %v550 = vunpack.c.h.b16 %v530
      %v551 = vunpack.c.l.b16 %v531
      %v552 = vunpack.c.l.b16 %v532
      %v553 = vunpack.c.h.b16 %v531
      %v554 = vunpack.c.h.b16 %v532
      %v555 = vunpack.c.l.b16 %v533
      %v556 = vunpack.c.l.b16 %v534
      %v557 = vunpack.c.h.b16 %v533
      %v558 = vunpack.c.h.b16 %v534
      %v559 = vpack.c.b16 %v544, %v543
      %v560 = vpack.c.b16 %v546, %v545
      %v561 = vpack.c.b16 %v548, %v547
      %v562 = vpack.c.b16 %v550, %v549
      %v563 = vpack.c.b16 %v552, %v551
      %v564 = vpack.c.b16 %v554, %v553
      %v565 = vpack.c.b16 %v556, %v555
      %v566 = vpack.c.b16 %v558, %v557
      %575 = vst [vmem:[%s365] sm:$0xff] %v559
      %576 = vst [vmem:[%s365 + $0x8] sm:$0xff] %v560
      %577 = vst [vmem:[%s365 + $0x10] sm:$0xff] %v561
      %578 = vst [vmem:[%s365 + $0x18] sm:$0xff] %v562
      %579 = vst [vmem:[%s365 + $0x20] sm:$0xff] %v563
      %580 = vst [vmem:[%s365 + $0x28] sm:$0xff] %v564
      %581 = vst [vmem:[%s365 + $0x30] sm:$0xff] %v565
      %582 = vst [vmem:[%s365 + $0x38] sm:$0xff] %v566
      %s583 = smul.u32 8, %s21
      %p584 = scmp.lt.s32.totalorder %s20, 1
      %s585 = scalar_select %p584, %s20, 1
      %p586 = scmp.lt.s32.totalorder %s583, 7
      %s587 = scalar_select %p586, %s583, 7
      %s588 = smul.addr %s587, 2
      %s589 = smul.addr %s585, 16
      %s590 = sadd.s32 %s588, %s589
      %s591 = smul.addr %s590, 4
      %s592 = scalar_lea.vmem %s5, %s591
      // Predicated region
      $region41: #{cross_dual_path_forward.26} parent=39 // pred_check
        %p593 = pneg %p182
      $region42: #{cross_dual_path_forward.26} parent=39 // pred_check_branch
        %595 = sbr.rel (%p593) target = $region44
      $region43: #{cross_dual_path_forward.26} parent=39 // pred_region
        %s596 = smul.u32 8, %s21
      $region44: #{cross_dual_path_forward.26} parent=39 // pred_fallthru
        _
    $region40: #{cross_dual_path_forward.26} parent=5 // pred_fallthru
      _
    %p597 = scmp.le.s32.totalorder 2, %s11
    // Predicated region
    $region45: #{cross_dual_path_forward.26} parent=5 // pred_check
      %p598 = pneg %p597
    $region46: #{cross_dual_path_forward.26} parent=5 // pred_check_branch
      %600 = sbr.rel (%p598) target = $region48
    $region47: #{cross_dual_path_forward.26} parent=5 // pred_region
      %s601 = ssub.s32 %s11, 2
      // Predicated region
      $region49: #{cross_dual_path_forward.26} parent=47 // pred_check
        %p602 = pneg %p188
      $region50: #{cross_dual_path_forward.26} parent=47 // pred_check_branch
        %604 = sbr.rel (%p602) target = $region52
      $region51: #{cross_dual_path_forward.26} parent=47 // pred_region
        %s605 = smul.u32 8, %s23
        %p606 = scmp.lt.s32.totalorder %s22, 1
        %s607 = scalar_select %p606, %s22, 1
        %p608 = scmp.lt.s32.totalorder %s605, 7
        %s609 = scalar_select %p608, %s605, 7
        %s610 = smul.addr %s609, 2
        %s611 = smul.addr %s607, 16
        %s612 = sadd.s32 %s610, %s611
        %s613 = smul.addr %s612, 4
        %s614 = scalar_lea.vmem %s5, %s613
      $region52: #{cross_dual_path_forward.26} parent=47 // pred_fallthru
        _
    $region48: #{cross_dual_path_forward.26} parent=5 // pred_fallthru
      _
  $region6: #{cross_dual_path_forward.26} parent=0 // loop_footer
    %s15 = sadd.s32 1, %s11
  $region7: #{cross_dual_path_forward.26} parent=0 // loop_footer_branch
    %10 = sbr.rel target = $region3
  $region8: #{cross_dual_path_forward.26} parent=0 // loop_exit
    _

// kernel: cross_dual_path_forward.29
$region0: #{cross_dual_path_forward.29}
  #allocation0 [shape = 'u32[]', space=smem, size = 0x4, offset = 0x4, fixed_abs, tag = 'smem constant byte address 0x4 - core index']
  #allocation1 [shape = 'u32[144,128]{1,0:T(1,128)}', space=vmem, size = 0x12000, scoped, tag = 'internal scratch']
  %s0 = inlined_call_operand.vmem [shape: bf16[2,64,256], index: 0, kind: input, shape index: {}]
  %s1 = inlined_call_operand.vmem [shape: f32[2,1,256], index: 1, kind: input, shape index: {}]
  %s2 = inlined_call_operand.vmem [shape: f32[2,1,256], index: 2, kind: input, shape index: {}]
  %s3 = inlined_call_operand.vmem [shape: bf16[2,64,256], index: 3, kind: input, shape index: {}]
  %s4 = inlined_call_operand.vmem [shape: bf16[2,64,256], index: 4, kind: output, shape index: {}]
  %s5 = sld [smem:[#allocation0]]
  $region49: #{cross_dual_path_forward.29} parent=0
    _
  %s7 = ssub.s32 1, %s5
  %s8 = scalar_select 0, %s7, %s5
  loop: start=0, step=1, limit=4
  $region2: #{cross_dual_path_forward.29} parent=0 // loop_pre_header
    _
  $region3: #{cross_dual_path_forward.29} parent=0 // loop_header
    %s10 = sphi 0, %s14
    %p11 = scmp.ge.s32.totalorder %s10, 4
    %s17 = sphi 0, %s29
    %s18 = sphi 0, %s25
    %s19 = sphi 0, %s17
    %s20 = sphi 0, %s18
    %s21 = sphi 0, %s19
    %s22 = sphi 0, %s20
    %s34 = sphi 0, %s36
    %s37 = sphi 0, %s34
    %s38 = sphi 0, %s37
    %s54 = sphi 0, %s38
    %s60 = sphi 0, %s62
    %s63 = sphi 0, %s60
    %s64 = sphi 0, %s63
    %s80 = sphi 0, %s64
    %s86 = sphi 0, %s88
    %s89 = sphi 0, %s86
    %s90 = sphi 0, %s89
    %s106 = sphi 0, %s90
    %s114 = sphi 0, %s116
    %s117 = sphi 0, %s114
    %s118 = sphi 0, %s117
    %s134 = sphi 0, %s118
    %s142 = sphi 0, %s144
    %s145 = sphi 0, %s142
    %s146 = sphi 0, %s145
    %s162 = sphi 0, %s146
  $region4: #{cross_dual_path_forward.29} parent=0 // loop_header_branch
    %13 = sbr.rel (%p11) target = $region8
  $region5: #{cross_dual_path_forward.29} parent=0 // loop_body
    %s15 = ssub.s32 %s10, 1
    %s16 = ssub.s32 %s10, 2
    %s23 = sadd.s32 1, %s18
    %p24 = scmp.ge.s32.totalorder %s23, 1
    %s25 = scalar_select %p24, 0, %s23
    %s26 = sadd.s32 1, %s17
    %s27 = scalar_select %p24, %s26, %s17
    %p28 = scmp.ge.s32.totalorder %s27, 2
    %s29 = scalar_select %p28, 0, %s27
    %s30 = ssub.s32 %s17, %s29
    %s31 = ssub.s32 %s18, %s25
    %s32 = sor.u32 %s30, %s31
    %p33 = scmp.eq.s32.totalorder %s32, 0
    %s35 = sadd.s32 %s34, 1
    %s36 = scalar_select %p33, %s34, %s35
    %p39 = pneg %p33
    %p40 = scmp.eq.s32.totalorder %s10, 1
    %p41 = por %p39, %p40
    %p42 = scmp.ne.s32.totalorder %s34, %s37
    %p43 = scmp.eq.s32.totalorder %s10, 0
    %p44 = por %p42, %p43
    %p45 = scmp.ne.s32.totalorder %s34, %s37
    %p46 = scmp.eq.s32.totalorder %s15, 1
    %p47 = por %p45, %p46
    %p48 = scmp.ne.s32.totalorder %s37, %s38
    %p49 = scmp.eq.s32.totalorder %s15, 0
    %p50 = por %p48, %p49
    %p51 = scmp.ne.s32.totalorder %s37, %s38
    %p52 = scmp.eq.s32.totalorder %s16, 1
    %p53 = por %p51, %p52
    %p55 = scmp.ne.s32.totalorder %s38, %s54
    %p56 = scmp.eq.s32.totalorder %s16, 0
    %p57 = por %p55, %p56
    %s58 = ssub.s32 %s17, %s29
    %p59 = scmp.eq.s32.totalorder %s58, 0
    %s61 = sadd.s32 %s60, 1
    %s62 = scalar_select %p59, %s60, %s61
    %p65 = pneg %p59
    %p66 = scmp.eq.s32.totalorder %s10, 1
    %p67 = por %p65, %p66
    %p68 = scmp.ne.s32.totalorder %s60, %s63
    %p69 = scmp.eq.s32.totalorder %s10, 0
    %p70 = por %p68, %p69
    %p71 = scmp.ne.s32.totalorder %s60, %s63
    %p72 = scmp.eq.s32.totalorder %s15, 1
    %p73 = por %p71, %p72
    %p74 = scmp.ne.s32.totalorder %s63, %s64
    %p75 = scmp.eq.s32.totalorder %s15, 0
    %p76 = por %p74, %p75
    %p77 = scmp.ne.s32.totalorder %s63, %s64
    %p78 = scmp.eq.s32.totalorder %s16, 1
    %p79 = por %p77, %p78
    %p81 = scmp.ne.s32.totalorder %s64, %s80
    %p82 = scmp.eq.s32.totalorder %s16, 0
    %p83 = por %p81, %p82
    %s84 = ssub.s32 %s17, %s29
    %p85 = scmp.eq.s32.totalorder %s84, 0
    %s87 = sadd.s32 %s86, 1
    %s88 = scalar_select %p85, %s86, %s87
    %p91 = pneg %p85
    %p92 = scmp.eq.s32.totalorder %s10, 1
    %p93 = por %p91, %p92
    %p94 = scmp.ne.s32.totalorder %s86, %s89
    %p95 = scmp.eq.s32.totalorder %s10, 0
    %p96 = por %p94, %p95
    %p97 = scmp.ne.s32.totalorder %s86, %s89
    %p98 = scmp.eq.s32.totalorder %s15, 1
    %p99 = por %p97, %p98
    %p100 = scmp.ne.s32.totalorder %s89, %s90
    %p101 = scmp.eq.s32.totalorder %s15, 0
    %p102 = por %p100, %p101
    %p103 = scmp.ne.s32.totalorder %s89, %s90
    %p104 = scmp.eq.s32.totalorder %s16, 1
    %p105 = por %p103, %p104
    %p107 = scmp.ne.s32.totalorder %s90, %s106
    %p108 = scmp.eq.s32.totalorder %s16, 0
    %p109 = por %p107, %p108
    %s110 = ssub.s32 %s17, %s29
    %s111 = ssub.s32 %s18, %s25
    %s112 = sor.u32 %s110, %s111
    %p113 = scmp.eq.s32.totalorder %s112, 0
    %s115 = sadd.s32 %s114, 1
    %s116 = scalar_select %p113, %s114, %s115
    %p119 = pneg %p113
    %p120 = scmp.eq.s32.totalorder %s10, 1
    %p121 = por %p119, %p120
    %p122 = scmp.ne.s32.totalorder %s114, %s117
    %p123 = scmp.eq.s32.totalorder %s10, 0
    %p124 = por %p122, %p123
    %p125 = scmp.ne.s32.totalorder %s114, %s117
    %p126 = scmp.eq.s32.totalorder %s15, 1
    %p127 = por %p125, %p126
    %p128 = scmp.ne.s32.totalorder %s117, %s118
    %p129 = scmp.eq.s32.totalorder %s15, 0
    %p130 = por %p128, %p129
    %p131 = scmp.ne.s32.totalorder %s117, %s118
    %p132 = scmp.eq.s32.totalorder %s16, 1
    %p133 = por %p131, %p132
    %p135 = scmp.ne.s32.totalorder %s118, %s134
    %p136 = scmp.eq.s32.totalorder %s16, 0
    %p137 = por %p135, %p136
    %s138 = ssub.s32 %s17, %s29
    %s139 = ssub.s32 %s18, %s25
    %s140 = sor.u32 %s138, %s139
    %p141 = scmp.eq.s32.totalorder %s140, 0
    %s143 = sadd.s32 %s142, 1
    %s144 = scalar_select %p141, %s142, %s143
    %p147 = pneg %p141
    %p148 = scmp.eq.s32.totalorder %s10, 1
    %p149 = por %p147, %p148
    %p150 = scmp.ne.s32.totalorder %s142, %s145
    %p151 = scmp.eq.s32.totalorder %s10, 0
    %p152 = por %p150, %p151
    %p153 = scmp.ne.s32.totalorder %s142, %s145
    %p154 = scmp.eq.s32.totalorder %s15, 1
    %p155 = por %p153, %p154
    %p156 = scmp.ne.s32.totalorder %s145, %s146
    %p157 = scmp.eq.s32.totalorder %s15, 0
    %p158 = por %p156, %p157
    %p159 = scmp.ne.s32.totalorder %s145, %s146
    %p160 = scmp.eq.s32.totalorder %s16, 1
    %p161 = por %p159, %p160
    %p163 = scmp.ne.s32.totalorder %s146, %s162
    %p164 = scmp.eq.s32.totalorder %s16, 0
    %p165 = por %p163, %p164
    %p166 = scmp.le.s32.totalorder 1, %s10
    %p167 = scmp.lt.s32.totalorder %s10, 3
    %p168 = pnand %p166, %p167
    %p169 = pneg %p168
    // Predicated region
    $region9: #{cross_dual_path_forward.29} parent=5 // pred_check
      _
    $region10: #{cross_dual_path_forward.29} parent=5 // pred_check_branch
      %171 = sbr.rel (%p168) target = $region12
    $region11: #{cross_dual_path_forward.29} parent=5 // pred_region
      %s172 = ssub.s32 %s10, 1
    $region12: #{cross_dual_path_forward.29} parent=5 // pred_fallthru
      _
    %p173 = scmp.lt.s32.totalorder %s10, 2
    // Predicated region
    $region13: #{cross_dual_path_forward.29} parent=5 // pred_check
      %p174 = pneg %p173
    $region14: #{cross_dual_path_forward.29} parent=5 // pred_check_branch
      %176 = sbr.rel (%p174) target = $region16
    $region15: #{cross_dual_path_forward.29} parent=5 // pred_region
      // Predicated region
      $region17: #{cross_dual_path_forward.29} parent=15 // pred_check
        %p177 = pneg %p44
      $region18: #{cross_dual_path_forward.29} parent=15 // pred_check_branch
        %179 = sbr.rel (%p177) target = $region20
      $region19: #{cross_dual_path_forward.29} parent=15 // pred_region
        %s180 = smul.u32 8, %s18
        %p181 = scmp.lt.s32.totalorder %s17, 1
        %s182 = scalar_select %p181, %s17, 1
        %p183 = scmp.lt.s32.totalorder %s180, 7
        %s184 = scalar_select %p183, %s180, 7
        %s185 = smul.addr %s184, 2
        %s186 = smul.addr %s182, 16
        %s187 = sadd.s32 %s185, %s186
        %s188 = smul.addr %s187, 4
        %s189 = scalar_lea.vmem %s0, %s188
        %s190 = smul.u32 8, %s18
      $region20: #{cross_dual_path_forward.29} parent=15 // pred_fallthru
        _
      // Predicated region
      $region21: #{cross_dual_path_forward.29} parent=15 // pred_check
        %p191 = pneg %p70
      $region22: #{cross_dual_path_forward.29} parent=15 // pred_check_branch
        %193 = sbr.rel (%p191) target = $region24
      $region23: #{cross_dual_path_forward.29} parent=15 // pred_region
        %p194 = scmp.lt.s32.totalorder %s17, 1
        %s195 = scalar_select %p194, %s17, 1
        %s196 = smul.addr %s195, 2
        %s197 = scalar_lea.vmem %s1, %s196
      $region24: #{cross_dual_path_forward.29} parent=15 // pred_fallthru
        _
      // Predicated region
      $region25: #{cross_dual_path_forward.29} parent=15 // pred_check
        %p198 = pneg %p96
      $region26: #{cross_dual_path_forward.29} parent=15 // pred_check_branch
        %200 = sbr.rel (%p198) target = $region28
      $region27: #{cross_dual_path_forward.29} parent=15 // pred_region
        %p201 = scmp.lt.s32.totalorder %s17, 1
        %s202 = scalar_select %p201, %s17, 1
        %s203 = smul.addr %s202, 2
        %s204 = scalar_lea.vmem %s2, %s203
      $region28: #{cross_dual_path_forward.29} parent=15 // pred_fallthru
        _
      // Predicated region
      $region29: #{cross_dual_path_forward.29} parent=15 // pred_check
        %p205 = pneg %p124
      $region30: #{cross_dual_path_forward.29} parent=15 // pred_check_branch
        %207 = sbr.rel (%p205) target = $region32
      $region31: #{cross_dual_path_forward.29} parent=15 // pred_region
        %s208 = smul.u32 8, %s18
        %p209 = scmp.lt.s32.totalorder %s17, 1
        %s210 = scalar_select %p209, %s17, 1
        %p211 = scmp.lt.s32.totalorder %s208, 7
        %s212 = scalar_select %p211, %s208, 7
        %s213 = smul.addr %s212, 2
        %s214 = smul.addr %s210, 16
        %s215 = sadd.s32 %s213, %s214
        %s216 = smul.addr %s215, 4
        %s217 = scalar_lea.vmem %s3, %s216
        %s218 = smul.u32 8, %s18
      $region32: #{cross_dual_path_forward.29} parent=15 // pred_fallthru
        _
    $region16: #{cross_dual_path_forward.29} parent=5 // pred_fallthru
      _
    %p219 = scmp.le.s32.totalorder 1, %s10
    %p220 = scmp.lt.s32.totalorder %s10, 3
    %p221 = pnand %p219, %p220
    %p222 = pneg %p221
    // Predicated region
    $region33: #{cross_dual_path_forward.29} parent=5 // pred_check
      _
    $region34: #{cross_dual_path_forward.29} parent=5 // pred_check_branch
      %224 = sbr.rel (%p221) target = $region36
    $region35: #{cross_dual_path_forward.29} parent=5 // pred_region
      %s225 = ssub.s32 %s10, 1
      %s226 = smul.u32 8, %s20
      %p227 = scmp.lt.s32.totalorder %s19, 1
      %s228 = scalar_select %p227, %s19, 1
      %p229 = scmp.lt.s32.totalorder %s226, 7
      %s230 = scalar_select %p229, %s226, 7
      %s231 = smul.addr %s230, 2
      %s232 = smul.addr %s228, 16
      %s233 = sadd.s32 %s231, %s232
      %s234 = smul.addr %s233, 4
      %s235 = scalar_lea.vmem %s0, %s234
      %p236 = pneg %p50
      %p237 = pneg %p47
      %p238 = scmp.lt.s32.totalorder %s19, 1
      %s239 = scalar_select %p238, %s19, 1
      %s240 = smul.addr %s239, 2
      %s241 = scalar_lea.vmem %s1, %s240
      %p242 = pneg %p76
      %p243 = pneg %p73
      %p244 = scmp.lt.s32.totalorder %s19, 1
      %s245 = scalar_select %p244, %s19, 1
      %s246 = smul.addr %s245, 2
      %s247 = scalar_lea.vmem %s2, %s246
      %p248 = pneg %p102
      %p249 = pneg %p99
      %s250 = smul.u32 8, %s20
      %p251 = scmp.lt.s32.totalorder %s19, 1
      %s252 = scalar_select %p251, %s19, 1
      %p253 = scmp.lt.s32.totalorder %s250, 7
      %s254 = scalar_select %p253, %s250, 7
      %s255 = smul.addr %s254, 2
      %s256 = smul.addr %s252, 16
      %s257 = sadd.s32 %s255, %s256
      %s258 = smul.addr %s257, 4
      %s259 = scalar_lea.vmem %s3, %s258
      %p260 = pneg %p130
      %p261 = pneg %p127
      %p262 = pneg %p158
      %p263 = pneg %p155
      %s264 = smul.u32 8, %s20
      %p265 = scmp.lt.s32.totalorder %s19, 1
      %s266 = scalar_select %p265, %s19, 1
      %p267 = scmp.lt.s32.totalorder %s264, 7
      %s268 = scalar_select %p267, %s264, 7
      %s269 = smul.addr %s268, 2
      %s270 = smul.addr %s266, 16
      %s271 = sadd.s32 %s269, %s270
      %s272 = smul.addr %s271, 4
      %s273 = scalar_lea.vmem %s4, %s272
      %s274 = smul.u32 8, %s20
      %p275 = scmp.lt.s32.totalorder %s19, 1
      %s276 = scalar_select %p275, %s19, 1
      %p277 = scmp.lt.s32.totalorder %s274, 7
      %s278 = scalar_select %p277, %s274, 7
      %s279 = smul.addr %s278, 2
      %s280 = smul.addr %s276, 16
      %s281 = sadd.s32 %s279, %s280
      %s282 = smul.addr %s281, 4
      %s283 = scalar_lea.vmem %s0, %s282
      %s284 = smul.u32 8, %s20
      %p285 = scmp.lt.s32.totalorder %s19, 1
      %s286 = scalar_select %p285, %s19, 1
      %s287 = smul.addr %s286, 2
      %s288 = scalar_lea.vmem %s1, %s287
      %p289 = scmp.lt.s32.totalorder %s19, 1
      %s290 = scalar_select %p289, %s19, 1
      %s291 = smul.addr %s290, 2
      %s292 = scalar_lea.vmem %s2, %s291
      %s293 = smul.u32 8, %s20
      %p294 = scmp.lt.s32.totalorder %s19, 1
      %s295 = scalar_select %p294, %s19, 1
      %p296 = scmp.lt.s32.totalorder %s293, 7
      %s297 = scalar_select %p296, %s293, 7
      %s298 = smul.addr %s297, 2
      %s299 = smul.addr %s295, 16
      %s300 = sadd.s32 %s298, %s299
      %s301 = smul.addr %s300, 4
      %s302 = scalar_lea.vmem %s3, %s301
      %s303 = smul.u32 8, %s20
      %s304 = smul.u32 8, %s20
      %p305 = scmp.lt.s32.totalorder %s19, 1
      %s306 = scalar_select %p305, %s19, 1
      %p307 = scmp.lt.s32.totalorder %s304, 7
      %s308 = scalar_select %p307, %s304, 7
      %s309 = smul.addr %s308, 2
      %s310 = smul.addr %s306, 16
      %s311 = sadd.s32 %s309, %s310
      %s312 = smul.addr %s311, 4
      %s313 = scalar_lea.vmem %s4, %s312
      %s314 = smul.u32 8, %s20
      %v315 = vld [vmem:[%s283] sm:$0xff]
      %v316 = vld [vmem:[%s283 + $0x8] sm:$0xff]
      %v317 = vld [vmem:[%s283 + $0x10] sm:$0xff]
      %v318 = vld [vmem:[%s283 + $0x18] sm:$0xff]
      %v319 = vld [vmem:[%s283 + $0x20] sm:$0xff]
      %v320 = vld [vmem:[%s283 + $0x28] sm:$0xff]
      %v321 = vld [vmem:[%s283 + $0x30] sm:$0xff]
      %v322 = vld [vmem:[%s283 + $0x38] sm:$0xff]
      %v323 = vunpack.c.l.bf16 %v315
      %v324 = vunpack.c.h.bf16 %v315
      %v325 = vunpack.c.l.bf16 %v316
      %v326 = vunpack.c.h.bf16 %v316
      %v327 = vunpack.c.l.bf16 %v317
      %v328 = vunpack.c.h.bf16 %v317
      %v329 = vunpack.c.l.bf16 %v318
      %v330 = vunpack.c.h.bf16 %v318
      %v331 = vunpack.c.l.bf16 %v319
      %v332 = vunpack.c.h.bf16 %v319
      %v333 = vunpack.c.l.bf16 %v320
      %v334 = vunpack.c.h.bf16 %v320
      %v335 = vunpack.c.l.bf16 %v321
      %v336 = vunpack.c.h.bf16 %v321
      %v337 = vunpack.c.l.bf16 %v322
      %v338 = vunpack.c.h.bf16 %v322
      %v339 = vld [vmem:[%s288] sm:$0x3]
      %v341 = vlaneseq
      %v342 = vshrl.u32 %v341, 7
      %v343 = vsub.s32 0, %v342
      %v344 = vrot.slane %v339, %v343
      %v345 = vlaneseq
      %v346 = vshrl.u32 %v345, 7
      %v347 = vsub.s32 1, %v346
      %v348 = vrot.slane %v339, %v347
      %v351 = vmul.f32 %v323, %v344
      %v352 = vmul.f32 %v324, %v348
      %v353 = vmul.f32 %v325, %v344
      %v354 = vmul.f32 %v326, %v348
      %v355 = vmul.f32 %v327, %v344
      %v356 = vmul.f32 %v328, %v348
      %v357 = vmul.f32 %v329, %v344
      %v358 = vmul.f32 %v330, %v348
      %v359 = vmul.f32 %v331, %v344
      %v360 = vmul.f32 %v332, %v348
      %v361 = vmul.f32 %v333, %v344
      %v362 = vmul.f32 %v334, %v348
      %v363 = vmul.f32 %v335, %v344
      %v364 = vmul.f32 %v336, %v348
      %v365 = vmul.f32 %v337, %v344
      %v366 = vmul.f32 %v338, %v348
      %v367 = vld [vmem:[%s292] sm:$0x3]
      %v369 = vlaneseq
      %v370 = vshrl.u32 %v369, 7
      %v371 = vsub.s32 0, %v370
      %v372 = vrot.slane %v367, %v371
      %v373 = vlaneseq
      %v374 = vshrl.u32 %v373, 7
      %v375 = vsub.s32 1, %v374
      %v376 = vrot.slane %v367, %v375
      %v379 = vadd.f32 %v351, %v372
      %v380 = vadd.f32 %v352, %v376
      %v381 = vadd.f32 %v353, %v372
      %v382 = vadd.f32 %v354, %v376
      %v383 = vadd.f32 %v355, %v372
      %v384 = vadd.f32 %v356, %v376
      %v385 = vadd.f32 %v357, %v372
      %v386 = vadd.f32 %v358, %v376
      %v387 = vadd.f32 %v359, %v372
      %v388 = vadd.f32 %v360, %v376
      %v389 = vadd.f32 %v361, %v372
      %v390 = vadd.f32 %v362, %v376
      %v391 = vadd.f32 %v363, %v372
      %v392 = vadd.f32 %v364, %v376
      %v393 = vadd.f32 %v365, %v372
      %v394 = vadd.f32 %v366, %v376
      %v395 = vld [vmem:[%s302] sm:$0xff]
      %v396 = vld [vmem:[%s302 + $0x8] sm:$0xff]
      %v397 = vld [vmem:[%s302 + $0x10] sm:$0xff]
      %v398 = vld [vmem:[%s302 + $0x18] sm:$0xff]
      %v399 = vld [vmem:[%s302 + $0x20] sm:$0xff]
      %v400 = vld [vmem:[%s302 + $0x28] sm:$0xff]
      %v401 = vld [vmem:[%s302 + $0x30] sm:$0xff]
      %v402 = vld [vmem:[%s302 + $0x38] sm:$0xff]
      %v403 = vunpack.c.l.bf16 %v395
      %v404 = vunpack.c.h.bf16 %v395
      %v405 = vunpack.c.l.bf16 %v396
      %v406 = vunpack.c.h.bf16 %v396
      %v407 = vunpack.c.l.bf16 %v397
      %v408 = vunpack.c.h.bf16 %v397
      %v409 = vunpack.c.l.bf16 %v398
      %v410 = vunpack.c.h.bf16 %v398
      %v411 = vunpack.c.l.bf16 %v399
      %v412 = vunpack.c.h.bf16 %v399
      %v413 = vunpack.c.l.bf16 %v400
      %v414 = vunpack.c.h.bf16 %v400
      %v415 = vunpack.c.l.bf16 %v401
      %v416 = vunpack.c.h.bf16 %v401
      %v417 = vunpack.c.l.bf16 %v402
      %v418 = vunpack.c.h.bf16 %v402
      %v419 = vadd.f32 %v379, %v403
      %v420 = vadd.f32 %v380, %v404
      %v421 = vadd.f32 %v381, %v405
      %v422 = vadd.f32 %v382, %v406
      %v423 = vadd.f32 %v383, %v407
      %v424 = vadd.f32 %v384, %v408
      %v425 = vadd.f32 %v385, %v409
      %v426 = vadd.f32 %v386, %v410
      %v427 = vadd.f32 %v387, %v411
      %v428 = vadd.f32 %v388, %v412
      %v429 = vadd.f32 %v389, %v413
      %v430 = vadd.f32 %v390, %v414
      %v431 = vadd.f32 %v391, %v415
      %v432 = vadd.f32 %v392, %v416
      %v433 = vadd.f32 %v393, %v417
      %v434 = vadd.f32 %v394, %v418
      %v435 = vpack.c.bf16 %v421, %v419
      %v436 = vpack.c.bf16 %v422, %v420
      %v437 = vpack.c.bf16 %v425, %v423
      %v438 = vpack.c.bf16 %v426, %v424
      %v439 = vpack.c.bf16 %v429, %v427
      %v440 = vpack.c.bf16 %v430, %v428
      %v441 = vpack.c.bf16 %v433, %v431
      %v442 = vpack.c.bf16 %v434, %v432
      %v451 = vunpack.c.l.b16 %v435
      %v452 = vunpack.c.l.b16 %v436
      %v453 = vunpack.c.h.b16 %v435
      %v454 = vunpack.c.h.b16 %v436
      %v455 = vunpack.c.l.b16 %v437
      %v456 = vunpack.c.l.b16 %v438
      %v457 = vunpack.c.h.b16 %v437
      %v458 = vunpack.c.h.b16 %v438
      %v459 = vunpack.c.l.b16 %v439
      %v460 = vunpack.c.l.b16 %v440
      %v461 = vunpack.c.h.b16 %v439
      %v462 = vunpack.c.h.b16 %v440
      %v463 = vunpack.c.l.b16 %v441
      %v464 = vunpack.c.l.b16 %v442
      %v465 = vunpack.c.h.b16 %v441
      %v466 = vunpack.c.h.b16 %v442
      %v467 = vpack.c.b16 %v452, %v451
      %v468 = vpack.c.b16 %v454, %v453
      %v469 = vpack.c.b16 %v456, %v455
      %v470 = vpack.c.b16 %v458, %v457
      %v471 = vpack.c.b16 %v460, %v459
      %v472 = vpack.c.b16 %v462, %v461
      %v473 = vpack.c.b16 %v464, %v463
      %v474 = vpack.c.b16 %v466, %v465
      %483 = vst [vmem:[%s313] sm:$0xff] %v467
      %484 = vst [vmem:[%s313 + $0x8] sm:$0xff] %v468
      %485 = vst [vmem:[%s313 + $0x10] sm:$0xff] %v469
      %486 = vst [vmem:[%s313 + $0x18] sm:$0xff] %v470
      %487 = vst [vmem:[%s313 + $0x20] sm:$0xff] %v471
      %488 = vst [vmem:[%s313 + $0x28] sm:$0xff] %v472
      %489 = vst [vmem:[%s313 + $0x30] sm:$0xff] %v473
      %490 = vst [vmem:[%s313 + $0x38] sm:$0xff] %v474
      %s491 = smul.u32 8, %s20
      %p492 = scmp.lt.s32.totalorder %s19, 1
      %s493 = scalar_select %p492, %s19, 1
      %p494 = scmp.lt.s32.totalorder %s491, 7
      %s495 = scalar_select %p494, %s491, 7
      %s496 = smul.addr %s495, 2
      %s497 = smul.addr %s493, 16
      %s498 = sadd.s32 %s496, %s497
      %s499 = smul.addr %s498, 4
      %s500 = scalar_lea.vmem %s4, %s499
      // Predicated region
      $region37: #{cross_dual_path_forward.29} parent=35 // pred_check
        %p501 = pneg %p155
      $region38: #{cross_dual_path_forward.29} parent=35 // pred_check_branch
        %503 = sbr.rel (%p501) target = $region40
      $region39: #{cross_dual_path_forward.29} parent=35 // pred_region
        %s504 = smul.u32 8, %s20
      $region40: #{cross_dual_path_forward.29} parent=35 // pred_fallthru
        _
    $region36: #{cross_dual_path_forward.29} parent=5 // pred_fallthru
      _
    %p505 = scmp.le.s32.totalorder 2, %s10
    // Predicated region
    $region41: #{cross_dual_path_forward.29} parent=5 // pred_check
      %p506 = pneg %p505
    $region42: #{cross_dual_path_forward.29} parent=5 // pred_check_branch
      %508 = sbr.rel (%p506) target = $region44
    $region43: #{cross_dual_path_forward.29} parent=5 // pred_region
      %s509 = ssub.s32 %s10, 2
      // Predicated region
      $region45: #{cross_dual_path_forward.29} parent=43 // pred_check
        %p510 = pneg %p161
      $region46: #{cross_dual_path_forward.29} parent=43 // pred_check_branch
        %512 = sbr.rel (%p510) target = $region48
      $region47: #{cross_dual_path_forward.29} parent=43 // pred_region
        %s513 = smul.u32 8, %s22
        %p514 = scmp.lt.s32.totalorder %s21, 1
        %s515 = scalar_select %p514, %s21, 1
        %p516 = scmp.lt.s32.totalorder %s513, 7
        %s517 = scalar_select %p516, %s513, 7
        %s518 = smul.addr %s517, 2
        %s519 = smul.addr %s515, 16
        %s520 = sadd.s32 %s518, %s519
        %s521 = smul.addr %s520, 4
        %s522 = scalar_lea.vmem %s4, %s521
      $region48: #{cross_dual_path_forward.29} parent=43 // pred_fallthru
        _
    $region44: #{cross_dual_path_forward.29} parent=5 // pred_fallthru
      _
  $region6: #{cross_dual_path_forward.29} parent=0 // loop_footer
    %s14 = sadd.s32 1, %s10
  $region7: #{cross_dual_path_forward.29} parent=0 // loop_footer_branch
    %9 = sbr.rel target = $region3
  $region8: #{cross_dual_path_forward.29} parent=0 // loop_exit
    _

// kernel: cross_dual_path_forward.25
$region0: #{cross_dual_path_forward.25}
  #allocation0 [shape = 'u32[]', space=smem, size = 0x4, offset = 0x4, fixed_abs, tag = 'smem constant byte address 0x4 - core index']
  #allocation1 [shape = 'u32[144,128]{1,0:T(1,128)}', space=vmem, size = 0x12000, scoped, tag = 'internal scratch']
  %s0 = inlined_call_operand.vmem [shape: bf16[2,64,256], index: 0, kind: input, shape index: {}]
  %s1 = inlined_call_operand.vmem [shape: bf16[64,256], index: 1, kind: input, shape index: {}]
  %s2 = inlined_call_operand.vmem [shape: bf16[256,256], index: 2, kind: input, shape index: {}]
  %s3 = inlined_call_operand.vmem [shape: f32[1,256], index: 3, kind: input, shape index: {}]
  %s4 = inlined_call_operand.vmem [shape: bf16[256,256], index: 4, kind: input, shape index: {}]
  %s5 = inlined_call_operand.vmem [shape: f32[1,256], index: 5, kind: input, shape index: {}]
  %s6 = inlined_call_operand.vmem [shape: bf16[2,64,256], index: 6, kind: output, shape index: {0}]
  %s7 = inlined_call_operand.vmem [shape: f32[2,16,256], index: 7, kind: output, shape index: {1}]
  %8 = xla_tuple %s6, %s7
  %s9 = sld [smem:[#allocation0]]
  $region65: #{cross_dual_path_forward.25} parent=0
    _
  %s11 = ssub.s32 1, %s9
  %s12 = scalar_select 0, %s11, %s9
  loop: start=0, step=1, limit=4
  $region2: #{cross_dual_path_forward.25} parent=0 // loop_pre_header
    _
  $region3: #{cross_dual_path_forward.25} parent=0 // loop_header
    %s14 = sphi 0, %s18
    %p15 = scmp.ge.s32.totalorder %s14, 4
    %s21 = sphi 0, %s33
    %s22 = sphi 0, %s29
    %s23 = sphi 0, %s21
    %s24 = sphi 0, %s22
    %s25 = sphi 0, %s23
    %s26 = sphi 0, %s24
    %s38 = sphi 0, %s40
    %s41 = sphi 0, %s38
    %s42 = sphi 0, %s41
    %s58 = sphi 0, %s42
    %s64 = sphi 0, %s66
    %s67 = sphi 0, %s64
    %s68 = sphi 0, %s67
    %s84 = sphi 0, %s68
    %s88 = sphi 0, %s88
    %s90 = sphi 0, %s88
    %s91 = sphi 0, %s90
    %s105 = sphi 0, %s91
    %s109 = sphi 0, %s109
    %s111 = sphi 0, %s109
    %s112 = sphi 0, %s111
    %s126 = sphi 0, %s112
    %s130 = sphi 0, %s130
    %s132 = sphi 0, %s130
    %s133 = sphi 0, %s132
    %s147 = sphi 0, %s133
    %s151 = sphi 0, %s151
    %s153 = sphi 0, %s151
    %s154 = sphi 0, %s153
    %s168 = sphi 0, %s154
    %s176 = sphi 0, %s178
    %s179 = sphi 0, %s176
    %s180 = sphi 0, %s179
    %s196 = sphi 0, %s180
    %s204 = sphi 0, %s206
    %s207 = sphi 0, %s204
    %s208 = sphi 0, %s207
    %s224 = sphi 0, %s208
  $region4: #{cross_dual_path_forward.25} parent=0 // loop_header_branch
    %17 = sbr.rel (%p15) target = $region8
  $region5: #{cross_dual_path_forward.25} parent=0 // loop_body
    %s19 = ssub.s32 %s14, 1
    %s20 = ssub.s32 %s14, 2
    %s27 = sadd.s32 1, %s22
    %p28 = scmp.ge.s32.totalorder %s27, 1
    %s29 = scalar_select %p28, 0, %s27
    %s30 = sadd.s32 1, %s21
    %s31 = scalar_select %p28, %s30, %s21
    %p32 = scmp.ge.s32.totalorder %s31, 2
    %s33 = scalar_select %p32, 0, %s31
    %s34 = ssub.s32 %s21, %s33
    %s35 = ssub.s32 %s22, %s29
    %s36 = sor.u32 %s34, %s35
    %p37 = scmp.eq.s32.totalorder %s36, 0
    %s39 = sadd.s32 %s38, 1
    %s40 = scalar_select %p37, %s38, %s39
    %p43 = pneg %p37
    %p44 = scmp.eq.s32.totalorder %s14, 1
    %p45 = por %p43, %p44
    %p46 = scmp.ne.s32.totalorder %s38, %s41
    %p47 = scmp.eq.s32.totalorder %s14, 0
    %p48 = por %p46, %p47
    %p49 = scmp.ne.s32.totalorder %s38, %s41
    %p50 = scmp.eq.s32.totalorder %s19, 1
    %p51 = por %p49, %p50
    %p52 = scmp.ne.s32.totalorder %s41, %s42
    %p53 = scmp.eq.s32.totalorder %s19, 0
    %p54 = por %p52, %p53
    %p55 = scmp.ne.s32.totalorder %s41, %s42
    %p56 = scmp.eq.s32.totalorder %s20, 1
    %p57 = por %p55, %p56
    %p59 = scmp.ne.s32.totalorder %s42, %s58
    %p60 = scmp.eq.s32.totalorder %s20, 0
    %p61 = por %p59, %p60
    %s62 = ssub.s32 %s22, %s29
    %p63 = scmp.eq.s32.totalorder %s62, 0
    %s65 = sadd.s32 %s64, 1
    %s66 = scalar_select %p63, %s64, %s65
    %p69 = pneg %p63
    %p70 = scmp.eq.s32.totalorder %s14, 1
    %p71 = por %p69, %p70
    %p72 = scmp.ne.s32.totalorder %s64, %s67
    %p73 = scmp.eq.s32.totalorder %s14, 0
    %p74 = por %p72, %p73
    %p75 = scmp.ne.s32.totalorder %s64, %s67
    %p76 = scmp.eq.s32.totalorder %s19, 1
    %p77 = por %p75, %p76
    %p78 = scmp.ne.s32.totalorder %s67, %s68
    %p79 = scmp.eq.s32.totalorder %s19, 0
    %p80 = por %p78, %p79
    %p81 = scmp.ne.s32.totalorder %s67, %s68
    %p82 = scmp.eq.s32.totalorder %s20, 1
    %p83 = por %p81, %p82
    %p85 = scmp.ne.s32.totalorder %s68, %s84
    %p86 = scmp.eq.s32.totalorder %s20, 0
    %p87 = por %p85, %p86
    %s89 = sadd.s32 %s88, 1
    %p92 = scmp.eq.s32.totalorder %s14, 1
    %p93 = scmp.ne.s32.totalorder %s88, %s90
    %p94 = scmp.eq.s32.totalorder %s14, 0
    %p95 = por %p93, %p94
    %p96 = scmp.ne.s32.totalorder %s88, %s90
    %p97 = scmp.eq.s32.totalorder %s19, 1
    %p98 = por %p96, %p97
    %p99 = scmp.ne.s32.totalorder %s90, %s91
    %p100 = scmp.eq.s32.totalorder %s19, 0
    %p101 = por %p99, %p100
    %p102 = scmp.ne.s32.totalorder %s90, %s91
    %p103 = scmp.eq.s32.totalorder %s20, 1
    %p104 = por %p102, %p103
    %p106 = scmp.ne.s32.totalorder %s91, %s105
    %p107 = scmp.eq.s32.totalorder %s20, 0
    %p108 = por %p106, %p107
    %s110 = sadd.s32 %s109, 1
    %p113 = scmp.eq.s32.totalorder %s14, 1
    %p114 = scmp.ne.s32.totalorder %s109, %s111
    %p115 = scmp.eq.s32.totalorder %s14, 0
    %p116 = por %p114, %p115
    %p117 = scmp.ne.s32.totalorder %s109, %s111
    %p118 = scmp.eq.s32.totalorder %s19, 1
    %p119 = por %p117, %p118
    %p120 = scmp.ne.s32.totalorder %s111, %s112
    %p121 = scmp.eq.s32.totalorder %s19, 0
    %p122 = por %p120, %p121
    %p123 = scmp.ne.s32.totalorder %s111, %s112
    %p124 = scmp.eq.s32.totalorder %s20, 1
    %p125 = por %p123, %p124
    %p127 = scmp.ne.s32.totalorder %s112, %s126
    %p128 = scmp.eq.s32.totalorder %s20, 0
    %p129 = por %p127, %p128
    %s131 = sadd.s32 %s130, 1
    %p134 = scmp.eq.s32.totalorder %s14, 1
    %p135 = scmp.ne.s32.totalorder %s130, %s132
    %p136 = scmp.eq.s32.totalorder %s14, 0
    %p137 = por %p135, %p136
    %p138 = scmp.ne.s32.totalorder %s130, %s132
    %p139 = scmp.eq.s32.totalorder %s19, 1
    %p140 = por %p138, %p139
    %p141 = scmp.ne.s32.totalorder %s132, %s133
    %p142 = scmp.eq.s32.totalorder %s19, 0
    %p143 = por %p141, %p142
    %p144 = scmp.ne.s32.totalorder %s132, %s133
    %p145 = scmp.eq.s32.totalorder %s20, 1
    %p146 = por %p144, %p145
    %p148 = scmp.ne.s32.totalorder %s133, %s147
    %p149 = scmp.eq.s32.totalorder %s20, 0
    %p150 = por %p148, %p149
    %s152 = sadd.s32 %s151, 1
    %p155 = scmp.eq.s32.totalorder %s14, 1
    %p156 = scmp.ne.s32.totalorder %s151, %s153
    %p157 = scmp.eq.s32.totalorder %s14, 0
    %p158 = por %p156, %p157
    %p159 = scmp.ne.s32.totalorder %s151, %s153
    %p160 = scmp.eq.s32.totalorder %s19, 1
    %p161 = por %p159, %p160
    %p162 = scmp.ne.s32.totalorder %s153, %s154
    %p163 = scmp.eq.s32.totalorder %s19, 0
    %p164 = por %p162, %p163
    %p165 = scmp.ne.s32.totalorder %s153, %s154
    %p166 = scmp.eq.s32.totalorder %s20, 1
    %p167 = por %p165, %p166
    %p169 = scmp.ne.s32.totalorder %s154, %s168
    %p170 = scmp.eq.s32.totalorder %s20, 0
    %p171 = por %p169, %p170
    %s172 = ssub.s32 %s21, %s33
    %s173 = ssub.s32 %s22, %s29
    %s174 = sor.u32 %s172, %s173
    %p175 = scmp.eq.s32.totalorder %s174, 0
    %s177 = sadd.s32 %s176, 1
    %s178 = scalar_select %p175, %s176, %s177
    %p181 = pneg %p175
    %p182 = scmp.eq.s32.totalorder %s14, 1
    %p183 = por %p181, %p182
    %p184 = scmp.ne.s32.totalorder %s176, %s179
    %p185 = scmp.eq.s32.totalorder %s14, 0
    %p186 = por %p184, %p185
    %p187 = scmp.ne.s32.totalorder %s176, %s179
    %p188 = scmp.eq.s32.totalorder %s19, 1
    %p189 = por %p187, %p188
    %p190 = scmp.ne.s32.totalorder %s179, %s180
    %p191 = scmp.eq.s32.totalorder %s19, 0
    %p192 = por %p190, %p191
    %p193 = scmp.ne.s32.totalorder %s179, %s180
    %p194 = scmp.eq.s32.totalorder %s20, 1
    %p195 = por %p193, %p194
    %p197 = scmp.ne.s32.totalorder %s180, %s196
    %p198 = scmp.eq.s32.totalorder %s20, 0
    %p199 = por %p197, %p198
    %s200 = ssub.s32 %s21, %s33
    %s201 = ssub.s32 %s22, %s29
    %s202 = sor.u32 %s200, %s201
    %p203 = scmp.eq.s32.totalorder %s202, 0
    %s205 = sadd.s32 %s204, 1
    %s206 = scalar_select %p203, %s204, %s205
    %p209 = pneg %p203
    %p210 = scmp.eq.s32.totalorder %s14, 1
    %p211 = por %p209, %p210
    %p212 = scmp.ne.s32.totalorder %s204, %s207
    %p213 = scmp.eq.s32.totalorder %s14, 0
    %p214 = por %p212, %p213
    %p215 = scmp.ne.s32.totalorder %s204, %s207
    %p216 = scmp.eq.s32.totalorder %s19, 1
    %p217 = por %p215, %p216
    %p218 = scmp.ne.s32.totalorder %s207, %s208
    %p219 = scmp.eq.s32.totalorder %s19, 0
    %p220 = por %p218, %p219
    %p221 = scmp.ne.s32.totalorder %s207, %s208
    %p222 = scmp.eq.s32.totalorder %s20, 1
    %p223 = por %p221, %p222
    %p225 = scmp.ne.s32.totalorder %s208, %s224
    %p226 = scmp.eq.s32.totalorder %s20, 0
    %p227 = por %p225, %p226
    %p228 = scmp.le.s32.totalorder 1, %s14
    %p229 = scmp.lt.s32.totalorder %s14, 3
    %p230 = pnand %p228, %p229
    %p231 = pneg %p230
    // Predicated region
    $region9: #{cross_dual_path_forward.25} parent=5 // pred_check
      _
    $region10: #{cross_dual_path_forward.25} parent=5 // pred_check_branch
      %233 = sbr.rel (%p230) target = $region12
    $region11: #{cross_dual_path_forward.25} parent=5 // pred_region
      %s234 = ssub.s32 %s14, 1
      // Predicated region
      $region13: #{cross_dual_path_forward.25} parent=11 // pred_check
        %p235 = pneg %p80
      $region14: #{cross_dual_path_forward.25} parent=11 // pred_check_branch
        %237 = sbr.rel (%p235) target = $region16
      $region15: #{cross_dual_path_forward.25} parent=11 // pred_region
        %s238 = smul.u32 8, %s24
        %p239 = scmp.lt.s32.totalorder %s238, 7
        %s240 = scalar_select %p239, %s238, 7
        %s241 = smul.addr %s240, 2
        %s242 = smul.addr %s241, 4
        %s243 = scalar_lea.vmem %s1, %s242
        %s244 = smul.u32 8, %s24
      $region16: #{cross_dual_path_forward.25} parent=11 // pred_fallthru
        _
      // Predicated region
      $region17: #{cross_dual_path_forward.25} parent=11 // pred_check
        %p245 = pneg %p101
      $region18: #{cross_dual_path_forward.25} parent=11 // pred_check_branch
        %247 = sbr.rel (%p245) target = $region20
      $region19: #{cross_dual_path_forward.25} parent=11 // pred_region
        _
      $region20: #{cross_dual_path_forward.25} parent=11 // pred_fallthru
        _
      // Predicated region
      $region21: #{cross_dual_path_forward.25} parent=11 // pred_check
        %p248 = pneg %p122
      $region22: #{cross_dual_path_forward.25} parent=11 // pred_check_branch
        %250 = sbr.rel (%p248) target = $region24
      $region23: #{cross_dual_path_forward.25} parent=11 // pred_region
        _
      $region24: #{cross_dual_path_forward.25} parent=11 // pred_fallthru
        _
      // Predicated region
      $region25: #{cross_dual_path_forward.25} parent=11 // pred_check
        %p251 = pneg %p143
      $region26: #{cross_dual_path_forward.25} parent=11 // pred_check_branch
        %253 = sbr.rel (%p251) target = $region28
      $region27: #{cross_dual_path_forward.25} parent=11 // pred_region
        _
      $region28: #{cross_dual_path_forward.25} parent=11 // pred_fallthru
        _
      // Predicated region
      $region29: #{cross_dual_path_forward.25} parent=11 // pred_check
        %p254 = pneg %p164
      $region30: #{cross_dual_path_forward.25} parent=11 // pred_check_branch
        %256 = sbr.rel (%p254) target = $region32
      $region31: #{cross_dual_path_forward.25} parent=11 // pred_region
        _
      $region32: #{cross_dual_path_forward.25} parent=11 // pred_fallthru
        _
    $region12: #{cross_dual_path_forward.25} parent=5 // pred_fallthru
      _
    %p257 = scmp.lt.s32.totalorder %s14, 2
    // Predicated region
    $region33: #{cross_dual_path_forward.25} parent=5 // pred_check
      %p258 = pneg %p257
    $region34: #{cross_dual_path_forward.25} parent=5 // pred_check_branch
      %260 = sbr.rel (%p258) target = $region36
    $region35: #{cross_dual_path_forward.25} parent=5 // pred_region
      // Predicated region
      $region37: #{cross_dual_path_forward.25} parent=35 // pred_check
        %p261 = pneg %p48
      $region38: #{cross_dual_path_forward.25} parent=35 // pred_check_branch
        %263 = sbr.rel (%p261) target = $region40
      $region39: #{cross_dual_path_forward.25} parent=35 // pred_region
        %s264 = smul.u32 8, %s22
        %p265 = scmp.lt.s32.totalorder %s21, 1
        %s266 = scalar_select %p265, %s21, 1
        %p267 = scmp.lt.s32.totalorder %s264, 7
        %s268 = scalar_select %p267, %s264, 7
        %s269 = smul.addr %s268, 2
        %s270 = smul.addr %s266, 16
        %s271 = sadd.s32 %s269, %s270
        %s272 = smul.addr %s271, 4
        %s273 = scalar_lea.vmem %s0, %s272
        %s274 = smul.u32 8, %s22
      $region40: #{cross_dual_path_forward.25} parent=35 // pred_fallthru
        _
    $region36: #{cross_dual_path_forward.25} parent=5 // pred_fallthru
      _
    %p275 = scmp.le.s32.totalorder 1, %s14
    %p276 = scmp.lt.s32.totalorder %s14, 3
    %p277 = pnand %p275, %p276
    %p278 = pneg %p277
    // Predicated region
    $region41: #{cross_dual_path_forward.25} parent=5 // pred_check
      _
    $region42: #{cross_dual_path_forward.25} parent=5 // pred_check_branch
      %280 = sbr.rel (%p277) target = $region44
    $region43: #{cross_dual_path_forward.25} parent=5 // pred_region
      %s281 = ssub.s32 %s14, 1
      %s282 = smul.u32 8, %s24
      %p283 = scmp.lt.s32.totalorder %s23, 1
      %s284 = scalar_select %p283, %s23, 1
      %p285 = scmp.lt.s32.totalorder %s282, 7
      %s286 = scalar_select %p285, %s282, 7
      %s287 = smul.addr %s286, 2
      %s288 = smul.addr %s284, 16
      %s289 = sadd.s32 %s287, %s288
      %s290 = smul.addr %s289, 4
      %s291 = scalar_lea.vmem %s0, %s290
      %p292 = pneg %p54
      %p293 = pneg %p51
      %s294 = smul.u32 8, %s24
      %p295 = scmp.lt.s32.totalorder %s294, 7
      %s296 = scalar_select %p295, %s294, 7
      %s297 = smul.addr %s296, 2
      %s298 = smul.addr %s297, 4
      %s299 = scalar_lea.vmem %s1, %s298
      %p300 = pneg %p80
      %p301 = pneg %p77
      %p302 = pneg %p101
      %p303 = pneg %p98
      %p304 = pneg %p122
      %p305 = pneg %p119
      %p306 = pneg %p143
      %p307 = pneg %p140
      %p308 = pneg %p164
      %p309 = pneg %p161
      %p310 = pneg %p192
      %p311 = pneg %p189
      %s312 = smul.u32 8, %s24
      %p313 = scmp.lt.s32.totalorder %s23, 1
      %s314 = scalar_select %p313, %s23, 1
      %p315 = scmp.lt.s32.totalorder %s312, 7
      %s316 = scalar_select %p315, %s312, 7
      %s317 = smul.addr %s316, 2
      %s318 = smul.addr %s314, 16
      %s319 = sadd.s32 %s317, %s318
      %s320 = smul.addr %s319, 4
      %s321 = scalar_lea.vmem %s6, %s320
      %p322 = pneg %p220
      %p323 = pneg %p217
      %s324 = smul.u32 2, %s24
      %p325 = scmp.lt.s32.totalorder %s23, 1
      %s326 = scalar_select %p325, %s23, 1
      %p327 = scmp.lt.s32.totalorder %s324, 1
      %s328 = scalar_select %p327, %s324, 1
      %s329 = smul.addr %s328, 2
      %s330 = smul.addr %s326, 4
      %s331 = sadd.s32 %s329, %s330
      %s332 = smul.addr %s331, 8
      %s333 = scalar_lea.vmem %s7, %s332
      %s334 = smul.u32 8, %s24
      %p335 = scmp.lt.s32.totalorder %s23, 1
      %s336 = scalar_select %p335, %s23, 1
      %p337 = scmp.lt.s32.totalorder %s334, 7
      %s338 = scalar_select %p337, %s334, 7
      %s339 = smul.addr %s338, 2
      %s340 = smul.addr %s336, 16
      %s341 = sadd.s32 %s339, %s340
      %s342 = smul.addr %s341, 4
      %s343 = scalar_lea.vmem %s0, %s342
      %s344 = smul.u32 8, %s24
      %s345 = smul.u32 8, %s24
      %p346 = scmp.lt.s32.totalorder %s345, 7
      %s347 = scalar_select %p346, %s345, 7
      %s348 = smul.addr %s347, 2
      %s349 = smul.addr %s348, 4
      %s350 = scalar_lea.vmem %s1, %s349
      %s351 = smul.u32 8, %s24
      %s352 = smul.u32 8, %s24
      %p353 = scmp.lt.s32.totalorder %s23, 1
      %s354 = scalar_select %p353, %s23, 1
      %p355 = scmp.lt.s32.totalorder %s352, 7
      %s356 = scalar_select %p355, %s352, 7
      %s357 = smul.addr %s356, 2
      %s358 = smul.addr %s354, 16
      %s359 = sadd.s32 %s357, %s358
      %s360 = smul.addr %s359, 4
      %s361 = scalar_lea.vmem %s6, %s360
      %s362 = smul.u32 8, %s24
      %s363 = smul.u32 2, %s24
      %p364 = scmp.lt.s32.totalorder %s23, 1
      %s365 = scalar_select %p364, %s23, 1
      %p366 = scmp.lt.s32.totalorder %s363, 1
      %s367 = scalar_select %p366, %s363, 1
      %s368 = smul.addr %s367, 2
      %s369 = smul.addr %s365, 4
      %s370 = sadd.s32 %s368, %s369
      %s371 = smul.addr %s370, 8
      %s372 = scalar_lea.vmem %s7, %s371
      %s373 = smul.u32 2, %s24
      %v374 = vld [vmem:[%s343] sm:$0xff]
      %v375 = vld [vmem:[%s343 + $0x8] sm:$0xff]
      %v376 = vld [vmem:[%s343 + $0x10] sm:$0xff]
      %v377 = vld [vmem:[%s343 + $0x18] sm:$0xff]
      %v378 = vld [vmem:[%s343 + $0x20] sm:$0xff]
      %v379 = vld [vmem:[%s343 + $0x28] sm:$0xff]
      %v380 = vld [vmem:[%s343 + $0x30] sm:$0xff]
      %v381 = vld [vmem:[%s343 + $0x38] sm:$0xff]
      %v382 = vld [vmem:[%s350] sm:$0xff]
      %v383 = vld [vmem:[%s350 + $0x8] sm:$0xff]
      %v384 = vld [vmem:[%s350 + $0x10] sm:$0xff]
      %v385 = vld [vmem:[%s350 + $0x18] sm:$0xff]
      %v386 = vld [vmem:[%s350 + $0x20] sm:$0xff]
      %v387 = vld [vmem:[%s350 + $0x28] sm:$0xff]
      %v388 = vld [vmem:[%s350 + $0x30] sm:$0xff]
      %v389 = vld [vmem:[%s350 + $0x38] sm:$0xff]
      %v390 = vadd.bf16 %v374, %v382
      %v391 = vadd.bf16 %v375, %v383
      %v392 = vadd.bf16 %v376, %v384
      %v393 = vadd.bf16 %v377, %v385
      %v394 = vadd.bf16 %v378, %v386
      %v395 = vadd.bf16 %v379, %v387
      %v396 = vadd.bf16 %v380, %v388
      %v397 = vadd.bf16 %v381, %v389
      %v398 = vld [vmem:[%s2] sm:$0xff]
      %v399 = vld [vmem:[%s2 + $0x8] sm:$0xff]
      %v400 = vld [vmem:[%s2 + $0x10] sm:$0xff]
      %v401 = vld [vmem:[%s2 + $0x18] sm:$0xff]
      %v402 = vld [vmem:[%s2 + $0x20] sm:$0xff]
      %v403 = vld [vmem:[%s2 + $0x28] sm:$0xff]
      %v404 = vld [vmem:[%s2 + $0x30] sm:$0xff]
      %v405 = vld [vmem:[%s2 + $0x38] sm:$0xff]
      %v406 = vld [vmem:[%s2 + $0x40] sm:$0xff]
      %v407 = vld [vmem:[%s2 + $0x48] sm:$0xff]
      %v408 = vld [vmem:[%s2 + $0x50] sm:$0xff]
      %v409 = vld [vmem:[%s2 + $0x58] sm:$0xff]
      %v410 = vld [vmem:[%s2 + $0x60] sm:$0xff]
      %v411 = vld [vmem:[%s2 + $0x68] sm:$0xff]
      %v412 = vld [vmem:[%s2 + $0x70] sm:$0xff]
      %v413 = vld [vmem:[%s2 + $0x78] sm:$0xff]
      %v414 = vld [vmem:[%s2 + $0x80] sm:$0xff]
      %v415 = vld [vmem:[%s2 + $0x88] sm:$0xff]
      %v416 = vld [vmem:[%s2 + $0x90] sm:$0xff]
      %v417 = vld [vmem:[%s2 + $0x98] sm:$0xff]
      %v418 = vld [vmem:[%s2 + $0xa0] sm:$0xff]
      %v419 = vld [vmem:[%s2 + $0xa8] sm:$0xff]
      %v420 = vld [vmem:[%s2 + $0xb0] sm:$0xff]
      %v421 = vld [vmem:[%s2 + $0xb8] sm:$0xff]
      %v422 = vld [vmem:[%s2 + $0xc0] sm:$0xff]
      %v423 = vld [vmem:[%s2 + $0xc8] sm:$0xff]
      %v424 = vld [vmem:[%s2 + $0xd0] sm:$0xff]
      %v425 = vld [vmem:[%s2 + $0xd8] sm:$0xff]
      %v426 = vld [vmem:[%s2 + $0xe0] sm:$0xff]
      %v427 = vld [vmem:[%s2 + $0xe8] sm:$0xff]
      %v428 = vld [vmem:[%s2 + $0xf0] sm:$0xff]
      %v429 = vld [vmem:[%s2 + $0xf8] sm:$0xff]
      %v430 = vld [vmem:[%s3] sm:$0x3]
      %v432 = vlaneseq
      %v433 = vshrl.u32 %v432, 7
      %v434 = vsub.s32 0, %v433
      %v435 = vrot.slane %v430, %v434
      %v436 = vlaneseq
      %v437 = vshrl.u32 %v436, 7
      %v438 = vsub.s32 1, %v437
      %v439 = vrot.slane %v430, %v438
      %v450 = vunpack.c.l.b16 %v390
      %v451 = vunpack.c.h.b16 %v390
      %v452 = vunpack.c.l.b16 %v391
      %v453 = vunpack.c.h.b16 %v391
      %v454 = vunpack.c.l.b16 %v392
      %v455 = vunpack.c.h.b16 %v392
      %v456 = vunpack.c.l.b16 %v393
      %v457 = vunpack.c.h.b16 %v393
      %v458 = vunpack.c.l.b16 %v394
      %v459 = vunpack.c.h.b16 %v394
      %v460 = vunpack.c.l.b16 %v395
      %v461 = vunpack.c.h.b16 %v395
      %v462 = vunpack.c.l.b16 %v396
      %v463 = vunpack.c.h.b16 %v396
      %v464 = vunpack.c.l.b16 %v397
      %v465 = vunpack.c.h.b16 %v397
      %v466 = vpack.c.b16 %v452, %v450
      %v467 = vpack.c.b16 %v453, %v451
      %v468 = vpack.c.b16 %v456, %v454
      %v469 = vpack.c.b16 %v457, %v455
      %v470 = vpack.c.b16 %v460, %v458
      %v471 = vpack.c.b16 %v461, %v459
      %v472 = vpack.c.b16 %v464, %v462
      %v473 = vpack.c.b16 %v465, %v463
      %v514 = vunpack.c.l.b16 %v398
      %v515 = vunpack.c.h.b16 %v398
      %v516 = vunpack.c.l.b16 %v399
      %v517 = vunpack.c.h.b16 %v399
      %v518 = vunpack.c.l.b16 %v400
      %v519 = vunpack.c.h.b16 %v400
      %v520 = vunpack.c.l.b16 %v401
      %v521 = vunpack.c.h.b16 %v401
      %v522 = vunpack.c.l.b16 %v402
      %v523 = vunpack.c.h.b16 %v402
      %v524 = vunpack.c.l.b16 %v403
      %v525 = vunpack.c.h.b16 %v403
      %v526 = vunpack.c.l.b16 %v404
      %v527 = vunpack.c.h.b16 %v404
      %v528 = vunpack.c.l.b16 %v405
      %v529 = vunpack.c.h.b16 %v405
      %v530 = vunpack.c.l.b16 %v406
      %v531 = vunpack.c.h.b16 %v406
      %v532 = vunpack.c.l.b16 %v407
      %v533 = vunpack.c.h.b16 %v407
      %v534 = vunpack.c.l.b16 %v408
      %v535 = vunpack.c.h.b16 %v408
      %v536 = vunpack.c.l.b16 %v409
      %v537 = vunpack.c.h.b16 %v409
      %v538 = vunpack.c.l.b16 %v410
      %v539 = vunpack.c.h.b16 %v410
      %v540 = vunpack.c.l.b16 %v411
      %v541 = vunpack.c.h.b16 %v411
      %v542 = vunpack.c.l.b16 %v412
      %v543 = vunpack.c.h.b16 %v412
      %v544 = vunpack.c.l.b16 %v413
      %v545 = vunpack.c.h.b16 %v413
      %v546 = vunpack.c.l.b16 %v414
      %v547 = vunpack.c.h.b16 %v414
      %v548 = vunpack.c.l.b16 %v415
      %v549 = vunpack.c.h.b16 %v415
      %v550 = vunpack.c.l.b16 %v416
      %v551 = vunpack.c.h.b16 %v416
      %v552 = vunpack.c.l.b16 %v417
      %v553 = vunpack.c.h.b16 %v417
      %v554 = vunpack.c.l.b16 %v418
      %v555 = vunpack.c.h.b16 %v418
      %v556 = vunpack.c.l.b16 %v419
      %v557 = vunpack.c.h.b16 %v419
      %v558 = vunpack.c.l.b16 %v420
      %v559 = vunpack.c.h.b16 %v420
      %v560 = vunpack.c.l.b16 %v421
      %v561 = vunpack.c.h.b16 %v421
      %v562 = vunpack.c.l.b16 %v422
      %v563 = vunpack.c.h.b16 %v422
      %v564 = vunpack.c.l.b16 %v423
      %v565 = vunpack.c.h.b16 %v423
      %v566 = vunpack.c.l.b16 %v424
      %v567 = vunpack.c.h.b16 %v424
      %v568 = vunpack.c.l.b16 %v425
      %v569 = vunpack.c.h.b16 %v425
      %v570 = vunpack.c.l.b16 %v426
      %v571 = vunpack.c.h.b16 %v426
      %v572 = vunpack.c.l.b16 %v427
      %v573 = vunpack.c.h.b16 %v427
      %v574 = vunpack.c.l.b16 %v428
      %v575 = vunpack.c.h.b16 %v428
      %v576 = vunpack.c.l.b16 %v429
      %v577 = vunpack.c.h.b16 %v429
      %v578 = vpack.c.b16 %v516, %v514
      %v579 = vpack.c.b16 %v517, %v515
      %v580 = vpack.c.b16 %v520, %v518
      %v581 = vpack.c.b16 %v521, %v519
      %v582 = vpack.c.b16 %v524, %v522
      %v583 = vpack.c.b16 %v525, %v523
      %v584 = vpack.c.b16 %v528, %v526
      %v585 = vpack.c.b16 %v529, %v527
      %v586 = vpack.c.b16 %v532, %v530
      %v587 = vpack.c.b16 %v533, %v531
      %v588 = vpack.c.b16 %v536, %v534
      %v589 = vpack.c.b16 %v537, %v535
      %v590 = vpack.c.b16 %v540, %v538
      %v591 = vpack.c.b16 %v541, %v539
      %v592 = vpack.c.b16 %v544, %v542
      %v593 = vpack.c.b16 %v545, %v543
      %v594 = vpack.c.b16 %v548, %v546
      %v595 = vpack.c.b16 %v549, %v547
      %v596 = vpack.c.b16 %v552, %v550
      %v597 = vpack.c.b16 %v553, %v551
      %v598 = vpack.c.b16 %v556, %v554
      %v599 = vpack.c.b16 %v557, %v555
      %v600 = vpack.c.b16 %v560, %v558
      %v601 = vpack.c.b16 %v561, %v559
      %v602 = vpack.c.b16 %v564, %v562
      %v603 = vpack.c.b16 %v565, %v563
      %v604 = vpack.c.b16 %v568, %v566
      %v605 = vpack.c.b16 %v569, %v567
      %v606 = vpack.c.b16 %v572, %v570
      %v607 = vpack.c.b16 %v573, %v571
      %v608 = vpack.c.b16 %v576, %v574
      %v609 = vpack.c.b16 %v577, %v575
      %642 = vmatprep.subr.bf16.mxu0 %v593
      %643 = vmatpush1.bf16.msra.mxu0 %v592
      %644 = vmatprep.subr.bf16.mxu0 %v591
      %645 = vmatpush1.bf16.msra.mxu0 %v590
      %646 = vmatprep.subr.bf16.mxu0 %v589
      %647 = vmatpush1.bf16.msra.mxu0 %v588
      %648 = vmatprep.subr.bf16.mxu0 %v587
      %649 = vmatpush1.bf16.msra.mxu0 %v586
      %650 = vmatprep.subr.bf16.mxu0 %v585
      %651 = vmatpush1.bf16.msra.mxu0 %v584
      %652 = vmatprep.subr.bf16.mxu0 %v583
      %653 = vmatpush1.bf16.msra.mxu0 %v582
      %654 = vmatprep.subr.bf16.mxu0 %v581
      %655 = vmatpush1.bf16.msra.mxu0 %v580
      %656 = vmatprep.subr.bf16.mxu0 %v579
      %657 = vmatpush1.bf16.msra.mxu0 %v578
      %658 = vmatprep.subr.bf16.mxu0 %v609
      %659 = vmatpush2.bf16.msra.mxu0 %v608
      %660 = vmatprep.subr.bf16.mxu0 %v607
      %661 = vmatpush2.bf16.msra.mxu0 %v606
      %662 = vmatprep.subr.bf16.mxu0 %v605
      %663 = vmatpush2.bf16.msra.mxu0 %v604
      %664 = vmatprep.subr.bf16.mxu0 %v603
      %665 = vmatpush2.bf16.msra.mxu0 %v602
      %666 = vmatprep.subr.bf16.mxu0 %v601
      %667 = vmatpush2.bf16.msra.mxu0 %v600
      %668 = vmatprep.subr.bf16.mxu0 %v599
      %669 = vmatpush2.bf16.msra.mxu0 %v598
      %670 = vmatprep.subr.bf16.mxu0 %v597
      %671 = vmatpush2.bf16.msra.mxu0 %v596
      %672 = vmatprep.subr.bf16.mxu0 %v595
      %673 = vmatpush2.bf16.msra.mxu0 %v594
      %674 = vmatprep.mubr.bf16.mxu0 %v467
      %675 = vmatmul.mubr.bf16.gmra.mxu0 %v466
      %v676 = vpop.f32.mrf.mxu0
      %v677 = vadd.f32 %v435, %v676
      %v678 = vpop.f32.mrf.mxu0
      %v679 = vadd.f32 %v439, %v678
      %v680 = vpop.f32.mrf.mxu0
      %v681 = vadd.f32 %v435, %v680
      %v682 = vpop.f32.mrf.mxu0
      %v683 = vadd.f32 %v439, %v682
      %684 = vmatprep.mubr.bf16.mxu0 %v469
      %685 = vmatmul.mubr.bf16.gmra.mxu0 %v468
      %v686 = vpop.f32.mrf.mxu0
      %v687 = vadd.f32 %v435, %v686
      %v688 = vpop.f32.mrf.mxu0
      %v689 = vadd.f32 %v439, %v688
      %v690 = vpop.f32.mrf.mxu0
      %v691 = vadd.f32 %v435, %v690
      %v692 = vpop.f32.mrf.mxu0
      %v693 = vadd.f32 %v439, %v692
      %694 = vmatprep.mubr.bf16.mxu0 %v471
      %695 = vmatmul.mubr.bf16.gmra.mxu0 %v470
      %v696 = vpop.f32.mrf.mxu0
      %v697 = vadd.f32 %v435, %v696
      %v698 = vpop.f32.mrf.mxu0
      %v699 = vadd.f32 %v439, %v698
      %v700 = vpop.f32.mrf.mxu0
      %v701 = vadd.f32 %v435, %v700
      %v702 = vpop.f32.mrf.mxu0
      %v703 = vadd.f32 %v439, %v702
      %704 = vmatprep.mubr.bf16.mxu0 %v473
      %705 = vmatmul.mubr.bf16.gmra.mxu0 %v472
      %v706 = vpop.f32.mrf.mxu0
      %v707 = vadd.f32 %v435, %v706
      %v708 = vpop.f32.mrf.mxu0
      %v709 = vadd.f32 %v439, %v708
      %v710 = vpop.f32.mrf.mxu0
      %v711 = vadd.f32 %v435, %v710
      %v712 = vpop.f32.mrf.mxu0
      %v713 = vadd.f32 %v439, %v712
      %714 = vdwg.mxu0
      %v715 = vmax.f32 %v677, 0.0
      %v716 = vmax.f32 %v679, 0.0
      %v717 = vmax.f32 %v681, 0.0
      %v718 = vmax.f32 %v683, 0.0
      %v719 = vmax.f32 %v687, 0.0
      %v720 = vmax.f32 %v689, 0.0
      %v721 = vmax.f32 %v691, 0.0
      %v722 = vmax.f32 %v693, 0.0
      %v723 = vmax.f32 %v697, 0.0
      %v724 = vmax.f32 %v699, 0.0
      %v725 = vmax.f32 %v701, 0.0
      %v726 = vmax.f32 %v703, 0.0
      %v727 = vmax.f32 %v707, 0.0
      %v728 = vmax.f32 %v709, 0.0
      %v729 = vmax.f32 %v711, 0.0
      %v730 = vmax.f32 %v713, 0.0
      %v731 = vpack.c.bf16 %v717, %v715
      %v732 = vpack.c.bf16 %v718, %v716
      %v733 = vpack.c.bf16 %v721, %v719
      %v734 = vpack.c.bf16 %v722, %v720
      %v735 = vpack.c.bf16 %v725, %v723
      %v736 = vpack.c.bf16 %v726, %v724
      %v737 = vpack.c.bf16 %v729, %v727
      %v738 = vpack.c.bf16 %v730, %v728
      %v739 = vld [vmem:[%s4] sm:$0xff]
      %v740 = vld [vmem:[%s4 + $0x8] sm:$0xff]
      %v741 = vld [vmem:[%s4 + $0x10] sm:$0xff]
      %v742 = vld [vmem:[%s4 + $0x18] sm:$0xff]
      %v743 = vld [vmem:[%s4 + $0x20] sm:$0xff]
      %v744 = vld [vmem:[%s4 + $0x28] sm:$0xff]
      %v745 = vld [vmem:[%s4 + $0x30] sm:$0xff]
      %v746 = vld [vmem:[%s4 + $0x38] sm:$0xff]
      %v747 = vld [vmem:[%s4 + $0x40] sm:$0xff]
      %v748 = vld [vmem:[%s4 + $0x48] sm:$0xff]
      %v749 = vld [vmem:[%s4 + $0x50] sm:$0xff]
      %v750 = vld [vmem:[%s4 + $0x58] sm:$0xff]
      %v751 = vld [vmem:[%s4 + $0x60] sm:$0xff]
      %v752 = vld [vmem:[%s4 + $0x68] sm:$0xff]
      %v753 = vld [vmem:[%s4 + $0x70] sm:$0xff]
      %v754 = vld [vmem:[%s4 + $0x78] sm:$0xff]
      %v755 = vld [vmem:[%s4 + $0x80] sm:$0xff]
      %v756 = vld [vmem:[%s4 + $0x88] sm:$0xff]
      %v757 = vld [vmem:[%s4 + $0x90] sm:$0xff]
      %v758 = vld [vmem:[%s4 + $0x98] sm:$0xff]
      %v759 = vld [vmem:[%s4 + $0xa0] sm:$0xff]
      %v760 = vld [vmem:[%s4 + $0xa8] sm:$0xff]
      %v761 = vld [vmem:[%s4 + $0xb0] sm:$0xff]
      %v762 = vld [vmem:[%s4 + $0xb8] sm:$0xff]
      %v763 = vld [vmem:[%s4 + $0xc0] sm:$0xff]
      %v764 = vld [vmem:[%s4 + $0xc8] sm:$0xff]
      %v765 = vld [vmem:[%s4 + $0xd0] sm:$0xff]
      %v766 = vld [vmem:[%s4 + $0xd8] sm:$0xff]
      %v767 = vld [vmem:[%s4 + $0xe0] sm:$0xff]
      %v768 = vld [vmem:[%s4 + $0xe8] sm:$0xff]
      %v769 = vld [vmem:[%s4 + $0xf0] sm:$0xff]
      %v770 = vld [vmem:[%s4 + $0xf8] sm:$0xff]
      %v771 = vld [vmem:[%s5] sm:$0x3]
      %v773 = vlaneseq
      %v774 = vshrl.u32 %v773, 7
      %v775 = vsub.s32 0, %v774
      %v776 = vrot.slane %v771, %v775
      %v777 = vlaneseq
      %v778 = vshrl.u32 %v777, 7
      %v779 = vsub.s32 1, %v778
      %v780 = vrot.slane %v771, %v779
      %v815 = vunpack.c.l.b16 %v739
      %v816 = vunpack.c.h.b16 %v739
      %v817 = vunpack.c.l.b16 %v740
      %v818 = vunpack.c.h.b16 %v740
      %v819 = vunpack.c.l.b16 %v741
      %v820 = vunpack.c.h.b16 %v741
      %v821 = vunpack.c.l.b16 %v742
      %v822 = vunpack.c.h.b16 %v742
      %v823 = vunpack.c.l.b16 %v743
      %v824 = vunpack.c.h.b16 %v743
      %v825 = vunpack.c.l.b16 %v744
      %v826 = vunpack.c.h.b16 %v744
      %v827 = vunpack.c.l.b16 %v745
      %v828 = vunpack.c.h.b16 %v745
      %v829 = vunpack.c.l.b16 %v746
      %v830 = vunpack.c.h.b16 %v746
      %v831 = vunpack.c.l.b16 %v747
      %v832 = vunpack.c.h.b16 %v747
      %v833 = vunpack.c.l.b16 %v748
      %v834 = vunpack.c.h.b16 %v748
      %v835 = vunpack.c.l.b16 %v749
      %v836 = vunpack.c.h.b16 %v749
      %v837 = vunpack.c.l.b16 %v750
      %v838 = vunpack.c.h.b16 %v750
      %v839 = vunpack.c.l.b16 %v751
      %v840 = vunpack.c.h.b16 %v751
      %v841 = vunpack.c.l.b16 %v752
      %v842 = vunpack.c.h.b16 %v752
      %v843 = vunpack.c.l.b16 %v753
      %v844 = vunpack.c.h.b16 %v753
      %v845 = vunpack.c.l.b16 %v754
      %v846 = vunpack.c.h.b16 %v754
      %v847 = vunpack.c.l.b16 %v755
      %v848 = vunpack.c.h.b16 %v755
      %v849 = vunpack.c.l.b16 %v756
      %v850 = vunpack.c.h.b16 %v756
      %v851 = vunpack.c.l.b16 %v757
      %v852 = vunpack.c.h.b16 %v757
      %v853 = vunpack.c.l.b16 %v758
      %v854 = vunpack.c.h.b16 %v758
      %v855 = vunpack.c.l.b16 %v759
      %v856 = vunpack.c.h.b16 %v759
      %v857 = vunpack.c.l.b16 %v760
      %v858 = vunpack.c.h.b16 %v760
      %v859 = vunpack.c.l.b16 %v761
      %v860 = vunpack.c.h.b16 %v761
      %v861 = vunpack.c.l.b16 %v762
      %v862 = vunpack.c.h.b16 %v762
      %v863 = vunpack.c.l.b16 %v763
      %v864 = vunpack.c.h.b16 %v763
      %v865 = vunpack.c.l.b16 %v764
      %v866 = vunpack.c.h.b16 %v764
      %v867 = vunpack.c.l.b16 %v765
      %v868 = vunpack.c.h.b16 %v765
      %v869 = vunpack.c.l.b16 %v766
      %v870 = vunpack.c.h.b16 %v766
      %v871 = vunpack.c.l.b16 %v767
      %v872 = vunpack.c.h.b16 %v767
      %v873 = vunpack.c.l.b16 %v768
      %v874 = vunpack.c.h.b16 %v768
      %v875 = vunpack.c.l.b16 %v769
      %v876 = vunpack.c.h.b16 %v769
      %v877 = vunpack.c.l.b16 %v770
      %v878 = vunpack.c.h.b16 %v770
      %v879 = vpack.c.b16 %v817, %v815
      %v880 = vpack.c.b16 %v818, %v816
      %v881 = vpack.c.b16 %v821, %v819
      %v882 = vpack.c.b16 %v822, %v820
      %v883 = vpack.c.b16 %v825, %v823
      %v884 = vpack.c.b16 %v826, %v824
      %v885 = vpack.c.b16 %v829, %v827
      %v886 = vpack.c.b16 %v830, %v828
      %v887 = vpack.c.b16 %v833, %v831
      %v888 = vpack.c.b16 %v834, %v832
      %v889 = vpack.c.b16 %v837, %v835
      %v890 = vpack.c.b16 %v838, %v836
      %v891 = vpack.c.b16 %v841, %v839
      %v892 = vpack.c.b16 %v842, %v840
      %v893 = vpack.c.b16 %v845, %v843
      %v894 = vpack.c.b16 %v846, %v844
      %v895 = vpack.c.b16 %v849, %v847
      %v896 = vpack.c.b16 %v850, %v848
      %v897 = vpack.c.b16 %v853, %v851
      %v898 = vpack.c.b16 %v854, %v852
      %v899 = vpack.c.b16 %v857, %v855
      %v900 = vpack.c.b16 %v858, %v856
      %v901 = vpack.c.b16 %v861, %v859
      %v902 = vpack.c.b16 %v862, %v860
      %v903 = vpack.c.b16 %v865, %v863
      %v904 = vpack.c.b16 %v866, %v864
      %v905 = vpack.c.b16 %v869, %v867
      %v906 = vpack.c.b16 %v870, %v868
      %v907 = vpack.c.b16 %v873, %v871
      %v908 = vpack.c.b16 %v874, %v872
      %v909 = vpack.c.b16 %v877, %v875
      %v910 = vpack.c.b16 %v878, %v876
      %943 = vmatprep.subr.bf16.mxu0 %v894
      %944 = vmatpush1.bf16.msra.mxu0 %v893
      %945 = vmatprep.subr.bf16.mxu0 %v892
      %946 = vmatpush1.bf16.msra.mxu0 %v891
      %947 = vmatprep.subr.bf16.mxu0 %v890
      %948 = vmatpush1.bf16.msra.mxu0 %v889
      %949 = vmatprep.subr.bf16.mxu0 %v888
      %950 = vmatpush1.bf16.msra.mxu0 %v887
      %951 = vmatprep.subr.bf16.mxu0 %v886
      %952 = vmatpush1.bf16.msra.mxu0 %v885
      %953 = vmatprep.subr.bf16.mxu0 %v884
      %954 = vmatpush1.bf16.msra.mxu0 %v883
      %955 = vmatprep.subr.bf16.mxu0 %v882
      %956 = vmatpush1.bf16.msra.mxu0 %v881
      %957 = vmatprep.subr.bf16.mxu0 %v880
      %958 = vmatpush1.bf16.msra.mxu0 %v879
      %959 = vmatprep.subr.bf16.mxu0 %v910
      %960 = vmatpush2.bf16.msra.mxu0 %v909
      %961 = vmatprep.subr.bf16.mxu0 %v908
      %962 = vmatpush2.bf16.msra.mxu0 %v907
      %963 = vmatprep.subr.bf16.mxu0 %v906
      %964 = vmatpush2.bf16.msra.mxu0 %v905
      %965 = vmatprep.subr.bf16.mxu0 %v904
      %966 = vmatpush2.bf16.msra.mxu0 %v903
      %967 = vmatprep.subr.bf16.mxu0 %v902
      %968 = vmatpush2.bf16.msra.mxu0 %v901
      %969 = vmatprep.subr.bf16.mxu0 %v900
      %970 = vmatpush2.bf16.msra.mxu0 %v899
      %971 = vmatprep.subr.bf16.mxu0 %v898
      %972 = vmatpush2.bf16.msra.mxu0 %v897
      %973 = vmatprep.subr.bf16.mxu0 %v896
      %974 = vmatpush2.bf16.msra.mxu0 %v895
      %975 = vmatprep.mubr.bf16.mxu0 %v732
      %976 = vmatmul.mubr.bf16.gmra.mxu0 %v731
      %v977 = vpop.f32.mrf.mxu0
      %v978 = vadd.f32 %v776, %v977
      %v979 = vpop.f32.mrf.mxu0
      %v980 = vadd.f32 %v780, %v979
      %v981 = vpop.f32.mrf.mxu0
      %v982 = vadd.f32 %v776, %v981
      %v983 = vpop.f32.mrf.mxu0
      %v984 = vadd.f32 %v780, %v983
      %985 = vmatprep.mubr.bf16.mxu0 %v734
      %986 = vmatmul.mubr.bf16.gmra.mxu0 %v733
      %v987 = vpop.f32.mrf.mxu0
      %v988 = vadd.f32 %v776, %v987
      %v989 = vpop.f32.mrf.mxu0
      %v990 = vadd.f32 %v780, %v989
      %v991 = vpop.f32.mrf.mxu0
      %v992 = vadd.f32 %v776, %v991
      %v993 = vpop.f32.mrf.mxu0
      %v994 = vadd.f32 %v780, %v993
      %995 = vmatprep.mubr.bf16.mxu0 %v736
      %996 = vmatmul.mubr.bf16.gmra.mxu0 %v735
      %v997 = vpop.f32.mrf.mxu0
      %v998 = vadd.f32 %v776, %v997
      %v999 = vpop.f32.mrf.mxu0
      %v1000 = vadd.f32 %v780, %v999
      %v1001 = vpop.f32.mrf.mxu0
      %v1002 = vadd.f32 %v776, %v1001
      %v1003 = vpop.f32.mrf.mxu0
      %v1004 = vadd.f32 %v780, %v1003
      %1005 = vmatprep.mubr.bf16.mxu0 %v738
      %1006 = vmatmul.mubr.bf16.gmra.mxu0 %v737
      %v1007 = vpop.f32.mrf.mxu0
      %v1008 = vadd.f32 %v776, %v1007
      %v1009 = vpop.f32.mrf.mxu0
      %v1010 = vadd.f32 %v780, %v1009
      %v1011 = vpop.f32.mrf.mxu0
      %v1012 = vadd.f32 %v776, %v1011
      %v1013 = vpop.f32.mrf.mxu0
      %v1014 = vadd.f32 %v780, %v1013
      %1015 = vdwg.mxu0
      %v1016 = vunpack.c.l.bf16 %v390
      %v1017 = vunpack.c.h.bf16 %v390
      %v1018 = vunpack.c.l.bf16 %v391
      %v1019 = vunpack.c.h.bf16 %v391
      %v1020 = vunpack.c.l.bf16 %v392
      %v1021 = vunpack.c.h.bf16 %v392
      %v1022 = vunpack.c.l.bf16 %v393
      %v1023 = vunpack.c.h.bf16 %v393
      %v1024 = vunpack.c.l.bf16 %v394
      %v1025 = vunpack.c.h.bf16 %v394
      %v1026 = vunpack.c.l.bf16 %v395
      %v1027 = vunpack.c.h.bf16 %v395
      %v1028 = vunpack.c.l.bf16 %v396
      %v1029 = vunpack.c.h.bf16 %v396
      %v1030 = vunpack.c.l.bf16 %v397
      %v1031 = vunpack.c.h.bf16 %v397
      %v1032 = vadd.f32 %v978, %v1016
      %v1033 = vadd.f32 %v980, %v1017
      %v1034 = vadd.f32 %v982, %v1018
      %v1035 = vadd.f32 %v984, %v1019
      %v1036 = vadd.f32 %v988, %v1020
      %v1037 = vadd.f32 %v990, %v1021
      %v1038 = vadd.f32 %v992, %v1022
      %v1039 = vadd.f32 %v994, %v1023
      %v1040 = vadd.f32 %v998, %v1024
      %v1041 = vadd.f32 %v1000, %v1025
      %v1042 = vadd.f32 %v1002, %v1026
      %v1043 = vadd.f32 %v1004, %v1027
      %v1044 = vadd.f32 %v1008, %v1028
      %v1045 = vadd.f32 %v1010, %v1029
      %v1046 = vadd.f32 %v1012, %v1030
      %v1047 = vadd.f32 %v1014, %v1031
      %v1048 = vpack.c.bf16 %v1034, %v1032
      %v1049 = vpack.c.bf16 %v1035, %v1033
      %v1050 = vpack.c.bf16 %v1038, %v1036
      %v1051 = vpack.c.bf16 %v1039, %v1037
      %v1052 = vpack.c.bf16 %v1042, %v1040
      %v1053 = vpack.c.bf16 %v1043, %v1041
      %v1054 = vpack.c.bf16 %v1046, %v1044
      %v1055 = vpack.c.bf16 %v1047, %v1045
      %v1064 = vunpack.c.l.b16 %v1048
      %v1065 = vunpack.c.l.b16 %v1049
      %v1066 = vunpack.c.h.b16 %v1048
      %v1067 = vunpack.c.h.b16 %v1049
      %v1068 = vunpack.c.l.b16 %v1050
      %v1069 = vunpack.c.l.b16 %v1051
      %v1070 = vunpack.c.h.b16 %v1050
      %v1071 = vunpack.c.h.b16 %v1051
      %v1072 = vunpack.c.l.b16 %v1052
      %v1073 = vunpack.c.l.b16 %v1053
      %v1074 = vunpack.c.h.b16 %v1052
      %v1075 = vunpack.c.h.b16 %v1053
      %v1076 = vunpack.c.l.b16 %v1054
      %v1077 = vunpack.c.l.b16 %v1055
      %v1078 = vunpack.c.h.b16 %v1054
      %v1079 = vunpack.c.h.b16 %v1055
      %v1080 = vpack.c.b16 %v1065, %v1064
      %v1081 = vpack.c.b16 %v1067, %v1066
      %v1082 = vpack.c.b16 %v1069, %v1068
      %v1083 = vpack.c.b16 %v1071, %v1070
      %v1084 = vpack.c.b16 %v1073, %v1072
      %v1085 = vpack.c.b16 %v1075, %v1074
      %v1086 = vpack.c.b16 %v1077, %v1076
      %v1087 = vpack.c.b16 %v1079, %v1078
      %1096 = vst [vmem:[%s361] sm:$0xff] %v1080
      %1097 = vst [vmem:[%s361 + $0x8] sm:$0xff] %v1081
      %1098 = vst [vmem:[%s361 + $0x10] sm:$0xff] %v1082
      %1099 = vst [vmem:[%s361 + $0x18] sm:$0xff] %v1083
      %1100 = vst [vmem:[%s361 + $0x20] sm:$0xff] %v1084
      %1101 = vst [vmem:[%s361 + $0x28] sm:$0xff] %v1085
      %1102 = vst [vmem:[%s361 + $0x30] sm:$0xff] %v1086
      %1103 = vst [vmem:[%s361 + $0x38] sm:$0xff] %v1087
      %v1104 = vadd.f32 %v1032, %v1034
      %v1105 = vadd.f32 %v1104, %v1036
      %v1106 = vadd.f32 %v1105, %v1038
      %v1107 = vadd.f32 %v1106, %v1040
      %v1108 = vadd.f32 %v1107, %v1042
      %v1109 = vadd.f32 %v1108, %v1044
      %v1110 = vadd.f32 %v1109, %v1046
      %v1111 = vadd.f32 %v1033, %v1035
      %v1112 = vadd.f32 %v1111, %v1037
      %v1113 = vadd.f32 %v1112, %v1039
      %v1114 = vadd.f32 %v1113, %v1041
      %v1115 = vadd.f32 %v1114, %v1043
      %v1116 = vadd.f32 %v1115, %v1045
      %v1117 = vadd.f32 %v1116, %v1047
      %v1118 = vmul.f32 %v1032, %v1032
      %v1119 = vmul.f32 %v1033, %v1033
      %v1120 = vmul.f32 %v1034, %v1034
      %v1121 = vmul.f32 %v1035, %v1035
      %v1122 = vmul.f32 %v1036, %v1036
      %v1123 = vmul.f32 %v1037, %v1037
      %v1124 = vmul.f32 %v1038, %v1038
      %v1125 = vmul.f32 %v1039, %v1039
      %v1126 = vmul.f32 %v1040, %v1040
      %v1127 = vmul.f32 %v1041, %v1041
      %v1128 = vmul.f32 %v1042, %v1042
      %v1129 = vmul.f32 %v1043, %v1043
      %v1130 = vmul.f32 %v1044, %v1044
      %v1131 = vmul.f32 %v1045, %v1045
      %v1132 = vmul.f32 %v1046, %v1046
      %v1133 = vmul.f32 %v1047, %v1047
      %v1134 = vadd.f32 %v1118, %v1120
      %v1135 = vadd.f32 %v1134, %v1122
      %v1136 = vadd.f32 %v1135, %v1124
      %v1137 = vadd.f32 %v1136, %v1126
      %v1138 = vadd.f32 %v1137, %v1128
      %v1139 = vadd.f32 %v1138, %v1130
      %v1140 = vadd.f32 %v1139, %v1132
      %v1141 = vadd.f32 %v1119, %v1121
      %v1142 = vadd.f32 %v1141, %v1123
      %v1143 = vadd.f32 %v1142, %v1125
      %v1144 = vadd.f32 %v1143, %v1127
      %v1145 = vadd.f32 %v1144, %v1129
      %v1146 = vadd.f32 %v1145, %v1131
      %v1147 = vadd.f32 %v1146, %v1133
      %1148 = vst [vmem:[%s372] sm:$0xff] %v1110
      %1149 = vst [vmem:[%s372 + $0x8] sm:$0xff] %v1117
      %1150 = vst [vmem:[%s372 + $0x10] sm:$0xff] %v1140
      %1151 = vst [vmem:[%s372 + $0x18] sm:$0xff] %v1147
      %s1152 = smul.u32 8, %s24
      %p1153 = scmp.lt.s32.totalorder %s23, 1
      %s1154 = scalar_select %p1153, %s23, 1
      %p1155 = scmp.lt.s32.totalorder %s1152, 7
      %s1156 = scalar_select %p1155, %s1152, 7
      %s1157 = smul.addr %s1156, 2
      %s1158 = smul.addr %s1154, 16
      %s1159 = sadd.s32 %s1157, %s1158
      %s1160 = smul.addr %s1159, 4
      %s1161 = scalar_lea.vmem %s6, %s1160
      %s1162 = smul.u32 2, %s24
      %p1163 = scmp.lt.s32.totalorder %s23, 1
      %s1164 = scalar_select %p1163, %s23, 1
      %p1165 = scmp.lt.s32.totalorder %s1162, 1
      %s1166 = scalar_select %p1165, %s1162, 1
      %s1167 = smul.addr %s1166, 2
      %s1168 = smul.addr %s1164, 4
      %s1169 = sadd.s32 %s1167, %s1168
      %s1170 = smul.addr %s1169, 8
      %s1171 = scalar_lea.vmem %s7, %s1170
      // Predicated region
      $region45: #{cross_dual_path_forward.25} parent=43 // pred_check
        %p1172 = pneg %p189
      $region46: #{cross_dual_path_forward.25} parent=43 // pred_check_branch
        %1174 = sbr.rel (%p1172) target = $region48
      $region47: #{cross_dual_path_forward.25} parent=43 // pred_region
        %s1175 = smul.u32 8, %s24
      $region48: #{cross_dual_path_forward.25} parent=43 // pred_fallthru
        _
      // Predicated region
      $region49: #{cross_dual_path_forward.25} parent=43 // pred_check
        %p1176 = pneg %p217
      $region50: #{cross_dual_path_forward.25} parent=43 // pred_check_branch
        %1178 = sbr.rel (%p1176) target = $region52
      $region51: #{cross_dual_path_forward.25} parent=43 // pred_region
        %s1179 = smul.u32 2, %s24
      $region52: #{cross_dual_path_forward.25} parent=43 // pred_fallthru
        _
    $region44: #{cross_dual_path_forward.25} parent=5 // pred_fallthru
      _
    %p1180 = scmp.le.s32.totalorder 2, %s14
    // Predicated region
    $region53: #{cross_dual_path_forward.25} parent=5 // pred_check
      %p1181 = pneg %p1180
    $region54: #{cross_dual_path_forward.25} parent=5 // pred_check_branch
      %1183 = sbr.rel (%p1181) target = $region56
    $region55: #{cross_dual_path_forward.25} parent=5 // pred_region
      %s1184 = ssub.s32 %s14, 2
      // Predicated region
      $region57: #{cross_dual_path_forward.25} parent=55 // pred_check
        %p1185 = pneg %p195
      $region58: #{cross_dual_path_forward.25} parent=55 // pred_check_branch
        %1187 = sbr.rel (%p1185) target = $region60
      $region59: #{cross_dual_path_forward.25} parent=55 // pred_region
        %s1188 = smul.u32 8, %s26
        %p1189 = scmp.lt.s32.totalorder %s25, 1
        %s1190 = scalar_select %p1189, %s25, 1
        %p1191 = scmp.lt.s32.totalorder %s1188, 7
        %s1192 = scalar_select %p1191, %s1188, 7
        %s1193 = smul.addr %s1192, 2
        %s1194 = smul.addr %s1190, 16
        %s1195 = sadd.s32 %s1193, %s1194
        %s1196 = smul.addr %s1195, 4
        %s1197 = scalar_lea.vmem %s6, %s1196
      $region60: #{cross_dual_path_forward.25} parent=55 // pred_fallthru
        _
      // Predicated region
      $region61: #{cross_dual_path_forward.25} parent=55 // pred_check
        %p1198 = pneg %p223
      $region62: #{cross_dual_path_forward.25} parent=55 // pred_check_branch
        %1200 = sbr.rel (%p1198) target = $region64
      $region63: #{cross_dual_path_forward.25} parent=55 // pred_region
        %s1201 = smul.u32 2, %s26
        %p1202 = scmp.lt.s32.totalorder %s25, 1
        %s1203 = scalar_select %p1202, %s25, 1
        %p1204 = scmp.lt.s32.totalorder %s1201, 1
        %s1205 = scalar_select %p1204, %s1201, 1
        %s1206 = smul.addr %s1205, 2
        %s1207 = smul.addr %s1203, 4
        %s1208 = sadd.s32 %s1206, %s1207
        %s1209 = smul.addr %s1208, 8
        %s1210 = scalar_lea.vmem %s7, %s1209
      $region64: #{cross_dual_path_forward.25} parent=55 // pred_fallthru
        _
    $region56: #{cross_dual_path_forward.25} parent=5 // pred_fallthru
      _
  $region6: #{cross_dual_path_forward.25} parent=0 // loop_footer
    %s18 = sadd.s32 1, %s14
  $region7: #{cross_dual_path_forward.25} parent=0 // loop_footer_branch
    %13 = sbr.rel target = $region3
  $region8: #{cross_dual_path_forward.25} parent=0 // loop_exit
    _

// kernel: cross_dual_path_forward.28
$region0: #{cross_dual_path_forward.28}
  #allocation0 [shape = 'u32[]', space=smem, size = 0x4, offset = 0x4, fixed_abs, tag = 'smem constant byte address 0x4 - core index']
  #allocation1 [shape = 'u32[144,128]{1,0:T(1,128)}', space=vmem, size = 0x12000, scoped, tag = 'internal scratch']
  %s0 = inlined_call_operand.vmem [shape: bf16[2,8,8,256], index: 0, kind: input, shape index: {}]
  %s1 = inlined_call_operand.vmem [shape: bf16[2,8,1,256], index: 1, kind: input, shape index: {}]
  %s2 = inlined_call_operand.vmem [shape: bf16[256,256], index: 2, kind: input, shape index: {}]
  %s3 = inlined_call_operand.vmem [shape: f32[1,256], index: 3, kind: input, shape index: {}]
  %s4 = inlined_call_operand.vmem [shape: bf16[256,256], index: 4, kind: input, shape index: {}]
  %s5 = inlined_call_operand.vmem [shape: f32[1,256], index: 5, kind: input, shape index: {}]
  %s6 = inlined_call_operand.vmem [shape: bf16[2,8,8,256], index: 6, kind: output, shape index: {0}]
  %s7 = inlined_call_operand.vmem [shape: f32[2,16,256], index: 7, kind: output, shape index: {1}]
  %8 = xla_tuple %s6, %s7
  %s9 = sld [smem:[#allocation0]]
  $region65: #{cross_dual_path_forward.28} parent=0
    _
  %s11 = ssub.s32 1, %s9
  %s12 = scalar_select 0, %s11, %s9
  loop: start=0, step=1, limit=4
  $region2: #{cross_dual_path_forward.28} parent=0 // loop_pre_header
    _
  $region3: #{cross_dual_path_forward.28} parent=0 // loop_header
    %s14 = sphi 0, %s18
    %p15 = scmp.ge.s32.totalorder %s14, 4
    %s21 = sphi 0, %s33
    %s22 = sphi 0, %s29
    %s23 = sphi 0, %s21
    %s24 = sphi 0, %s22
    %s25 = sphi 0, %s23
    %s26 = sphi 0, %s24
    %s38 = sphi 0, %s40
    %s41 = sphi 0, %s38
    %s42 = sphi 0, %s41
    %s58 = sphi 0, %s42
    %s66 = sphi 0, %s68
    %s69 = sphi 0, %s66
    %s70 = sphi 0, %s69
    %s86 = sphi 0, %s70
    %s90 = sphi 0, %s90
    %s92 = sphi 0, %s90
    %s93 = sphi 0, %s92
    %s107 = sphi 0, %s93
    %s111 = sphi 0, %s111
    %s113 = sphi 0, %s111
    %s114 = sphi 0, %s113
    %s128 = sphi 0, %s114
    %s132 = sphi 0, %s132
    %s134 = sphi 0, %s132
    %s135 = sphi 0, %s134
    %s149 = sphi 0, %s135
    %s153 = sphi 0, %s153
    %s155 = sphi 0, %s153
    %s156 = sphi 0, %s155
    %s170 = sphi 0, %s156
    %s178 = sphi 0, %s180
    %s181 = sphi 0, %s178
    %s182 = sphi 0, %s181
    %s198 = sphi 0, %s182
    %s206 = sphi 0, %s208
    %s209 = sphi 0, %s206
    %s210 = sphi 0, %s209
    %s226 = sphi 0, %s210
  $region4: #{cross_dual_path_forward.28} parent=0 // loop_header_branch
    %17 = sbr.rel (%p15) target = $region8
  $region5: #{cross_dual_path_forward.28} parent=0 // loop_body
    %s19 = ssub.s32 %s14, 1
    %s20 = ssub.s32 %s14, 2
    %s27 = sadd.s32 1, %s22
    %p28 = scmp.ge.s32.totalorder %s27, 1
    %s29 = scalar_select %p28, 0, %s27
    %s30 = sadd.s32 1, %s21
    %s31 = scalar_select %p28, %s30, %s21
    %p32 = scmp.ge.s32.totalorder %s31, 2
    %s33 = scalar_select %p32, 0, %s31
    %s34 = ssub.s32 %s21, %s33
    %s35 = ssub.s32 %s22, %s29
    %s36 = sor.u32 %s34, %s35
    %p37 = scmp.eq.s32.totalorder %s36, 0
    %s39 = sadd.s32 %s38, 1
    %s40 = scalar_select %p37, %s38, %s39
    %p43 = pneg %p37
    %p44 = scmp.eq.s32.totalorder %s14, 1
    %p45 = por %p43, %p44
    %p46 = scmp.ne.s32.totalorder %s38, %s41
    %p47 = scmp.eq.s32.totalorder %s14, 0
    %p48 = por %p46, %p47
    %p49 = scmp.ne.s32.totalorder %s38, %s41
    %p50 = scmp.eq.s32.totalorder %s19, 1
    %p51 = por %p49, %p50
    %p52 = scmp.ne.s32.totalorder %s41, %s42
    %p53 = scmp.eq.s32.totalorder %s19, 0
    %p54 = por %p52, %p53
    %p55 = scmp.ne.s32.totalorder %s41, %s42
    %p56 = scmp.eq.s32.totalorder %s20, 1
    %p57 = por %p55, %p56
    %p59 = scmp.ne.s32.totalorder %s42, %s58
    %p60 = scmp.eq.s32.totalorder %s20, 0
    %p61 = por %p59, %p60
    %s62 = ssub.s32 %s21, %s33
    %s63 = ssub.s32 %s22, %s29
    %s64 = sor.u32 %s62, %s63
    %p65 = scmp.eq.s32.totalorder %s64, 0
    %s67 = sadd.s32 %s66, 1
    %s68 = scalar_select %p65, %s66, %s67
    %p71 = pneg %p65
    %p72 = scmp.eq.s32.totalorder %s14, 1
    %p73 = por %p71, %p72
    %p74 = scmp.ne.s32.totalorder %s66, %s69
    %p75 = scmp.eq.s32.totalorder %s14, 0
    %p76 = por %p74, %p75
    %p77 = scmp.ne.s32.totalorder %s66, %s69
    %p78 = scmp.eq.s32.totalorder %s19, 1
    %p79 = por %p77, %p78
    %p80 = scmp.ne.s32.totalorder %s69, %s70
    %p81 = scmp.eq.s32.totalorder %s19, 0
    %p82 = por %p80, %p81
    %p83 = scmp.ne.s32.totalorder %s69, %s70
    %p84 = scmp.eq.s32.totalorder %s20, 1
    %p85 = por %p83, %p84
    %p87 = scmp.ne.s32.totalorder %s70, %s86
    %p88 = scmp.eq.s32.totalorder %s20, 0
    %p89 = por %p87, %p88
    %s91 = sadd.s32 %s90, 1
    %p94 = scmp.eq.s32.totalorder %s14, 1
    %p95 = scmp.ne.s32.totalorder %s90, %s92
    %p96 = scmp.eq.s32.totalorder %s14, 0
    %p97 = por %p95, %p96
    %p98 = scmp.ne.s32.totalorder %s90, %s92
    %p99 = scmp.eq.s32.totalorder %s19, 1
    %p100 = por %p98, %p99
    %p101 = scmp.ne.s32.totalorder %s92, %s93
    %p102 = scmp.eq.s32.totalorder %s19, 0
    %p103 = por %p101, %p102
    %p104 = scmp.ne.s32.totalorder %s92, %s93
    %p105 = scmp.eq.s32.totalorder %s20, 1
    %p106 = por %p104, %p105
    %p108 = scmp.ne.s32.totalorder %s93, %s107
    %p109 = scmp.eq.s32.totalorder %s20, 0
    %p110 = por %p108, %p109
    %s112 = sadd.s32 %s111, 1
    %p115 = scmp.eq.s32.totalorder %s14, 1
    %p116 = scmp.ne.s32.totalorder %s111, %s113
    %p117 = scmp.eq.s32.totalorder %s14, 0
    %p118 = por %p116, %p117
    %p119 = scmp.ne.s32.totalorder %s111, %s113
    %p120 = scmp.eq.s32.totalorder %s19, 1
    %p121 = por %p119, %p120
    %p122 = scmp.ne.s32.totalorder %s113, %s114
    %p123 = scmp.eq.s32.totalorder %s19, 0
    %p124 = por %p122, %p123
    %p125 = scmp.ne.s32.totalorder %s113, %s114
    %p126 = scmp.eq.s32.totalorder %s20, 1
    %p127 = por %p125, %p126
    %p129 = scmp.ne.s32.totalorder %s114, %s128
    %p130 = scmp.eq.s32.totalorder %s20, 0
    %p131 = por %p129, %p130
    %s133 = sadd.s32 %s132, 1
    %p136 = scmp.eq.s32.totalorder %s14, 1
    %p137 = scmp.ne.s32.totalorder %s132, %s134
    %p138 = scmp.eq.s32.totalorder %s14, 0
    %p139 = por %p137, %p138
    %p140 = scmp.ne.s32.totalorder %s132, %s134
    %p141 = scmp.eq.s32.totalorder %s19, 1
    %p142 = por %p140, %p141
    %p143 = scmp.ne.s32.totalorder %s134, %s135
    %p144 = scmp.eq.s32.totalorder %s19, 0
    %p145 = por %p143, %p144
    %p146 = scmp.ne.s32.totalorder %s134, %s135
    %p147 = scmp.eq.s32.totalorder %s20, 1
    %p148 = por %p146, %p147
    %p150 = scmp.ne.s32.totalorder %s135, %s149
    %p151 = scmp.eq.s32.totalorder %s20, 0
    %p152 = por %p150, %p151
    %s154 = sadd.s32 %s153, 1
    %p157 = scmp.eq.s32.totalorder %s14, 1
    %p158 = scmp.ne.s32.totalorder %s153, %s155
    %p159 = scmp.eq.s32.totalorder %s14, 0
    %p160 = por %p158, %p159
    %p161 = scmp.ne.s32.totalorder %s153, %s155
    %p162 = scmp.eq.s32.totalorder %s19, 1
    %p163 = por %p161, %p162
    %p164 = scmp.ne.s32.totalorder %s155, %s156
    %p165 = scmp.eq.s32.totalorder %s19, 0
    %p166 = por %p164, %p165
    %p167 = scmp.ne.s32.totalorder %s155, %s156
    %p168 = scmp.eq.s32.totalorder %s20, 1
    %p169 = por %p167, %p168
    %p171 = scmp.ne.s32.totalorder %s156, %s170
    %p172 = scmp.eq.s32.totalorder %s20, 0
    %p173 = por %p171, %p172
    %s174 = ssub.s32 %s21, %s33
    %s175 = ssub.s32 %s22, %s29
    %s176 = sor.u32 %s174, %s175
    %p177 = scmp.eq.s32.totalorder %s176, 0
    %s179 = sadd.s32 %s178, 1
    %s180 = scalar_select %p177, %s178, %s179
    %p183 = pneg %p177
    %p184 = scmp.eq.s32.totalorder %s14, 1
    %p185 = por %p183, %p184
    %p186 = scmp.ne.s32.totalorder %s178, %s181
    %p187 = scmp.eq.s32.totalorder %s14, 0
    %p188 = por %p186, %p187
    %p189 = scmp.ne.s32.totalorder %s178, %s181
    %p190 = scmp.eq.s32.totalorder %s19, 1
    %p191 = por %p189, %p190
    %p192 = scmp.ne.s32.totalorder %s181, %s182
    %p193 = scmp.eq.s32.totalorder %s19, 0
    %p194 = por %p192, %p193
    %p195 = scmp.ne.s32.totalorder %s181, %s182
    %p196 = scmp.eq.s32.totalorder %s20, 1
    %p197 = por %p195, %p196
    %p199 = scmp.ne.s32.totalorder %s182, %s198
    %p200 = scmp.eq.s32.totalorder %s20, 0
    %p201 = por %p199, %p200
    %s202 = ssub.s32 %s21, %s33
    %s203 = ssub.s32 %s22, %s29
    %s204 = sor.u32 %s202, %s203
    %p205 = scmp.eq.s32.totalorder %s204, 0
    %s207 = sadd.s32 %s206, 1
    %s208 = scalar_select %p205, %s206, %s207
    %p211 = pneg %p205
    %p212 = scmp.eq.s32.totalorder %s14, 1
    %p213 = por %p211, %p212
    %p214 = scmp.ne.s32.totalorder %s206, %s209
    %p215 = scmp.eq.s32.totalorder %s14, 0
    %p216 = por %p214, %p215
    %p217 = scmp.ne.s32.totalorder %s206, %s209
    %p218 = scmp.eq.s32.totalorder %s19, 1
    %p219 = por %p217, %p218
    %p220 = scmp.ne.s32.totalorder %s209, %s210
    %p221 = scmp.eq.s32.totalorder %s19, 0
    %p222 = por %p220, %p221
    %p223 = scmp.ne.s32.totalorder %s209, %s210
    %p224 = scmp.eq.s32.totalorder %s20, 1
    %p225 = por %p223, %p224
    %p227 = scmp.ne.s32.totalorder %s210, %s226
    %p228 = scmp.eq.s32.totalorder %s20, 0
    %p229 = por %p227, %p228
    %p230 = scmp.le.s32.totalorder 1, %s14
    %p231 = scmp.lt.s32.totalorder %s14, 3
    %p232 = pnand %p230, %p231
    %p233 = pneg %p232
    // Predicated region
    $region9: #{cross_dual_path_forward.28} parent=5 // pred_check
      _
    $region10: #{cross_dual_path_forward.28} parent=5 // pred_check_branch
      %235 = sbr.rel (%p232) target = $region12
    $region11: #{cross_dual_path_forward.28} parent=5 // pred_region
      %s236 = ssub.s32 %s14, 1
      // Predicated region
      $region13: #{cross_dual_path_forward.28} parent=11 // pred_check
        %p237 = pneg %p103
      $region14: #{cross_dual_path_forward.28} parent=11 // pred_check_branch
        %239 = sbr.rel (%p237) target = $region16
      $region15: #{cross_dual_path_forward.28} parent=11 // pred_region
        _
      $region16: #{cross_dual_path_forward.28} parent=11 // pred_fallthru
        _
      // Predicated region
      $region17: #{cross_dual_path_forward.28} parent=11 // pred_check
        %p240 = pneg %p124
      $region18: #{cross_dual_path_forward.28} parent=11 // pred_check_branch
        %242 = sbr.rel (%p240) target = $region20
      $region19: #{cross_dual_path_forward.28} parent=11 // pred_region
        _
      $region20: #{cross_dual_path_forward.28} parent=11 // pred_fallthru
        _
      // Predicated region
      $region21: #{cross_dual_path_forward.28} parent=11 // pred_check
        %p243 = pneg %p145
      $region22: #{cross_dual_path_forward.28} parent=11 // pred_check_branch
        %245 = sbr.rel (%p243) target = $region24
      $region23: #{cross_dual_path_forward.28} parent=11 // pred_region
        _
      $region24: #{cross_dual_path_forward.28} parent=11 // pred_fallthru
        _
      // Predicated region
      $region25: #{cross_dual_path_forward.28} parent=11 // pred_check
        %p246 = pneg %p166
      $region26: #{cross_dual_path_forward.28} parent=11 // pred_check_branch
        %248 = sbr.rel (%p246) target = $region28
      $region27: #{cross_dual_path_forward.28} parent=11 // pred_region
        _
      $region28: #{cross_dual_path_forward.28} parent=11 // pred_fallthru
        _
    $region12: #{cross_dual_path_forward.28} parent=5 // pred_fallthru
      _
    %p249 = scmp.lt.s32.totalorder %s14, 2
    // Predicated region
    $region29: #{cross_dual_path_forward.28} parent=5 // pred_check
      %p250 = pneg %p249
    $region30: #{cross_dual_path_forward.28} parent=5 // pred_check_branch
      %252 = sbr.rel (%p250) target = $region32
    $region31: #{cross_dual_path_forward.28} parent=5 // pred_region
      // Predicated region
      $region33: #{cross_dual_path_forward.28} parent=31 // pred_check
        %p253 = pneg %p48
      $region34: #{cross_dual_path_forward.28} parent=31 // pred_check_branch
        %255 = sbr.rel (%p253) target = $region36
      $region35: #{cross_dual_path_forward.28} parent=31 // pred_region
        %s256 = smul.u32 8, %s22
        %p257 = scmp.lt.s32.totalorder %s21, 1
        %s258 = scalar_select %p257, %s21, 1
        %p259 = scmp.lt.s32.totalorder %s256, 7
        %s260 = scalar_select %p259, %s256, 7
        %s261 = smul.addr %s260, 2
        %s262 = smul.addr %s258, 16
        %s263 = sadd.s32 %s261, %s262
        %s264 = smul.addr %s263, 4
        %s265 = scalar_lea.vmem %s0, %s264
        %s266 = smul.u32 8, %s22
      $region36: #{cross_dual_path_forward.28} parent=31 // pred_fallthru
        _
      // Predicated region
      $region37: #{cross_dual_path_forward.28} parent=31 // pred_check
        %p267 = pneg %p76
      $region38: #{cross_dual_path_forward.28} parent=31 // pred_check_branch
        %269 = sbr.rel (%p267) target = $region40
      $region39: #{cross_dual_path_forward.28} parent=31 // pred_region
        %s270 = smul.u32 8, %s22
        %p271 = scmp.lt.s32.totalorder %s21, 1
        %s272 = scalar_select %p271, %s21, 1
        %p273 = scmp.lt.s32.totalorder %s270, 7
        %s274 = scalar_select %p273, %s270, 7
        %s275 = smul.addr %s274, 2
        %s276 = smul.addr %s272, 16
        %s277 = sadd.s32 %s275, %s276
        %s278 = scalar_lea.vmem %s1, %s277
        %s279 = smul.u32 8, %s22
      $region40: #{cross_dual_path_forward.28} parent=31 // pred_fallthru
        _
    $region32: #{cross_dual_path_forward.28} parent=5 // pred_fallthru
      _
    %p280 = scmp.le.s32.totalorder 1, %s14
    %p281 = scmp.lt.s32.totalorder %s14, 3
    %p282 = pnand %p280, %p281
    %p283 = pneg %p282
    // Predicated region
    $region41: #{cross_dual_path_forward.28} parent=5 // pred_check
      _
    $region42: #{cross_dual_path_forward.28} parent=5 // pred_check_branch
      %285 = sbr.rel (%p282) target = $region44
    $region43: #{cross_dual_path_forward.28} parent=5 // pred_region
      %s286 = ssub.s32 %s14, 1
      %s287 = smul.u32 8, %s24
      %p288 = scmp.lt.s32.totalorder %s23, 1
      %s289 = scalar_select %p288, %s23, 1
      %p290 = scmp.lt.s32.totalorder %s287, 7
      %s291 = scalar_select %p290, %s287, 7
      %s292 = smul.addr %s291, 2
      %s293 = smul.addr %s289, 16
      %s294 = sadd.s32 %s292, %s293
      %s295 = smul.addr %s294, 4
      %s296 = scalar_lea.vmem %s0, %s295
      %p297 = pneg %p54
      %p298 = pneg %p51
      %s299 = smul.u32 8, %s24
      %p300 = scmp.lt.s32.totalorder %s23, 1
      %s301 = scalar_select %p300, %s23, 1
      %p302 = scmp.lt.s32.totalorder %s299, 7
      %s303 = scalar_select %p302, %s299, 7
      %s304 = smul.addr %s303, 2
      %s305 = smul.addr %s301, 16
      %s306 = sadd.s32 %s304, %s305
      %s307 = scalar_lea.vmem %s1, %s306
      %p308 = pneg %p82
      %p309 = pneg %p79
      %p310 = pneg %p103
      %p311 = pneg %p100
      %p312 = pneg %p124
      %p313 = pneg %p121
      %p314 = pneg %p145
      %p315 = pneg %p142
      %p316 = pneg %p166
      %p317 = pneg %p163
      %p318 = pneg %p194
      %p319 = pneg %p191
      %s320 = smul.u32 8, %s24
      %p321 = scmp.lt.s32.totalorder %s23, 1
      %s322 = scalar_select %p321, %s23, 1
      %p323 = scmp.lt.s32.totalorder %s320, 7
      %s324 = scalar_select %p323, %s320, 7
      %s325 = smul.addr %s324, 2
      %s326 = smul.addr %s322, 16
      %s327 = sadd.s32 %s325, %s326
      %s328 = smul.addr %s327, 4
      %s329 = scalar_lea.vmem %s6, %s328
      %p330 = pneg %p222
      %p331 = pneg %p219
      %s332 = smul.u32 2, %s24
      %p333 = scmp.lt.s32.totalorder %s23, 1
      %s334 = scalar_select %p333, %s23, 1
      %p335 = scmp.lt.s32.totalorder %s332, 1
      %s336 = scalar_select %p335, %s332, 1
      %s337 = smul.addr %s336, 2
      %s338 = smul.addr %s334, 4
      %s339 = sadd.s32 %s337, %s338
      %s340 = smul.addr %s339, 8
      %s341 = scalar_lea.vmem %s7, %s340
      %s342 = smul.u32 8, %s24
      %p343 = scmp.lt.s32.totalorder %s23, 1
      %s344 = scalar_select %p343, %s23, 1
      %p345 = scmp.lt.s32.totalorder %s342, 7
      %s346 = scalar_select %p345, %s342, 7
      %s347 = smul.addr %s346, 2
      %s348 = smul.addr %s344, 16
      %s349 = sadd.s32 %s347, %s348
      %s350 = smul.addr %s349, 4
      %s351 = scalar_lea.vmem %s0, %s350
      %s352 = smul.u32 8, %s24
      %s353 = smul.u32 8, %s24
      %p354 = scmp.lt.s32.totalorder %s23, 1
      %s355 = scalar_select %p354, %s23, 1
      %p356 = scmp.lt.s32.totalorder %s353, 7
      %s357 = scalar_select %p356, %s353, 7
      %s358 = smul.addr %s357, 2
      %s359 = smul.addr %s355, 16
      %s360 = sadd.s32 %s358, %s359
      %s361 = scalar_lea.vmem %s1, %s360
      %s362 = smul.u32 8, %s24
      %s363 = smul.u32 8, %s24
      %p364 = scmp.lt.s32.totalorder %s23, 1
      %s365 = scalar_select %p364, %s23, 1
      %p366 = scmp.lt.s32.totalorder %s363, 7
      %s367 = scalar_select %p366, %s363, 7
      %s368 = smul.addr %s367, 2
      %s369 = smul.addr %s365, 16
      %s370 = sadd.s32 %s368, %s369
      %s371 = smul.addr %s370, 4
      %s372 = scalar_lea.vmem %s6, %s371
      %s373 = smul.u32 8, %s24
      %s374 = smul.u32 2, %s24
      %p375 = scmp.lt.s32.totalorder %s23, 1
      %s376 = scalar_select %p375, %s23, 1
      %p377 = scmp.lt.s32.totalorder %s374, 1
      %s378 = scalar_select %p377, %s374, 1
      %s379 = smul.addr %s378, 2
      %s380 = smul.addr %s376, 4
      %s381 = sadd.s32 %s379, %s380
      %s382 = smul.addr %s381, 8
      %s383 = scalar_lea.vmem %s7, %s382
      %s384 = smul.u32 2, %s24
      %v385 = vld [vmem:[%s351] sm:$0xff]
      %v386 = vld [vmem:[%s351 + $0x8] sm:$0xff]
      %v387 = vld [vmem:[%s351 + $0x10] sm:$0xff]
      %v388 = vld [vmem:[%s351 + $0x18] sm:$0xff]
      %v389 = vld [vmem:[%s351 + $0x20] sm:$0xff]
      %v390 = vld [vmem:[%s351 + $0x28] sm:$0xff]
      %v391 = vld [vmem:[%s351 + $0x30] sm:$0xff]
      %v392 = vld [vmem:[%s351 + $0x38] sm:$0xff]
      %v393 = vld [vmem:[%s361] sm:$0x3]
      %v394 = vld [vmem:[%s361 + $0x2] sm:$0x3]
      %v395 = vld [vmem:[%s361 + $0x4] sm:$0x3]
      %v396 = vld [vmem:[%s361 + $0x6] sm:$0x3]
      %v397 = vld [vmem:[%s361 + $0x8] sm:$0x3]
      %v398 = vld [vmem:[%s361 + $0xa] sm:$0x3]
      %v399 = vld [vmem:[%s361 + $0xc] sm:$0x3]
      %v400 = vld [vmem:[%s361 + $0xe] sm:$0x3]
      %v410 = vunpack.c.l.s4 1966171168
      %v411 = vunpack.c.0.s8 %v410
      %v412 = vlaneseq
      %v413 = vshrl.u32 %v412, 7
      %v414 = vsub.s32 %v411, %v413
      %v415 = vrot.slane %v393, %v414
      %v416 = vcombine.high %v415, %v415
      %v418 = vunpack.c.l.s4 1966171168
      %v419 = vunpack.c.0.s8 %v418
      %v420 = vlaneseq
      %v421 = vshrl.u32 %v420, 7
      %v422 = vsub.s32 %v419, %v421
      %v423 = vrot.slane %v415, %v422
      %v425 = vunpack.c.l.s4 1966171168
      %v426 = vunpack.c.0.s8 %v425
      %v427 = vlaneseq
      %v428 = vshrl.u32 %v427, 7
      %v429 = vsub.s32 %v426, %v428
      %v430 = vrot.slane %v416, %v429
      %v432 = vunpack.c.l.s4 1966171168
      %v433 = vunpack.c.0.s8 %v432
      %v434 = vlaneseq
      %v435 = vshrl.u32 %v434, 7
      %v436 = vsub.s32 %v433, %v435
      %v437 = vrot.slane %v394, %v436
      %v438 = vcombine.high %v437, %v437
      %v440 = vunpack.c.l.s4 1966171168
      %v441 = vunpack.c.0.s8 %v440
      %v442 = vlaneseq
      %v443 = vshrl.u32 %v442, 7
      %v444 = vsub.s32 %v441, %v443
      %v445 = vrot.slane %v437, %v444
      %v447 = vunpack.c.l.s4 1966171168
      %v448 = vunpack.c.0.s8 %v447
      %v449 = vlaneseq
      %v450 = vshrl.u32 %v449, 7
      %v451 = vsub.s32 %v448, %v450
      %v452 = vrot.slane %v438, %v451
      %v454 = vunpack.c.l.s4 1966171168
      %v455 = vunpack.c.0.s8 %v454
      %v456 = vlaneseq
      %v457 = vshrl.u32 %v456, 7
      %v458 = vsub.s32 %v455, %v457
      %v459 = vrot.slane %v395, %v458
      %v460 = vcombine.high %v459, %v459
      %v462 = vunpack.c.l.s4 1966171168
      %v463 = vunpack.c.0.s8 %v462
      %v464 = vlaneseq
      %v465 = vshrl.u32 %v464, 7
      %v466 = vsub.s32 %v463, %v465
      %v467 = vrot.slane %v459, %v466
      %v469 = vunpack.c.l.s4 1966171168
      %v470 = vunpack.c.0.s8 %v469
      %v471 = vlaneseq
      %v472 = vshrl.u32 %v471, 7
      %v473 = vsub.s32 %v470, %v472
      %v474 = vrot.slane %v460, %v473
      %v476 = vunpack.c.l.s4 1966171168
      %v477 = vunpack.c.0.s8 %v476
      %v478 = vlaneseq
      %v479 = vshrl.u32 %v478, 7
      %v480 = vsub.s32 %v477, %v479
      %v481 = vrot.slane %v396, %v480
      %v482 = vcombine.high %v481, %v481
      %v484 = vunpack.c.l.s4 1966171168
      %v485 = vunpack.c.0.s8 %v484
      %v486 = vlaneseq
      %v487 = vshrl.u32 %v486, 7
      %v488 = vsub.s32 %v485, %v487
      %v489 = vrot.slane %v481, %v488
      %v491 = vunpack.c.l.s4 1966171168
      %v492 = vunpack.c.0.s8 %v491
      %v493 = vlaneseq
      %v494 = vshrl.u32 %v493, 7
      %v495 = vsub.s32 %v492, %v494
      %v496 = vrot.slane %v482, %v495
      %v498 = vunpack.c.l.s4 1966171168
      %v499 = vunpack.c.0.s8 %v498
      %v500 = vlaneseq
      %v501 = vshrl.u32 %v500, 7
      %v502 = vsub.s32 %v499, %v501
      %v503 = vrot.slane %v397, %v502
      %v504 = vcombine.high %v503, %v503
      %v506 = vunpack.c.l.s4 1966171168
      %v507 = vunpack.c.0.s8 %v506
      %v508 = vlaneseq
      %v509 = vshrl.u32 %v508, 7
      %v510 = vsub.s32 %v507, %v509
      %v511 = vrot.slane %v503, %v510
      %v513 = vunpack.c.l.s4 1966171168
      %v514 = vunpack.c.0.s8 %v513
      %v515 = vlaneseq
      %v516 = vshrl.u32 %v515, 7
      %v517 = vsub.s32 %v514, %v516
      %v518 = vrot.slane %v504, %v517
      %v520 = vunpack.c.l.s4 1966171168
      %v521 = vunpack.c.0.s8 %v520
      %v522 = vlaneseq
      %v523 = vshrl.u32 %v522, 7
      %v524 = vsub.s32 %v521, %v523
      %v525 = vrot.slane %v398, %v524
      %v526 = vcombine.high %v525, %v525
      %v528 = vunpack.c.l.s4 1966171168
      %v529 = vunpack.c.0.s8 %v528
      %v530 = vlaneseq
      %v531 = vshrl.u32 %v530, 7
      %v532 = vsub.s32 %v529, %v531
      %v533 = vrot.slane %v525, %v532
      %v535 = vunpack.c.l.s4 1966171168
      %v536 = vunpack.c.0.s8 %v535
      %v537 = vlaneseq
      %v538 = vshrl.u32 %v537, 7
      %v539 = vsub.s32 %v536, %v538
      %v540 = vrot.slane %v526, %v539
      %v542 = vunpack.c.l.s4 1966171168
      %v543 = vunpack.c.0.s8 %v542
      %v544 = vlaneseq
      %v545 = vshrl.u32 %v544, 7
      %v546 = vsub.s32 %v543, %v545
      %v547 = vrot.slane %v399, %v546
      %v548 = vcombine.high %v547, %v547
      %v550 = vunpack.c.l.s4 1966171168
      %v551 = vunpack.c.0.s8 %v550
      %v552 = vlaneseq
      %v553 = vshrl.u32 %v552, 7
      %v554 = vsub.s32 %v551, %v553
      %v555 = vrot.slane %v547, %v554
      %v557 = vunpack.c.l.s4 1966171168
      %v558 = vunpack.c.0.s8 %v557
      %v559 = vlaneseq
      %v560 = vshrl.u32 %v559, 7
      %v561 = vsub.s32 %v558, %v560
      %v562 = vrot.slane %v548, %v561
      %v564 = vunpack.c.l.s4 1966171168
      %v565 = vunpack.c.0.s8 %v564
      %v566 = vlaneseq
      %v567 = vshrl.u32 %v566, 7
      %v568 = vsub.s32 %v565, %v567
      %v569 = vrot.slane %v400, %v568
      %v570 = vcombine.high %v569, %v569
      %v572 = vunpack.c.l.s4 1966171168
      %v573 = vunpack.c.0.s8 %v572
      %v574 = vlaneseq
      %v575 = vshrl.u32 %v574, 7
      %v576 = vsub.s32 %v573, %v575
      %v577 = vrot.slane %v569, %v576
      %v579 = vunpack.c.l.s4 1966171168
      %v580 = vunpack.c.0.s8 %v579
      %v581 = vlaneseq
      %v582 = vshrl.u32 %v581, 7
      %v583 = vsub.s32 %v580, %v582
      %v584 = vrot.slane %v570, %v583
      %v586 = vpack.i.b16 %v423, %v423
      %v588 = vlaneseq
      %v589 = vshrl.u32 %v588, 7
      %v590 = vsub.s32 0, %v589
      %v591 = vrot.slane %v586, %v590
      %v593 = vpack.i.b16 %v430, %v430
      %v595 = vlaneseq
      %v596 = vshrl.u32 %v595, 7
      %v597 = vsub.s32 0, %v596
      %v598 = vrot.slane %v593, %v597
      %v600 = vpack.i.b16 %v445, %v445
      %v602 = vlaneseq
      %v603 = vshrl.u32 %v602, 7
      %v604 = vsub.s32 0, %v603
      %v605 = vrot.slane %v600, %v604
      %v607 = vpack.i.b16 %v452, %v452
      %v609 = vlaneseq
      %v610 = vshrl.u32 %v609, 7
      %v611 = vsub.s32 0, %v610
      %v612 = vrot.slane %v607, %v611
      %v614 = vpack.i.b16 %v467, %v467
      %v616 = vlaneseq
      %v617 = vshrl.u32 %v616, 7
      %v618 = vsub.s32 0, %v617
      %v619 = vrot.slane %v614, %v618
      %v621 = vpack.i.b16 %v474, %v474
      %v623 = vlaneseq
      %v624 = vshrl.u32 %v623, 7
      %v625 = vsub.s32 0, %v624
      %v626 = vrot.slane %v621, %v625
      %v628 = vpack.i.b16 %v489, %v489
      %v630 = vlaneseq
      %v631 = vshrl.u32 %v630, 7
      %v632 = vsub.s32 0, %v631
      %v633 = vrot.slane %v628, %v632
      %v635 = vpack.i.b16 %v496, %v496
      %v637 = vlaneseq
      %v638 = vshrl.u32 %v637, 7
      %v639 = vsub.s32 0, %v638
      %v640 = vrot.slane %v635, %v639
      %v642 = vpack.i.b16 %v511, %v511
      %v644 = vlaneseq
      %v645 = vshrl.u32 %v644, 7
      %v646 = vsub.s32 0, %v645
      %v647 = vrot.slane %v642, %v646
      %v649 = vpack.i.b16 %v518, %v518
      %v651 = vlaneseq
      %v652 = vshrl.u32 %v651, 7
      %v653 = vsub.s32 0, %v652
      %v654 = vrot.slane %v649, %v653
      %v656 = vpack.i.b16 %v533, %v533
      %v658 = vlaneseq
      %v659 = vshrl.u32 %v658, 7
      %v660 = vsub.s32 0, %v659
      %v661 = vrot.slane %v656, %v660
      %v663 = vpack.i.b16 %v540, %v540
      %v665 = vlaneseq
      %v666 = vshrl.u32 %v665, 7
      %v667 = vsub.s32 0, %v666
      %v668 = vrot.slane %v663, %v667
      %v670 = vpack.i.b16 %v555, %v555
      %v672 = vlaneseq
      %v673 = vshrl.u32 %v672, 7
      %v674 = vsub.s32 0, %v673
      %v675 = vrot.slane %v670, %v674
      %v677 = vpack.i.b16 %v562, %v562
      %v679 = vlaneseq
      %v680 = vshrl.u32 %v679, 7
      %v681 = vsub.s32 0, %v680
      %v682 = vrot.slane %v677, %v681
      %v684 = vpack.i.b16 %v577, %v577
      %v686 = vlaneseq
      %v687 = vshrl.u32 %v686, 7
      %v688 = vsub.s32 0, %v687
      %v689 = vrot.slane %v684, %v688
      %v691 = vpack.i.b16 %v584, %v584
      %v693 = vlaneseq
      %v694 = vshrl.u32 %v693, 7
      %v695 = vsub.s32 0, %v694
      %v696 = vrot.slane %v691, %v695
      %v713 = vunpack.c.l.b16 %v591
      %v714 = vunpack.c.l.b16 %v598
      %v715 = vunpack.c.l.b16 %v605
      %v716 = vunpack.c.l.b16 %v612
      %v717 = vunpack.c.l.b16 %v619
      %v718 = vunpack.c.l.b16 %v626
      %v719 = vunpack.c.l.b16 %v633
      %v720 = vunpack.c.l.b16 %v640
      %v721 = vunpack.c.l.b16 %v647
      %v722 = vunpack.c.l.b16 %v654
      %v723 = vunpack.c.l.b16 %v661
      %v724 = vunpack.c.l.b16 %v668
      %v725 = vunpack.c.l.b16 %v675
      %v726 = vunpack.c.l.b16 %v682
      %v727 = vunpack.c.l.b16 %v689
      %v728 = vunpack.c.l.b16 %v696
      %v729 = vpack.c.b16 %v714, %v713
      %v730 = vpack.c.b16 %v716, %v715
      %v731 = vpack.c.b16 %v718, %v717
      %v732 = vpack.c.b16 %v720, %v719
      %v733 = vpack.c.b16 %v722, %v721
      %v734 = vpack.c.b16 %v724, %v723
      %v735 = vpack.c.b16 %v726, %v725
      %v736 = vpack.c.b16 %v728, %v727
      %v745 = vadd.bf16 %v385, %v729
      %v746 = vadd.bf16 %v386, %v730
      %v747 = vadd.bf16 %v387, %v731
      %v748 = vadd.bf16 %v388, %v732
      %v749 = vadd.bf16 %v389, %v733
      %v750 = vadd.bf16 %v390, %v734
      %v751 = vadd.bf16 %v391, %v735
      %v752 = vadd.bf16 %v392, %v736
      %v753 = vld [vmem:[%s2] sm:$0xff]
      %v754 = vld [vmem:[%s2 + $0x8] sm:$0xff]
      %v755 = vld [vmem:[%s2 + $0x10] sm:$0xff]
      %v756 = vld [vmem:[%s2 + $0x18] sm:$0xff]
      %v757 = vld [vmem:[%s2 + $0x20] sm:$0xff]
      %v758 = vld [vmem:[%s2 + $0x28] sm:$0xff]
      %v759 = vld [vmem:[%s2 + $0x30] sm:$0xff]
      %v760 = vld [vmem:[%s2 + $0x38] sm:$0xff]
      %v761 = vld [vmem:[%s2 + $0x40] sm:$0xff]
      %v762 = vld [vmem:[%s2 + $0x48] sm:$0xff]
      %v763 = vld [vmem:[%s2 + $0x50] sm:$0xff]
      %v764 = vld [vmem:[%s2 + $0x58] sm:$0xff]
      %v765 = vld [vmem:[%s2 + $0x60] sm:$0xff]
      %v766 = vld [vmem:[%s2 + $0x68] sm:$0xff]
      %v767 = vld [vmem:[%s2 + $0x70] sm:$0xff]
      %v768 = vld [vmem:[%s2 + $0x78] sm:$0xff]
      %v769 = vld [vmem:[%s2 + $0x80] sm:$0xff]
      %v770 = vld [vmem:[%s2 + $0x88] sm:$0xff]
      %v771 = vld [vmem:[%s2 + $0x90] sm:$0xff]
      %v772 = vld [vmem:[%s2 + $0x98] sm:$0xff]
      %v773 = vld [vmem:[%s2 + $0xa0] sm:$0xff]
      %v774 = vld [vmem:[%s2 + $0xa8] sm:$0xff]
      %v775 = vld [vmem:[%s2 + $0xb0] sm:$0xff]
      %v776 = vld [vmem:[%s2 + $0xb8] sm:$0xff]
      %v777 = vld [vmem:[%s2 + $0xc0] sm:$0xff]
      %v778 = vld [vmem:[%s2 + $0xc8] sm:$0xff]
      %v779 = vld [vmem:[%s2 + $0xd0] sm:$0xff]
      %v780 = vld [vmem:[%s2 + $0xd8] sm:$0xff]
      %v781 = vld [vmem:[%s2 + $0xe0] sm:$0xff]
      %v782 = vld [vmem:[%s2 + $0xe8] sm:$0xff]
      %v783 = vld [vmem:[%s2 + $0xf0] sm:$0xff]
      %v784 = vld [vmem:[%s2 + $0xf8] sm:$0xff]
      %v785 = vld [vmem:[%s3] sm:$0x3]
      %v787 = vlaneseq
      %v788 = vshrl.u32 %v787, 7
      %v789 = vsub.s32 0, %v788
      %v790 = vrot.slane %v785, %v789
      %v791 = vlaneseq
      %v792 = vshrl.u32 %v791, 7
      %v793 = vsub.s32 1, %v792
      %v794 = vrot.slane %v785, %v793
      %v805 = vunpack.c.l.b16 %v745
      %v806 = vunpack.c.h.b16 %v745
      %v807 = vunpack.c.l.b16 %v746
      %v808 = vunpack.c.h.b16 %v746
      %v809 = vunpack.c.l.b16 %v747
      %v810 = vunpack.c.h.b16 %v747
      %v811 = vunpack.c.l.b16 %v748
      %v812 = vunpack.c.h.b16 %v748
      %v813 = vunpack.c.l.b16 %v749
      %v814 = vunpack.c.h.b16 %v749
      %v815 = vunpack.c.l.b16 %v750
      %v816 = vunpack.c.h.b16 %v750
      %v817 = vunpack.c.l.b16 %v751
      %v818 = vunpack.c.h.b16 %v751
      %v819 = vunpack.c.l.b16 %v752
      %v820 = vunpack.c.h.b16 %v752
      %v821 = vpack.c.b16 %v807, %v805
      %v822 = vpack.c.b16 %v808, %v806
      %v823 = vpack.c.b16 %v811, %v809
      %v824 = vpack.c.b16 %v812, %v810
      %v825 = vpack.c.b16 %v815, %v813
      %v826 = vpack.c.b16 %v816, %v814
      %v827 = vpack.c.b16 %v819, %v817
      %v828 = vpack.c.b16 %v820, %v818
      %v869 = vunpack.c.l.b16 %v753
      %v870 = vunpack.c.h.b16 %v753
      %v871 = vunpack.c.l.b16 %v754
      %v872 = vunpack.c.h.b16 %v754
      %v873 = vunpack.c.l.b16 %v755
      %v874 = vunpack.c.h.b16 %v755
      %v875 = vunpack.c.l.b16 %v756
      %v876 = vunpack.c.h.b16 %v756
      %v877 = vunpack.c.l.b16 %v757
      %v878 = vunpack.c.h.b16 %v757
      %v879 = vunpack.c.l.b16 %v758
      %v880 = vunpack.c.h.b16 %v758
      %v881 = vunpack.c.l.b16 %v759
      %v882 = vunpack.c.h.b16 %v759
      %v883 = vunpack.c.l.b16 %v760
      %v884 = vunpack.c.h.b16 %v760
      %v885 = vunpack.c.l.b16 %v761
      %v886 = vunpack.c.h.b16 %v761
      %v887 = vunpack.c.l.b16 %v762
      %v888 = vunpack.c.h.b16 %v762
      %v889 = vunpack.c.l.b16 %v763
      %v890 = vunpack.c.h.b16 %v763
      %v891 = vunpack.c.l.b16 %v764
      %v892 = vunpack.c.h.b16 %v764
      %v893 = vunpack.c.l.b16 %v765
      %v894 = vunpack.c.h.b16 %v765
      %v895 = vunpack.c.l.b16 %v766
      %v896 = vunpack.c.h.b16 %v766
      %v897 = vunpack.c.l.b16 %v767
      %v898 = vunpack.c.h.b16 %v767
      %v899 = vunpack.c.l.b16 %v768
      %v900 = vunpack.c.h.b16 %v768
      %v901 = vunpack.c.l.b16 %v769
      %v902 = vunpack.c.h.b16 %v769
      %v903 = vunpack.c.l.b16 %v770
      %v904 = vunpack.c.h.b16 %v770
      %v905 = vunpack.c.l.b16 %v771
      %v906 = vunpack.c.h.b16 %v771
      %v907 = vunpack.c.l.b16 %v772
      %v908 = vunpack.c.h.b16 %v772
      %v909 = vunpack.c.l.b16 %v773
      %v910 = vunpack.c.h.b16 %v773
      %v911 = vunpack.c.l.b16 %v774
      %v912 = vunpack.c.h.b16 %v774
      %v913 = vunpack.c.l.b16 %v775
      %v914 = vunpack.c.h.b16 %v775
      %v915 = vunpack.c.l.b16 %v776
      %v916 = vunpack.c.h.b16 %v776
      %v917 = vunpack.c.l.b16 %v777
      %v918 = vunpack.c.h.b16 %v777
      %v919 = vunpack.c.l.b16 %v778
      %v920 = vunpack.c.h.b16 %v778
      %v921 = vunpack.c.l.b16 %v779
      %v922 = vunpack.c.h.b16 %v779
      %v923 = vunpack.c.l.b16 %v780
      %v924 = vunpack.c.h.b16 %v780
      %v925 = vunpack.c.l.b16 %v781
      %v926 = vunpack.c.h.b16 %v781
      %v927 = vunpack.c.l.b16 %v782
      %v928 = vunpack.c.h.b16 %v782
      %v929 = vunpack.c.l.b16 %v783
      %v930 = vunpack.c.h.b16 %v783
      %v931 = vunpack.c.l.b16 %v784
      %v932 = vunpack.c.h.b16 %v784
      %v933 = vpack.c.b16 %v871, %v869
      %v934 = vpack.c.b16 %v872, %v870
      %v935 = vpack.c.b16 %v875, %v873
      %v936 = vpack.c.b16 %v876, %v874
      %v937 = vpack.c.b16 %v879, %v877
      %v938 = vpack.c.b16 %v880, %v878
      %v939 = vpack.c.b16 %v883, %v881
      %v940 = vpack.c.b16 %v884, %v882
      %v941 = vpack.c.b16 %v887, %v885
      %v942 = vpack.c.b16 %v888, %v886
      %v943 = vpack.c.b16 %v891, %v889
      %v944 = vpack.c.b16 %v892, %v890
      %v945 = vpack.c.b16 %v895, %v893
      %v946 = vpack.c.b16 %v896, %v894
      %v947 = vpack.c.b16 %v899, %v897
      %v948 = vpack.c.b16 %v900, %v898
      %v949 = vpack.c.b16 %v903, %v901
      %v950 = vpack.c.b16 %v904, %v902
      %v951 = vpack.c.b16 %v907, %v905
      %v952 = vpack.c.b16 %v908, %v906
      %v953 = vpack.c.b16 %v911, %v909
      %v954 = vpack.c.b16 %v912, %v910
      %v955 = vpack.c.b16 %v915, %v913
      %v956 = vpack.c.b16 %v916, %v914
      %v957 = vpack.c.b16 %v919, %v917
      %v958 = vpack.c.b16 %v920, %v918
      %v959 = vpack.c.b16 %v923, %v921
      %v960 = vpack.c.b16 %v924, %v922
      %v961 = vpack.c.b16 %v927, %v925
      %v962 = vpack.c.b16 %v928, %v926
      %v963 = vpack.c.b16 %v931, %v929
      %v964 = vpack.c.b16 %v932, %v930
      %997 = vmatprep.subr.bf16.mxu0 %v948
      %998 = vmatpush1.bf16.msra.mxu0 %v947
      %999 = vmatprep.subr.bf16.mxu0 %v946
      %1000 = vmatpush1.bf16.msra.mxu0 %v945
      %1001 = vmatprep.subr.bf16.mxu0 %v944
      %1002 = vmatpush1.bf16.msra.mxu0 %v943
      %1003 = vmatprep.subr.bf16.mxu0 %v942
      %1004 = vmatpush1.bf16.msra.mxu0 %v941
      %1005 = vmatprep.subr.bf16.mxu0 %v940
      %1006 = vmatpush1.bf16.msra.mxu0 %v939
      %1007 = vmatprep.subr.bf16.mxu0 %v938
      %1008 = vmatpush1.bf16.msra.mxu0 %v937
      %1009 = vmatprep.subr.bf16.mxu0 %v936
      %1010 = vmatpush1.bf16.msra.mxu0 %v935
      %1011 = vmatprep.subr.bf16.mxu0 %v934
      %1012 = vmatpush1.bf16.msra.mxu0 %v933
      %1013 = vmatprep.subr.bf16.mxu0 %v964
      %1014 = vmatpush2.bf16.msra.mxu0 %v963
      %1015 = vmatprep.subr.bf16.mxu0 %v962
      %1016 = vmatpush2.bf16.msra.mxu0 %v961
      %1017 = vmatprep.subr.bf16.mxu0 %v960
      %1018 = vmatpush2.bf16.msra.mxu0 %v959
      %1019 = vmatprep.subr.bf16.mxu0 %v958
      %1020 = vmatpush2.bf16.msra.mxu0 %v957
      %1021 = vmatprep.subr.bf16.mxu0 %v956
      %1022 = vmatpush2.bf16.msra.mxu0 %v955
      %1023 = vmatprep.subr.bf16.mxu0 %v954
      %1024 = vmatpush2.bf16.msra.mxu0 %v953
      %1025 = vmatprep.subr.bf16.mxu0 %v952
      %1026 = vmatpush2.bf16.msra.mxu0 %v951
      %1027 = vmatprep.subr.bf16.mxu0 %v950
      %1028 = vmatpush2.bf16.msra.mxu0 %v949
      %1029 = vmatprep.mubr.bf16.mxu0 %v822
      %1030 = vmatmul.mubr.bf16.gmra.mxu0 %v821
      %v1031 = vpop.f32.mrf.mxu0
      %v1032 = vadd.f32 %v790, %v1031
      %v1033 = vpop.f32.mrf.mxu0
      %v1034 = vadd.f32 %v794, %v1033
      %v1035 = vpop.f32.mrf.mxu0
      %v1036 = vadd.f32 %v790, %v1035
      %v1037 = vpop.f32.mrf.mxu0
      %v1038 = vadd.f32 %v794, %v1037
      %1039 = vmatprep.mubr.bf16.mxu0 %v824
      %1040 = vmatmul.mubr.bf16.gmra.mxu0 %v823
      %v1041 = vpop.f32.mrf.mxu0
      %v1042 = vadd.f32 %v790, %v1041
      %v1043 = vpop.f32.mrf.mxu0
      %v1044 = vadd.f32 %v794, %v1043
      %v1045 = vpop.f32.mrf.mxu0
      %v1046 = vadd.f32 %v790, %v1045
      %v1047 = vpop.f32.mrf.mxu0
      %v1048 = vadd.f32 %v794, %v1047
      %1049 = vmatprep.mubr.bf16.mxu0 %v826
      %1050 = vmatmul.mubr.bf16.gmra.mxu0 %v825
      %v1051 = vpop.f32.mrf.mxu0
      %v1052 = vadd.f32 %v790, %v1051
      %v1053 = vpop.f32.mrf.mxu0
      %v1054 = vadd.f32 %v794, %v1053
      %v1055 = vpop.f32.mrf.mxu0
      %v1056 = vadd.f32 %v790, %v1055
      %v1057 = vpop.f32.mrf.mxu0
      %v1058 = vadd.f32 %v794, %v1057
      %1059 = vmatprep.mubr.bf16.mxu0 %v828
      %1060 = vmatmul.mubr.bf16.gmra.mxu0 %v827
      %v1061 = vpop.f32.mrf.mxu0
      %v1062 = vadd.f32 %v790, %v1061
      %v1063 = vpop.f32.mrf.mxu0
      %v1064 = vadd.f32 %v794, %v1063
      %v1065 = vpop.f32.mrf.mxu0
      %v1066 = vadd.f32 %v790, %v1065
      %v1067 = vpop.f32.mrf.mxu0
      %v1068 = vadd.f32 %v794, %v1067
      %1069 = vdwg.mxu0
      %v1070 = vmax.f32 %v1032, 0.0
      %v1071 = vmax.f32 %v1034, 0.0
      %v1072 = vmax.f32 %v1036, 0.0
      %v1073 = vmax.f32 %v1038, 0.0
      %v1074 = vmax.f32 %v1042, 0.0
      %v1075 = vmax.f32 %v1044, 0.0
      %v1076 = vmax.f32 %v1046, 0.0
      %v1077 = vmax.f32 %v1048, 0.0
      %v1078 = vmax.f32 %v1052, 0.0
      %v1079 = vmax.f32 %v1054, 0.0
      %v1080 = vmax.f32 %v1056, 0.0
      %v1081 = vmax.f32 %v1058, 0.0
      %v1082 = vmax.f32 %v1062, 0.0
      %v1083 = vmax.f32 %v1064, 0.0
      %v1084 = vmax.f32 %v1066, 0.0
      %v1085 = vmax.f32 %v1068, 0.0
      %v1086 = vpack.c.bf16 %v1072, %v1070
      %v1087 = vpack.c.bf16 %v1073, %v1071
      %v1088 = vpack.c.bf16 %v1076, %v1074
      %v1089 = vpack.c.bf16 %v1077, %v1075
      %v1090 = vpack.c.bf16 %v1080, %v1078
      %v1091 = vpack.c.bf16 %v1081, %v1079
      %v1092 = vpack.c.bf16 %v1084, %v1082
      %v1093 = vpack.c.bf16 %v1085, %v1083
      %v1094 = vld [vmem:[%s4] sm:$0xff]
      %v1095 = vld [vmem:[%s4 + $0x8] sm:$0xff]
      %v1096 = vld [vmem:[%s4 + $0x10] sm:$0xff]
      %v1097 = vld [vmem:[%s4 + $0x18] sm:$0xff]
      %v1098 = vld [vmem:[%s4 + $0x20] sm:$0xff]
      %v1099 = vld [vmem:[%s4 + $0x28] sm:$0xff]
      %v1100 = vld [vmem:[%s4 + $0x30] sm:$0xff]
      %v1101 = vld [vmem:[%s4 + $0x38] sm:$0xff]
      %v1102 = vld [vmem:[%s4 + $0x40] sm:$0xff]
      %v1103 = vld [vmem:[%s4 + $0x48] sm:$0xff]
      %v1104 = vld [vmem:[%s4 + $0x50] sm:$0xff]
      %v1105 = vld [vmem:[%s4 + $0x58] sm:$0xff]
      %v1106 = vld [vmem:[%s4 + $0x60] sm:$0xff]
      %v1107 = vld [vmem:[%s4 + $0x68] sm:$0xff]
      %v1108 = vld [vmem:[%s4 + $0x70] sm:$0xff]
      %v1109 = vld [vmem:[%s4 + $0x78] sm:$0xff]
      %v1110 = vld [vmem:[%s4 + $0x80] sm:$0xff]
      %v1111 = vld [vmem:[%s4 + $0x88] sm:$0xff]
      %v1112 = vld [vmem:[%s4 + $0x90] sm:$0xff]
      %v1113 = vld [vmem:[%s4 + $0x98] sm:$0xff]
      %v1114 = vld [vmem:[%s4 + $0xa0] sm:$0xff]
      %v1115 = vld [vmem:[%s4 + $0xa8] sm:$0xff]
      %v1116 = vld [vmem:[%s4 + $0xb0] sm:$0xff]
      %v1117 = vld [vmem:[%s4 + $0xb8] sm:$0xff]
      %v1118 = vld [vmem:[%s4 + $0xc0] sm:$0xff]
      %v1119 = vld [vmem:[%s4 + $0xc8] sm:$0xff]
      %v1120 = vld [vmem:[%s4 + $0xd0] sm:$0xff]
      %v1121 = vld [vmem:[%s4 + $0xd8] sm:$0xff]
      %v1122 = vld [vmem:[%s4 + $0xe0] sm:$0xff]
      %v1123 = vld [vmem:[%s4 + $0xe8] sm:$0xff]
      %v1124 = vld [vmem:[%s4 + $0xf0] sm:$0xff]
      %v1125 = vld [vmem:[%s4 + $0xf8] sm:$0xff]
      %v1126 = vld [vmem:[%s5] sm:$0x3]
      %v1128 = vlaneseq
      %v1129 = vshrl.u32 %v1128, 7
      %v1130 = vsub.s32 0, %v1129
      %v1131 = vrot.slane %v1126, %v1130
      %v1132 = vlaneseq
      %v1133 = vshrl.u32 %v1132, 7
      %v1134 = vsub.s32 1, %v1133
      %v1135 = vrot.slane %v1126, %v1134
      %v1170 = vunpack.c.l.b16 %v1094
      %v1171 = vunpack.c.h.b16 %v1094
      %v1172 = vunpack.c.l.b16 %v1095
      %v1173 = vunpack.c.h.b16 %v1095
      %v1174 = vunpack.c.l.b16 %v1096
      %v1175 = vunpack.c.h.b16 %v1096
      %v1176 = vunpack.c.l.b16 %v1097
      %v1177 = vunpack.c.h.b16 %v1097
      %v1178 = vunpack.c.l.b16 %v1098
      %v1179 = vunpack.c.h.b16 %v1098
      %v1180 = vunpack.c.l.b16 %v1099
      %v1181 = vunpack.c.h.b16 %v1099
      %v1182 = vunpack.c.l.b16 %v1100
      %v1183 = vunpack.c.h.b16 %v1100
      %v1184 = vunpack.c.l.b16 %v1101
      %v1185 = vunpack.c.h.b16 %v1101
      %v1186 = vunpack.c.l.b16 %v1102
      %v1187 = vunpack.c.h.b16 %v1102
      %v1188 = vunpack.c.l.b16 %v1103
      %v1189 = vunpack.c.h.b16 %v1103
      %v1190 = vunpack.c.l.b16 %v1104
      %v1191 = vunpack.c.h.b16 %v1104
      %v1192 = vunpack.c.l.b16 %v1105
      %v1193 = vunpack.c.h.b16 %v1105
      %v1194 = vunpack.c.l.b16 %v1106
      %v1195 = vunpack.c.h.b16 %v1106
      %v1196 = vunpack.c.l.b16 %v1107
      %v1197 = vunpack.c.h.b16 %v1107
      %v1198 = vunpack.c.l.b16 %v1108
      %v1199 = vunpack.c.h.b16 %v1108
      %v1200 = vunpack.c.l.b16 %v1109
      %v1201 = vunpack.c.h.b16 %v1109
      %v1202 = vunpack.c.l.b16 %v1110
      %v1203 = vunpack.c.h.b16 %v1110
      %v1204 = vunpack.c.l.b16 %v1111
      %v1205 = vunpack.c.h.b16 %v1111
      %v1206 = vunpack.c.l.b16 %v1112
      %v1207 = vunpack.c.h.b16 %v1112
      %v1208 = vunpack.c.l.b16 %v1113
      %v1209 = vunpack.c.h.b16 %v1113
      %v1210 = vunpack.c.l.b16 %v1114
      %v1211 = vunpack.c.h.b16 %v1114
      %v1212 = vunpack.c.l.b16 %v1115
      %v1213 = vunpack.c.h.b16 %v1115
      %v1214 = vunpack.c.l.b16 %v1116
      %v1215 = vunpack.c.h.b16 %v1116
      %v1216 = vunpack.c.l.b16 %v1117
      %v1217 = vunpack.c.h.b16 %v1117
      %v1218 = vunpack.c.l.b16 %v1118
      %v1219 = vunpack.c.h.b16 %v1118
      %v1220 = vunpack.c.l.b16 %v1119
      %v1221 = vunpack.c.h.b16 %v1119
      %v1222 = vunpack.c.l.b16 %v1120
      %v1223 = vunpack.c.h.b16 %v1120
      %v1224 = vunpack.c.l.b16 %v1121
      %v1225 = vunpack.c.h.b16 %v1121
      %v1226 = vunpack.c.l.b16 %v1122
      %v1227 = vunpack.c.h.b16 %v1122
      %v1228 = vunpack.c.l.b16 %v1123
      %v1229 = vunpack.c.h.b16 %v1123
      %v1230 = vunpack.c.l.b16 %v1124
      %v1231 = vunpack.c.h.b16 %v1124
      %v1232 = vunpack.c.l.b16 %v1125
      %v1233 = vunpack.c.h.b16 %v1125
      %v1234 = vpack.c.b16 %v1172, %v1170
      %v1235 = vpack.c.b16 %v1173, %v1171
      %v1236 = vpack.c.b16 %v1176, %v1174
      %v1237 = vpack.c.b16 %v1177, %v1175
      %v1238 = vpack.c.b16 %v1180, %v1178
      %v1239 = vpack.c.b16 %v1181, %v1179
      %v1240 = vpack.c.b16 %v1184, %v1182
      %v1241 = vpack.c.b16 %v1185, %v1183
      %v1242 = vpack.c.b16 %v1188, %v1186
      %v1243 = vpack.c.b16 %v1189, %v1187
      %v1244 = vpack.c.b16 %v1192, %v1190
      %v1245 = vpack.c.b16 %v1193, %v1191
      %v1246 = vpack.c.b16 %v1196, %v1194
      %v1247 = vpack.c.b16 %v1197, %v1195
      %v1248 = vpack.c.b16 %v1200, %v1198
      %v1249 = vpack.c.b16 %v1201, %v1199
      %v1250 = vpack.c.b16 %v1204, %v1202
      %v1251 = vpack.c.b16 %v1205, %v1203
      %v1252 = vpack.c.b16 %v1208, %v1206
      %v1253 = vpack.c.b16 %v1209, %v1207
      %v1254 = vpack.c.b16 %v1212, %v1210
      %v1255 = vpack.c.b16 %v1213, %v1211
      %v1256 = vpack.c.b16 %v1216, %v1214
      %v1257 = vpack.c.b16 %v1217, %v1215
      %v1258 = vpack.c.b16 %v1220, %v1218
      %v1259 = vpack.c.b16 %v1221, %v1219
      %v1260 = vpack.c.b16 %v1224, %v1222
      %v1261 = vpack.c.b16 %v1225, %v1223
      %v1262 = vpack.c.b16 %v1228, %v1226
      %v1263 = vpack.c.b16 %v1229, %v1227
      %v1264 = vpack.c.b16 %v1232, %v1230
      %v1265 = vpack.c.b16 %v1233, %v1231
      %1298 = vmatprep.subr.bf16.mxu0 %v1249
      %1299 = vmatpush1.bf16.msra.mxu0 %v1248
      %1300 = vmatprep.subr.bf16.mxu0 %v1247
      %1301 = vmatpush1.bf16.msra.mxu0 %v1246
      %1302 = vmatprep.subr.bf16.mxu0 %v1245
      %1303 = vmatpush1.bf16.msra.mxu0 %v1244
      %1304 = vmatprep.subr.bf16.mxu0 %v1243
      %1305 = vmatpush1.bf16.msra.mxu0 %v1242
      %1306 = vmatprep.subr.bf16.mxu0 %v1241
      %1307 = vmatpush1.bf16.msra.mxu0 %v1240
      %1308 = vmatprep.subr.bf16.mxu0 %v1239
      %1309 = vmatpush1.bf16.msra.mxu0 %v1238
      %1310 = vmatprep.subr.bf16.mxu0 %v1237
      %1311 = vmatpush1.bf16.msra.mxu0 %v1236
      %1312 = vmatprep.subr.bf16.mxu0 %v1235
      %1313 = vmatpush1.bf16.msra.mxu0 %v1234
      %1314 = vmatprep.subr.bf16.mxu0 %v1265
      %1315 = vmatpush2.bf16.msra.mxu0 %v1264
      %1316 = vmatprep.subr.bf16.mxu0 %v1263
      %1317 = vmatpush2.bf16.msra.mxu0 %v1262
      %1318 = vmatprep.subr.bf16.mxu0 %v1261
      %1319 = vmatpush2.bf16.msra.mxu0 %v1260
      %1320 = vmatprep.subr.bf16.mxu0 %v1259
      %1321 = vmatpush2.bf16.msra.mxu0 %v1258
      %1322 = vmatprep.subr.bf16.mxu0 %v1257
      %1323 = vmatpush2.bf16.msra.mxu0 %v1256
      %1324 = vmatprep.subr.bf16.mxu0 %v1255
      %1325 = vmatpush2.bf16.msra.mxu0 %v1254
      %1326 = vmatprep.subr.bf16.mxu0 %v1253
      %1327 = vmatpush2.bf16.msra.mxu0 %v1252
      %1328 = vmatprep.subr.bf16.mxu0 %v1251
      %1329 = vmatpush2.bf16.msra.mxu0 %v1250
      %1330 = vmatprep.mubr.bf16.mxu0 %v1087
      %1331 = vmatmul.mubr.bf16.gmra.mxu0 %v1086
      %v1332 = vpop.f32.mrf.mxu0
      %v1333 = vadd.f32 %v1131, %v1332
      %v1334 = vpop.f32.mrf.mxu0
      %v1335 = vadd.f32 %v1135, %v1334
      %v1336 = vpop.f32.mrf.mxu0
      %v1337 = vadd.f32 %v1131, %v1336
      %v1338 = vpop.f32.mrf.mxu0
      %v1339 = vadd.f32 %v1135, %v1338
      %1340 = vmatprep.mubr.bf16.mxu0 %v1089
      %1341 = vmatmul.mubr.bf16.gmra.mxu0 %v1088
      %v1342 = vpop.f32.mrf.mxu0
      %v1343 = vadd.f32 %v1131, %v1342
      %v1344 = vpop.f32.mrf.mxu0
      %v1345 = vadd.f32 %v1135, %v1344
      %v1346 = vpop.f32.mrf.mxu0
      %v1347 = vadd.f32 %v1131, %v1346
      %v1348 = vpop.f32.mrf.mxu0
      %v1349 = vadd.f32 %v1135, %v1348
      %1350 = vmatprep.mubr.bf16.mxu0 %v1091
      %1351 = vmatmul.mubr.bf16.gmra.mxu0 %v1090
      %v1352 = vpop.f32.mrf.mxu0
      %v1353 = vadd.f32 %v1131, %v1352
      %v1354 = vpop.f32.mrf.mxu0
      %v1355 = vadd.f32 %v1135, %v1354
      %v1356 = vpop.f32.mrf.mxu0
      %v1357 = vadd.f32 %v1131, %v1356
      %v1358 = vpop.f32.mrf.mxu0
      %v1359 = vadd.f32 %v1135, %v1358
      %1360 = vmatprep.mubr.bf16.mxu0 %v1093
      %1361 = vmatmul.mubr.bf16.gmra.mxu0 %v1092
      %v1362 = vpop.f32.mrf.mxu0
      %v1363 = vadd.f32 %v1131, %v1362
      %v1364 = vpop.f32.mrf.mxu0
      %v1365 = vadd.f32 %v1135, %v1364
      %v1366 = vpop.f32.mrf.mxu0
      %v1367 = vadd.f32 %v1131, %v1366
      %v1368 = vpop.f32.mrf.mxu0
      %v1369 = vadd.f32 %v1135, %v1368
      %1370 = vdwg.mxu0
      %v1371 = vunpack.c.l.bf16 %v385
      %v1372 = vunpack.c.h.bf16 %v385
      %v1373 = vunpack.c.l.bf16 %v386
      %v1374 = vunpack.c.h.bf16 %v386
      %v1375 = vunpack.c.l.bf16 %v387
      %v1376 = vunpack.c.h.bf16 %v387
      %v1377 = vunpack.c.l.bf16 %v388
      %v1378 = vunpack.c.h.bf16 %v388
      %v1379 = vunpack.c.l.bf16 %v389
      %v1380 = vunpack.c.h.bf16 %v389
      %v1381 = vunpack.c.l.bf16 %v390
      %v1382 = vunpack.c.h.bf16 %v390
      %v1383 = vunpack.c.l.bf16 %v391
      %v1384 = vunpack.c.h.bf16 %v391
      %v1385 = vunpack.c.l.bf16 %v392
      %v1386 = vunpack.c.h.bf16 %v392
      %v1387 = vadd.f32 %v1333, %v1371
      %v1388 = vadd.f32 %v1335, %v1372
      %v1389 = vadd.f32 %v1337, %v1373
      %v1390 = vadd.f32 %v1339, %v1374
      %v1391 = vadd.f32 %v1343, %v1375
      %v1392 = vadd.f32 %v1345, %v1376
      %v1393 = vadd.f32 %v1347, %v1377
      %v1394 = vadd.f32 %v1349, %v1378
      %v1395 = vadd.f32 %v1353, %v1379
      %v1396 = vadd.f32 %v1355, %v1380
      %v1397 = vadd.f32 %v1357, %v1381
      %v1398 = vadd.f32 %v1359, %v1382
      %v1399 = vadd.f32 %v1363, %v1383
      %v1400 = vadd.f32 %v1365, %v1384
      %v1401 = vadd.f32 %v1367, %v1385
      %v1402 = vadd.f32 %v1369, %v1386
      %v1403 = vpack.c.bf16 %v1387, %v1387
      %v1404 = vpack.c.bf16 %v1388, %v1388
      %v1405 = vpack.c.bf16 %v1389, %v1389
      %v1406 = vpack.c.bf16 %v1390, %v1390
      %v1407 = vpack.c.bf16 %v1391, %v1391
      %v1408 = vpack.c.bf16 %v1392, %v1392
      %v1409 = vpack.c.bf16 %v1393, %v1393
      %v1410 = vpack.c.bf16 %v1394, %v1394
      %v1411 = vpack.c.bf16 %v1395, %v1395
      %v1412 = vpack.c.bf16 %v1396, %v1396
      %v1413 = vpack.c.bf16 %v1397, %v1397
      %v1414 = vpack.c.bf16 %v1398, %v1398
      %v1415 = vpack.c.bf16 %v1399, %v1399
      %v1416 = vpack.c.bf16 %v1400, %v1400
      %v1417 = vpack.c.bf16 %v1401, %v1401
      %v1418 = vpack.c.bf16 %v1402, %v1402
      %v1435 = vunpack.c.l.b16 %v1403
      %v1436 = vunpack.c.l.b16 %v1404
      %v1437 = vunpack.c.l.b16 %v1405
      %v1438 = vunpack.c.l.b16 %v1406
      %v1439 = vunpack.c.l.b16 %v1407
      %v1440 = vunpack.c.l.b16 %v1408
      %v1441 = vunpack.c.l.b16 %v1409
      %v1442 = vunpack.c.l.b16 %v1410
      %v1443 = vunpack.c.l.b16 %v1411
      %v1444 = vunpack.c.l.b16 %v1412
      %v1445 = vunpack.c.l.b16 %v1413
      %v1446 = vunpack.c.l.b16 %v1414
      %v1447 = vunpack.c.l.b16 %v1415
      %v1448 = vunpack.c.l.b16 %v1416
      %v1449 = vunpack.c.l.b16 %v1417
      %v1450 = vunpack.c.l.b16 %v1418
      %v1451 = vpack.c.b16 %v1436, %v1435
      %v1452 = vpack.c.b16 %v1438, %v1437
      %v1453 = vpack.c.b16 %v1440, %v1439
      %v1454 = vpack.c.b16 %v1442, %v1441
      %v1455 = vpack.c.b16 %v1444, %v1443
      %v1456 = vpack.c.b16 %v1446, %v1445
      %v1457 = vpack.c.b16 %v1448, %v1447
      %v1458 = vpack.c.b16 %v1450, %v1449
      %1467 = vst [vmem:[%s372] sm:$0xff] %v1451
      %1468 = vst [vmem:[%s372 + $0x8] sm:$0xff] %v1452
      %1469 = vst [vmem:[%s372 + $0x10] sm:$0xff] %v1453
      %1470 = vst [vmem:[%s372 + $0x18] sm:$0xff] %v1454
      %1471 = vst [vmem:[%s372 + $0x20] sm:$0xff] %v1455
      %1472 = vst [vmem:[%s372 + $0x28] sm:$0xff] %v1456
      %1473 = vst [vmem:[%s372 + $0x30] sm:$0xff] %v1457
      %1474 = vst [vmem:[%s372 + $0x38] sm:$0xff] %v1458
      %v1475 = vadd.f32 %v1387, %v1389
      %v1476 = vadd.f32 %v1475, %v1391
      %v1477 = vadd.f32 %v1476, %v1393
      %v1478 = vadd.f32 %v1477, %v1395
      %v1479 = vadd.f32 %v1478, %v1397
      %v1480 = vadd.f32 %v1479, %v1399
      %v1481 = vadd.f32 %v1480, %v1401
      %v1482 = vadd.f32 %v1388, %v1390
      %v1483 = vadd.f32 %v1482, %v1392
      %v1484 = vadd.f32 %v1483, %v1394
      %v1485 = vadd.f32 %v1484, %v1396
      %v1486 = vadd.f32 %v1485, %v1398
      %v1487 = vadd.f32 %v1486, %v1400
      %v1488 = vadd.f32 %v1487, %v1402
      %v1489 = vmul.f32 %v1387, %v1387
      %v1490 = vmul.f32 %v1388, %v1388
      %v1491 = vmul.f32 %v1389, %v1389
      %v1492 = vmul.f32 %v1390, %v1390
      %v1493 = vmul.f32 %v1391, %v1391
      %v1494 = vmul.f32 %v1392, %v1392
      %v1495 = vmul.f32 %v1393, %v1393
      %v1496 = vmul.f32 %v1394, %v1394
      %v1497 = vmul.f32 %v1395, %v1395
      %v1498 = vmul.f32 %v1396, %v1396
      %v1499 = vmul.f32 %v1397, %v1397
      %v1500 = vmul.f32 %v1398, %v1398
      %v1501 = vmul.f32 %v1399, %v1399
      %v1502 = vmul.f32 %v1400, %v1400
      %v1503 = vmul.f32 %v1401, %v1401
      %v1504 = vmul.f32 %v1402, %v1402
      %v1505 = vadd.f32 %v1489, %v1491
      %v1506 = vadd.f32 %v1505, %v1493
      %v1507 = vadd.f32 %v1506, %v1495
      %v1508 = vadd.f32 %v1507, %v1497
      %v1509 = vadd.f32 %v1508, %v1499
      %v1510 = vadd.f32 %v1509, %v1501
      %v1511 = vadd.f32 %v1510, %v1503
      %v1512 = vadd.f32 %v1490, %v1492
      %v1513 = vadd.f32 %v1512, %v1494
      %v1514 = vadd.f32 %v1513, %v1496
      %v1515 = vadd.f32 %v1514, %v1498
      %v1516 = vadd.f32 %v1515, %v1500
      %v1517 = vadd.f32 %v1516, %v1502
      %v1518 = vadd.f32 %v1517, %v1504
      %1519 = vst [vmem:[%s383] sm:$0xff] %v1481
      %1520 = vst [vmem:[%s383 + $0x8] sm:$0xff] %v1488
      %1521 = vst [vmem:[%s383 + $0x10] sm:$0xff] %v1511
      %1522 = vst [vmem:[%s383 + $0x18] sm:$0xff] %v1518
      %s1523 = smul.u32 8, %s24
      %p1524 = scmp.lt.s32.totalorder %s23, 1
      %s1525 = scalar_select %p1524, %s23, 1
      %p1526 = scmp.lt.s32.totalorder %s1523, 7
      %s1527 = scalar_select %p1526, %s1523, 7
      %s1528 = smul.addr %s1527, 2
      %s1529 = smul.addr %s1525, 16
      %s1530 = sadd.s32 %s1528, %s1529
      %s1531 = smul.addr %s1530, 4
      %s1532 = scalar_lea.vmem %s6, %s1531
      %s1533 = smul.u32 2, %s24
      %p1534 = scmp.lt.s32.totalorder %s23, 1
      %s1535 = scalar_select %p1534, %s23, 1
      %p1536 = scmp.lt.s32.totalorder %s1533, 1
      %s1537 = scalar_select %p1536, %s1533, 1
      %s1538 = smul.addr %s1537, 2
      %s1539 = smul.addr %s1535, 4
      %s1540 = sadd.s32 %s1538, %s1539
      %s1541 = smul.addr %s1540, 8
      %s1542 = scalar_lea.vmem %s7, %s1541
      // Predicated region
      $region45: #{cross_dual_path_forward.28} parent=43 // pred_check
        %p1543 = pneg %p191
      $region46: #{cross_dual_path_forward.28} parent=43 // pred_check_branch
        %1545 = sbr.rel (%p1543) target = $region48
      $region47: #{cross_dual_path_forward.28} parent=43 // pred_region
        %s1546 = smul.u32 8, %s24
      $region48: #{cross_dual_path_forward.28} parent=43 // pred_fallthru
        _
      // Predicated region
      $region49: #{cross_dual_path_forward.28} parent=43 // pred_check
        %p1547 = pneg %p219
      $region50: #{cross_dual_path_forward.28} parent=43 // pred_check_branch
        %1549 = sbr.rel (%p1547) target = $region52
      $region51: #{cross_dual_path_forward.28} parent=43 // pred_region
        %s1550 = smul.u32 2, %s24
      $region52: #{cross_dual_path_forward.28} parent=43 // pred_fallthru
        _
    $region44: #{cross_dual_path_forward.28} parent=5 // pred_fallthru
      _
    %p1551 = scmp.le.s32.totalorder 2, %s14
    // Predicated region
    $region53: #{cross_dual_path_forward.28} parent=5 // pred_check
      %p1552 = pneg %p1551
    $region54: #{cross_dual_path_forward.28} parent=5 // pred_check_branch
      %1554 = sbr.rel (%p1552) target = $region56
    $region55: #{cross_dual_path_forward.28} parent=5 // pred_region
      %s1555 = ssub.s32 %s14, 2
      // Predicated region
      $region57: #{cross_dual_path_forward.28} parent=55 // pred_check
        %p1556 = pneg %p197
      $region58: #{cross_dual_path_forward.28} parent=55 // pred_check_branch
        %1558 = sbr.rel (%p1556) target = $region60
      $region59: #{cross_dual_path_forward.28} parent=55 // pred_region
        %s1559 = smul.u32 8, %s26
        %p1560 = scmp.lt.s32.totalorder %s25, 1
        %s1561 = scalar_select %p1560, %s25, 1
        %p1562 = scmp.lt.s32.totalorder %s1559, 7
        %s1563 = scalar_select %p1562, %s1559, 7
        %s1564 = smul.addr %s1563, 2
        %s1565 = smul.addr %s1561, 16
        %s1566 = sadd.s32 %s1564, %s1565
        %s1567 = smul.addr %s1566, 4
        %s1568 = scalar_lea.vmem %s6, %s1567
      $region60: #{cross_dual_path_forward.28} parent=55 // pred_fallthru
        _
      // Predicated region
      $region61: #{cross_dual_path_forward.28} parent=55 // pred_check
        %p1569 = pneg %p225
      $region62: #{cross_dual_path_forward.28} parent=55 // pred_check_branch
        %1571 = sbr.rel (%p1569) target = $region64
      $region63: #{cross_dual_path_forward.28} parent=55 // pred_region
        %s1572 = smul.u32 2, %s26
        %p1573 = scmp.lt.s32.totalorder %s25, 1
        %s1574 = scalar_select %p1573, %s25, 1
        %p1575 = scmp.lt.s32.totalorder %s1572, 1
        %s1576 = scalar_select %p1575, %s1572, 1
        %s1577 = smul.addr %s1576, 2
        %s1578 = smul.addr %s1574, 4
        %s1579 = sadd.s32 %s1577, %s1578
        %s1580 = smul.addr %s1579, 8
        %s1581 = scalar_lea.vmem %s7, %s1580
      $region64: #{cross_dual_path_forward.28} parent=55 // pred_fallthru
        _
    $region56: #{cross_dual_path_forward.28} parent=5 // pred_fallthru
      _
  $region6: #{cross_dual_path_forward.28} parent=0 // loop_footer
    %s18 = sadd.s32 1, %s14
  $region7: #{cross_dual_path_forward.28} parent=0 // loop_footer_branch
    %13 = sbr.rel target = $region3
  $region8: #{cross_dual_path_forward.28} parent=0 // loop_exit
    _

// kernel: cross_dual_path_forward.30
$region0: #{cross_dual_path_forward.30}
  #allocation0 [shape = 'u32[]', space=smem, size = 0x4, offset = 0x4, fixed_abs, tag = 'smem constant byte address 0x4 - core index']
  #allocation1 [shape = 'u32[144,128]{1,0:T(1,128)}', space=vmem, size = 0x12000, scoped, tag = 'internal scratch']
  #allocation2 [shape = 'f32[1]{0:T(128)S(6)}', space=smem, size = 0x200, scoped, tag = 'scoped memory for cross_dual_path_forward.30']
  %s0 = inlined_call_operand.vmem [shape: bf16[128,256], index: 0, kind: input, shape index: {}]
  %s1 = inlined_call_operand.vmem [shape: bf16[256,512], index: 1, kind: input, shape index: {}]
  %s2 = inlined_call_operand.vmem [shape: f32[1,512], index: 2, kind: input, shape index: {}]
  %s3 = inlined_call_operand.<no memory space> [shape: f32[1], index: 3, kind: input, shape index: {}]
  %s4 = inlined_call_operand.vmem [shape: bf16[128,512], index: 4, kind: output, shape index: {}]
  %s5 = sld [smem:[#allocation0]]
  $region26: #{cross_dual_path_forward.30} parent=0
    _
  %s7 = ssub.s32 1, %s5
  %s8 = scalar_select 0, %s7, %s5
  %9 = sst [smem:[#allocation2]] %s3
  // Predicated region
  $region2: #{cross_dual_path_forward.30} parent=0 // pred_check
    _
  $region3: #{cross_dual_path_forward.30} parent=0 // pred_check_branch
    %11 = sbr.rel (0) target = $region5
  $region4: #{cross_dual_path_forward.30} parent=0 // pred_region
    _
  $region5: #{cross_dual_path_forward.30} parent=0 // pred_fallthru
    _
  // Predicated region
  $region6: #{cross_dual_path_forward.30} parent=0 // pred_check
    _
  $region7: #{cross_dual_path_forward.30} parent=0 // pred_check_branch
    %13 = sbr.rel (0) target = $region9
  $region8: #{cross_dual_path_forward.30} parent=0 // pred_region
    _
  $region9: #{cross_dual_path_forward.30} parent=0 // pred_fallthru
    _
  // Predicated region
  $region10: #{cross_dual_path_forward.30} parent=0 // pred_check
    _
  $region11: #{cross_dual_path_forward.30} parent=0 // pred_check_branch
    %15 = sbr.rel (0) target = $region13
  $region12: #{cross_dual_path_forward.30} parent=0 // pred_region
    _
  $region13: #{cross_dual_path_forward.30} parent=0 // pred_fallthru
    _
  // Predicated region
  $region14: #{cross_dual_path_forward.30} parent=0 // pred_check
    _
  $region15: #{cross_dual_path_forward.30} parent=0 // pred_check_branch
    %17 = sbr.rel (0) target = $region17
  $region16: #{cross_dual_path_forward.30} parent=0 // pred_region
    _
  $region17: #{cross_dual_path_forward.30} parent=0 // pred_fallthru
    _
  %v19 = vld [vmem:[%s0] sm:$0xff]
  %v20 = vld [vmem:[%s0 + $0x8] sm:$0xff]
  %v21 = vld [vmem:[%s0 + $0x10] sm:$0xff]
  %v22 = vld [vmem:[%s0 + $0x18] sm:$0xff]
  %v23 = vld [vmem:[%s0 + $0x20] sm:$0xff]
  %v24 = vld [vmem:[%s0 + $0x28] sm:$0xff]
  %v25 = vld [vmem:[%s0 + $0x30] sm:$0xff]
  %v26 = vld [vmem:[%s0 + $0x38] sm:$0xff]
  %v27 = vld [vmem:[%s0 + $0x40] sm:$0xff]
  %v28 = vld [vmem:[%s0 + $0x48] sm:$0xff]
  %v29 = vld [vmem:[%s0 + $0x50] sm:$0xff]
  %v30 = vld [vmem:[%s0 + $0x58] sm:$0xff]
  %v31 = vld [vmem:[%s0 + $0x60] sm:$0xff]
  %v32 = vld [vmem:[%s0 + $0x68] sm:$0xff]
  %v33 = vld [vmem:[%s0 + $0x70] sm:$0xff]
  %v34 = vld [vmem:[%s0 + $0x78] sm:$0xff]
  %s35 = sld [smem:[#allocation2]]
  %p37 = scmp.ne.f32.partialorder %s35, %s35
  %s38 = sshrl.u32 %s35, 16
  %s39 = sand.u32 %s38, 1
  %s40 = sadd.s32 32767, %s39
  %s41 = sadd.s32 %s35, %s40
  %s42 = sand.u32 %s41, 4294901760
  %s43 = scalar_select %p37, 2143289344, %s42
  %s45 = sshrl.u32 %s43, 16
  %vm46 = vcmp.ge.bf16.partialorder %v19, 0
  %vm47 = vcmp.ge.bf16.partialorder %v20, 0
  %vm48 = vcmp.ge.bf16.partialorder %v21, 0
  %vm49 = vcmp.ge.bf16.partialorder %v22, 0
  %vm50 = vcmp.ge.bf16.partialorder %v23, 0
  %vm51 = vcmp.ge.bf16.partialorder %v24, 0
  %vm52 = vcmp.ge.bf16.partialorder %v25, 0
  %vm53 = vcmp.ge.bf16.partialorder %v26, 0
  %vm54 = vcmp.ge.bf16.partialorder %v27, 0
  %vm55 = vcmp.ge.bf16.partialorder %v28, 0
  %vm56 = vcmp.ge.bf16.partialorder %v29, 0
  %vm57 = vcmp.ge.bf16.partialorder %v30, 0
  %vm58 = vcmp.ge.bf16.partialorder %v31, 0
  %vm59 = vcmp.ge.bf16.partialorder %v32, 0
  %vm60 = vcmp.ge.bf16.partialorder %v33, 0
  %vm61 = vcmp.ge.bf16.partialorder %v34, 0
  %s62 = sshll.u32 %s45, 16
  %s63 = sor.u32 %s45, %s62
  %v64 = vstv %s63
  %v66 = vmul.bf16 %v64, %v19
  %v67 = vmul.bf16 %v64, %v20
  %v68 = vmul.bf16 %v64, %v21
  %v69 = vmul.bf16 %v64, %v22
  %v70 = vmul.bf16 %v64, %v23
  %v71 = vmul.bf16 %v64, %v24
  %v72 = vmul.bf16 %v64, %v25
  %v73 = vmul.bf16 %v64, %v26
  %v74 = vmul.bf16 %v64, %v27
  %v75 = vmul.bf16 %v64, %v28
  %v76 = vmul.bf16 %v64, %v29
  %v77 = vmul.bf16 %v64, %v30
  %v78 = vmul.bf16 %v64, %v31
  %v79 = vmul.bf16 %v64, %v32
  %v80 = vmul.bf16 %v64, %v33
  %v81 = vmul.bf16 %v64, %v34
  %v82 = vsel %vm46, %v19, %v66
  %v83 = vsel %vm47, %v20, %v67
  %v84 = vsel %vm48, %v21, %v68
  %v85 = vsel %vm49, %v22, %v69
  %v86 = vsel %vm50, %v23, %v70
  %v87 = vsel %vm51, %v24, %v71
  %v88 = vsel %vm52, %v25, %v72
  %v89 = vsel %vm53, %v26, %v73
  %v90 = vsel %vm54, %v27, %v74
  %v91 = vsel %vm55, %v28, %v75
  %v92 = vsel %vm56, %v29, %v76
  %v93 = vsel %vm57, %v30, %v77
  %v94 = vsel %vm58, %v31, %v78
  %v95 = vsel %vm59, %v32, %v79
  %v96 = vsel %vm60, %v33, %v80
  %v97 = vsel %vm61, %v34, %v81
  %v98 = vld [vmem:[%s1] sm:$0xff]
  %v99 = vld [vmem:[%s1 + $0x8] sm:$0xff]
  %v100 = vld [vmem:[%s1 + $0x10] sm:$0xff]
  %v101 = vld [vmem:[%s1 + $0x18] sm:$0xff]
  %v102 = vld [vmem:[%s1 + $0x20] sm:$0xff]
  %v103 = vld [vmem:[%s1 + $0x28] sm:$0xff]
  %v104 = vld [vmem:[%s1 + $0x30] sm:$0xff]
  %v105 = vld [vmem:[%s1 + $0x38] sm:$0xff]
  %v106 = vld [vmem:[%s1 + $0x40] sm:$0xff]
  %v107 = vld [vmem:[%s1 + $0x48] sm:$0xff]
  %v108 = vld [vmem:[%s1 + $0x50] sm:$0xff]
  %v109 = vld [vmem:[%s1 + $0x58] sm:$0xff]
  %v110 = vld [vmem:[%s1 + $0x60] sm:$0xff]
  %v111 = vld [vmem:[%s1 + $0x68] sm:$0xff]
  %v112 = vld [vmem:[%s1 + $0x70] sm:$0xff]
  %v113 = vld [vmem:[%s1 + $0x78] sm:$0xff]
  %v114 = vld [vmem:[%s1 + $0x80] sm:$0xff]
  %v115 = vld [vmem:[%s1 + $0x88] sm:$0xff]
  %v116 = vld [vmem:[%s1 + $0x90] sm:$0xff]
  %v117 = vld [vmem:[%s1 + $0x98] sm:$0xff]
  %v118 = vld [vmem:[%s1 + $0xa0] sm:$0xff]
  %v119 = vld [vmem:[%s1 + $0xa8] sm:$0xff]
  %v120 = vld [vmem:[%s1 + $0xb0] sm:$0xff]
  %v121 = vld [vmem:[%s1 + $0xb8] sm:$0xff]
  %v122 = vld [vmem:[%s1 + $0xc0] sm:$0xff]
  %v123 = vld [vmem:[%s1 + $0xc8] sm:$0xff]
  %v124 = vld [vmem:[%s1 + $0xd0] sm:$0xff]
  %v125 = vld [vmem:[%s1 + $0xd8] sm:$0xff]
  %v126 = vld [vmem:[%s1 + $0xe0] sm:$0xff]
  %v127 = vld [vmem:[%s1 + $0xe8] sm:$0xff]
  %v128 = vld [vmem:[%s1 + $0xf0] sm:$0xff]
  %v129 = vld [vmem:[%s1 + $0xf8] sm:$0xff]
  %v130 = vld [vmem:[%s1 + $0x100] sm:$0xff]
  %v131 = vld [vmem:[%s1 + $0x108] sm:$0xff]
  %v132 = vld [vmem:[%s1 + $0x110] sm:$0xff]
  %v133 = vld [vmem:[%s1 + $0x118] sm:$0xff]
  %v134 = vld [vmem:[%s1 + $0x120] sm:$0xff]
  %v135 = vld [vmem:[%s1 + $0x128] sm:$0xff]
  %v136 = vld [vmem:[%s1 + $0x130] sm:$0xff]
  %v137 = vld [vmem:[%s1 + $0x138] sm:$0xff]
  %v138 = vld [vmem:[%s1 + $0x140] sm:$0xff]
  %v139 = vld [vmem:[%s1 + $0x148] sm:$0xff]
  %v140 = vld [vmem:[%s1 + $0x150] sm:$0xff]
  %v141 = vld [vmem:[%s1 + $0x158] sm:$0xff]
  %v142 = vld [vmem:[%s1 + $0x160] sm:$0xff]
  %v143 = vld [vmem:[%s1 + $0x168] sm:$0xff]
  %v144 = vld [vmem:[%s1 + $0x170] sm:$0xff]
  %v145 = vld [vmem:[%s1 + $0x178] sm:$0xff]
  %v146 = vld [vmem:[%s1 + $0x180] sm:$0xff]
  %v147 = vld [vmem:[%s1 + $0x188] sm:$0xff]
  %v148 = vld [vmem:[%s1 + $0x190] sm:$0xff]
  %v149 = vld [vmem:[%s1 + $0x198] sm:$0xff]
  %v150 = vld [vmem:[%s1 + $0x1a0] sm:$0xff]
  %v151 = vld [vmem:[%s1 + $0x1a8] sm:$0xff]
  %v152 = vld [vmem:[%s1 + $0x1b0] sm:$0xff]
  %v153 = vld [vmem:[%s1 + $0x1b8] sm:$0xff]
  %v154 = vld [vmem:[%s1 + $0x1c0] sm:$0xff]
  %v155 = vld [vmem:[%s1 + $0x1c8] sm:$0xff]
  %v156 = vld [vmem:[%s1 + $0x1d0] sm:$0xff]
  %v157 = vld [vmem:[%s1 + $0x1d8] sm:$0xff]
  %v158 = vld [vmem:[%s1 + $0x1e0] sm:$0xff]
  %v159 = vld [vmem:[%s1 + $0x1e8] sm:$0xff]
  %v160 = vld [vmem:[%s1 + $0x1f0] sm:$0xff]
  %v161 = vld [vmem:[%s1 + $0x1f8] sm:$0xff]
  %v162 = vld [vmem:[%s2] sm:$0xf]
  %v164 = vlaneseq
  %v165 = vshrl.u32 %v164, 7
  %v166 = vsub.s32 0, %v165
  %v167 = vrot.slane %v162, %v166
  %v168 = vlaneseq
  %v169 = vshrl.u32 %v168, 7
  %v170 = vsub.s32 1, %v169
  %v171 = vrot.slane %v162, %v170
  %v172 = vlaneseq
  %v173 = vshrl.u32 %v172, 7
  %v174 = vsub.s32 2, %v173
  %v175 = vrot.slane %v162, %v174
  %v176 = vlaneseq
  %v177 = vshrl.u32 %v176, 7
  %v178 = vsub.s32 3, %v177
  %v179 = vrot.slane %v162, %v178
  %v200 = vunpack.c.l.b16 %v82
  %v201 = vunpack.c.h.b16 %v82
  %v202 = vunpack.c.l.b16 %v83
  %v203 = vunpack.c.h.b16 %v83
  %v204 = vunpack.c.l.b16 %v84
  %v205 = vunpack.c.h.b16 %v84
  %v206 = vunpack.c.l.b16 %v85
  %v207 = vunpack.c.h.b16 %v85
  %v208 = vunpack.c.l.b16 %v86
  %v209 = vunpack.c.h.b16 %v86
  %v210 = vunpack.c.l.b16 %v87
  %v211 = vunpack.c.h.b16 %v87
  %v212 = vunpack.c.l.b16 %v88
  %v213 = vunpack.c.h.b16 %v88
  %v214 = vunpack.c.l.b16 %v89
  %v215 = vunpack.c.h.b16 %v89
  %v216 = vunpack.c.l.b16 %v90
  %v217 = vunpack.c.h.b16 %v90
  %v218 = vunpack.c.l.b16 %v91
  %v219 = vunpack.c.h.b16 %v91
  %v220 = vunpack.c.l.b16 %v92
  %v221 = vunpack.c.h.b16 %v92
  %v222 = vunpack.c.l.b16 %v93
  %v223 = vunpack.c.h.b16 %v93
  %v224 = vunpack.c.l.b16 %v94
  %v225 = vunpack.c.h.b16 %v94
  %v226 = vunpack.c.l.b16 %v95
  %v227 = vunpack.c.h.b16 %v95
  %v228 = vunpack.c.l.b16 %v96
  %v229 = vunpack.c.h.b16 %v96
  %v230 = vunpack.c.l.b16 %v97
  %v231 = vunpack.c.h.b16 %v97
  %v232 = vpack.c.b16 %v202, %v200
  %v233 = vpack.c.b16 %v203, %v201
  %v234 = vpack.c.b16 %v206, %v204
  %v235 = vpack.c.b16 %v207, %v205
  %v236 = vpack.c.b16 %v210, %v208
  %v237 = vpack.c.b16 %v211, %v209
  %v238 = vpack.c.b16 %v214, %v212
  %v239 = vpack.c.b16 %v215, %v213
  %v240 = vpack.c.b16 %v218, %v216
  %v241 = vpack.c.b16 %v219, %v217
  %v242 = vpack.c.b16 %v222, %v220
  %v243 = vpack.c.b16 %v223, %v221
  %v244 = vpack.c.b16 %v226, %v224
  %v245 = vpack.c.b16 %v227, %v225
  %v246 = vpack.c.b16 %v230, %v228
  %v247 = vpack.c.b16 %v231, %v229
  %v328 = vunpack.c.l.b16 %v98
  %v329 = vunpack.c.h.b16 %v98
  %v330 = vunpack.c.l.b16 %v99
  %v331 = vunpack.c.h.b16 %v99
  %v332 = vunpack.c.l.b16 %v100
  %v333 = vunpack.c.h.b16 %v100
  %v334 = vunpack.c.l.b16 %v101
  %v335 = vunpack.c.h.b16 %v101
  %v336 = vunpack.c.l.b16 %v102
  %v337 = vunpack.c.h.b16 %v102
  %v338 = vunpack.c.l.b16 %v103
  %v339 = vunpack.c.h.b16 %v103
  %v340 = vunpack.c.l.b16 %v104
  %v341 = vunpack.c.h.b16 %v104
  %v342 = vunpack.c.l.b16 %v105
  %v343 = vunpack.c.h.b16 %v105
  %v344 = vunpack.c.l.b16 %v106
  %v345 = vunpack.c.h.b16 %v106
  %v346 = vunpack.c.l.b16 %v107
  %v347 = vunpack.c.h.b16 %v107
  %v348 = vunpack.c.l.b16 %v108
  %v349 = vunpack.c.h.b16 %v108
  %v350 = vunpack.c.l.b16 %v109
  %v351 = vunpack.c.h.b16 %v109
  %v352 = vunpack.c.l.b16 %v110
  %v353 = vunpack.c.h.b16 %v110
  %v354 = vunpack.c.l.b16 %v111
  %v355 = vunpack.c.h.b16 %v111
  %v356 = vunpack.c.l.b16 %v112
  %v357 = vunpack.c.h.b16 %v112
  %v358 = vunpack.c.l.b16 %v113
  %v359 = vunpack.c.h.b16 %v113
  %v360 = vunpack.c.l.b16 %v114
  %v361 = vunpack.c.h.b16 %v114
  %v362 = vunpack.c.l.b16 %v115
  %v363 = vunpack.c.h.b16 %v115
  %v364 = vunpack.c.l.b16 %v116
  %v365 = vunpack.c.h.b16 %v116
  %v366 = vunpack.c.l.b16 %v117
  %v367 = vunpack.c.h.b16 %v117
  %v368 = vunpack.c.l.b16 %v118
  %v369 = vunpack.c.h.b16 %v118
  %v370 = vunpack.c.l.b16 %v119
  %v371 = vunpack.c.h.b16 %v119
  %v372 = vunpack.c.l.b16 %v120
  %v373 = vunpack.c.h.b16 %v120
  %v374 = vunpack.c.l.b16 %v121
  %v375 = vunpack.c.h.b16 %v121
  %v376 = vunpack.c.l.b16 %v122
  %v377 = vunpack.c.h.b16 %v122
  %v378 = vunpack.c.l.b16 %v123
  %v379 = vunpack.c.h.b16 %v123
  %v380 = vunpack.c.l.b16 %v124
  %v381 = vunpack.c.h.b16 %v124
  %v382 = vunpack.c.l.b16 %v125
  %v383 = vunpack.c.h.b16 %v125
  %v384 = vunpack.c.l.b16 %v126
  %v385 = vunpack.c.h.b16 %v126
  %v386 = vunpack.c.l.b16 %v127
  %v387 = vunpack.c.h.b16 %v127
  %v388 = vunpack.c.l.b16 %v128
  %v389 = vunpack.c.h.b16 %v128
  %v390 = vunpack.c.l.b16 %v129
  %v391 = vunpack.c.h.b16 %v129
  %v392 = vunpack.c.l.b16 %v130
  %v393 = vunpack.c.h.b16 %v130
  %v394 = vunpack.c.l.b16 %v131
  %v395 = vunpack.c.h.b16 %v131
  %v396 = vunpack.c.l.b16 %v132
  %v397 = vunpack.c.h.b16 %v132
  %v398 = vunpack.c.l.b16 %v133
  %v399 = vunpack.c.h.b16 %v133
  %v400 = vunpack.c.l.b16 %v134
  %v401 = vunpack.c.h.b16 %v134
  %v402 = vunpack.c.l.b16 %v135
  %v403 = vunpack.c.h.b16 %v135
  %v404 = vunpack.c.l.b16 %v136
  %v405 = vunpack.c.h.b16 %v136
  %v406 = vunpack.c.l.b16 %v137
  %v407 = vunpack.c.h.b16 %v137
  %v408 = vunpack.c.l.b16 %v138
  %v409 = vunpack.c.h.b16 %v138
  %v410 = vunpack.c.l.b16 %v139
  %v411 = vunpack.c.h.b16 %v139
  %v412 = vunpack.c.l.b16 %v140
  %v413 = vunpack.c.h.b16 %v140
  %v414 = vunpack.c.l.b16 %v141
  %v415 = vunpack.c.h.b16 %v141
  %v416 = vunpack.c.l.b16 %v142
  %v417 = vunpack.c.h.b16 %v142
  %v418 = vunpack.c.l.b16 %v143
  %v419 = vunpack.c.h.b16 %v143
  %v420 = vunpack.c.l.b16 %v144
  %v421 = vunpack.c.h.b16 %v144
  %v422 = vunpack.c.l.b16 %v145
  %v423 = vunpack.c.h.b16 %v145
  %v424 = vunpack.c.l.b16 %v146
  %v425 = vunpack.c.h.b16 %v146
  %v426 = vunpack.c.l.b16 %v147
  %v427 = vunpack.c.h.b16 %v147
  %v428 = vunpack.c.l.b16 %v148
  %v429 = vunpack.c.h.b16 %v148
  %v430 = vunpack.c.l.b16 %v149
  %v431 = vunpack.c.h.b16 %v149
  %v432 = vunpack.c.l.b16 %v150
  %v433 = vunpack.c.h.b16 %v150
  %v434 = vunpack.c.l.b16 %v151
  %v435 = vunpack.c.h.b16 %v151
  %v436 = vunpack.c.l.b16 %v152
  %v437 = vunpack.c.h.b16 %v152
  %v438 = vunpack.c.l.b16 %v153
  %v439 = vunpack.c.h.b16 %v153
  %v440 = vunpack.c.l.b16 %v154
  %v441 = vunpack.c.h.b16 %v154
  %v442 = vunpack.c.l.b16 %v155
  %v443 = vunpack.c.h.b16 %v155
  %v444 = vunpack.c.l.b16 %v156
  %v445 = vunpack.c.h.b16 %v156
  %v446 = vunpack.c.l.b16 %v157
  %v447 = vunpack.c.h.b16 %v157
  %v448 = vunpack.c.l.b16 %v158
  %v449 = vunpack.c.h.b16 %v158
  %v450 = vunpack.c.l.b16 %v159
  %v451 = vunpack.c.h.b16 %v159
  %v452 = vunpack.c.l.b16 %v160
  %v453 = vunpack.c.h.b16 %v160
  %v454 = vunpack.c.l.b16 %v161
  %v455 = vunpack.c.h.b16 %v161
  %v456 = vpack.c.b16 %v332, %v328
  %v457 = vpack.c.b16 %v333, %v329
  %v458 = vpack.c.b16 %v334, %v330
  %v459 = vpack.c.b16 %v335, %v331
  %v460 = vpack.c.b16 %v340, %v336
  %v461 = vpack.c.b16 %v341, %v337
  %v462 = vpack.c.b16 %v342, %v338
  %v463 = vpack.c.b16 %v343, %v339
  %v464 = vpack.c.b16 %v348, %v344
  %v465 = vpack.c.b16 %v349, %v345
  %v466 = vpack.c.b16 %v350, %v346
  %v467 = vpack.c.b16 %v351, %v347
  %v468 = vpack.c.b16 %v356, %v352
  %v469 = vpack.c.b16 %v357, %v353
  %v470 = vpack.c.b16 %v358, %v354
  %v471 = vpack.c.b16 %v359, %v355
  %v472 = vpack.c.b16 %v364, %v360
  %v473 = vpack.c.b16 %v365, %v361
  %v474 = vpack.c.b16 %v366, %v362
  %v475 = vpack.c.b16 %v367, %v363
  %v476 = vpack.c.b16 %v372, %v368
  %v477 = vpack.c.b16 %v373, %v369
  %v478 = vpack.c.b16 %v374, %v370
  %v479 = vpack.c.b16 %v375, %v371
  %v480 = vpack.c.b16 %v380, %v376
  %v481 = vpack.c.b16 %v381, %v377
  %v482 = vpack.c.b16 %v382, %v378
  %v483 = vpack.c.b16 %v383, %v379
  %v484 = vpack.c.b16 %v388, %v384
  %v485 = vpack.c.b16 %v389, %v385
  %v486 = vpack.c.b16 %v390, %v386
  %v487 = vpack.c.b16 %v391, %v387
  %v488 = vpack.c.b16 %v396, %v392
  %v489 = vpack.c.b16 %v397, %v393
  %v490 = vpack.c.b16 %v398, %v394
  %v491 = vpack.c.b16 %v399, %v395
  %v492 = vpack.c.b16 %v404, %v400
  %v493 = vpack.c.b16 %v405, %v401
  %v494 = vpack.c.b16 %v406, %v402
  %v495 = vpack.c.b16 %v407, %v403
  %v496 = vpack.c.b16 %v412, %v408
  %v497 = vpack.c.b16 %v413, %v409
  %v498 = vpack.c.b16 %v414, %v410
  %v499 = vpack.c.b16 %v415, %v411
  %v500 = vpack.c.b16 %v420, %v416
  %v501 = vpack.c.b16 %v421, %v417
  %v502 = vpack.c.b16 %v422, %v418
  %v503 = vpack.c.b16 %v423, %v419
  %v504 = vpack.c.b16 %v428, %v424
  %v505 = vpack.c.b16 %v429, %v425
  %v506 = vpack.c.b16 %v430, %v426
  %v507 = vpack.c.b16 %v431, %v427
  %v508 = vpack.c.b16 %v436, %v432
  %v509 = vpack.c.b16 %v437, %v433
  %v510 = vpack.c.b16 %v438, %v434
  %v511 = vpack.c.b16 %v439, %v435
  %v512 = vpack.c.b16 %v444, %v440
  %v513 = vpack.c.b16 %v445, %v441
  %v514 = vpack.c.b16 %v446, %v442
  %v515 = vpack.c.b16 %v447, %v443
  %v516 = vpack.c.b16 %v452, %v448
  %v517 = vpack.c.b16 %v453, %v449
  %v518 = vpack.c.b16 %v454, %v450
  %v519 = vpack.c.b16 %v455, %v451
  %584 = vmatprep.subr.bf16.mxu0 %v485
  %585 = vmatpush1.bf16.msra.mxu0 %v484
  %586 = vmatprep.subr.bf16.mxu0 %v481
  %587 = vmatpush1.bf16.msra.mxu0 %v480
  %588 = vmatprep.subr.bf16.mxu0 %v477
  %589 = vmatpush1.bf16.msra.mxu0 %v476
  %590 = vmatprep.subr.bf16.mxu0 %v473
  %591 = vmatpush1.bf16.msra.mxu0 %v472
  %592 = vmatprep.subr.bf16.mxu0 %v469
  %593 = vmatpush1.bf16.msra.mxu0 %v468
  %594 = vmatprep.subr.bf16.mxu0 %v465
  %595 = vmatpush1.bf16.msra.mxu0 %v464
  %596 = vmatprep.subr.bf16.mxu0 %v461
  %597 = vmatpush1.bf16.msra.mxu0 %v460
  %598 = vmatprep.subr.bf16.mxu0 %v457
  %599 = vmatpush1.bf16.msra.mxu0 %v456
  %600 = vmatprep.subr.bf16.mxu0 %v517
  %601 = vmatpush2.bf16.msra.mxu0 %v516
  %602 = vmatprep.subr.bf16.mxu0 %v513
  %603 = vmatpush2.bf16.msra.mxu0 %v512
  %604 = vmatprep.subr.bf16.mxu0 %v509
  %605 = vmatpush2.bf16.msra.mxu0 %v508
  %606 = vmatprep.subr.bf16.mxu0 %v505
  %607 = vmatpush2.bf16.msra.mxu0 %v504
  %608 = vmatprep.subr.bf16.mxu0 %v501
  %609 = vmatpush2.bf16.msra.mxu0 %v500
  %610 = vmatprep.subr.bf16.mxu0 %v497
  %611 = vmatpush2.bf16.msra.mxu0 %v496
  %612 = vmatprep.subr.bf16.mxu0 %v493
  %613 = vmatpush2.bf16.msra.mxu0 %v492
  %614 = vmatprep.subr.bf16.mxu0 %v489
  %615 = vmatpush2.bf16.msra.mxu0 %v488
  %616 = vmatprep.mubr.bf16.mxu0 %v233
  %617 = vmatmul.mubr.bf16.gmra.mxu0 %v232
  %v618 = vpop.f32.mrf.mxu0
  %v619 = vadd.f32 %v167, %v618
  %v620 = vpop.f32.mrf.mxu0
  %v621 = vadd.f32 %v171, %v620
  %v622 = vpop.f32.mrf.mxu0
  %v623 = vadd.f32 %v167, %v622
  %v624 = vpop.f32.mrf.mxu0
  %v625 = vadd.f32 %v171, %v624
  %626 = vmatprep.mubr.bf16.mxu0 %v235
  %627 = vmatmul.mubr.bf16.gmra.mxu0 %v234
  %v628 = vpop.f32.mrf.mxu0
  %v629 = vadd.f32 %v167, %v628
  %v630 = vpop.f32.mrf.mxu0
  %v631 = vadd.f32 %v171, %v630
  %v632 = vpop.f32.mrf.mxu0
  %v633 = vadd.f32 %v167, %v632
  %v634 = vpop.f32.mrf.mxu0
  %v635 = vadd.f32 %v171, %v634
  %636 = vmatprep.mubr.bf16.mxu0 %v237
  %637 = vmatmul.mubr.bf16.gmra.mxu0 %v236
  %v638 = vpop.f32.mrf.mxu0
  %v639 = vadd.f32 %v167, %v638
  %v640 = vpop.f32.mrf.mxu0
  %v641 = vadd.f32 %v171, %v640
  %v642 = vpop.f32.mrf.mxu0
  %v643 = vadd.f32 %v167, %v642
  %v644 = vpop.f32.mrf.mxu0
  %v645 = vadd.f32 %v171, %v644
  %646 = vmatprep.mubr.bf16.mxu0 %v239
  %647 = vmatmul.mubr.bf16.gmra.mxu0 %v238
  %v648 = vpop.f32.mrf.mxu0
  %v649 = vadd.f32 %v167, %v648
  %v650 = vpop.f32.mrf.mxu0
  %v651 = vadd.f32 %v171, %v650
  %v652 = vpop.f32.mrf.mxu0
  %v653 = vadd.f32 %v167, %v652
  %v654 = vpop.f32.mrf.mxu0
  %v655 = vadd.f32 %v171, %v654
  %656 = vmatprep.mubr.bf16.mxu0 %v241
  %657 = vmatmul.mubr.bf16.gmra.mxu0 %v240
  %v658 = vpop.f32.mrf.mxu0
  %v659 = vadd.f32 %v167, %v658
  %v660 = vpop.f32.mrf.mxu0
  %v661 = vadd.f32 %v171, %v660
  %v662 = vpop.f32.mrf.mxu0
  %v663 = vadd.f32 %v167, %v662
  %v664 = vpop.f32.mrf.mxu0
  %v665 = vadd.f32 %v171, %v664
  %666 = vmatprep.mubr.bf16.mxu0 %v243
  %667 = vmatmul.mubr.bf16.gmra.mxu0 %v242
  %v668 = vpop.f32.mrf.mxu0
  %v669 = vadd.f32 %v167, %v668
  %v670 = vpop.f32.mrf.mxu0
  %v671 = vadd.f32 %v171, %v670
  %v672 = vpop.f32.mrf.mxu0
  %v673 = vadd.f32 %v167, %v672
  %v674 = vpop.f32.mrf.mxu0
  %v675 = vadd.f32 %v171, %v674
  %676 = vmatprep.mubr.bf16.mxu0 %v245
  %677 = vmatmul.mubr.bf16.gmra.mxu0 %v244
  %v678 = vpop.f32.mrf.mxu0
  %v679 = vadd.f32 %v167, %v678
  %v680 = vpop.f32.mrf.mxu0
  %v681 = vadd.f32 %v171, %v680
  %v682 = vpop.f32.mrf.mxu0
  %v683 = vadd.f32 %v167, %v682
  %v684 = vpop.f32.mrf.mxu0
  %v685 = vadd.f32 %v171, %v684
  %686 = vmatprep.mubr.bf16.mxu0 %v247
  %687 = vmatmul.mubr.bf16.gmra.mxu0 %v246
  %v688 = vpop.f32.mrf.mxu0
  %v689 = vadd.f32 %v167, %v688
  %v690 = vpop.f32.mrf.mxu0
  %v691 = vadd.f32 %v171, %v690
  %v692 = vpop.f32.mrf.mxu0
  %v693 = vadd.f32 %v167, %v692
  %v694 = vpop.f32.mrf.mxu0
  %v695 = vadd.f32 %v171, %v694
  %696 = vdwg.mxu0
  %697 = vmatprep.subr.bf16.mxu0 %v487
  %698 = vmatpush1.bf16.msra.mxu0 %v486
  %699 = vmatprep.subr.bf16.mxu0 %v483
  %700 = vmatpush1.bf16.msra.mxu0 %v482
  %701 = vmatprep.subr.bf16.mxu0 %v479
  %702 = vmatpush1.bf16.msra.mxu0 %v478
  %703 = vmatprep.subr.bf16.mxu0 %v475
  %704 = vmatpush1.bf16.msra.mxu0 %v474
  %705 = vmatprep.subr.bf16.mxu0 %v471
  %706 = vmatpush1.bf16.msra.mxu0 %v470
  %707 = vmatprep.subr.bf16.mxu0 %v467
  %708 = vmatpush1.bf16.msra.mxu0 %v466
  %709 = vmatprep.subr.bf16.mxu0 %v463
  %710 = vmatpush1.bf16.msra.mxu0 %v462
  %711 = vmatprep.subr.bf16.mxu0 %v459
  %712 = vmatpush1.bf16.msra.mxu0 %v458
  %713 = vmatprep.subr.bf16.mxu0 %v519
  %714 = vmatpush2.bf16.msra.mxu0 %v518
  %715 = vmatprep.subr.bf16.mxu0 %v515
  %716 = vmatpush2.bf16.msra.mxu0 %v514
  %717 = vmatprep.subr.bf16.mxu0 %v511
  %718 = vmatpush2.bf16.msra.mxu0 %v510
  %719 = vmatprep.subr.bf16.mxu0 %v507
  %720 = vmatpush2.bf16.msra.mxu0 %v506
  %721 = vmatprep.subr.bf16.mxu0 %v503
  %722 = vmatpush2.bf16.msra.mxu0 %v502
  %723 = vmatprep.subr.bf16.mxu0 %v499
  %724 = vmatpush2.bf16.msra.mxu0 %v498
  %725 = vmatprep.subr.bf16.mxu0 %v495
  %726 = vmatpush2.bf16.msra.mxu0 %v494
  %727 = vmatprep.subr.bf16.mxu0 %v491
  %728 = vmatpush2.bf16.msra.mxu0 %v490
  %729 = vmatprep.mubr.bf16.mxu0 %v233
  %730 = vmatmul.mubr.bf16.gmra.mxu0 %v232
  %v731 = vpop.f32.mrf.mxu0
  %v732 = vadd.f32 %v175, %v731
  %v733 = vpop.f32.mrf.mxu0
  %v734 = vadd.f32 %v179, %v733
  %v735 = vpop.f32.mrf.mxu0
  %v736 = vadd.f32 %v175, %v735
  %v737 = vpop.f32.mrf.mxu0
  %v738 = vadd.f32 %v179, %v737
  %739 = vmatprep.mubr.bf16.mxu0 %v235
  %740 = vmatmul.mubr.bf16.gmra.mxu0 %v234
  %v741 = vpop.f32.mrf.mxu0
  %v742 = vadd.f32 %v175, %v741
  %v743 = vpop.f32.mrf.mxu0
  %v744 = vadd.f32 %v179, %v743
  %v745 = vpop.f32.mrf.mxu0
  %v746 = vadd.f32 %v175, %v745
  %v747 = vpop.f32.mrf.mxu0
  %v748 = vadd.f32 %v179, %v747
  %749 = vmatprep.mubr.bf16.mxu0 %v237
  %750 = vmatmul.mubr.bf16.gmra.mxu0 %v236
  %v751 = vpop.f32.mrf.mxu0
  %v752 = vadd.f32 %v175, %v751
  %v753 = vpop.f32.mrf.mxu0
  %v754 = vadd.f32 %v179, %v753
  %v755 = vpop.f32.mrf.mxu0
  %v756 = vadd.f32 %v175, %v755
  %v757 = vpop.f32.mrf.mxu0
  %v758 = vadd.f32 %v179, %v757
  %759 = vmatprep.mubr.bf16.mxu0 %v239
  %760 = vmatmul.mubr.bf16.gmra.mxu0 %v238
  %v761 = vpop.f32.mrf.mxu0
  %v762 = vadd.f32 %v175, %v761
  %v763 = vpop.f32.mrf.mxu0
  %v764 = vadd.f32 %v179, %v763
  %v765 = vpop.f32.mrf.mxu0
  %v766 = vadd.f32 %v175, %v765
  %v767 = vpop.f32.mrf.mxu0
  %v768 = vadd.f32 %v179, %v767
  %769 = vmatprep.mubr.bf16.mxu0 %v241
  %770 = vmatmul.mubr.bf16.gmra.mxu0 %v240
  %v771 = vpop.f32.mrf.mxu0
  %v772 = vadd.f32 %v175, %v771
  %v773 = vpop.f32.mrf.mxu0
  %v774 = vadd.f32 %v179, %v773
  %v775 = vpop.f32.mrf.mxu0
  %v776 = vadd.f32 %v175, %v775
  %v777 = vpop.f32.mrf.mxu0
  %v778 = vadd.f32 %v179, %v777
  %779 = vmatprep.mubr.bf16.mxu0 %v243
  %780 = vmatmul.mubr.bf16.gmra.mxu0 %v242
  %v781 = vpop.f32.mrf.mxu0
  %v782 = vadd.f32 %v175, %v781
  %v783 = vpop.f32.mrf.mxu0
  %v784 = vadd.f32 %v179, %v783
  %v785 = vpop.f32.mrf.mxu0
  %v786 = vadd.f32 %v175, %v785
  %v787 = vpop.f32.mrf.mxu0
  %v788 = vadd.f32 %v179, %v787
  %789 = vmatprep.mubr.bf16.mxu0 %v245
  %790 = vmatmul.mubr.bf16.gmra.mxu0 %v244
  %v791 = vpop.f32.mrf.mxu0
  %v792 = vadd.f32 %v175, %v791
  %v793 = vpop.f32.mrf.mxu0
  %v794 = vadd.f32 %v179, %v793
  %v795 = vpop.f32.mrf.mxu0
  %v796 = vadd.f32 %v175, %v795
  %v797 = vpop.f32.mrf.mxu0
  %v798 = vadd.f32 %v179, %v797
  %799 = vmatprep.mubr.bf16.mxu0 %v247
  %800 = vmatmul.mubr.bf16.gmra.mxu0 %v246
  %v801 = vpop.f32.mrf.mxu0
  %v802 = vadd.f32 %v175, %v801
  %v803 = vpop.f32.mrf.mxu0
  %v804 = vadd.f32 %v179, %v803
  %v805 = vpop.f32.mrf.mxu0
  %v806 = vadd.f32 %v175, %v805
  %v807 = vpop.f32.mrf.mxu0
  %v808 = vadd.f32 %v179, %v807
  %809 = vdwg.mxu0
  %v810 = vpack.c.bf16 %v623, %v619
  %v811 = vpack.c.bf16 %v625, %v621
  %v812 = vpack.c.bf16 %v736, %v732
  %v813 = vpack.c.bf16 %v738, %v734
  %v814 = vpack.c.bf16 %v633, %v629
  %v815 = vpack.c.bf16 %v635, %v631
  %v816 = vpack.c.bf16 %v746, %v742
  %v817 = vpack.c.bf16 %v748, %v744
  %v818 = vpack.c.bf16 %v643, %v639
  %v819 = vpack.c.bf16 %v645, %v641
  %v820 = vpack.c.bf16 %v756, %v752
  %v821 = vpack.c.bf16 %v758, %v754
  %v822 = vpack.c.bf16 %v653, %v649
  %v823 = vpack.c.bf16 %v655, %v651
  %v824 = vpack.c.bf16 %v766, %v762
  %v825 = vpack.c.bf16 %v768, %v764
  %v826 = vpack.c.bf16 %v663, %v659
  %v827 = vpack.c.bf16 %v665, %v661
  %v828 = vpack.c.bf16 %v776, %v772
  %v829 = vpack.c.bf16 %v778, %v774
  %v830 = vpack.c.bf16 %v673, %v669
  %v831 = vpack.c.bf16 %v675, %v671
  %v832 = vpack.c.bf16 %v786, %v782
  %v833 = vpack.c.bf16 %v788, %v784
  %v834 = vpack.c.bf16 %v683, %v679
  %v835 = vpack.c.bf16 %v685, %v681
  %v836 = vpack.c.bf16 %v796, %v792
  %v837 = vpack.c.bf16 %v798, %v794
  %v838 = vpack.c.bf16 %v693, %v689
  %v839 = vpack.c.bf16 %v695, %v691
  %v840 = vpack.c.bf16 %v806, %v802
  %v841 = vpack.c.bf16 %v808, %v804
  %v874 = vunpack.c.l.b16 %v810
  %v875 = vunpack.c.l.b16 %v811
  %v876 = vunpack.c.l.b16 %v812
  %v877 = vunpack.c.l.b16 %v813
  %v878 = vunpack.c.h.b16 %v810
  %v879 = vunpack.c.h.b16 %v811
  %v880 = vunpack.c.h.b16 %v812
  %v881 = vunpack.c.h.b16 %v813
  %v882 = vunpack.c.l.b16 %v814
  %v883 = vunpack.c.l.b16 %v815
  %v884 = vunpack.c.l.b16 %v816
  %v885 = vunpack.c.l.b16 %v817
  %v886 = vunpack.c.h.b16 %v814
  %v887 = vunpack.c.h.b16 %v815
  %v888 = vunpack.c.h.b16 %v816
  %v889 = vunpack.c.h.b16 %v817
  %v890 = vunpack.c.l.b16 %v818
  %v891 = vunpack.c.l.b16 %v819
  %v892 = vunpack.c.l.b16 %v820
  %v893 = vunpack.c.l.b16 %v821
  %v894 = vunpack.c.h.b16 %v818
  %v895 = vunpack.c.h.b16 %v819
  %v896 = vunpack.c.h.b16 %v820
  %v897 = vunpack.c.h.b16 %v821
  %v898 = vunpack.c.l.b16 %v822
  %v899 = vunpack.c.l.b16 %v823
  %v900 = vunpack.c.l.b16 %v824
  %v901 = vunpack.c.l.b16 %v825
  %v902 = vunpack.c.h.b16 %v822
  %v903 = vunpack.c.h.b16 %v823
  %v904 = vunpack.c.h.b16 %v824
  %v905 = vunpack.c.h.b16 %v825
  %v906 = vunpack.c.l.b16 %v826
  %v907 = vunpack.c.l.b16 %v827
  %v908 = vunpack.c.l.b16 %v828
  %v909 = vunpack.c.l.b16 %v829
  %v910 = vunpack.c.h.b16 %v826
  %v911 = vunpack.c.h.b16 %v827
  %v912 = vunpack.c.h.b16 %v828
  %v913 = vunpack.c.h.b16 %v829
  %v914 = vunpack.c.l.b16 %v830
  %v915 = vunpack.c.l.b16 %v831
  %v916 = vunpack.c.l.b16 %v832
  %v917 = vunpack.c.l.b16 %v833
  %v918 = vunpack.c.h.b16 %v830
  %v919 = vunpack.c.h.b16 %v831
  %v920 = vunpack.c.h.b16 %v832
  %v921 = vunpack.c.h.b16 %v833
  %v922 = vunpack.c.l.b16 %v834
  %v923 = vunpack.c.l.b16 %v835
  %v924 = vunpack.c.l.b16 %v836
  %v925 = vunpack.c.l.b16 %v837
  %v926 = vunpack.c.h.b16 %v834
  %v927 = vunpack.c.h.b16 %v835
  %v928 = vunpack.c.h.b16 %v836
  %v929 = vunpack.c.h.b16 %v837
  %v930 = vunpack.c.l.b16 %v838
  %v931 = vunpack.c.l.b16 %v839
  %v932 = vunpack.c.l.b16 %v840
  %v933 = vunpack.c.l.b16 %v841
  %v934 = vunpack.c.h.b16 %v838
  %v935 = vunpack.c.h.b16 %v839
  %v936 = vunpack.c.h.b16 %v840
  %v937 = vunpack.c.h.b16 %v841
  %v938 = vpack.c.b16 %v875, %v874
  %v939 = vpack.c.b16 %v877, %v876
  %v940 = vpack.c.b16 %v879, %v878
  %v941 = vpack.c.b16 %v881, %v880
  %v942 = vpack.c.b16 %v883, %v882
  %v943 = vpack.c.b16 %v885, %v884
  %v944 = vpack.c.b16 %v887, %v886
  %v945 = vpack.c.b16 %v889, %v888
  %v946 = vpack.c.b16 %v891, %v890
  %v947 = vpack.c.b16 %v893, %v892
  %v948 = vpack.c.b16 %v895, %v894
  %v949 = vpack.c.b16 %v897, %v896
  %v950 = vpack.c.b16 %v899, %v898
  %v951 = vpack.c.b16 %v901, %v900
  %v952 = vpack.c.b16 %v903, %v902
  %v953 = vpack.c.b16 %v905, %v904
  %v954 = vpack.c.b16 %v907, %v906
  %v955 = vpack.c.b16 %v909, %v908
  %v956 = vpack.c.b16 %v911, %v910
  %v957 = vpack.c.b16 %v913, %v912
  %v958 = vpack.c.b16 %v915, %v914
  %v959 = vpack.c.b16 %v917, %v916
  %v960 = vpack.c.b16 %v919, %v918
  %v961 = vpack.c.b16 %v921, %v920
  %v962 = vpack.c.b16 %v923, %v922
  %v963 = vpack.c.b16 %v925, %v924
  %v964 = vpack.c.b16 %v927, %v926
  %v965 = vpack.c.b16 %v929, %v928
  %v966 = vpack.c.b16 %v931, %v930
  %v967 = vpack.c.b16 %v933, %v932
  %v968 = vpack.c.b16 %v935, %v934
  %v969 = vpack.c.b16 %v937, %v936
  %1002 = vst [vmem:[%s4] sm:$0xff] %v938
  %1003 = vst [vmem:[%s4 + $0x8] sm:$0xff] %v939
  %1004 = vst [vmem:[%s4 + $0x10] sm:$0xff] %v940
  %1005 = vst [vmem:[%s4 + $0x18] sm:$0xff] %v941
  %1006 = vst [vmem:[%s4 + $0x20] sm:$0xff] %v942
  %1007 = vst [vmem:[%s4 + $0x28] sm:$0xff] %v943
  %1008 = vst [vmem:[%s4 + $0x30] sm:$0xff] %v944
  %1009 = vst [vmem:[%s4 + $0x38] sm:$0xff] %v945
  %1010 = vst [vmem:[%s4 + $0x40] sm:$0xff] %v946
  %1011 = vst [vmem:[%s4 + $0x48] sm:$0xff] %v947
  %1012 = vst [vmem:[%s4 + $0x50] sm:$0xff] %v948
  %1013 = vst [vmem:[%s4 + $0x58] sm:$0xff] %v949
  %1014 = vst [vmem:[%s4 + $0x60] sm:$0xff] %v950
  %1015 = vst [vmem:[%s4 + $0x68] sm:$0xff] %v951
  %1016 = vst [vmem:[%s4 + $0x70] sm:$0xff] %v952
  %1017 = vst [vmem:[%s4 + $0x78] sm:$0xff] %v953
  %1018 = vst [vmem:[%s4 + $0x80] sm:$0xff] %v954
  %1019 = vst [vmem:[%s4 + $0x88] sm:$0xff] %v955
  %1020 = vst [vmem:[%s4 + $0x90] sm:$0xff] %v956
  %1021 = vst [vmem:[%s4 + $0x98] sm:$0xff] %v957
  %1022 = vst [vmem:[%s4 + $0xa0] sm:$0xff] %v958
  %1023 = vst [vmem:[%s4 + $0xa8] sm:$0xff] %v959
  %1024 = vst [vmem:[%s4 + $0xb0] sm:$0xff] %v960
  %1025 = vst [vmem:[%s4 + $0xb8] sm:$0xff] %v961
  %1026 = vst [vmem:[%s4 + $0xc0] sm:$0xff] %v962
  %1027 = vst [vmem:[%s4 + $0xc8] sm:$0xff] %v963
  %1028 = vst [vmem:[%s4 + $0xd0] sm:$0xff] %v964
  %1029 = vst [vmem:[%s4 + $0xd8] sm:$0xff] %v965
  %1030 = vst [vmem:[%s4 + $0xe0] sm:$0xff] %v966
  %1031 = vst [vmem:[%s4 + $0xe8] sm:$0xff] %v967
  %1032 = vst [vmem:[%s4 + $0xf0] sm:$0xff] %v968
  %1033 = vst [vmem:[%s4 + $0xf8] sm:$0xff] %v969
  // Predicated region
  $region18: #{cross_dual_path_forward.30} parent=0 // pred_check
    _
  $region19: #{cross_dual_path_forward.30} parent=0 // pred_check_branch
    %1035 = sbr.rel (0) target = $region21
  $region20: #{cross_dual_path_forward.30} parent=0 // pred_region
    _
  $region21: #{cross_dual_path_forward.30} parent=0 // pred_fallthru
    _
  // Predicated region
  $region22: #{cross_dual_path_forward.30} parent=0 // pred_check
    _
  $region23: #{cross_dual_path_forward.30} parent=0 // pred_check_branch
    %1037 = sbr.rel (0) target = $region25
  $region24: #{cross_dual_path_forward.30} parent=0 // pred_region
    _
  $region25: #{cross_dual_path_forward.30} parent=0 // pred_fallthru
    _

// kernel: cross_dual_path_forward.31
$region0: #{cross_dual_path_forward.31}
  #allocation0 [shape = 'u32[]', space=smem, size = 0x4, offset = 0x4, fixed_abs, tag = 'smem constant byte address 0x4 - core index']
  #allocation1 [shape = 'u32[144,128]{1,0:T(1,128)}', space=vmem, size = 0x12000, scoped, tag = 'internal scratch']
  %s0 = inlined_call_operand.vmem [shape: bf16[80,256], index: 0, kind: input, shape index: {}]
  %s1 = inlined_call_operand.vmem [shape: bf16[256,512], index: 1, kind: input, shape index: {}]
  %s2 = inlined_call_operand.vmem [shape: f32[1,512], index: 2, kind: input, shape index: {}]
  %s3 = inlined_call_operand.vmem [shape: bf16[256,128], index: 3, kind: input, shape index: {}]
  %s4 = inlined_call_operand.vmem [shape: f32[80,128], index: 4, kind: output, shape index: {}]
  %s5 = sld [smem:[#allocation0]]
  $region26: #{cross_dual_path_forward.31} parent=0
    _
  %s7 = ssub.s32 1, %s5
  %s8 = scalar_select 0, %s7, %s5
  // Predicated region
  $region2: #{cross_dual_path_forward.31} parent=0 // pred_check
    _
  $region3: #{cross_dual_path_forward.31} parent=0 // pred_check_branch
    %10 = sbr.rel (0) target = $region5
  $region4: #{cross_dual_path_forward.31} parent=0 // pred_region
    _
  $region5: #{cross_dual_path_forward.31} parent=0 // pred_fallthru
    _
  // Predicated region
  $region6: #{cross_dual_path_forward.31} parent=0 // pred_check
    _
  $region7: #{cross_dual_path_forward.31} parent=0 // pred_check_branch
    %12 = sbr.rel (0) target = $region9
  $region8: #{cross_dual_path_forward.31} parent=0 // pred_region
    _
  $region9: #{cross_dual_path_forward.31} parent=0 // pred_fallthru
    _
  // Predicated region
  $region10: #{cross_dual_path_forward.31} parent=0 // pred_check
    _
  $region11: #{cross_dual_path_forward.31} parent=0 // pred_check_branch
    %14 = sbr.rel (0) target = $region13
  $region12: #{cross_dual_path_forward.31} parent=0 // pred_region
    _
  $region13: #{cross_dual_path_forward.31} parent=0 // pred_fallthru
    _
  // Predicated region
  $region14: #{cross_dual_path_forward.31} parent=0 // pred_check
    _
  $region15: #{cross_dual_path_forward.31} parent=0 // pred_check_branch
    %16 = sbr.rel (0) target = $region17
  $region16: #{cross_dual_path_forward.31} parent=0 // pred_region
    _
  $region17: #{cross_dual_path_forward.31} parent=0 // pred_fallthru
    _
  %v18 = vld [vmem:[%s0] sm:$0xff]
  %v19 = vld [vmem:[%s0 + $0x8] sm:$0xff]
  %v20 = vld [vmem:[%s0 + $0x10] sm:$0xff]
  %v21 = vld [vmem:[%s0 + $0x18] sm:$0xff]
  %v22 = vld [vmem:[%s0 + $0x20] sm:$0xff]
  %v23 = vld [vmem:[%s0 + $0x28] sm:$0xff]
  %v24 = vld [vmem:[%s0 + $0x30] sm:$0xff]
  %v25 = vld [vmem:[%s0 + $0x38] sm:$0xff]
  %v26 = vld [vmem:[%s0 + $0x40] sm:$0xff]
  %v27 = vld [vmem:[%s0 + $0x48] sm:$0xff]
  %v28 = vld [vmem:[%s1] sm:$0xff]
  %v29 = vld [vmem:[%s1 + $0x8] sm:$0xff]
  %v30 = vld [vmem:[%s1 + $0x10] sm:$0xff]
  %v31 = vld [vmem:[%s1 + $0x18] sm:$0xff]
  %v32 = vld [vmem:[%s1 + $0x20] sm:$0xff]
  %v33 = vld [vmem:[%s1 + $0x28] sm:$0xff]
  %v34 = vld [vmem:[%s1 + $0x30] sm:$0xff]
  %v35 = vld [vmem:[%s1 + $0x38] sm:$0xff]
  %v36 = vld [vmem:[%s1 + $0x40] sm:$0xff]
  %v37 = vld [vmem:[%s1 + $0x48] sm:$0xff]
  %v38 = vld [vmem:[%s1 + $0x50] sm:$0xff]
  %v39 = vld [vmem:[%s1 + $0x58] sm:$0xff]
  %v40 = vld [vmem:[%s1 + $0x60] sm:$0xff]
  %v41 = vld [vmem:[%s1 + $0x68] sm:$0xff]
  %v42 = vld [vmem:[%s1 + $0x70] sm:$0xff]
  %v43 = vld [vmem:[%s1 + $0x78] sm:$0xff]
  %v44 = vld [vmem:[%s1 + $0x80] sm:$0xff]
  %v45 = vld [vmem:[%s1 + $0x88] sm:$0xff]
  %v46 = vld [vmem:[%s1 + $0x90] sm:$0xff]
  %v47 = vld [vmem:[%s1 + $0x98] sm:$0xff]
  %v48 = vld [vmem:[%s1 + $0xa0] sm:$0xff]
  %v49 = vld [vmem:[%s1 + $0xa8] sm:$0xff]
  %v50 = vld [vmem:[%s1 + $0xb0] sm:$0xff]
  %v51 = vld [vmem:[%s1 + $0xb8] sm:$0xff]
  %v52 = vld [vmem:[%s1 + $0xc0] sm:$0xff]
  %v53 = vld [vmem:[%s1 + $0xc8] sm:$0xff]
  %v54 = vld [vmem:[%s1 + $0xd0] sm:$0xff]
  %v55 = vld [vmem:[%s1 + $0xd8] sm:$0xff]
  %v56 = vld [vmem:[%s1 + $0xe0] sm:$0xff]
  %v57 = vld [vmem:[%s1 + $0xe8] sm:$0xff]
  %v58 = vld [vmem:[%s1 + $0xf0] sm:$0xff]
  %v59 = vld [vmem:[%s1 + $0xf8] sm:$0xff]
  %v60 = vld [vmem:[%s1 + $0x100] sm:$0xff]
  %v61 = vld [vmem:[%s1 + $0x108] sm:$0xff]
  %v62 = vld [vmem:[%s1 + $0x110] sm:$0xff]
  %v63 = vld [vmem:[%s1 + $0x118] sm:$0xff]
  %v64 = vld [vmem:[%s1 + $0x120] sm:$0xff]
  %v65 = vld [vmem:[%s1 + $0x128] sm:$0xff]
  %v66 = vld [vmem:[%s1 + $0x130] sm:$0xff]
  %v67 = vld [vmem:[%s1 + $0x138] sm:$0xff]
  %v68 = vld [vmem:[%s1 + $0x140] sm:$0xff]
  %v69 = vld [vmem:[%s1 + $0x148] sm:$0xff]
  %v70 = vld [vmem:[%s1 + $0x150] sm:$0xff]
  %v71 = vld [vmem:[%s1 + $0x158] sm:$0xff]
  %v72 = vld [vmem:[%s1 + $0x160] sm:$0xff]
  %v73 = vld [vmem:[%s1 + $0x168] sm:$0xff]
  %v74 = vld [vmem:[%s1 + $0x170] sm:$0xff]
  %v75 = vld [vmem:[%s1 + $0x178] sm:$0xff]
  %v76 = vld [vmem:[%s1 + $0x180] sm:$0xff]
  %v77 = vld [vmem:[%s1 + $0x188] sm:$0xff]
  %v78 = vld [vmem:[%s1 + $0x190] sm:$0xff]
  %v79 = vld [vmem:[%s1 + $0x198] sm:$0xff]
  %v80 = vld [vmem:[%s1 + $0x1a0] sm:$0xff]
  %v81 = vld [vmem:[%s1 + $0x1a8] sm:$0xff]
  %v82 = vld [vmem:[%s1 + $0x1b0] sm:$0xff]
  %v83 = vld [vmem:[%s1 + $0x1b8] sm:$0xff]
  %v84 = vld [vmem:[%s1 + $0x1c0] sm:$0xff]
  %v85 = vld [vmem:[%s1 + $0x1c8] sm:$0xff]
  %v86 = vld [vmem:[%s1 + $0x1d0] sm:$0xff]
  %v87 = vld [vmem:[%s1 + $0x1d8] sm:$0xff]
  %v88 = vld [vmem:[%s1 + $0x1e0] sm:$0xff]
  %v89 = vld [vmem:[%s1 + $0x1e8] sm:$0xff]
  %v90 = vld [vmem:[%s1 + $0x1f0] sm:$0xff]
  %v91 = vld [vmem:[%s1 + $0x1f8] sm:$0xff]
  %v92 = vld [vmem:[%s2] sm:$0xf]
  %v94 = vlaneseq
  %v95 = vshrl.u32 %v94, 7
  %v96 = vsub.s32 0, %v95
  %v97 = vrot.slane %v92, %v96
  %v98 = vlaneseq
  %v99 = vshrl.u32 %v98, 7
  %v100 = vsub.s32 1, %v99
  %v101 = vrot.slane %v92, %v100
  %v102 = vlaneseq
  %v103 = vshrl.u32 %v102, 7
  %v104 = vsub.s32 2, %v103
  %v105 = vrot.slane %v92, %v104
  %v106 = vlaneseq
  %v107 = vshrl.u32 %v106, 7
  %v108 = vsub.s32 3, %v107
  %v109 = vrot.slane %v92, %v108
  %v124 = vunpack.c.l.b16 %v18
  %v125 = vunpack.c.h.b16 %v18
  %v126 = vunpack.c.l.b16 %v19
  %v127 = vunpack.c.h.b16 %v19
  %v128 = vunpack.c.l.b16 %v20
  %v129 = vunpack.c.h.b16 %v20
  %v130 = vunpack.c.l.b16 %v21
  %v131 = vunpack.c.h.b16 %v21
  %v132 = vunpack.c.l.b16 %v22
  %v133 = vunpack.c.h.b16 %v22
  %v134 = vunpack.c.l.b16 %v23
  %v135 = vunpack.c.h.b16 %v23
  %v136 = vunpack.c.l.b16 %v24
  %v137 = vunpack.c.h.b16 %v24
  %v138 = vunpack.c.l.b16 %v25
  %v139 = vunpack.c.h.b16 %v25
  %v140 = vunpack.c.l.b16 %v26
  %v141 = vunpack.c.h.b16 %v26
  %v142 = vunpack.c.l.b16 %v27
  %v143 = vunpack.c.h.b16 %v27
  %v144 = vpack.c.b16 %v126, %v124
  %v145 = vpack.c.b16 %v127, %v125
  %v146 = vpack.c.b16 %v130, %v128
  %v147 = vpack.c.b16 %v131, %v129
  %v148 = vpack.c.b16 %v134, %v132
  %v149 = vpack.c.b16 %v135, %v133
  %v150 = vpack.c.b16 %v138, %v136
  %v151 = vpack.c.b16 %v139, %v137
  %v152 = vpack.c.b16 %v142, %v140
  %v153 = vpack.c.b16 %v143, %v141
  %v228 = vunpack.c.l.b16 %v28
  %v229 = vunpack.c.h.b16 %v28
  %v230 = vunpack.c.l.b16 %v29
  %v231 = vunpack.c.h.b16 %v29
  %v232 = vunpack.c.l.b16 %v30
  %v233 = vunpack.c.h.b16 %v30
  %v234 = vunpack.c.l.b16 %v31
  %v235 = vunpack.c.h.b16 %v31
  %v236 = vunpack.c.l.b16 %v32
  %v237 = vunpack.c.h.b16 %v32
  %v238 = vunpack.c.l.b16 %v33
  %v239 = vunpack.c.h.b16 %v33
  %v240 = vunpack.c.l.b16 %v34
  %v241 = vunpack.c.h.b16 %v34
  %v242 = vunpack.c.l.b16 %v35
  %v243 = vunpack.c.h.b16 %v35
  %v244 = vunpack.c.l.b16 %v36
  %v245 = vunpack.c.h.b16 %v36
  %v246 = vunpack.c.l.b16 %v37
  %v247 = vunpack.c.h.b16 %v37
  %v248 = vunpack.c.l.b16 %v38
  %v249 = vunpack.c.h.b16 %v38
  %v250 = vunpack.c.l.b16 %v39
  %v251 = vunpack.c.h.b16 %v39
  %v252 = vunpack.c.l.b16 %v40
  %v253 = vunpack.c.h.b16 %v40
  %v254 = vunpack.c.l.b16 %v41
  %v255 = vunpack.c.h.b16 %v41
  %v256 = vunpack.c.l.b16 %v42
  %v257 = vunpack.c.h.b16 %v42
  %v258 = vunpack.c.l.b16 %v43
  %v259 = vunpack.c.h.b16 %v43
  %v260 = vunpack.c.l.b16 %v44
  %v261 = vunpack.c.h.b16 %v44
  %v262 = vunpack.c.l.b16 %v45
  %v263 = vunpack.c.h.b16 %v45
  %v264 = vunpack.c.l.b16 %v46
  %v265 = vunpack.c.h.b16 %v46
  %v266 = vunpack.c.l.b16 %v47
  %v267 = vunpack.c.h.b16 %v47
  %v268 = vunpack.c.l.b16 %v48
  %v269 = vunpack.c.h.b16 %v48
  %v270 = vunpack.c.l.b16 %v49
  %v271 = vunpack.c.h.b16 %v49
  %v272 = vunpack.c.l.b16 %v50
  %v273 = vunpack.c.h.b16 %v50
  %v274 = vunpack.c.l.b16 %v51
  %v275 = vunpack.c.h.b16 %v51
  %v276 = vunpack.c.l.b16 %v52
  %v277 = vunpack.c.h.b16 %v52
  %v278 = vunpack.c.l.b16 %v53
  %v279 = vunpack.c.h.b16 %v53
  %v280 = vunpack.c.l.b16 %v54
  %v281 = vunpack.c.h.b16 %v54
  %v282 = vunpack.c.l.b16 %v55
  %v283 = vunpack.c.h.b16 %v55
  %v284 = vunpack.c.l.b16 %v56
  %v285 = vunpack.c.h.b16 %v56
  %v286 = vunpack.c.l.b16 %v57
  %v287 = vunpack.c.h.b16 %v57
  %v288 = vunpack.c.l.b16 %v58
  %v289 = vunpack.c.h.b16 %v58
  %v290 = vunpack.c.l.b16 %v59
  %v291 = vunpack.c.h.b16 %v59
  %v292 = vunpack.c.l.b16 %v60
  %v293 = vunpack.c.h.b16 %v60
  %v294 = vunpack.c.l.b16 %v61
  %v295 = vunpack.c.h.b16 %v61
  %v296 = vunpack.c.l.b16 %v62
  %v297 = vunpack.c.h.b16 %v62
  %v298 = vunpack.c.l.b16 %v63
  %v299 = vunpack.c.h.b16 %v63
  %v300 = vunpack.c.l.b16 %v64
  %v301 = vunpack.c.h.b16 %v64
  %v302 = vunpack.c.l.b16 %v65
  %v303 = vunpack.c.h.b16 %v65
  %v304 = vunpack.c.l.b16 %v66
  %v305 = vunpack.c.h.b16 %v66
  %v306 = vunpack.c.l.b16 %v67
  %v307 = vunpack.c.h.b16 %v67
  %v308 = vunpack.c.l.b16 %v68
  %v309 = vunpack.c.h.b16 %v68
  %v310 = vunpack.c.l.b16 %v69
  %v311 = vunpack.c.h.b16 %v69
  %v312 = vunpack.c.l.b16 %v70
  %v313 = vunpack.c.h.b16 %v70
  %v314 = vunpack.c.l.b16 %v71
  %v315 = vunpack.c.h.b16 %v71
  %v316 = vunpack.c.l.b16 %v72
  %v317 = vunpack.c.h.b16 %v72
  %v318 = vunpack.c.l.b16 %v73
  %v319 = vunpack.c.h.b16 %v73
  %v320 = vunpack.c.l.b16 %v74
  %v321 = vunpack.c.h.b16 %v74
  %v322 = vunpack.c.l.b16 %v75
  %v323 = vunpack.c.h.b16 %v75
  %v324 = vunpack.c.l.b16 %v76
  %v325 = vunpack.c.h.b16 %v76
  %v326 = vunpack.c.l.b16 %v77
  %v327 = vunpack.c.h.b16 %v77
  %v328 = vunpack.c.l.b16 %v78
  %v329 = vunpack.c.h.b16 %v78
  %v330 = vunpack.c.l.b16 %v79
  %v331 = vunpack.c.h.b16 %v79
  %v332 = vunpack.c.l.b16 %v80
  %v333 = vunpack.c.h.b16 %v80
  %v334 = vunpack.c.l.b16 %v81
  %v335 = vunpack.c.h.b16 %v81
  %v336 = vunpack.c.l.b16 %v82
  %v337 = vunpack.c.h.b16 %v82
  %v338 = vunpack.c.l.b16 %v83
  %v339 = vunpack.c.h.b16 %v83
  %v340 = vunpack.c.l.b16 %v84
  %v341 = vunpack.c.h.b16 %v84
  %v342 = vunpack.c.l.b16 %v85
  %v343 = vunpack.c.h.b16 %v85
  %v344 = vunpack.c.l.b16 %v86
  %v345 = vunpack.c.h.b16 %v86
  %v346 = vunpack.c.l.b16 %v87
  %v347 = vunpack.c.h.b16 %v87
  %v348 = vunpack.c.l.b16 %v88
  %v349 = vunpack.c.h.b16 %v88
  %v350 = vunpack.c.l.b16 %v89
  %v351 = vunpack.c.h.b16 %v89
  %v352 = vunpack.c.l.b16 %v90
  %v353 = vunpack.c.h.b16 %v90
  %v354 = vunpack.c.l.b16 %v91
  %v355 = vunpack.c.h.b16 %v91
  %v356 = vpack.c.b16 %v232, %v228
  %v357 = vpack.c.b16 %v233, %v229
  %v358 = vpack.c.b16 %v234, %v230
  %v359 = vpack.c.b16 %v235, %v231
  %v360 = vpack.c.b16 %v240, %v236
  %v361 = vpack.c.b16 %v241, %v237
  %v362 = vpack.c.b16 %v242, %v238
  %v363 = vpack.c.b16 %v243, %v239
  %v364 = vpack.c.b16 %v248, %v244
  %v365 = vpack.c.b16 %v249, %v245
  %v366 = vpack.c.b16 %v250, %v246
  %v367 = vpack.c.b16 %v251, %v247
  %v368 = vpack.c.b16 %v256, %v252
  %v369 = vpack.c.b16 %v257, %v253
  %v370 = vpack.c.b16 %v258, %v254
  %v371 = vpack.c.b16 %v259, %v255
  %v372 = vpack.c.b16 %v264, %v260
  %v373 = vpack.c.b16 %v265, %v261
  %v374 = vpack.c.b16 %v266, %v262
  %v375 = vpack.c.b16 %v267, %v263
  %v376 = vpack.c.b16 %v272, %v268
  %v377 = vpack.c.b16 %v273, %v269
  %v378 = vpack.c.b16 %v274, %v270
  %v379 = vpack.c.b16 %v275, %v271
  %v380 = vpack.c.b16 %v280, %v276
  %v381 = vpack.c.b16 %v281, %v277
  %v382 = vpack.c.b16 %v282, %v278
  %v383 = vpack.c.b16 %v283, %v279
  %v384 = vpack.c.b16 %v288, %v284
  %v385 = vpack.c.b16 %v289, %v285
  %v386 = vpack.c.b16 %v290, %v286
  %v387 = vpack.c.b16 %v291, %v287
  %v388 = vpack.c.b16 %v296, %v292
  %v389 = vpack.c.b16 %v297, %v293
  %v390 = vpack.c.b16 %v298, %v294
  %v391 = vpack.c.b16 %v299, %v295
  %v392 = vpack.c.b16 %v304, %v300
  %v393 = vpack.c.b16 %v305, %v301
  %v394 = vpack.c.b16 %v306, %v302
  %v395 = vpack.c.b16 %v307, %v303
  %v396 = vpack.c.b16 %v312, %v308
  %v397 = vpack.c.b16 %v313, %v309
  %v398 = vpack.c.b16 %v314, %v310
  %v399 = vpack.c.b16 %v315, %v311
  %v400 = vpack.c.b16 %v320, %v316
  %v401 = vpack.c.b16 %v321, %v317
  %v402 = vpack.c.b16 %v322, %v318
  %v403 = vpack.c.b16 %v323, %v319
  %v404 = vpack.c.b16 %v328, %v324
  %v405 = vpack.c.b16 %v329, %v325
  %v406 = vpack.c.b16 %v330, %v326
  %v407 = vpack.c.b16 %v331, %v327
  %v408 = vpack.c.b16 %v336, %v332
  %v409 = vpack.c.b16 %v337, %v333
  %v410 = vpack.c.b16 %v338, %v334
  %v411 = vpack.c.b16 %v339, %v335
  %v412 = vpack.c.b16 %v344, %v340
  %v413 = vpack.c.b16 %v345, %v341
  %v414 = vpack.c.b16 %v346, %v342
  %v415 = vpack.c.b16 %v347, %v343
  %v416 = vpack.c.b16 %v352, %v348
  %v417 = vpack.c.b16 %v353, %v349
  %v418 = vpack.c.b16 %v354, %v350
  %v419 = vpack.c.b16 %v355, %v351
  %484 = vmatprep.subr.bf16.mxu0 %v385
  %485 = vmatpush1.bf16.msra.mxu0 %v384
  %486 = vmatprep.subr.bf16.mxu0 %v381
  %487 = vmatpush1.bf16.msra.mxu0 %v380
  %488 = vmatprep.subr.bf16.mxu0 %v377
  %489 = vmatpush1.bf16.msra.mxu0 %v376
  %490 = vmatprep.subr.bf16.mxu0 %v373
  %491 = vmatpush1.bf16.msra.mxu0 %v372
  %492 = vmatprep.subr.bf16.mxu0 %v369
  %493 = vmatpush1.bf16.msra.mxu0 %v368
  %494 = vmatprep.subr.bf16.mxu0 %v365
  %495 = vmatpush1.bf16.msra.mxu0 %v364
  %496 = vmatprep.subr.bf16.mxu0 %v361
  %497 = vmatpush1.bf16.msra.mxu0 %v360
  %498 = vmatprep.subr.bf16.mxu0 %v357
  %499 = vmatpush1.bf16.msra.mxu0 %v356
  %500 = vmatprep.subr.bf16.mxu0 %v417
  %501 = vmatpush2.bf16.msra.mxu0 %v416
  %502 = vmatprep.subr.bf16.mxu0 %v413
  %503 = vmatpush2.bf16.msra.mxu0 %v412
  %504 = vmatprep.subr.bf16.mxu0 %v409
  %505 = vmatpush2.bf16.msra.mxu0 %v408
  %506 = vmatprep.subr.bf16.mxu0 %v405
  %507 = vmatpush2.bf16.msra.mxu0 %v404
  %508 = vmatprep.subr.bf16.mxu0 %v401
  %509 = vmatpush2.bf16.msra.mxu0 %v400
  %510 = vmatprep.subr.bf16.mxu0 %v397
  %511 = vmatpush2.bf16.msra.mxu0 %v396
  %512 = vmatprep.subr.bf16.mxu0 %v393
  %513 = vmatpush2.bf16.msra.mxu0 %v392
  %514 = vmatprep.subr.bf16.mxu0 %v389
  %515 = vmatpush2.bf16.msra.mxu0 %v388
  %516 = vmatprep.mubr.bf16.mxu0 %v145
  %517 = vmatmul.mubr.bf16.gmra.mxu0 %v144
  %v518 = vpop.f32.mrf.mxu0
  %v519 = vadd.f32 %v97, %v518
  %v520 = vpop.f32.mrf.mxu0
  %v521 = vadd.f32 %v101, %v520
  %v522 = vpop.f32.mrf.mxu0
  %v523 = vadd.f32 %v97, %v522
  %v524 = vpop.f32.mrf.mxu0
  %v525 = vadd.f32 %v101, %v524
  %526 = vmatprep.mubr.bf16.mxu0 %v147
  %527 = vmatmul.mubr.bf16.gmra.mxu0 %v146
  %v528 = vpop.f32.mrf.mxu0
  %v529 = vadd.f32 %v97, %v528
  %v530 = vpop.f32.mrf.mxu0
  %v531 = vadd.f32 %v101, %v530
  %v532 = vpop.f32.mrf.mxu0
  %v533 = vadd.f32 %v97, %v532
  %v534 = vpop.f32.mrf.mxu0
  %v535 = vadd.f32 %v101, %v534
  %536 = vmatprep.mubr.bf16.mxu0 %v149
  %537 = vmatmul.mubr.bf16.gmra.mxu0 %v148
  %v538 = vpop.f32.mrf.mxu0
  %v539 = vadd.f32 %v97, %v538
  %v540 = vpop.f32.mrf.mxu0
  %v541 = vadd.f32 %v101, %v540
  %v542 = vpop.f32.mrf.mxu0
  %v543 = vadd.f32 %v97, %v542
  %v544 = vpop.f32.mrf.mxu0
  %v545 = vadd.f32 %v101, %v544
  %546 = vmatprep.mubr.bf16.mxu0 %v151
  %547 = vmatmul.mubr.bf16.gmra.mxu0 %v150
  %v548 = vpop.f32.mrf.mxu0
  %v549 = vadd.f32 %v97, %v548
  %v550 = vpop.f32.mrf.mxu0
  %v551 = vadd.f32 %v101, %v550
  %v552 = vpop.f32.mrf.mxu0
  %v553 = vadd.f32 %v97, %v552
  %v554 = vpop.f32.mrf.mxu0
  %v555 = vadd.f32 %v101, %v554
  %556 = vmatprep.mubr.bf16.mxu0 %v153
  %557 = vmatmul.mubr.bf16.gmra.mxu0 %v152
  %v558 = vpop.f32.mrf.mxu0
  %v559 = vadd.f32 %v97, %v558
  %v560 = vpop.f32.mrf.mxu0
  %v561 = vadd.f32 %v101, %v560
  %v562 = vpop.f32.mrf.mxu0
  %v563 = vadd.f32 %v97, %v562
  %v564 = vpop.f32.mrf.mxu0
  %v565 = vadd.f32 %v101, %v564
  %566 = vdwg.mxu0
  %567 = vmatprep.subr.bf16.mxu0 %v387
  %568 = vmatpush1.bf16.msra.mxu0 %v386
  %569 = vmatprep.subr.bf16.mxu0 %v383
  %570 = vmatpush1.bf16.msra.mxu0 %v382
  %571 = vmatprep.subr.bf16.mxu0 %v379
  %572 = vmatpush1.bf16.msra.mxu0 %v378
  %573 = vmatprep.subr.bf16.mxu0 %v375
  %574 = vmatpush1.bf16.msra.mxu0 %v374
  %575 = vmatprep.subr.bf16.mxu0 %v371
  %576 = vmatpush1.bf16.msra.mxu0 %v370
  %577 = vmatprep.subr.bf16.mxu0 %v367
  %578 = vmatpush1.bf16.msra.mxu0 %v366
  %579 = vmatprep.subr.bf16.mxu0 %v363
  %580 = vmatpush1.bf16.msra.mxu0 %v362
  %581 = vmatprep.subr.bf16.mxu0 %v359
  %582 = vmatpush1.bf16.msra.mxu0 %v358
  %583 = vmatprep.subr.bf16.mxu0 %v419
  %584 = vmatpush2.bf16.msra.mxu0 %v418
  %585 = vmatprep.subr.bf16.mxu0 %v415
  %586 = vmatpush2.bf16.msra.mxu0 %v414
  %587 = vmatprep.subr.bf16.mxu0 %v411
  %588 = vmatpush2.bf16.msra.mxu0 %v410
  %589 = vmatprep.subr.bf16.mxu0 %v407
  %590 = vmatpush2.bf16.msra.mxu0 %v406
  %591 = vmatprep.subr.bf16.mxu0 %v403
  %592 = vmatpush2.bf16.msra.mxu0 %v402
  %593 = vmatprep.subr.bf16.mxu0 %v399
  %594 = vmatpush2.bf16.msra.mxu0 %v398
  %595 = vmatprep.subr.bf16.mxu0 %v395
  %596 = vmatpush2.bf16.msra.mxu0 %v394
  %597 = vmatprep.subr.bf16.mxu0 %v391
  %598 = vmatpush2.bf16.msra.mxu0 %v390
  %599 = vmatprep.mubr.bf16.mxu0 %v145
  %600 = vmatmul.mubr.bf16.gmra.mxu0 %v144
  %v601 = vpop.f32.mrf.mxu0
  %v602 = vadd.f32 %v105, %v601
  %v603 = vpop.f32.mrf.mxu0
  %v604 = vadd.f32 %v109, %v603
  %v605 = vpop.f32.mrf.mxu0
  %v606 = vadd.f32 %v105, %v605
  %v607 = vpop.f32.mrf.mxu0
  %v608 = vadd.f32 %v109, %v607
  %609 = vmatprep.mubr.bf16.mxu0 %v147
  %610 = vmatmul.mubr.bf16.gmra.mxu0 %v146
  %v611 = vpop.f32.mrf.mxu0
  %v612 = vadd.f32 %v105, %v611
  %v613 = vpop.f32.mrf.mxu0
  %v614 = vadd.f32 %v109, %v613
  %v615 = vpop.f32.mrf.mxu0
  %v616 = vadd.f32 %v105, %v615
  %v617 = vpop.f32.mrf.mxu0
  %v618 = vadd.f32 %v109, %v617
  %619 = vmatprep.mubr.bf16.mxu0 %v149
  %620 = vmatmul.mubr.bf16.gmra.mxu0 %v148
  %v621 = vpop.f32.mrf.mxu0
  %v622 = vadd.f32 %v105, %v621
  %v623 = vpop.f32.mrf.mxu0
  %v624 = vadd.f32 %v109, %v623
  %v625 = vpop.f32.mrf.mxu0
  %v626 = vadd.f32 %v105, %v625
  %v627 = vpop.f32.mrf.mxu0
  %v628 = vadd.f32 %v109, %v627
  %629 = vmatprep.mubr.bf16.mxu0 %v151
  %630 = vmatmul.mubr.bf16.gmra.mxu0 %v150
  %v631 = vpop.f32.mrf.mxu0
  %v632 = vadd.f32 %v105, %v631
  %v633 = vpop.f32.mrf.mxu0
  %v634 = vadd.f32 %v109, %v633
  %v635 = vpop.f32.mrf.mxu0
  %v636 = vadd.f32 %v105, %v635
  %v637 = vpop.f32.mrf.mxu0
  %v638 = vadd.f32 %v109, %v637
  %639 = vmatprep.mubr.bf16.mxu0 %v153
  %640 = vmatmul.mubr.bf16.gmra.mxu0 %v152
  %v641 = vpop.f32.mrf.mxu0
  %v642 = vadd.f32 %v105, %v641
  %v643 = vpop.f32.mrf.mxu0
  %v644 = vadd.f32 %v109, %v643
  %v645 = vpop.f32.mrf.mxu0
  %v646 = vadd.f32 %v105, %v645
  %v647 = vpop.f32.mrf.mxu0
  %v648 = vadd.f32 %v109, %v647
  %649 = vdwg.mxu0
  %v650 = vtanh.pop %v519
  %v651 = vtanh.pop %v521
  %v652 = vtanh.pop %v523
  %v653 = vtanh.pop %v525
  %v654 = vtanh.pop %v529
  %v655 = vtanh.pop %v531
  %v656 = vtanh.pop %v533
  %v657 = vtanh.pop %v535
  %v658 = vtanh.pop %v539
  %v659 = vtanh.pop %v541
  %v660 = vtanh.pop %v543
  %v661 = vtanh.pop %v545
  %v662 = vtanh.pop %v549
  %v663 = vtanh.pop %v551
  %v664 = vtanh.pop %v553
  %v665 = vtanh.pop %v555
  %v666 = vtanh.pop %v559
  %v667 = vtanh.pop %v561
  %v668 = vtanh.pop %v563
  %v669 = vtanh.pop %v565
  %v670 = vxor.u32 %v602, 2147483648
  %v671 = vxor.u32 %v604, 2147483648
  %v672 = vxor.u32 %v606, 2147483648
  %v673 = vxor.u32 %v608, 2147483648
  %v674 = vxor.u32 %v612, 2147483648
  %v675 = vxor.u32 %v614, 2147483648
  %v676 = vxor.u32 %v616, 2147483648
  %v677 = vxor.u32 %v618, 2147483648
  %v678 = vxor.u32 %v622, 2147483648
  %v679 = vxor.u32 %v624, 2147483648
  %v680 = vxor.u32 %v626, 2147483648
  %v681 = vxor.u32 %v628, 2147483648
  %v682 = vxor.u32 %v632, 2147483648
  %v683 = vxor.u32 %v634, 2147483648
  %v684 = vxor.u32 %v636, 2147483648
  %v685 = vxor.u32 %v638, 2147483648
  %v686 = vxor.u32 %v642, 2147483648
  %v687 = vxor.u32 %v644, 2147483648
  %v688 = vxor.u32 %v646, 2147483648
  %v689 = vxor.u32 %v648, 2147483648
  %v690 = vmul.f32 %v670, 1.442695
  %v691 = vpow.pop %v690
  %v692 = vmul.f32 %v671, 1.442695
  %v693 = vpow.pop %v692
  %v694 = vmul.f32 %v672, 1.442695
  %v695 = vpow.pop %v694
  %v696 = vmul.f32 %v673, 1.442695
  %v697 = vpow.pop %v696
  %v698 = vmul.f32 %v674, 1.442695
  %v699 = vpow.pop %v698
  %v700 = vmul.f32 %v675, 1.442695
  %v701 = vpow.pop %v700
  %v702 = vmul.f32 %v676, 1.442695
  %v703 = vpow.pop %v702
  %v704 = vmul.f32 %v677, 1.442695
  %v705 = vpow.pop %v704
  %v706 = vmul.f32 %v678, 1.442695
  %v707 = vpow.pop %v706
  %v708 = vmul.f32 %v679, 1.442695
  %v709 = vpow.pop %v708
  %v710 = vmul.f32 %v680, 1.442695
  %v711 = vpow.pop %v710
  %v712 = vmul.f32 %v681, 1.442695
  %v713 = vpow.pop %v712
  %v714 = vmul.f32 %v682, 1.442695
  %v715 = vpow.pop %v714
  %v716 = vmul.f32 %v683, 1.442695
  %v717 = vpow.pop %v716
  %v718 = vmul.f32 %v684, 1.442695
  %v719 = vpow.pop %v718
  %v720 = vmul.f32 %v685, 1.442695
  %v721 = vpow.pop %v720
  %v722 = vmul.f32 %v686, 1.442695
  %v723 = vpow.pop %v722
  %v724 = vmul.f32 %v687, 1.442695
  %v725 = vpow.pop %v724
  %v726 = vmul.f32 %v688, 1.442695
  %v727 = vpow.pop %v726
  %v728 = vmul.f32 %v689, 1.442695
  %v729 = vpow.pop %v728
  %v730 = vadd.f32 %v691, 1.0
  %v731 = vadd.f32 %v693, 1.0
  %v732 = vadd.f32 %v695, 1.0
  %v733 = vadd.f32 %v697, 1.0
  %v734 = vadd.f32 %v699, 1.0
  %v735 = vadd.f32 %v701, 1.0
  %v736 = vadd.f32 %v703, 1.0
  %v737 = vadd.f32 %v705, 1.0
  %v738 = vadd.f32 %v707, 1.0
  %v739 = vadd.f32 %v709, 1.0
  %v740 = vadd.f32 %v711, 1.0
  %v741 = vadd.f32 %v713, 1.0
  %v742 = vadd.f32 %v715, 1.0
  %v743 = vadd.f32 %v717, 1.0
  %v744 = vadd.f32 %v719, 1.0
  %v745 = vadd.f32 %v721, 1.0
  %v746 = vadd.f32 %v723, 1.0
  %v747 = vadd.f32 %v725, 1.0
  %v748 = vadd.f32 %v727, 1.0
  %v749 = vadd.f32 %v729, 1.0
  %v750 = vrcp.pop %v730
  %v751 = vmul.f32 1.0, %v750
  %v752 = vrcp.pop %v731
  %v753 = vmul.f32 1.0, %v752
  %v754 = vrcp.pop %v732
  %v755 = vmul.f32 1.0, %v754
  %v756 = vrcp.pop %v733
  %v757 = vmul.f32 1.0, %v756
  %v758 = vrcp.pop %v734
  %v759 = vmul.f32 1.0, %v758
  %v760 = vrcp.pop %v735
  %v761 = vmul.f32 1.0, %v760
  %v762 = vrcp.pop %v736
  %v763 = vmul.f32 1.0, %v762
  %v764 = vrcp.pop %v737
  %v765 = vmul.f32 1.0, %v764
  %v766 = vrcp.pop %v738
  %v767 = vmul.f32 1.0, %v766
  %v768 = vrcp.pop %v739
  %v769 = vmul.f32 1.0, %v768
  %v770 = vrcp.pop %v740
  %v771 = vmul.f32 1.0, %v770
  %v772 = vrcp.pop %v741
  %v773 = vmul.f32 1.0, %v772
  %v774 = vrcp.pop %v742
  %v775 = vmul.f32 1.0, %v774
  %v776 = vrcp.pop %v743
  %v777 = vmul.f32 1.0, %v776
  %v778 = vrcp.pop %v744
  %v779 = vmul.f32 1.0, %v778
  %v780 = vrcp.pop %v745
  %v781 = vmul.f32 1.0, %v780
  %v782 = vrcp.pop %v746
  %v783 = vmul.f32 1.0, %v782
  %v784 = vrcp.pop %v747
  %v785 = vmul.f32 1.0, %v784
  %v786 = vrcp.pop %v748
  %v787 = vmul.f32 1.0, %v786
  %v788 = vrcp.pop %v749
  %v789 = vmul.f32 1.0, %v788
  %v790 = vmul.f32 %v650, %v751
  %v791 = vmul.f32 %v651, %v753
  %v792 = vmul.f32 %v652, %v755
  %v793 = vmul.f32 %v653, %v757
  %v794 = vmul.f32 %v654, %v759
  %v795 = vmul.f32 %v655, %v761
  %v796 = vmul.f32 %v656, %v763
  %v797 = vmul.f32 %v657, %v765
  %v798 = vmul.f32 %v658, %v767
  %v799 = vmul.f32 %v659, %v769
  %v800 = vmul.f32 %v660, %v771
  %v801 = vmul.f32 %v661, %v773
  %v802 = vmul.f32 %v662, %v775
  %v803 = vmul.f32 %v663, %v777
  %v804 = vmul.f32 %v664, %v779
  %v805 = vmul.f32 %v665, %v781
  %v806 = vmul.f32 %v666, %v783
  %v807 = vmul.f32 %v667, %v785
  %v808 = vmul.f32 %v668, %v787
  %v809 = vmul.f32 %v669, %v789
  %v810 = vpack.c.bf16 %v792, %v790
  %v811 = vpack.c.bf16 %v793, %v791
  %v812 = vpack.c.bf16 %v796, %v794
  %v813 = vpack.c.bf16 %v797, %v795
  %v814 = vpack.c.bf16 %v800, %v798
  %v815 = vpack.c.bf16 %v801, %v799
  %v816 = vpack.c.bf16 %v804, %v802
  %v817 = vpack.c.bf16 %v805, %v803
  %v818 = vpack.c.bf16 %v808, %v806
  %v819 = vpack.c.bf16 %v809, %v807
  %v820 = vld [vmem:[%s3] sm:$0xf]
  %v821 = vld [vmem:[%s3 + $0x4] sm:$0xf]
  %v822 = vld [vmem:[%s3 + $0x8] sm:$0xf]
  %v823 = vld [vmem:[%s3 + $0xc] sm:$0xf]
  %v824 = vld [vmem:[%s3 + $0x10] sm:$0xf]
  %v825 = vld [vmem:[%s3 + $0x14] sm:$0xf]
  %v826 = vld [vmem:[%s3 + $0x18] sm:$0xf]
  %v827 = vld [vmem:[%s3 + $0x1c] sm:$0xf]
  %v828 = vld [vmem:[%s3 + $0x20] sm:$0xf]
  %v829 = vld [vmem:[%s3 + $0x24] sm:$0xf]
  %v830 = vld [vmem:[%s3 + $0x28] sm:$0xf]
  %v831 = vld [vmem:[%s3 + $0x2c] sm:$0xf]
  %v832 = vld [vmem:[%s3 + $0x30] sm:$0xf]
  %v833 = vld [vmem:[%s3 + $0x34] sm:$0xf]
  %v834 = vld [vmem:[%s3 + $0x38] sm:$0xf]
  %v835 = vld [vmem:[%s3 + $0x3c] sm:$0xf]
  %v836 = vld [vmem:[%s3 + $0x40] sm:$0xf]
  %v837 = vld [vmem:[%s3 + $0x44] sm:$0xf]
  %v838 = vld [vmem:[%s3 + $0x48] sm:$0xf]
  %v839 = vld [vmem:[%s3 + $0x4c] sm:$0xf]
  %v840 = vld [vmem:[%s3 + $0x50] sm:$0xf]
  %v841 = vld [vmem:[%s3 + $0x54] sm:$0xf]
  %v842 = vld [vmem:[%s3 + $0x58] sm:$0xf]
  %v843 = vld [vmem:[%s3 + $0x5c] sm:$0xf]
  %v844 = vld [vmem:[%s3 + $0x60] sm:$0xf]
  %v845 = vld [vmem:[%s3 + $0x64] sm:$0xf]
  %v846 = vld [vmem:[%s3 + $0x68] sm:$0xf]
  %v847 = vld [vmem:[%s3 + $0x6c] sm:$0xf]
  %v848 = vld [vmem:[%s3 + $0x70] sm:$0xf]
  %v849 = vld [vmem:[%s3 + $0x74] sm:$0xf]
  %v850 = vld [vmem:[%s3 + $0x78] sm:$0xf]
  %v851 = vld [vmem:[%s3 + $0x7c] sm:$0xf]
  %v884 = vunpack.c.l.b16 %v820
  %v885 = vunpack.c.l.b16 %v821
  %v886 = vunpack.c.l.b16 %v822
  %v887 = vunpack.c.l.b16 %v823
  %v888 = vunpack.c.l.b16 %v824
  %v889 = vunpack.c.l.b16 %v825
  %v890 = vunpack.c.l.b16 %v826
  %v891 = vunpack.c.l.b16 %v827
  %v892 = vunpack.c.l.b16 %v828
  %v893 = vunpack.c.l.b16 %v829
  %v894 = vunpack.c.l.b16 %v830
  %v895 = vunpack.c.l.b16 %v831
  %v896 = vunpack.c.l.b16 %v832
  %v897 = vunpack.c.l.b16 %v833
  %v898 = vunpack.c.l.b16 %v834
  %v899 = vunpack.c.l.b16 %v835
  %v900 = vunpack.c.l.b16 %v836
  %v901 = vunpack.c.l.b16 %v837
  %v902 = vunpack.c.l.b16 %v838
  %v903 = vunpack.c.l.b16 %v839
  %v904 = vunpack.c.l.b16 %v840
  %v905 = vunpack.c.l.b16 %v841
  %v906 = vunpack.c.l.b16 %v842
  %v907 = vunpack.c.l.b16 %v843
  %v908 = vunpack.c.l.b16 %v844
  %v909 = vunpack.c.l.b16 %v845
  %v910 = vunpack.c.l.b16 %v846
  %v911 = vunpack.c.l.b16 %v847
  %v912 = vunpack.c.l.b16 %v848
  %v913 = vunpack.c.l.b16 %v849
  %v914 = vunpack.c.l.b16 %v850
  %v915 = vunpack.c.l.b16 %v851
  %v916 = vpack.c.b16 %v885, %v884
  %v917 = vpack.c.b16 %v887, %v886
  %v918 = vpack.c.b16 %v889, %v888
  %v919 = vpack.c.b16 %v891, %v890
  %v920 = vpack.c.b16 %v893, %v892
  %v921 = vpack.c.b16 %v895, %v894
  %v922 = vpack.c.b16 %v897, %v896
  %v923 = vpack.c.b16 %v899, %v898
  %v924 = vpack.c.b16 %v901, %v900
  %v925 = vpack.c.b16 %v903, %v902
  %v926 = vpack.c.b16 %v905, %v904
  %v927 = vpack.c.b16 %v907, %v906
  %v928 = vpack.c.b16 %v909, %v908
  %v929 = vpack.c.b16 %v911, %v910
  %v930 = vpack.c.b16 %v913, %v912
  %v931 = vpack.c.b16 %v915, %v914
  %948 = vmatprep.subr.bf16.mxu0 0
  %949 = vmatpush1.bf16.msra.mxu0 %v923
  %950 = vmatprep.subr.bf16.mxu0 0
  %951 = vmatpush1.bf16.msra.mxu0 %v922
  %952 = vmatprep.subr.bf16.mxu0 0
  %953 = vmatpush1.bf16.msra.mxu0 %v921
  %954 = vmatprep.subr.bf16.mxu0 0
  %955 = vmatpush1.bf16.msra.mxu0 %v920
  %956 = vmatprep.subr.bf16.mxu0 0
  %957 = vmatpush1.bf16.msra.mxu0 %v919
  %958 = vmatprep.subr.bf16.mxu0 0
  %959 = vmatpush1.bf16.msra.mxu0 %v918
  %960 = vmatprep.subr.bf16.mxu0 0
  %961 = vmatpush1.bf16.msra.mxu0 %v917
  %962 = vmatprep.subr.bf16.mxu0 0
  %963 = vmatpush1.bf16.msra.mxu0 %v916
  %964 = vmatprep.subr.bf16.mxu0 0
  %965 = vmatpush2.bf16.msra.mxu0 %v931
  %966 = vmatprep.subr.bf16.mxu0 0
  %967 = vmatpush2.bf16.msra.mxu0 %v930
  %968 = vmatprep.subr.bf16.mxu0 0
  %969 = vmatpush2.bf16.msra.mxu0 %v929
  %970 = vmatprep.subr.bf16.mxu0 0
  %971 = vmatpush2.bf16.msra.mxu0 %v928
  %972 = vmatprep.subr.bf16.mxu0 0
  %973 = vmatpush2.bf16.msra.mxu0 %v927
  %974 = vmatprep.subr.bf16.mxu0 0
  %975 = vmatpush2.bf16.msra.mxu0 %v926
  %976 = vmatprep.subr.bf16.mxu0 0
  %977 = vmatpush2.bf16.msra.mxu0 %v925
  %978 = vmatprep.subr.bf16.mxu0 0
  %979 = vmatpush2.bf16.msra.mxu0 %v924
  %980 = vmatprep.mubr.bf16.mxu0 %v811
  %981 = vmatmul.mubr.bf16.gmra.mxu0 %v810
  %v982 = vpop.f32.mrf.mxu0
  %v983 = vadd.f32 0.0, %v982
  %v984 = vpop.f32.mrf.mxu0
  %v985 = vpop.f32.mrf.mxu0
  %v986 = vadd.f32 0.0, %v985
  %v987 = vpop.f32.mrf.mxu0
  %988 = vmatprep.mubr.bf16.mxu0 %v813
  %989 = vmatmul.mubr.bf16.gmra.mxu0 %v812
  %v990 = vpop.f32.mrf.mxu0
  %v991 = vadd.f32 0.0, %v990
  %v992 = vpop.f32.mrf.mxu0
  %v993 = vpop.f32.mrf.mxu0
  %v994 = vadd.f32 0.0, %v993
  %v995 = vpop.f32.mrf.mxu0
  %996 = vmatprep.mubr.bf16.mxu0 %v815
  %997 = vmatmul.mubr.bf16.gmra.mxu0 %v814
  %v998 = vpop.f32.mrf.mxu0
  %v999 = vadd.f32 0.0, %v998
  %v1000 = vpop.f32.mrf.mxu0
  %v1001 = vpop.f32.mrf.mxu0
  %v1002 = vadd.f32 0.0, %v1001
  %v1003 = vpop.f32.mrf.mxu0
  %1004 = vmatprep.mubr.bf16.mxu0 %v817
  %1005 = vmatmul.mubr.bf16.gmra.mxu0 %v816
  %v1006 = vpop.f32.mrf.mxu0
  %v1007 = vadd.f32 0.0, %v1006
  %v1008 = vpop.f32.mrf.mxu0
  %v1009 = vpop.f32.mrf.mxu0
  %v1010 = vadd.f32 0.0, %v1009
  %v1011 = vpop.f32.mrf.mxu0
  %1012 = vmatprep.mubr.bf16.mxu0 %v819
  %1013 = vmatmul.mubr.bf16.gmra.mxu0 %v818
  %v1014 = vpop.f32.mrf.mxu0
  %v1015 = vadd.f32 0.0, %v1014
  %v1016 = vpop.f32.mrf.mxu0
  %v1017 = vpop.f32.mrf.mxu0
  %v1018 = vadd.f32 0.0, %v1017
  %v1019 = vpop.f32.mrf.mxu0
  %1020 = vdwg.mxu0
  %v1021 = vmax.f32 %v983, 0.0
  %v1022 = vmax.f32 %v986, 0.0
  %v1023 = vmax.f32 %v991, 0.0
  %v1024 = vmax.f32 %v994, 0.0
  %v1025 = vmax.f32 %v999, 0.0
  %v1026 = vmax.f32 %v1002, 0.0
  %v1027 = vmax.f32 %v1007, 0.0
  %v1028 = vmax.f32 %v1010, 0.0
  %v1029 = vmax.f32 %v1015, 0.0
  %v1030 = vmax.f32 %v1018, 0.0
  %1031 = vst [vmem:[%s4] sm:$0xff] %v1021
  %1032 = vst [vmem:[%s4 + $0x8] sm:$0xff] %v1022
  %1033 = vst [vmem:[%s4 + $0x10] sm:$0xff] %v1023
  %1034 = vst [vmem:[%s4 + $0x18] sm:$0xff] %v1024
  %1035 = vst [vmem:[%s4 + $0x20] sm:$0xff] %v1025
  %1036 = vst [vmem:[%s4 + $0x28] sm:$0xff] %v1026
  %1037 = vst [vmem:[%s4 + $0x30] sm:$0xff] %v1027
  %1038 = vst [vmem:[%s4 + $0x38] sm:$0xff] %v1028
  %1039 = vst [vmem:[%s4 + $0x40] sm:$0xff] %v1029
  %1040 = vst [vmem:[%s4 + $0x48] sm:$0xff] %v1030
  // Predicated region
  $region18: #{cross_dual_path_forward.31} parent=0 // pred_check
    _
  $region19: #{cross_dual_path_forward.31} parent=0 // pred_check_branch
    %1042 = sbr.rel (0) target = $region21
  $region20: #{cross_dual_path_forward.31} parent=0 // pred_region
    _
  $region21: #{cross_dual_path_forward.31} parent=0 // pred_fallthru
    _
  // Predicated region
  $region22: #{cross_dual_path_forward.31} parent=0 // pred_check
    _
  $region23: #{cross_dual_path_forward.31} parent=0 // pred_check_branch
    %1044 = sbr.rel (0) target = $region25
  $region24: #{cross_dual_path_forward.31} parent=0 // pred_region
    _
  $region25: #{cross_dual_path_forward.31} parent=0 // pred_fallthru
    _

</llo_original>
